<compile_context>
chip_gen: v6e
topology: v6e:2x2x1
jax: 0.10.0
libtpu: 0.0.40
codegen_flags: <defaults>
</compile_context>

<pallas_src>
import numpy as np
import jax
import jax.numpy as jnp
from jax.experimental import pallas as pl
from jax.experimental.pallas import tpu as pltpu

# ---------------- problem sizes (small, consistent with Embed) ----------------
B = 2
C_IN = 32          # in_channels (divisible by heads=8)
C_OUT = 16         # out_channels
H = W = 14         # multiple of window_size=7
WS = 7             # window size
WS2 = WS * WS      # 49 tokens per window
HEADS = 8
HEAD_DIM = C_IN // HEADS
SCALE = HEAD_DIM ** -0.5
DISP = WS // 2     # cyclic shift displacement = 3
NWH, NWW = H // WS, W // WS
NW = NWH * NWW     # windows per image = 4
TPB = NW * WS2     # tokens per image = 196
NT = B * TPB       # 392 tokens total (== B*H*W pixels)
EPS = 1e-5
NEG = -1e9         # effectively -inf: exp() underflows to exactly 0


# -------------------------- mask / pos-embedding glue --------------------------
def create_mask_np(window_size, displacement, upper_lower, left_right):
    mask = np.zeros((window_size ** 2, window_size ** 2), dtype=np.float32)
    if upper_lower:
        mask[-displacement * window_size:, :-displacement * window_size] = -np.inf
        mask[:-displacement * window_size, -displacement * window_size:] = -np.inf
    if left_right:
        mask = mask.reshape(window_size, window_size, window_size, window_size)
        mask[:, -displacement:, :, :-displacement] = -np.inf
        mask[:, :-displacement, :, -displacement:] = -np.inf
        mask = mask.reshape(window_size ** 2, window_size ** 2)
    return mask


def relative_indices_np(window_size):
    idx = np.array([[x, y] for x in range(window_size) for y in range(window_size)])
    return idx[None, :, :] - idx[:, None, :] + window_size - 1  # [49, 49, 2]


UL_MASK = create_mask_np(WS, DISP, True, False)
LR_MASK = create_mask_np(WS, DISP, False, True)
REL_IDX = relative_indices_np(WS)

# per-window additive mask [NW, 49, 49] (last row / last column of windows)
WIN_MASKS_NP = np.zeros((NW, WS2, WS2), dtype=np.float32)
for _wh in range(NWH):
    for _ww in range(NWW):
        _wi = _wh * NWW + _ww
        if _wh == NWH - 1:
            WIN_MASKS_NP[_wi] += UL_MASK
        if _ww == NWW - 1:
            WIN_MASKS_NP[_wi] += LR_MASK


# ------------------------------- Pallas kernel --------------------------------
def fused_embed_kernel(x_ref, xt_ref, bias_ref, wa_ref, wb_ref, wct_ref,
                       o_ref, acc_ref):
    """One grid step = one image (196 tokens): attention + 1x1 conv (pre-BN).

    x_ref    : [1, TPB, C_IN]        tokens (shifted+windowed order), token-major
    xt_ref   : [1, C_IN, TPB]        same tokens, channels-major (matmul RHS)
    bias_ref : [TPB, TPB]            block-diag pos-bias + shift masks (NEG off-block)
    wa_ref   : [C_IN, HEADS*C_IN]    per-head A_h = scale*Wq_h@Wk_h^T, heads on lanes
    wb_ref   : [C_IN, HEADS*C_IN]    per-head B_h = Wv_h@Wout_h,       heads on lanes
    wct_ref  : [C_OUT, C_IN]         1x1-conv weight, transposed
    o_ref    : [1, C_OUT, TPB]       pre-BatchNorm output, channels-major (lane-dense)
    acc_ref  : [TPB, C_IN]           VMEM scratch accumulator
    """
    x = x_ref[0]                                              # [196, 32]
    xt = xt_ref[0]                                            # [32, 196]
    bias = bias_ref[...]                                      # [196, 196]

    # Batched head projections: two lane-dense N=256 MXU matmuls.
    xa = jnp.dot(x, wa_ref[...], preferred_element_type=jnp.float32)   # [196, 256]
    xb = jnp.dot(x, wb_ref[...], preferred_element_type=jnp.float32)   # [196, 256]

    acc_ref[...] = jnp.zeros_like(acc_ref)
    # 8 heads, statically unrolled; per head: one [196,196] score matmul,
    # row softmax (un-normalized), one PV matmul, 1/s applied on 32 lanes only.
    for h in range(HEADS):
        lo = h * C_IN
        xa_h = xa[:, lo:lo + C_IN]                            # [196, 32] static slice
        xb_h = xb[:, lo:lo + C_IN]                            # [196, 32]
        # dots[i, j] = scale * q_h[i].k_h[j]  (A_h pre-combined into xa_h)
        dots = jnp.dot(xa_h, xt, preferred_element_type=jnp.float32) + bias
        m = jnp.max(dots, axis=-1, keepdims=True)
        e = jnp.exp(dots - m)                                 # un-normalized attn
        s = jnp.sum(e, axis=-1, keepdims=True)
        pv = jnp.dot(e, xb_h, preferred_element_type=jnp.float32)      # [196, 32]
        # exact reciprocal: approx=True's extra error eats the 2e-3 margin
        acc_ref[...] += pv * pl.reciprocal(s, approx=False)

    # 1x1 conv, channels-major: y[d, t] = sum_c w_conv[c, d] * acc[t, c]
    y = jax.lax.dot_general(
        wct_ref[...], acc_ref[...], (((1,), (1,)), ((), ())),
        preferred_element_type=jnp.float32)                   # [16, 196]
    o_ref[0] = y.astype(o_ref.dtype)


# ----------------------------- host-side precompute ----------------------------
def build_prep(params):
    """One-time precompute: head-combined (lane-concatenated) weights and the
    per-image fused block-diagonal bias matrix."""
    w_qkv = np.asarray(params["w_qkv"], np.float32)
    w_out = np.asarray(params["w_out"], np.float32)
    pos_bias = np.asarray(params["pos_bias"], np.float32)

    wq, wk, wv = w_qkv[:, :C_IN], w_qkv[:, C_IN:2 * C_IN], w_qkv[:, 2 * C_IN:]
    wa = np.zeros((C_IN, HEADS * C_IN), np.float32)
    wb = np.zeros((C_IN, HEADS * C_IN), np.float32)
    for h in range(HEADS):
        lo, hi = h * HEAD_DIM, (h + 1) * HEAD_DIM
        wa[:, h * C_IN:(h + 1) * C_IN] = SCALE * (wq[:, lo:hi] @ wk[:, lo:hi].T)
        wb[:, h * C_IN:(h + 1) * C_IN] = wv[:, lo:hi] @ w_out[lo:hi, :]

    # block-diagonal additive bias over the NW window blocks of one image
    bias = np.full((TPB, TPB), NEG, np.float32)
    for wi in range(NW):
        r0 = wi * WS2
        blk = np.maximum(pos_bias + WIN_MASKS_NP[wi], NEG)    # -inf -> NEG
        bias[r0:r0 + WS2, r0:r0 + WS2] = blk

    # NOTE: to_out bias (b_out) intentionally dropped: token-independent bias
    # through the 1x1 conv is exactly cancelled by BN mean subtraction.
    return dict(
        bias=jnp.asarray(bias),
        wa=jnp.asarray(wa),
        wb=jnp.asarray(wb),
        wconv_t=jnp.asarray(params["w_conv"], dtype=jnp.float32).T,   # [C_OUT, C_IN]
        gamma=jnp.asarray(params["gamma"], dtype=jnp.float32).reshape(C_OUT),
        beta=jnp.asarray(params["beta"], dtype=jnp.float32).reshape(C_OUT),
    )


# ----------------------------------- wrapper -----------------------------------
def embed_forward(x_nchw, prep):
    # (1) NCHW -> (shifted, windowed) tokens via roll + reshape/transpose HLOs
    #     (XLA lowers these to efficient copies; no gathers).
    xr = jnp.roll(x_nchw, shift=(-DISP, -DISP), axis=(2, 3))
    xr = xr.reshape(B, C_IN, NWH, WS, NWW, WS)
    x_tok = jnp.transpose(xr, (0, 2, 4, 3, 5, 1)).reshape(B, TPB, C_IN)   # [2,196,32]
    x_t = jnp.transpose(xr, (0, 1, 2, 4, 3, 5)).reshape(B, C_IN, TPB)     # [2,32,196]

    # (2) fused attention + 1x1 conv kernel; grid=(B,) parallel over images
    #     (both v7x TensorCores busy; sequential but cheaper steps on v5e/v6e).
    y_pre = pl.pallas_call(
        fused_embed_kernel,
        out_shape=jax.ShapeDtypeStruct((B, C_OUT, TPB), jnp.float32),
        grid=(B,),
        in_specs=[
            pl.BlockSpec((1, TPB, C_IN), lambda i: (i, 0, 0)),
            pl.BlockSpec((1, C_IN, TPB), lambda i: (i, 0, 0)),
            pl.BlockSpec((TPB, TPB), lambda i: (0, 0)),
            pl.BlockSpec((C_IN, HEADS * C_IN), lambda i: (0, 0)),
            pl.BlockSpec((C_IN, HEADS * C_IN), lambda i: (0, 0)),
            pl.BlockSpec((C_OUT, C_IN), lambda i: (0, 0)),
        ],
        out_specs=pl.BlockSpec((1, C_OUT, TPB), lambda i: (i, 0, 0)),
        scratch_shapes=[pltpu.VMEM((TPB, C_IN), jnp.float32)],
        compiler_params=pltpu.CompilerParams(
            dimension_semantics=("parallel",)),
    )(x_tok, x_t, prep["bias"], prep["wa"], prep["wb"], prep["wconv_t"])

    # (3) BatchNorm2d with training-mode batch statistics over all B*H*W pixels
    #     (tiny [16,392] XLA reduction; token order is a pixel permutation so
    #     the statistics are identical).
    mean = jnp.mean(y_pre, axis=(0, 2), keepdims=True)
    var = jnp.mean(jnp.square(y_pre - mean), axis=(0, 2), keepdims=True)  # biased
    y = (y_pre - mean) * jax.lax.rsqrt(var + EPS)
    y = y * prep["gamma"][None, :, None] + prep["beta"][None, :, None]

    # (4) un-window + un-shift back to NCHW via reshape/transpose + roll.
    y = y.reshape(B, C_OUT, NWH, NWW, WS, WS)
    y = jnp.transpose(y, (0, 1, 2, 4, 3, 5)).reshape(B, C_OUT, H, W)
    return jnp.roll(y, shift=(DISP, DISP), axis=(2, 3))


# --------------------------- pure-JAX reference check ---------------------------
def embed_reference(x_nchw, params):
    x = jnp.transpose(x_nchw, (0, 2, 3, 1))
    x = jnp.roll(x, shift=(-DISP, -DISP), axis=(1, 2))
    qkv = x @ params["w_qkv"]
    q, k, v = jnp.split(qkv, 3, axis=-1)

    def to_win(t):
        t = t.reshape(B, NWH, WS, NWW, WS, HEADS, HEAD_DIM)
        t = jnp.transpose(t, (0, 5, 1, 3, 2, 4, 6))
        return t.reshape(B, HEADS, NW, WS2, HEAD_DIM)

    q, k, v = to_win(q), to_win(k), to_win(v)
    dots = jnp.einsum('bhwid,bhwjd->bhwij', q, k) * SCALE
    dots = dots + params["pos_bias"][None, None, None]
    dots = dots + params["win_masks"][None, None]
    m = jnp.max(dots, axis=-1, keepdims=True)
    e = jnp.exp(dots - m)
    attn = e / jnp.sum(e, axis=-1, keepdims=True)
    out = jnp.einsum('bhwij,bhwjd->bhwid', attn, v)
    out = out.reshape(B, HEADS, NWH, NWW, WS, WS, HEAD_DIM)
    out = jnp.transpose(out, (0, 2, 4, 3, 5, 1, 6)).reshape(B, H, W, C_IN)
    out = out @ params["w_out"] + params["b_out"][0]
    out = jnp.roll(out, shift=(DISP, DISP), axis=(1, 2))

    y = out.reshape(B * H * W, C_IN) @ params["w_conv"]
    mean = jnp.mean(y, axis=0, keepdims=True)
    var = jnp.mean(jnp.square(y - mean), axis=0, keepdims=True)
    y = (y - mean) * jax.lax.rsqrt(var + EPS) * params["gamma"] + params["beta"]
    return jnp.transpose(y.reshape(B, H, W, C_OUT), (0, 3, 1, 2))


# ------------------------------------- main --------------------------------------
if __name__ == "__main__":
    key = jax.random.PRNGKey(0)
    k_x, k_qkv, k_out, k_bout, k_pos, k_conv = jax.random.split(key, 6)

    x = jax.random.normal(k_x, (B, C_IN, H, W), dtype=jnp.float32)

    # deterministic synthetic parameters (shapes from Embed.__init__):
    # to_qkv: Linear(C, 3C, bias=False); to_out: Linear(C, C);
    # pos_embedding: randn(2*ws-1, 2*ws-1); conv2d: (Cout, Cin, 1, 1), no bias;
    # BatchNorm2d(Cout): gamma=1, beta=0.
    w_qkv = jax.random.normal(k_qkv, (C_IN, 3 * C_IN), jnp.float32) * 0.05
    w_out = jax.random.normal(k_out, (C_IN, C_IN), jnp.float32) * 0.05
    b_out = jax.random.normal(k_bout, (1, C_IN), jnp.float32) * 0.05
    pos_embedding = jax.random.normal(k_pos, (2 * WS - 1, 2 * WS - 1), jnp.float32)
    pos_bias = pos_embedding[REL_IDX[..., 0], REL_IDX[..., 1]]          # [49, 49]
    w_conv = jax.random.normal(k_conv, (C_IN, C_OUT), jnp.float32) * 0.05
    gamma = jnp.ones((1, C_OUT), jnp.float32)
    beta = jnp.zeros((1, C_OUT), jnp.float32)

    params = dict(
        w_qkv=w_qkv, w_out=w_out, b_out=b_out,
        pos_bias=pos_bias, win_masks=jnp.asarray(WIN_MASKS_NP),
        w_conv=w_conv, gamma=gamma, beta=beta,
    )
    prep = build_prep(params)     # one-time host-side precompute

    run = jax.jit(embed_forward)
    out = run(x, prep)
    jax.block_until_ready(out)

    ref = embed_reference(x, params)
    np.testing.assert_allclose(np.asarray(out), np.asarray(ref),
                               atol=2e-3, rtol=2e-3)

    print("KERNEL_OK")
</pallas_src>

<mosaic_0001>
module attributes {stable_mosaic.version = 11 : i64} {
  func.func @fused_embed_kernel(%arg0: i32, %arg1: memref<1x196x32xf32, #tpu.memory_space<vmem>>, %arg2: memref<1x32x196xf32, #tpu.memory_space<vmem>>, %arg3: memref<196x196xf32, #tpu.memory_space<vmem>>, %arg4: memref<32x256xf32, #tpu.memory_space<vmem>>, %arg5: memref<32x256xf32, #tpu.memory_space<vmem>>, %arg6: memref<16x32xf32, #tpu.memory_space<vmem>>, %arg7: memref<1x16x196xf32, #tpu.memory_space<vmem>>, %arg8: memref<196x32xf32, #tpu.memory_space<vmem>>) attributes {dimension_semantics = [#tpu.dimension_semantics<parallel>], iteration_bounds = array<i64: 2>, scalar_prefetch = 0 : i64, scratch_operands = 1 : i64, tpu.core_type = #tpu.core_type<tc>, window_params = [{transform_indices = @transform_0, window_bounds = array<i64: 1, 196, 32>}, {transform_indices = @transform_1, window_bounds = array<i64: 1, 32, 196>}, {pipeline_mode = #tpu.pipeline_mode<synchronous>, transform_indices = @transform_2, window_bounds = array<i64: 196, 196>}, {pipeline_mode = #tpu.pipeline_mode<synchronous>, transform_indices = @transform_3, window_bounds = array<i64: 32, 256>}, {pipeline_mode = #tpu.pipeline_mode<synchronous>, transform_indices = @transform_4, window_bounds = array<i64: 32, 256>}, {pipeline_mode = #tpu.pipeline_mode<synchronous>, transform_indices = @transform_5, window_bounds = array<i64: 16, 32>}, {transform_indices = @transform_6, window_bounds = array<i64: 1, 16, 196>}]} {
    %c0 = arith.constant 0 : index
    %c0_0 = arith.constant 0 : index
    %c0_1 = arith.constant 0 : index
    %0 = vector.load %arg1[%c0, %c0_0, %c0_1] : memref<1x196x32xf32, #tpu.memory_space<vmem>>, vector<1x196x32xf32>
    %1 = vector.shape_cast %0 : vector<1x196x32xf32> to vector<196x32xf32>
    %c0_2 = arith.constant 0 : index
    %c0_3 = arith.constant 0 : index
    %c0_4 = arith.constant 0 : index
    %2 = vector.load %arg2[%c0_2, %c0_3, %c0_4] : memref<1x32x196xf32, #tpu.memory_space<vmem>>, vector<1x32x196xf32>
    %3 = vector.shape_cast %2 : vector<1x32x196xf32> to vector<32x196xf32>
    %c0_5 = arith.constant 0 : index
    %c0_6 = arith.constant 0 : index
    %4 = vector.load %arg3[%c0_5, %c0_6] : memref<196x196xf32, #tpu.memory_space<vmem>>, vector<196x196xf32>
    %c0_7 = arith.constant 0 : index
    %c0_8 = arith.constant 0 : index
    %5 = vector.load %arg4[%c0_7, %c0_8] : memref<32x256xf32, #tpu.memory_space<vmem>>, vector<32x256xf32>
    %cst = arith.constant dense<0.000000e+00> : vector<196x256xf32>
    %6 = tpu.matmul %1, %5, %cst {dimension_numbers = #tpu.dot_dimension_numbers<[1], [0], [0], [1], [0, 0, 1, 1], [], []>} : vector<196x32xf32>, vector<32x256xf32>, vector<196x256xf32> -> vector<196x256xf32>
    %c0_9 = arith.constant 0 : index
    %c0_10 = arith.constant 0 : index
    %7 = vector.load %arg5[%c0_9, %c0_10] : memref<32x256xf32, #tpu.memory_space<vmem>>, vector<32x256xf32>
    %cst_11 = arith.constant dense<0.000000e+00> : vector<196x256xf32>
    %8 = tpu.matmul %1, %7, %cst_11 {dimension_numbers = #tpu.dot_dimension_numbers<[1], [0], [0], [1], [0, 0, 1, 1], [], []>} : vector<196x32xf32>, vector<32x256xf32>, vector<196x256xf32> -> vector<196x256xf32>
    %cst_12 = arith.constant 0.000000e+00 : f32
    %9 = vector.broadcast %cst_12 : f32 to vector<196x32xf32>
    %c0_13 = arith.constant 0 : index
    %c0_14 = arith.constant 0 : index
    %10 = vector.load %arg8[%c0_13, %c0_14] : memref<196x32xf32, #tpu.memory_space<vmem>>, vector<196x32xf32>
    tpu.vector_store %arg8[%c0_13, %c0_14], %9 {strides = array<i32>} : memref<196x32xf32, #tpu.memory_space<vmem>>, vector<196x32xf32>,
    %11 = vector.extract_strided_slice %6 {offsets = [0, 0], sizes = [196, 32], strides = [1, 1]} : vector<196x256xf32> to vector<196x32xf32>
    %12 = vector.extract_strided_slice %8 {offsets = [0, 0], sizes = [196, 32], strides = [1, 1]} : vector<196x256xf32> to vector<196x32xf32>
    %cst_15 = arith.constant dense<0.000000e+00> : vector<196x196xf32>
    %13 = tpu.matmul %11, %3, %cst_15 {dimension_numbers = #tpu.dot_dimension_numbers<[1], [0], [0], [1], [0, 0, 1, 1], [], []>} : vector<196x32xf32>, vector<32x196xf32>, vector<196x196xf32> -> vector<196x196xf32>
    %14 = arith.addf %13, %4 : vector<196x196xf32>
    %cst_16 = arith.constant dense<0xFF800000> : vector<196xf32>
    %15 = vector.multi_reduction <maximumf>, %14, %cst_16 [1] : vector<196x196xf32> to vector<196xf32>
    %16 = vector.shape_cast %15 : vector<196xf32> to vector<196x1xf32>
    %17 = vector.broadcast %16 : vector<196x1xf32> to vector<196x196xf32>
    %18 = arith.subf %14, %17 : vector<196x196xf32>
    %19 = math.exp %18 : vector<196x196xf32>
    %cst_17 = arith.constant dense<0.000000e+00> : vector<196xf32>
    %20 = vector.multi_reduction <add>, %19, %cst_17 [1] : vector<196x196xf32> to vector<196xf32>
    %21 = vector.shape_cast %20 : vector<196xf32> to vector<196x1xf32>
    %cst_18 = arith.constant dense<0.000000e+00> : vector<196x32xf32>
    %22 = tpu.matmul %19, %12, %cst_18 {dimension_numbers = #tpu.dot_dimension_numbers<[1], [0], [0], [1], [0, 0, 1, 1], [], []>} : vector<196x196xf32>, vector<196x32xf32>, vector<196x32xf32> -> vector<196x32xf32>
    %c0_19 = arith.constant 0 : index
    %c0_20 = arith.constant 0 : index
    %23 = vector.load %arg8[%c0_19, %c0_20] : memref<196x32xf32, #tpu.memory_space<vmem>>, vector<196x32xf32>
    %24 = tpu.reciprocal %21 : vector<196x1xf32> -> vector<196x1xf32>
    %25 = vector.broadcast %24 : vector<196x1xf32> to vector<196x32xf32>
    %26 = arith.mulf %22, %25 : vector<196x32xf32>
    %27 = arith.addf %23, %26 : vector<196x32xf32>
    %c0_21 = arith.constant 0 : index
    %c0_22 = arith.constant 0 : index
    %28 = vector.load %arg8[%c0_21, %c0_22] : memref<196x32xf32, #tpu.memory_space<vmem>>, vector<196x32xf32>
    tpu.vector_store %arg8[%c0_21, %c0_22], %27 {strides = array<i32>} : memref<196x32xf32, #tpu.memory_space<vmem>>, vector<196x32xf32>,
    %29 = vector.extract_strided_slice %6 {offsets = [0, 32], sizes = [196, 32], strides = [1, 1]} : vector<196x256xf32> to vector<196x32xf32>
    %30 = vector.extract_strided_slice %8 {offsets = [0, 32], sizes = [196, 32], strides = [1, 1]} : vector<196x256xf32> to vector<196x32xf32>
    %cst_23 = arith.constant dense<0.000000e+00> : vector<196x196xf32>
    %31 = tpu.matmul %29, %3, %cst_23 {dimension_numbers = #tpu.dot_dimension_numbers<[1], [0], [0], [1], [0, 0, 1, 1], [], []>} : vector<196x32xf32>, vector<32x196xf32>, vector<196x196xf32> -> vector<196x196xf32>
    %32 = arith.addf %31, %4 : vector<196x196xf32>
    %cst_24 = arith.constant dense<0xFF800000> : vector<196xf32>
    %33 = vector.multi_reduction <maximumf>, %32, %cst_24 [1] : vector<196x196xf32> to vector<196xf32>
    %34 = vector.shape_cast %33 : vector<196xf32> to vector<196x1xf32>
    %35 = vector.broadcast %34 : vector<196x1xf32> to vector<196x196xf32>
    %36 = arith.subf %32, %35 : vector<196x196xf32>
    %37 = math.exp %36 : vector<196x196xf32>
    %cst_25 = arith.constant dense<0.000000e+00> : vector<196xf32>
    %38 = vector.multi_reduction <add>, %37, %cst_25 [1] : vector<196x196xf32> to vector<196xf32>
    %39 = vector.shape_cast %38 : vector<196xf32> to vector<196x1xf32>
    %cst_26 = arith.constant dense<0.000000e+00> : vector<196x32xf32>
    %40 = tpu.matmul %37, %30, %cst_26 {dimension_numbers = #tpu.dot_dimension_numbers<[1], [0], [0], [1], [0, 0, 1, 1], [], []>} : vector<196x196xf32>, vector<196x32xf32>, vector<196x32xf32> -> vector<196x32xf32>
    %c0_27 = arith.constant 0 : index
    %c0_28 = arith.constant 0 : index
    %41 = vector.load %arg8[%c0_27, %c0_28] : memref<196x32xf32, #tpu.memory_space<vmem>>, vector<196x32xf32>
    %42 = tpu.reciprocal %39 : vector<196x1xf32> -> vector<196x1xf32>
    %43 = vector.broadcast %42 : vector<196x1xf32> to vector<196x32xf32>
    %44 = arith.mulf %40, %43 : vector<196x32xf32>
    %45 = arith.addf %41, %44 : vector<196x32xf32>
    %c0_29 = arith.constant 0 : index
    %c0_30 = arith.constant 0 : index
    %46 = vector.load %arg8[%c0_29, %c0_30] : memref<196x32xf32, #tpu.memory_space<vmem>>, vector<196x32xf32>
    tpu.vector_store %arg8[%c0_29, %c0_30], %45 {strides = array<i32>} : memref<196x32xf32, #tpu.memory_space<vmem>>, vector<196x32xf32>,
    %47 = vector.extract_strided_slice %6 {offsets = [0, 64], sizes = [196, 32], strides = [1, 1]} : vector<196x256xf32> to vector<196x32xf32>
    %48 = vector.extract_strided_slice %8 {offsets = [0, 64], sizes = [196, 32], strides = [1, 1]} : vector<196x256xf32> to vector<196x32xf32>
    %cst_31 = arith.constant dense<0.000000e+00> : vector<196x196xf32>
    %49 = tpu.matmul %47, %3, %cst_31 {dimension_numbers = #tpu.dot_dimension_numbers<[1], [0], [0], [1], [0, 0, 1, 1], [], []>} : vector<196x32xf32>, vector<32x196xf32>, vector<196x196xf32> -> vector<196x196xf32>
    %50 = arith.addf %49, %4 : vector<196x196xf32>
    %cst_32 = arith.constant dense<0xFF800000> : vector<196xf32>
    %51 = vector.multi_reduction <maximumf>, %50, %cst_32 [1] : vector<196x196xf32> to vector<196xf32>
    %52 = vector.shape_cast %51 : vector<196xf32> to vector<196x1xf32>
    %53 = vector.broadcast %52 : vector<196x1xf32> to vector<196x196xf32>
    %54 = arith.subf %50, %53 : vector<196x196xf32>
    %55 = math.exp %54 : vector<196x196xf32>
    %cst_33 = arith.constant dense<0.000000e+00> : vector<196xf32>
    %56 = vector.multi_reduction <add>, %55, %cst_33 [1] : vector<196x196xf32> to vector<196xf32>
    %57 = vector.shape_cast %56 : vector<196xf32> to vector<196x1xf32>
    %cst_34 = arith.constant dense<0.000000e+00> : vector<196x32xf32>
    %58 = tpu.matmul %55, %48, %cst_34 {dimension_numbers = #tpu.dot_dimension_numbers<[1], [0], [0], [1], [0, 0, 1, 1], [], []>} : vector<196x196xf32>, vector<196x32xf32>, vector<196x32xf32> -> vector<196x32xf32>
    %c0_35 = arith.constant 0 : index
    %c0_36 = arith.constant 0 : index
    %59 = vector.load %arg8[%c0_35, %c0_36] : memref<196x32xf32, #tpu.memory_space<vmem>>, vector<196x32xf32>
    %60 = tpu.reciprocal %57 : vector<196x1xf32> -> vector<196x1xf32>
    %61 = vector.broadcast %60 : vector<196x1xf32> to vector<196x32xf32>
    %62 = arith.mulf %58, %61 : vector<196x32xf32>
    %63 = arith.addf %59, %62 : vector<196x32xf32>
    %c0_37 = arith.constant 0 : index
    %c0_38 = arith.constant 0 : index
    %64 = vector.load %arg8[%c0_37, %c0_38] : memref<196x32xf32, #tpu.memory_space<vmem>>, vector<196x32xf32>
    tpu.vector_store %arg8[%c0_37, %c0_38], %63 {strides = array<i32>} : memref<196x32xf32, #tpu.memory_space<vmem>>, vector<196x32xf32>,
    %65 = vector.extract_strided_slice %6 {offsets = [0, 96], sizes = [196, 32], strides = [1, 1]} : vector<196x256xf32> to vector<196x32xf32>
    %66 = vector.extract_strided_slice %8 {offsets = [0, 96], sizes = [196, 32], strides = [1, 1]} : vector<196x256xf32> to vector<196x32xf32>
    %cst_39 = arith.constant dense<0.000000e+00> : vector<196x196xf32>
    %67 = tpu.matmul %65, %3, %cst_39 {dimension_numbers = #tpu.dot_dimension_numbers<[1], [0], [0], [1], [0, 0, 1, 1], [], []>} : vector<196x32xf32>, vector<32x196xf32>, vector<196x196xf32> -> vector<196x196xf32>
    %68 = arith.addf %67, %4 : vector<196x196xf32>
    %cst_40 = arith.constant dense<0xFF800000> : vector<196xf32>
    %69 = vector.multi_reduction <maximumf>, %68, %cst_40 [1] : vector<196x196xf32> to vector<196xf32>
    %70 = vector.shape_cast %69 : vector<196xf32> to vector<196x1xf32>
    %71 = vector.broadcast %70 : vector<196x1xf32> to vector<196x196xf32>
    %72 = arith.subf %68, %71 : vector<196x196xf32>
    %73 = math.exp %72 : vector<196x196xf32>
    %cst_41 = arith.constant dense<0.000000e+00> : vector<196xf32>
    %74 = vector.multi_reduction <add>, %73, %cst_41 [1] : vector<196x196xf32> to vector<196xf32>
    %75 = vector.shape_cast %74 : vector<196xf32> to vector<196x1xf32>
    %cst_42 = arith.constant dense<0.000000e+00> : vector<196x32xf32>
    %76 = tpu.matmul %73, %66, %cst_42 {dimension_numbers = #tpu.dot_dimension_numbers<[1], [0], [0], [1], [0, 0, 1, 1], [], []>} : vector<196x196xf32>, vector<196x32xf32>, vector<196x32xf32> -> vector<196x32xf32>
    %c0_43 = arith.constant 0 : index
    %c0_44 = arith.constant 0 : index
    %77 = vector.load %arg8[%c0_43, %c0_44] : memref<196x32xf32, #tpu.memory_space<vmem>>, vector<196x32xf32>
    %78 = tpu.reciprocal %75 : vector<196x1xf32> -> vector<196x1xf32>
    %79 = vector.broadcast %78 : vector<196x1xf32> to vector<196x32xf32>
    %80 = arith.mulf %76, %79 : vector<196x32xf32>
    %81 = arith.addf %77, %80 : vector<196x32xf32>
    %c0_45 = arith.constant 0 : index
    %c0_46 = arith.constant 0 : index
    %82 = vector.load %arg8[%c0_45, %c0_46] : memref<196x32xf32, #tpu.memory_space<vmem>>, vector<196x32xf32>
    tpu.vector_store %arg8[%c0_45, %c0_46], %81 {strides = array<i32>} : memref<196x32xf32, #tpu.memory_space<vmem>>, vector<196x32xf32>,
    %83 = vector.extract_strided_slice %6 {offsets = [0, 128], sizes = [196, 32], strides = [1, 1]} : vector<196x256xf32> to vector<196x32xf32>
    %84 = vector.extract_strided_slice %8 {offsets = [0, 128], sizes = [196, 32], strides = [1, 1]} : vector<196x256xf32> to vector<196x32xf32>
    %cst_47 = arith.constant dense<0.000000e+00> : vector<196x196xf32>
    %85 = tpu.matmul %83, %3, %cst_47 {dimension_numbers = #tpu.dot_dimension_numbers<[1], [0], [0], [1], [0, 0, 1, 1], [], []>} : vector<196x32xf32>, vector<32x196xf32>, vector<196x196xf32> -> vector<196x196xf32>
    %86 = arith.addf %85, %4 : vector<196x196xf32>
    %cst_48 = arith.constant dense<0xFF800000> : vector<196xf32>
    %87 = vector.multi_reduction <maximumf>, %86, %cst_48 [1] : vector<196x196xf32> to vector<196xf32>
    %88 = vector.shape_cast %87 : vector<196xf32> to vector<196x1xf32>
    %89 = vector.broadcast %88 : vector<196x1xf32> to vector<196x196xf32>
    %90 = arith.subf %86, %89 : vector<196x196xf32>
    %91 = math.exp %90 : vector<196x196xf32>
    %cst_49 = arith.constant dense<0.000000e+00> : vector<196xf32>
    %92 = vector.multi_reduction <add>, %91, %cst_49 [1] : vector<196x196xf32> to vector<196xf32>
    %93 = vector.shape_cast %92 : vector<196xf32> to vector<196x1xf32>
    %cst_50 = arith.constant dense<0.000000e+00> : vector<196x32xf32>
    %94 = tpu.matmul %91, %84, %cst_50 {dimension_numbers = #tpu.dot_dimension_numbers<[1], [0], [0], [1], [0, 0, 1, 1], [], []>} : vector<196x196xf32>, vector<196x32xf32>, vector<196x32xf32> -> vector<196x32xf32>
    %c0_51 = arith.constant 0 : index
    %c0_52 = arith.constant 0 : index
    %95 = vector.load %arg8[%c0_51, %c0_52] : memref<196x32xf32, #tpu.memory_space<vmem>>, vector<196x32xf32>
    %96 = tpu.reciprocal %93 : vector<196x1xf32> -> vector<196x1xf32>
    %97 = vector.broadcast %96 : vector<196x1xf32> to vector<196x32xf32>
    %98 = arith.mulf %94, %97 : vector<196x32xf32>
    %99 = arith.addf %95, %98 : vector<196x32xf32>
    %c0_53 = arith.constant 0 : index
    %c0_54 = arith.constant 0 : index
    %100 = vector.load %arg8[%c0_53, %c0_54] : memref<196x32xf32, #tpu.memory_space<vmem>>, vector<196x32xf32>
    tpu.vector_store %arg8[%c0_53, %c0_54], %99 {strides = array<i32>} : memref<196x32xf32, #tpu.memory_space<vmem>>, vector<196x32xf32>,
    %101 = vector.extract_strided_slice %6 {offsets = [0, 160], sizes = [196, 32], strides = [1, 1]} : vector<196x256xf32> to vector<196x32xf32>
    %102 = vector.extract_strided_slice %8 {offsets = [0, 160], sizes = [196, 32], strides = [1, 1]} : vector<196x256xf32> to vector<196x32xf32>
    %cst_55 = arith.constant dense<0.000000e+00> : vector<196x196xf32>
    %103 = tpu.matmul %101, %3, %cst_55 {dimension_numbers = #tpu.dot_dimension_numbers<[1], [0], [0], [1], [0, 0, 1, 1], [], []>} : vector<196x32xf32>, vector<32x196xf32>, vector<196x196xf32> -> vector<196x196xf32>
    %104 = arith.addf %103, %4 : vector<196x196xf32>
    %cst_56 = arith.constant dense<0xFF800000> : vector<196xf32>
    %105 = vector.multi_reduction <maximumf>, %104, %cst_56 [1] : vector<196x196xf32> to vector<196xf32>
    %106 = vector.shape_cast %105 : vector<196xf32> to vector<196x1xf32>
    %107 = vector.broadcast %106 : vector<196x1xf32> to vector<196x196xf32>
    %108 = arith.subf %104, %107 : vector<196x196xf32>
    %109 = math.exp %108 : vector<196x196xf32>
    %cst_57 = arith.constant dense<0.000000e+00> : vector<196xf32>
    %110 = vector.multi_reduction <add>, %109, %cst_57 [1] : vector<196x196xf32> to vector<196xf32>
    %111 = vector.shape_cast %110 : vector<196xf32> to vector<196x1xf32>
    %cst_58 = arith.constant dense<0.000000e+00> : vector<196x32xf32>
    %112 = tpu.matmul %109, %102, %cst_58 {dimension_numbers = #tpu.dot_dimension_numbers<[1], [0], [0], [1], [0, 0, 1, 1], [], []>} : vector<196x196xf32>, vector<196x32xf32>, vector<196x32xf32> -> vector<196x32xf32>
    %c0_59 = arith.constant 0 : index
    %c0_60 = arith.constant 0 : index
    %113 = vector.load %arg8[%c0_59, %c0_60] : memref<196x32xf32, #tpu.memory_space<vmem>>, vector<196x32xf32>
    %114 = tpu.reciprocal %111 : vector<196x1xf32> -> vector<196x1xf32>
    %115 = vector.broadcast %114 : vector<196x1xf32> to vector<196x32xf32>
    %116 = arith.mulf %112, %115 : vector<196x32xf32>
    %117 = arith.addf %113, %116 : vector<196x32xf32>
    %c0_61 = arith.constant 0 : index
    %c0_62 = arith.constant 0 : index
    %118 = vector.load %arg8[%c0_61, %c0_62] : memref<196x32xf32, #tpu.memory_space<vmem>>, vector<196x32xf32>
    tpu.vector_store %arg8[%c0_61, %c0_62], %117 {strides = array<i32>} : memref<196x32xf32, #tpu.memory_space<vmem>>, vector<196x32xf32>,
    %119 = vector.extract_strided_slice %6 {offsets = [0, 192], sizes = [196, 32], strides = [1, 1]} : vector<196x256xf32> to vector<196x32xf32>
    %120 = vector.extract_strided_slice %8 {offsets = [0, 192], sizes = [196, 32], strides = [1, 1]} : vector<196x256xf32> to vector<196x32xf32>
    %cst_63 = arith.constant dense<0.000000e+00> : vector<196x196xf32>
    %121 = tpu.matmul %119, %3, %cst_63 {dimension_numbers = #tpu.dot_dimension_numbers<[1], [0], [0], [1], [0, 0, 1, 1], [], []>} : vector<196x32xf32>, vector<32x196xf32>, vector<196x196xf32> -> vector<196x196xf32>
    %122 = arith.addf %121, %4 : vector<196x196xf32>
    %cst_64 = arith.constant dense<0xFF800000> : vector<196xf32>
    %123 = vector.multi_reduction <maximumf>, %122, %cst_64 [1] : vector<196x196xf32> to vector<196xf32>
    %124 = vector.shape_cast %123 : vector<196xf32> to vector<196x1xf32>
    %125 = vector.broadcast %124 : vector<196x1xf32> to vector<196x196xf32>
    %126 = arith.subf %122, %125 : vector<196x196xf32>
    %127 = math.exp %126 : vector<196x196xf32>
    %cst_65 = arith.constant dense<0.000000e+00> : vector<196xf32>
    %128 = vector.multi_reduction <add>, %127, %cst_65 [1] : vector<196x196xf32> to vector<196xf32>
    %129 = vector.shape_cast %128 : vector<196xf32> to vector<196x1xf32>
    %cst_66 = arith.constant dense<0.000000e+00> : vector<196x32xf32>
    %130 = tpu.matmul %127, %120, %cst_66 {dimension_numbers = #tpu.dot_dimension_numbers<[1], [0], [0], [1], [0, 0, 1, 1], [], []>} : vector<196x196xf32>, vector<196x32xf32>, vector<196x32xf32> -> vector<196x32xf32>
    %c0_67 = arith.constant 0 : index
    %c0_68 = arith.constant 0 : index
    %131 = vector.load %arg8[%c0_67, %c0_68] : memref<196x32xf32, #tpu.memory_space<vmem>>, vector<196x32xf32>
    %132 = tpu.reciprocal %129 : vector<196x1xf32> -> vector<196x1xf32>
    %133 = vector.broadcast %132 : vector<196x1xf32> to vector<196x32xf32>
    %134 = arith.mulf %130, %133 : vector<196x32xf32>
    %135 = arith.addf %131, %134 : vector<196x32xf32>
    %c0_69 = arith.constant 0 : index
    %c0_70 = arith.constant 0 : index
    %136 = vector.load %arg8[%c0_69, %c0_70] : memref<196x32xf32, #tpu.memory_space<vmem>>, vector<196x32xf32>
    tpu.vector_store %arg8[%c0_69, %c0_70], %135 {strides = array<i32>} : memref<196x32xf32, #tpu.memory_space<vmem>>, vector<196x32xf32>,
    %137 = vector.extract_strided_slice %6 {offsets = [0, 224], sizes = [196, 32], strides = [1, 1]} : vector<196x256xf32> to vector<196x32xf32>
    %138 = vector.extract_strided_slice %8 {offsets = [0, 224], sizes = [196, 32], strides = [1, 1]} : vector<196x256xf32> to vector<196x32xf32>
    %cst_71 = arith.constant dense<0.000000e+00> : vector<196x196xf32>
    %139 = tpu.matmul %137, %3, %cst_71 {dimension_numbers = #tpu.dot_dimension_numbers<[1], [0], [0], [1], [0, 0, 1, 1], [], []>} : vector<196x32xf32>, vector<32x196xf32>, vector<196x196xf32> -> vector<196x196xf32>
    %140 = arith.addf %139, %4 : vector<196x196xf32>
    %cst_72 = arith.constant dense<0xFF800000> : vector<196xf32>
    %141 = vector.multi_reduction <maximumf>, %140, %cst_72 [1] : vector<196x196xf32> to vector<196xf32>
    %142 = vector.shape_cast %141 : vector<196xf32> to vector<196x1xf32>
    %143 = vector.broadcast %142 : vector<196x1xf32> to vector<196x196xf32>
    %144 = arith.subf %140, %143 : vector<196x196xf32>
    %145 = math.exp %144 : vector<196x196xf32>
    %cst_73 = arith.constant dense<0.000000e+00> : vector<196xf32>
    %146 = vector.multi_reduction <add>, %145, %cst_73 [1] : vector<196x196xf32> to vector<196xf32>
    %147 = vector.shape_cast %146 : vector<196xf32> to vector<196x1xf32>
    %cst_74 = arith.constant dense<0.000000e+00> : vector<196x32xf32>
    %148 = tpu.matmul %145, %138, %cst_74 {dimension_numbers = #tpu.dot_dimension_numbers<[1], [0], [0], [1], [0, 0, 1, 1], [], []>} : vector<196x196xf32>, vector<196x32xf32>, vector<196x32xf32> -> vector<196x32xf32>
    %c0_75 = arith.constant 0 : index
    %c0_76 = arith.constant 0 : index
    %149 = vector.load %arg8[%c0_75, %c0_76] : memref<196x32xf32, #tpu.memory_space<vmem>>, vector<196x32xf32>
    %150 = tpu.reciprocal %147 : vector<196x1xf32> -> vector<196x1xf32>
    %151 = vector.broadcast %150 : vector<196x1xf32> to vector<196x32xf32>
    %152 = arith.mulf %148, %151 : vector<196x32xf32>
    %153 = arith.addf %149, %152 : vector<196x32xf32>
    %c0_77 = arith.constant 0 : index
    %c0_78 = arith.constant 0 : index
    %154 = vector.load %arg8[%c0_77, %c0_78] : memref<196x32xf32, #tpu.memory_space<vmem>>, vector<196x32xf32>
    tpu.vector_store %arg8[%c0_77, %c0_78], %153 {strides = array<i32>} : memref<196x32xf32, #tpu.memory_space<vmem>>, vector<196x32xf32>,
    %c0_79 = arith.constant 0 : index
    %c0_80 = arith.constant 0 : index
    %155 = vector.load %arg6[%c0_79, %c0_80] : memref<16x32xf32, #tpu.memory_space<vmem>>, vector<16x32xf32>
    %c0_81 = arith.constant 0 : index
    %c0_82 = arith.constant 0 : index
    %156 = vector.load %arg8[%c0_81, %c0_82] : memref<196x32xf32, #tpu.memory_space<vmem>>, vector<196x32xf32>
    %cst_83 = arith.constant dense<0.000000e+00> : vector<16x196xf32>
    %157 = tpu.matmul %155, %156, %cst_83 {dimension_numbers = #tpu.dot_dimension_numbers<[1], [1], [0], [0], [0, 0, 1, 0], [], []>} : vector<16x32xf32>, vector<196x32xf32>, vector<16x196xf32> -> vector<16x196xf32>
    %c0_84 = arith.constant 0 : index
    %c0_85 = arith.constant 0 : index
    %c0_86 = arith.constant 0 : index
    %158 = vector.load %arg7[%c0_84, %c0_85, %c0_86] : memref<1x16x196xf32, #tpu.memory_space<vmem>>, vector<1x16x196xf32>
    %159 = vector.shape_cast %158 : vector<1x16x196xf32> to vector<16x196xf32>
    %160 = vector.shape_cast %157 : vector<16x196xf32> to vector<1x16x196xf32>
    tpu.vector_store %arg7[%c0_84, %c0_85, %c0_86], %160 {strides = array<i32>} : memref<1x16x196xf32, #tpu.memory_space<vmem>>, vector<1x16x196xf32>,
    return
  }
  func.func @transform_0(%arg0: i32) -> (i32, i32, i32) {
    %c0_i32 = arith.constant 0 : i32
    %c0_i32_0 = arith.constant 0 : i32
    %c0_i32_1 = arith.constant 0 : i32
    return %arg0, %c0_i32, %c0_i32_0 : i32, i32, i32
  }
  func.func @transform_1(%arg0: i32) -> (i32, i32, i32) {
    %c0_i32 = arith.constant 0 : i32
    %c0_i32_0 = arith.constant 0 : i32
    %c0_i32_1 = arith.constant 0 : i32
    return %arg0, %c0_i32, %c0_i32_0 : i32, i32, i32
  }
  func.func @transform_2(%arg0: i32) -> (i32, i32) {
    %c0_i32 = arith.constant 0 : i32
    %c0_i32_0 = arith.constant 0 : i32
    %c0_i32_1 = arith.constant 0 : i32
    return %c0_i32, %c0_i32_0 : i32, i32
  }
  func.func @transform_3(%arg0: i32) -> (i32, i32) {
    %c0_i32 = arith.constant 0 : i32
    %c0_i32_0 = arith.constant 0 : i32
    %c0_i32_1 = arith.constant 0 : i32
    return %c0_i32, %c0_i32_0 : i32, i32
  }
  func.func @transform_4(%arg0: i32) -> (i32, i32) {
    %c0_i32 = arith.constant 0 : i32
    %c0_i32_0 = arith.constant 0 : i32
    %c0_i32_1 = arith.constant 0 : i32
    return %c0_i32, %c0_i32_0 : i32, i32
  }
  func.func @transform_5(%arg0: i32) -> (i32, i32) {
    %c0_i32 = arith.constant 0 : i32
    %c0_i32_0 = arith.constant 0 : i32
    %c0_i32_1 = arith.constant 0 : i32
    return %c0_i32, %c0_i32_0 : i32, i32
  }
  func.func @transform_6(%arg0: i32) -> (i32, i32, i32) {
    %c0_i32 = arith.constant 0 : i32
    %c0_i32_0 = arith.constant 0 : i32
    %c0_i32_1 = arith.constant 0 : i32
    return %arg0, %c0_i32, %c0_i32_0 : i32, i32, i32
  }
}

</mosaic_0001>

<llo_original>
// kernel: embed_forward.1
$region0: #{embed_forward.1}
  #allocation0 [shape = 'u32[]', space=smem, size = 0x4, offset = 0x4, fixed_abs, tag = 'smem constant byte address 0x4 - core index']
  #allocation1 [shape = 'u32[144,128]{1,0:T(1,128)}', space=vmem, size = 0x12000, scoped, tag = 'internal scratch']
  #allocation2 [shape = 'f32[196,32]{1,0:T(8,128)}', space=vmem, size = 0x19000, scoped, tag = 'scratch operand']
  %s0 = inlined_call_operand.vmem [shape: f32[2,196,32], index: 0, kind: input, shape index: {}]
  %s1 = inlined_call_operand.vmem [shape: f32[2,32,196], index: 1, kind: input, shape index: {}]
  %s2 = inlined_call_operand.vmem [shape: f32[196,196], index: 2, kind: input, shape index: {}]
  %s3 = inlined_call_operand.vmem [shape: f32[32,256], index: 3, kind: input, shape index: {}]
  %s4 = inlined_call_operand.vmem [shape: f32[32,256], index: 4, kind: input, shape index: {}]
  %s5 = inlined_call_operand.vmem [shape: f32[16,32], index: 5, kind: input, shape index: {}]
  %s6 = inlined_call_operand.vmem [shape: f32[2,16,196], index: 6, kind: output, shape index: {}]
  %s7 = sld [smem:[#allocation0]]
  $region57: #{embed_forward.1} parent=0
    _
  %s9 = ssub.s32 1, %s7
  %s10 = scalar_select 0, %s9, %s7
  loop: start=0, step=1, limit=4
  $region2: #{embed_forward.1} parent=0 // loop_pre_header
    _
  $region3: #{embed_forward.1} parent=0 // loop_header
    %s12 = sphi 0, %s16
    %p13 = scmp.ge.s32.totalorder %s12, 4
    %s22 = sphi 0, %s24
    %s25 = sphi 0, %s22
    %s26 = sphi 0, %s25
    %s42 = sphi 0, %s26
    %s48 = sphi 0, %s50
    %s51 = sphi 0, %s48
    %s52 = sphi 0, %s51
    %s68 = sphi 0, %s52
    %s72 = sphi 0, %s72
    %s74 = sphi 0, %s72
    %s75 = sphi 0, %s74
    %s89 = sphi 0, %s75
    %s93 = sphi 0, %s93
    %s95 = sphi 0, %s93
    %s96 = sphi 0, %s95
    %s110 = sphi 0, %s96
    %s114 = sphi 0, %s114
    %s116 = sphi 0, %s114
    %s117 = sphi 0, %s116
    %s131 = sphi 0, %s117
    %s135 = sphi 0, %s135
    %s137 = sphi 0, %s135
    %s138 = sphi 0, %s137
    %s152 = sphi 0, %s138
    %s158 = sphi 0, %s160
    %s161 = sphi 0, %s158
    %s162 = sphi 0, %s161
    %s178 = sphi 0, %s162
  $region4: #{embed_forward.1} parent=0 // loop_header_branch
    %15 = sbr.rel (%p13) target = $region8
  $region5: #{embed_forward.1} parent=0 // loop_body
    %s17 = ssub.s32 %s12, 1
    %s18 = ssub.s32 %s12, 2
    %s19 = sadd.s32 %s12, 1
    %s20 = ssub.s32 %s12, %s19
    %p21 = scmp.eq.s32.totalorder %s20, 0
    %s23 = sadd.s32 %s22, 1
    %s24 = scalar_select %p21, %s22, %s23
    %p27 = pneg %p21
    %p28 = scmp.eq.s32.totalorder %s12, 1
    %p29 = por %p27, %p28
    %p30 = scmp.ne.s32.totalorder %s22, %s25
    %p31 = scmp.eq.s32.totalorder %s12, 0
    %p32 = por %p30, %p31
    %p33 = scmp.ne.s32.totalorder %s22, %s25
    %p34 = scmp.eq.s32.totalorder %s17, 1
    %p35 = por %p33, %p34
    %p36 = scmp.ne.s32.totalorder %s25, %s26
    %p37 = scmp.eq.s32.totalorder %s17, 0
    %p38 = por %p36, %p37
    %p39 = scmp.ne.s32.totalorder %s25, %s26
    %p40 = scmp.eq.s32.totalorder %s18, 1
    %p41 = por %p39, %p40
    %p43 = scmp.ne.s32.totalorder %s26, %s42
    %p44 = scmp.eq.s32.totalorder %s18, 0
    %p45 = por %p43, %p44
    %s46 = ssub.s32 %s12, %s19
    %p47 = scmp.eq.s32.totalorder %s46, 0
    %s49 = sadd.s32 %s48, 1
    %s50 = scalar_select %p47, %s48, %s49
    %p53 = pneg %p47
    %p54 = scmp.eq.s32.totalorder %s12, 1
    %p55 = por %p53, %p54
    %p56 = scmp.ne.s32.totalorder %s48, %s51
    %p57 = scmp.eq.s32.totalorder %s12, 0
    %p58 = por %p56, %p57
    %p59 = scmp.ne.s32.totalorder %s48, %s51
    %p60 = scmp.eq.s32.totalorder %s17, 1
    %p61 = por %p59, %p60
    %p62 = scmp.ne.s32.totalorder %s51, %s52
    %p63 = scmp.eq.s32.totalorder %s17, 0
    %p64 = por %p62, %p63
    %p65 = scmp.ne.s32.totalorder %s51, %s52
    %p66 = scmp.eq.s32.totalorder %s18, 1
    %p67 = por %p65, %p66
    %p69 = scmp.ne.s32.totalorder %s52, %s68
    %p70 = scmp.eq.s32.totalorder %s18, 0
    %p71 = por %p69, %p70
    %s73 = sadd.s32 %s72, 1
    %p76 = scmp.eq.s32.totalorder %s12, 1
    %p77 = scmp.ne.s32.totalorder %s72, %s74
    %p78 = scmp.eq.s32.totalorder %s12, 0
    %p79 = por %p77, %p78
    %p80 = scmp.ne.s32.totalorder %s72, %s74
    %p81 = scmp.eq.s32.totalorder %s17, 1
    %p82 = por %p80, %p81
    %p83 = scmp.ne.s32.totalorder %s74, %s75
    %p84 = scmp.eq.s32.totalorder %s17, 0
    %p85 = por %p83, %p84
    %p86 = scmp.ne.s32.totalorder %s74, %s75
    %p87 = scmp.eq.s32.totalorder %s18, 1
    %p88 = por %p86, %p87
    %p90 = scmp.ne.s32.totalorder %s75, %s89
    %p91 = scmp.eq.s32.totalorder %s18, 0
    %p92 = por %p90, %p91
    %s94 = sadd.s32 %s93, 1
    %p97 = scmp.eq.s32.totalorder %s12, 1
    %p98 = scmp.ne.s32.totalorder %s93, %s95
    %p99 = scmp.eq.s32.totalorder %s12, 0
    %p100 = por %p98, %p99
    %p101 = scmp.ne.s32.totalorder %s93, %s95
    %p102 = scmp.eq.s32.totalorder %s17, 1
    %p103 = por %p101, %p102
    %p104 = scmp.ne.s32.totalorder %s95, %s96
    %p105 = scmp.eq.s32.totalorder %s17, 0
    %p106 = por %p104, %p105
    %p107 = scmp.ne.s32.totalorder %s95, %s96
    %p108 = scmp.eq.s32.totalorder %s18, 1
    %p109 = por %p107, %p108
    %p111 = scmp.ne.s32.totalorder %s96, %s110
    %p112 = scmp.eq.s32.totalorder %s18, 0
    %p113 = por %p111, %p112
    %s115 = sadd.s32 %s114, 1
    %p118 = scmp.eq.s32.totalorder %s12, 1
    %p119 = scmp.ne.s32.totalorder %s114, %s116
    %p120 = scmp.eq.s32.totalorder %s12, 0
    %p121 = por %p119, %p120
    %p122 = scmp.ne.s32.totalorder %s114, %s116
    %p123 = scmp.eq.s32.totalorder %s17, 1
    %p124 = por %p122, %p123
    %p125 = scmp.ne.s32.totalorder %s116, %s117
    %p126 = scmp.eq.s32.totalorder %s17, 0
    %p127 = por %p125, %p126
    %p128 = scmp.ne.s32.totalorder %s116, %s117
    %p129 = scmp.eq.s32.totalorder %s18, 1
    %p130 = por %p128, %p129
    %p132 = scmp.ne.s32.totalorder %s117, %s131
    %p133 = scmp.eq.s32.totalorder %s18, 0
    %p134 = por %p132, %p133
    %s136 = sadd.s32 %s135, 1
    %p139 = scmp.eq.s32.totalorder %s12, 1
    %p140 = scmp.ne.s32.totalorder %s135, %s137
    %p141 = scmp.eq.s32.totalorder %s12, 0
    %p142 = por %p140, %p141
    %p143 = scmp.ne.s32.totalorder %s135, %s137
    %p144 = scmp.eq.s32.totalorder %s17, 1
    %p145 = por %p143, %p144
    %p146 = scmp.ne.s32.totalorder %s137, %s138
    %p147 = scmp.eq.s32.totalorder %s17, 0
    %p148 = por %p146, %p147
    %p149 = scmp.ne.s32.totalorder %s137, %s138
    %p150 = scmp.eq.s32.totalorder %s18, 1
    %p151 = por %p149, %p150
    %p153 = scmp.ne.s32.totalorder %s138, %s152
    %p154 = scmp.eq.s32.totalorder %s18, 0
    %p155 = por %p153, %p154
    %s156 = ssub.s32 %s12, %s19
    %p157 = scmp.eq.s32.totalorder %s156, 0
    %s159 = sadd.s32 %s158, 1
    %s160 = scalar_select %p157, %s158, %s159
    %p163 = pneg %p157
    %p164 = scmp.eq.s32.totalorder %s12, 1
    %p165 = por %p163, %p164
    %p166 = scmp.ne.s32.totalorder %s158, %s161
    %p167 = scmp.eq.s32.totalorder %s12, 0
    %p168 = por %p166, %p167
    %p169 = scmp.ne.s32.totalorder %s158, %s161
    %p170 = scmp.eq.s32.totalorder %s17, 1
    %p171 = por %p169, %p170
    %p172 = scmp.ne.s32.totalorder %s161, %s162
    %p173 = scmp.eq.s32.totalorder %s17, 0
    %p174 = por %p172, %p173
    %p175 = scmp.ne.s32.totalorder %s161, %s162
    %p176 = scmp.eq.s32.totalorder %s18, 1
    %p177 = por %p175, %p176
    %p179 = scmp.ne.s32.totalorder %s162, %s178
    %p180 = scmp.eq.s32.totalorder %s18, 0
    %p181 = por %p179, %p180
    %p182 = scmp.le.s32.totalorder 1, %s12
    %p183 = scmp.lt.s32.totalorder %s12, 3
    %p184 = pnand %p182, %p183
    %p185 = pneg %p184
    // Predicated region
    $region9: #{embed_forward.1} parent=5 // pred_check
      _
    $region10: #{embed_forward.1} parent=5 // pred_check_branch
      %187 = sbr.rel (%p184) target = $region12
    $region11: #{embed_forward.1} parent=5 // pred_region
      %s188 = ssub.s32 %s12, 1
      // Predicated region
      $region13: #{embed_forward.1} parent=11 // pred_check
        %p189 = pneg %p85
      $region14: #{embed_forward.1} parent=11 // pred_check_branch
        %191 = sbr.rel (%p189) target = $region16
      $region15: #{embed_forward.1} parent=11 // pred_region
        _
      $region16: #{embed_forward.1} parent=11 // pred_fallthru
        _
      // Predicated region
      $region17: #{embed_forward.1} parent=11 // pred_check
        %p192 = pneg %p106
      $region18: #{embed_forward.1} parent=11 // pred_check_branch
        %194 = sbr.rel (%p192) target = $region20
      $region19: #{embed_forward.1} parent=11 // pred_region
        _
      $region20: #{embed_forward.1} parent=11 // pred_fallthru
        _
      // Predicated region
      $region21: #{embed_forward.1} parent=11 // pred_check
        %p195 = pneg %p127
      $region22: #{embed_forward.1} parent=11 // pred_check_branch
        %197 = sbr.rel (%p195) target = $region24
      $region23: #{embed_forward.1} parent=11 // pred_region
        _
      $region24: #{embed_forward.1} parent=11 // pred_fallthru
        _
      // Predicated region
      $region25: #{embed_forward.1} parent=11 // pred_check
        %p198 = pneg %p148
      $region26: #{embed_forward.1} parent=11 // pred_check_branch
        %200 = sbr.rel (%p198) target = $region28
      $region27: #{embed_forward.1} parent=11 // pred_region
        _
      $region28: #{embed_forward.1} parent=11 // pred_fallthru
        _
    $region12: #{embed_forward.1} parent=5 // pred_fallthru
      _
    %p201 = scmp.lt.s32.totalorder %s12, 2
    // Predicated region
    $region29: #{embed_forward.1} parent=5 // pred_check
      %p202 = pneg %p201
    $region30: #{embed_forward.1} parent=5 // pred_check_branch
      %204 = sbr.rel (%p202) target = $region32
    $region31: #{embed_forward.1} parent=5 // pred_region
      // Predicated region
      $region33: #{embed_forward.1} parent=31 // pred_check
        %p205 = pneg %p32
      $region34: #{embed_forward.1} parent=31 // pred_check_branch
        %207 = sbr.rel (%p205) target = $region36
      $region35: #{embed_forward.1} parent=31 // pred_region
        %p208 = scmp.lt.s32.totalorder %s12, 1
        %s209 = scalar_select %p208, %s12, 1
        %s210 = smul.addr %s209, 25
        %s211 = smul.addr %s210, 8
        %s212 = scalar_lea.vmem %s0, %s211
      $region36: #{embed_forward.1} parent=31 // pred_fallthru
        _
      // Predicated region
      $region37: #{embed_forward.1} parent=31 // pred_check
        %p213 = pneg %p58
      $region38: #{embed_forward.1} parent=31 // pred_check_branch
        %215 = sbr.rel (%p213) target = $region40
      $region39: #{embed_forward.1} parent=31 // pred_region
        %p216 = scmp.lt.s32.totalorder %s12, 1
        %s217 = scalar_select %p216, %s12, 1
        %s218 = smul.addr %s217, 8
        %s219 = smul.addr %s218, 8
        %s220 = scalar_lea.vmem %s1, %s219
      $region40: #{embed_forward.1} parent=31 // pred_fallthru
        _
    $region32: #{embed_forward.1} parent=5 // pred_fallthru
      _
    %p221 = scmp.le.s32.totalorder 1, %s12
    %p222 = scmp.lt.s32.totalorder %s12, 3
    %p223 = pnand %p221, %p222
    %p224 = pneg %p223
    // Predicated region
    $region41: #{embed_forward.1} parent=5 // pred_check
      _
    $region42: #{embed_forward.1} parent=5 // pred_check_branch
      %226 = sbr.rel (%p223) target = $region44
    $region43: #{embed_forward.1} parent=5 // pred_region
      %s227 = ssub.s32 %s12, 1
      %p228 = scmp.lt.s32.totalorder %s17, 1
      %s229 = scalar_select %p228, %s17, 1
      %s230 = smul.addr %s229, 25
      %s231 = smul.addr %s230, 8
      %s232 = scalar_lea.vmem %s0, %s231
      %p233 = pneg %p38
      %p234 = pneg %p35
      %p235 = scmp.lt.s32.totalorder %s17, 1
      %s236 = scalar_select %p235, %s17, 1
      %s237 = smul.addr %s236, 8
      %s238 = smul.addr %s237, 8
      %s239 = scalar_lea.vmem %s1, %s238
      %p240 = pneg %p64
      %p241 = pneg %p61
      %p242 = pneg %p85
      %p243 = pneg %p82
      %p244 = pneg %p106
      %p245 = pneg %p103
      %p246 = pneg %p127
      %p247 = pneg %p124
      %p248 = pneg %p148
      %p249 = pneg %p145
      %p250 = pneg %p174
      %p251 = pneg %p171
      %p252 = scmp.lt.s32.totalorder %s17, 1
      %s253 = scalar_select %p252, %s17, 1
      %s254 = smul.addr %s253, 4
      %s255 = smul.addr %s254, 8
      %s256 = scalar_lea.vmem %s6, %s255
      %p257 = scmp.lt.s32.totalorder %s17, 1
      %s258 = scalar_select %p257, %s17, 1
      %s259 = smul.addr %s258, 25
      %s260 = smul.addr %s259, 8
      %s261 = scalar_lea.vmem %s0, %s260
      %p262 = scmp.lt.s32.totalorder %s17, 1
      %s263 = scalar_select %p262, %s17, 1
      %s264 = smul.addr %s263, 8
      %s265 = smul.addr %s264, 8
      %s266 = scalar_lea.vmem %s1, %s265
      %p267 = scmp.lt.s32.totalorder %s17, 1
      %s268 = scalar_select %p267, %s17, 1
      %s269 = smul.addr %s268, 4
      %s270 = smul.addr %s269, 8
      %s271 = scalar_lea.vmem %s6, %s270
      %v272 = vld [vmem:[%s261] sm:$0xff]
      %v273 = vld [vmem:[%s261 + $0x8] sm:$0xff]
      %v274 = vld [vmem:[%s261 + $0x10] sm:$0xff]
      %v275 = vld [vmem:[%s261 + $0x18] sm:$0xff]
      %v276 = vld [vmem:[%s261 + $0x20] sm:$0xff]
      %v277 = vld [vmem:[%s261 + $0x28] sm:$0xff]
      %v278 = vld [vmem:[%s261 + $0x30] sm:$0xff]
      %v279 = vld [vmem:[%s261 + $0x38] sm:$0xff]
      %v280 = vld [vmem:[%s261 + $0x40] sm:$0xff]
      %v281 = vld [vmem:[%s261 + $0x48] sm:$0xff]
      %v282 = vld [vmem:[%s261 + $0x50] sm:$0xff]
      %v283 = vld [vmem:[%s261 + $0x58] sm:$0xff]
      %v284 = vld [vmem:[%s261 + $0x60] sm:$0xff]
      %v285 = vld [vmem:[%s261 + $0x68] sm:$0xff]
      %v286 = vld [vmem:[%s261 + $0x70] sm:$0xff]
      %v287 = vld [vmem:[%s261 + $0x78] sm:$0xff]
      %v288 = vld [vmem:[%s261 + $0x80] sm:$0xff]
      %v289 = vld [vmem:[%s261 + $0x88] sm:$0xff]
      %v290 = vld [vmem:[%s261 + $0x90] sm:$0xff]
      %v291 = vld [vmem:[%s261 + $0x98] sm:$0xff]
      %v292 = vld [vmem:[%s261 + $0xa0] sm:$0xff]
      %v293 = vld [vmem:[%s261 + $0xa8] sm:$0xff]
      %v294 = vld [vmem:[%s261 + $0xb0] sm:$0xff]
      %v295 = vld [vmem:[%s261 + $0xb8] sm:$0xff]
      %v296 = vld [vmem:[%s261 + $0xc0] sm:$0xf]
      %v297 = vld [vmem:[%s266] sm:$0xff]
      %v298 = vld [vmem:[%s266 + $0x8] sm:$0xff]
      %v299 = vld [vmem:[%s266 + $0x10] sm:$0xff]
      %v300 = vld [vmem:[%s266 + $0x18] sm:$0xff]
      %v301 = vld [vmem:[%s266 + $0x20] sm:$0xff]
      %v302 = vld [vmem:[%s266 + $0x28] sm:$0xff]
      %v303 = vld [vmem:[%s266 + $0x30] sm:$0xff]
      %v304 = vld [vmem:[%s266 + $0x38] sm:$0xff]
      %v305 = vld [vmem:[%s2] sm:$0xff]
      %v306 = vld [vmem:[%s2 + $0x8] sm:$0xff]
      %v307 = vld [vmem:[%s2 + $0x10] sm:$0xff]
      %v308 = vld [vmem:[%s2 + $0x18] sm:$0xff]
      %v309 = vld [vmem:[%s2 + $0x20] sm:$0xff]
      %v310 = vld [vmem:[%s2 + $0x28] sm:$0xff]
      %v311 = vld [vmem:[%s2 + $0x30] sm:$0xff]
      %v312 = vld [vmem:[%s2 + $0x38] sm:$0xff]
      %v313 = vld [vmem:[%s2 + $0x40] sm:$0xff]
      %v314 = vld [vmem:[%s2 + $0x48] sm:$0xff]
      %v315 = vld [vmem:[%s2 + $0x50] sm:$0xff]
      %v316 = vld [vmem:[%s2 + $0x58] sm:$0xff]
      %v317 = vld [vmem:[%s2 + $0x60] sm:$0xff]
      %v318 = vld [vmem:[%s2 + $0x68] sm:$0xff]
      %v319 = vld [vmem:[%s2 + $0x70] sm:$0xff]
      %v320 = vld [vmem:[%s2 + $0x78] sm:$0xff]
      %v321 = vld [vmem:[%s2 + $0x80] sm:$0xff]
      %v322 = vld [vmem:[%s2 + $0x88] sm:$0xff]
      %v323 = vld [vmem:[%s2 + $0x90] sm:$0xff]
      %v324 = vld [vmem:[%s2 + $0x98] sm:$0xff]
      %v325 = vld [vmem:[%s2 + $0xa0] sm:$0xff]
      %v326 = vld [vmem:[%s2 + $0xa8] sm:$0xff]
      %v327 = vld [vmem:[%s2 + $0xb0] sm:$0xff]
      %v328 = vld [vmem:[%s2 + $0xb8] sm:$0xff]
      %v329 = vld [vmem:[%s2 + $0xc0] sm:$0xff]
      %v330 = vld [vmem:[%s2 + $0xc8] sm:$0xff]
      %v331 = vld [vmem:[%s2 + $0xd0] sm:$0xff]
      %v332 = vld [vmem:[%s2 + $0xd8] sm:$0xff]
      %v333 = vld [vmem:[%s2 + $0xe0] sm:$0xff]
      %v334 = vld [vmem:[%s2 + $0xe8] sm:$0xff]
      %v335 = vld [vmem:[%s2 + $0xf0] sm:$0xff]
      %v336 = vld [vmem:[%s2 + $0xf8] sm:$0xff]
      %v337 = vld [vmem:[%s2 + $0x100] sm:$0xff]
      %v338 = vld [vmem:[%s2 + $0x108] sm:$0xff]
      %v339 = vld [vmem:[%s2 + $0x110] sm:$0xff]
      %v340 = vld [vmem:[%s2 + $0x118] sm:$0xff]
      %v341 = vld [vmem:[%s2 + $0x120] sm:$0xff]
      %v342 = vld [vmem:[%s2 + $0x128] sm:$0xff]
      %v343 = vld [vmem:[%s2 + $0x130] sm:$0xff]
      %v344 = vld [vmem:[%s2 + $0x138] sm:$0xff]
      %v345 = vld [vmem:[%s2 + $0x140] sm:$0xff]
      %v346 = vld [vmem:[%s2 + $0x148] sm:$0xff]
      %v347 = vld [vmem:[%s2 + $0x150] sm:$0xff]
      %v348 = vld [vmem:[%s2 + $0x158] sm:$0xff]
      %v349 = vld [vmem:[%s2 + $0x160] sm:$0xff]
      %v350 = vld [vmem:[%s2 + $0x168] sm:$0xff]
      %v351 = vld [vmem:[%s2 + $0x170] sm:$0xff]
      %v352 = vld [vmem:[%s2 + $0x178] sm:$0xff]
      %v353 = vld [vmem:[%s2 + $0x180] sm:$0xf]
      %v354 = vld [vmem:[%s2 + $0x188] sm:$0xf]
      %v355 = vld [vmem:[%s3] sm:$0xff]
      %v356 = vld [vmem:[%s3 + $0x8] sm:$0xff]
      %v357 = vld [vmem:[%s3 + $0x10] sm:$0xff]
      %v358 = vld [vmem:[%s3 + $0x18] sm:$0xff]
      %v359 = vld [vmem:[%s3 + $0x20] sm:$0xff]
      %v360 = vld [vmem:[%s3 + $0x28] sm:$0xff]
      %v361 = vld [vmem:[%s3 + $0x30] sm:$0xff]
      %v362 = vld [vmem:[%s3 + $0x38] sm:$0xff]
      %vm363 = vcmask 261120
      %v365 = vsel %vm363, %v272, 0
      %v368 = vsel %vm363, %v273, 0
      %v371 = vsel %vm363, %v274, 0
      %v374 = vsel %vm363, %v275, 0
      %v377 = vsel %vm363, %v276, 0
      %v380 = vsel %vm363, %v277, 0
      %v383 = vsel %vm363, %v278, 0
      %v386 = vsel %vm363, %v279, 0
      %v389 = vsel %vm363, %v280, 0
      %v392 = vsel %vm363, %v281, 0
      %v395 = vsel %vm363, %v282, 0
      %v398 = vsel %vm363, %v283, 0
      %v401 = vsel %vm363, %v284, 0
      %v404 = vsel %vm363, %v285, 0
      %v407 = vsel %vm363, %v286, 0
      %v410 = vsel %vm363, %v287, 0
      %v413 = vsel %vm363, %v288, 0
      %v416 = vsel %vm363, %v289, 0
      %v419 = vsel %vm363, %v290, 0
      %v422 = vsel %vm363, %v291, 0
      %v425 = vsel %vm363, %v292, 0
      %v428 = vsel %vm363, %v293, 0
      %v431 = vsel %vm363, %v294, 0
      %v434 = vsel %vm363, %v295, 0
      %v437 = vsel %vm363, %v296, 0
      %439 = vmatprep.subr.mxu0 0.0
      %440 = vmatpush1.msra.mxu0 0.0
      %441 = vmatprep.subr.mxu0 0.0
      %442 = vmatpush1.msra.mxu0 0.0
      %443 = vmatprep.subr.mxu0 0.0
      %444 = vmatpush1.msra.mxu0 0.0
      %445 = vmatprep.subr.mxu0 0.0
      %446 = vmatpush1.msra.mxu0 0.0
      %447 = vmatprep.subr.mxu0 0.0
      %448 = vmatpush1.msra.mxu0 0.0
      %449 = vmatprep.subr.mxu0 0.0
      %450 = vmatpush1.msra.mxu0 0.0
      %451 = vmatprep.subr.mxu0 0.0
      %452 = vmatpush1.msra.mxu0 0.0
      %453 = vmatprep.subr.mxu0 0.0
      %454 = vmatpush1.msra.mxu0 0.0
      %455 = vmatprep.subr.mxu0 0.0
      %456 = vmatpush1.msra.mxu0 0.0
      %457 = vmatprep.subr.mxu0 0.0
      %458 = vmatpush1.msra.mxu0 0.0
      %459 = vmatprep.subr.mxu0 0.0
      %460 = vmatpush1.msra.mxu0 0.0
      %461 = vmatprep.subr.mxu0 0.0
      %462 = vmatpush1.msra.mxu0 0.0
      %463 = vmatprep.subr.mxu0 %v362
      %464 = vmatpush1.msra.mxu0 %v361
      %465 = vmatprep.subr.mxu0 %v360
      %466 = vmatpush1.msra.mxu0 %v359
      %467 = vmatprep.subr.mxu0 %v358
      %468 = vmatpush1.msra.mxu0 %v357
      %469 = vmatprep.subr.mxu0 %v356
      %470 = vmatpush1.msra.mxu0 %v355
      %471 = vmatprep.subr.mxu0 0.0
      %472 = vmatpush2.msra.mxu0 0.0
      %473 = vmatprep.subr.mxu0 0.0
      %474 = vmatpush2.msra.mxu0 0.0
      %475 = vmatprep.subr.mxu0 0.0
      %476 = vmatpush2.msra.mxu0 0.0
      %477 = vmatprep.subr.mxu0 0.0
      %478 = vmatpush2.msra.mxu0 0.0
      %479 = vmatprep.subr.mxu0 0.0
      %480 = vmatpush2.msra.mxu0 0.0
      %481 = vmatprep.subr.mxu0 0.0
      %482 = vmatpush2.msra.mxu0 0.0
      %483 = vmatprep.subr.mxu0 0.0
      %484 = vmatpush2.msra.mxu0 0.0
      %485 = vmatprep.subr.mxu0 0.0
      %486 = vmatpush2.msra.mxu0 0.0
      %487 = vmatprep.subr.mxu0 0.0
      %488 = vmatpush2.msra.mxu0 0.0
      %489 = vmatprep.subr.mxu0 0.0
      %490 = vmatpush2.msra.mxu0 0.0
      %491 = vmatprep.subr.mxu0 0.0
      %492 = vmatpush2.msra.mxu0 0.0
      %493 = vmatprep.subr.mxu0 0.0
      %494 = vmatpush2.msra.mxu0 0.0
      %495 = vmatprep.subr.mxu0 0.0
      %496 = vmatpush2.msra.mxu0 0.0
      %497 = vmatprep.subr.mxu0 0.0
      %498 = vmatpush2.msra.mxu0 0.0
      %499 = vmatprep.subr.mxu0 0.0
      %500 = vmatpush2.msra.mxu0 0.0
      %501 = vmatprep.subr.mxu0 0.0
      %502 = vmatpush2.msra.mxu0 0.0
      %503 = vmatprep.mubr.f32.mxu0 0.0
      %504 = vmatmul.mubr.f32.gmra.mxu0 %v365
      %v505 = vpop.f32.mrf.mxu0
      %v506 = vadd.f32 0.0, %v505
      %v507 = vpop.f32.mrf.mxu0
      %v508 = vadd.f32 0.0, %v507
      %509 = vmatprep.mubr.f32.mxu0 0.0
      %510 = vmatmul.mubr.f32.gmra.mxu0 %v368
      %v511 = vpop.f32.mrf.mxu0
      %v512 = vadd.f32 0.0, %v511
      %v513 = vpop.f32.mrf.mxu0
      %v514 = vadd.f32 0.0, %v513
      %515 = vmatprep.mubr.f32.mxu0 0.0
      %516 = vmatmul.mubr.f32.gmra.mxu0 %v371
      %v517 = vpop.f32.mrf.mxu0
      %v518 = vadd.f32 0.0, %v517
      %v519 = vpop.f32.mrf.mxu0
      %v520 = vadd.f32 0.0, %v519
      %521 = vmatprep.mubr.f32.mxu0 0.0
      %522 = vmatmul.mubr.f32.gmra.mxu0 %v374
      %v523 = vpop.f32.mrf.mxu0
      %v524 = vadd.f32 0.0, %v523
      %v525 = vpop.f32.mrf.mxu0
      %v526 = vadd.f32 0.0, %v525
      %527 = vmatprep.mubr.f32.mxu0 0.0
      %528 = vmatmul.mubr.f32.gmra.mxu0 %v377
      %v529 = vpop.f32.mrf.mxu0
      %v530 = vadd.f32 0.0, %v529
      %v531 = vpop.f32.mrf.mxu0
      %v532 = vadd.f32 0.0, %v531
      %533 = vmatprep.mubr.f32.mxu0 0.0
      %534 = vmatmul.mubr.f32.gmra.mxu0 %v380
      %v535 = vpop.f32.mrf.mxu0
      %v536 = vadd.f32 0.0, %v535
      %v537 = vpop.f32.mrf.mxu0
      %v538 = vadd.f32 0.0, %v537
      %539 = vmatprep.mubr.f32.mxu0 0.0
      %540 = vmatmul.mubr.f32.gmra.mxu0 %v383
      %v541 = vpop.f32.mrf.mxu0
      %v542 = vadd.f32 0.0, %v541
      %v543 = vpop.f32.mrf.mxu0
      %v544 = vadd.f32 0.0, %v543
      %545 = vmatprep.mubr.f32.mxu0 0.0
      %546 = vmatmul.mubr.f32.gmra.mxu0 %v386
      %v547 = vpop.f32.mrf.mxu0
      %v548 = vadd.f32 0.0, %v547
      %v549 = vpop.f32.mrf.mxu0
      %v550 = vadd.f32 0.0, %v549
      %551 = vmatprep.mubr.f32.mxu0 0.0
      %552 = vmatmul.mubr.f32.gmra.mxu0 %v389
      %v553 = vpop.f32.mrf.mxu0
      %v554 = vadd.f32 0.0, %v553
      %v555 = vpop.f32.mrf.mxu0
      %v556 = vadd.f32 0.0, %v555
      %557 = vmatprep.mubr.f32.mxu0 0.0
      %558 = vmatmul.mubr.f32.gmra.mxu0 %v392
      %v559 = vpop.f32.mrf.mxu0
      %v560 = vadd.f32 0.0, %v559
      %v561 = vpop.f32.mrf.mxu0
      %v562 = vadd.f32 0.0, %v561
      %563 = vmatprep.mubr.f32.mxu0 0.0
      %564 = vmatmul.mubr.f32.gmra.mxu0 %v395
      %v565 = vpop.f32.mrf.mxu0
      %v566 = vadd.f32 0.0, %v565
      %v567 = vpop.f32.mrf.mxu0
      %v568 = vadd.f32 0.0, %v567
      %569 = vmatprep.mubr.f32.mxu0 0.0
      %570 = vmatmul.mubr.f32.gmra.mxu0 %v398
      %v571 = vpop.f32.mrf.mxu0
      %v572 = vadd.f32 0.0, %v571
      %v573 = vpop.f32.mrf.mxu0
      %v574 = vadd.f32 0.0, %v573
      %575 = vmatprep.mubr.f32.mxu0 0.0
      %576 = vmatmul.mubr.f32.gmra.mxu0 %v401
      %v577 = vpop.f32.mrf.mxu0
      %v578 = vadd.f32 0.0, %v577
      %v579 = vpop.f32.mrf.mxu0
      %v580 = vadd.f32 0.0, %v579
      %581 = vmatprep.mubr.f32.mxu0 0.0
      %582 = vmatmul.mubr.f32.gmra.mxu0 %v404
      %v583 = vpop.f32.mrf.mxu0
      %v584 = vadd.f32 0.0, %v583
      %v585 = vpop.f32.mrf.mxu0
      %v586 = vadd.f32 0.0, %v585
      %587 = vmatprep.mubr.f32.mxu0 0.0
      %588 = vmatmul.mubr.f32.gmra.mxu0 %v407
      %v589 = vpop.f32.mrf.mxu0
      %v590 = vadd.f32 0.0, %v589
      %v591 = vpop.f32.mrf.mxu0
      %v592 = vadd.f32 0.0, %v591
      %593 = vmatprep.mubr.f32.mxu0 0.0
      %594 = vmatmul.mubr.f32.gmra.mxu0 %v410
      %v595 = vpop.f32.mrf.mxu0
      %v596 = vadd.f32 0.0, %v595
      %v597 = vpop.f32.mrf.mxu0
      %v598 = vadd.f32 0.0, %v597
      %599 = vmatprep.mubr.f32.mxu0 0.0
      %600 = vmatmul.mubr.f32.gmra.mxu0 %v413
      %v601 = vpop.f32.mrf.mxu0
      %v602 = vadd.f32 0.0, %v601
      %v603 = vpop.f32.mrf.mxu0
      %v604 = vadd.f32 0.0, %v603
      %605 = vmatprep.mubr.f32.mxu0 0.0
      %606 = vmatmul.mubr.f32.gmra.mxu0 %v416
      %v607 = vpop.f32.mrf.mxu0
      %v608 = vadd.f32 0.0, %v607
      %v609 = vpop.f32.mrf.mxu0
      %v610 = vadd.f32 0.0, %v609
      %611 = vmatprep.mubr.f32.mxu0 0.0
      %612 = vmatmul.mubr.f32.gmra.mxu0 %v419
      %v613 = vpop.f32.mrf.mxu0
      %v614 = vadd.f32 0.0, %v613
      %v615 = vpop.f32.mrf.mxu0
      %v616 = vadd.f32 0.0, %v615
      %617 = vmatprep.mubr.f32.mxu0 0.0
      %618 = vmatmul.mubr.f32.gmra.mxu0 %v422
      %v619 = vpop.f32.mrf.mxu0
      %v620 = vadd.f32 0.0, %v619
      %v621 = vpop.f32.mrf.mxu0
      %v622 = vadd.f32 0.0, %v621
      %623 = vmatprep.mubr.f32.mxu0 0.0
      %624 = vmatmul.mubr.f32.gmra.mxu0 %v425
      %v625 = vpop.f32.mrf.mxu0
      %v626 = vadd.f32 0.0, %v625
      %v627 = vpop.f32.mrf.mxu0
      %v628 = vadd.f32 0.0, %v627
      %629 = vmatprep.mubr.f32.mxu0 0.0
      %630 = vmatmul.mubr.f32.gmra.mxu0 %v428
      %v631 = vpop.f32.mrf.mxu0
      %v632 = vadd.f32 0.0, %v631
      %v633 = vpop.f32.mrf.mxu0
      %v634 = vadd.f32 0.0, %v633
      %635 = vmatprep.mubr.f32.mxu0 0.0
      %636 = vmatmul.mubr.f32.gmra.mxu0 %v431
      %v637 = vpop.f32.mrf.mxu0
      %v638 = vadd.f32 0.0, %v637
      %v639 = vpop.f32.mrf.mxu0
      %v640 = vadd.f32 0.0, %v639
      %641 = vmatprep.mubr.f32.mxu0 0.0
      %642 = vmatmul.mubr.f32.gmra.mxu0 %v434
      %v643 = vpop.f32.mrf.mxu0
      %v644 = vadd.f32 0.0, %v643
      %v645 = vpop.f32.mrf.mxu0
      %v646 = vadd.f32 0.0, %v645
      %647 = vmatprep.mubr.f32.mxu0 0.0
      %648 = vmatmul.mubr.f32.gmra.mxu0 %v437
      %v649 = vpop.f32.mrf.mxu0
      %v650 = vadd.f32 0.0, %v649
      %v651 = vpop.f32.mrf.mxu0
      %v652 = vadd.f32 0.0, %v651
      %653 = vdwg.mxu0
      %v654 = vld [vmem:[%s4] sm:$0xff]
      %v655 = vld [vmem:[%s4 + $0x8] sm:$0xff]
      %v656 = vld [vmem:[%s4 + $0x10] sm:$0xff]
      %v657 = vld [vmem:[%s4 + $0x18] sm:$0xff]
      %v658 = vld [vmem:[%s4 + $0x20] sm:$0xff]
      %v659 = vld [vmem:[%s4 + $0x28] sm:$0xff]
      %v660 = vld [vmem:[%s4 + $0x30] sm:$0xff]
      %v661 = vld [vmem:[%s4 + $0x38] sm:$0xff]
      %662 = vmatprep.subr.mxu0 0.0
      %663 = vmatpush1.msra.mxu0 0.0
      %664 = vmatprep.subr.mxu0 0.0
      %665 = vmatpush1.msra.mxu0 0.0
      %666 = vmatprep.subr.mxu0 0.0
      %667 = vmatpush1.msra.mxu0 0.0
      %668 = vmatprep.subr.mxu0 0.0
      %669 = vmatpush1.msra.mxu0 0.0
      %670 = vmatprep.subr.mxu0 0.0
      %671 = vmatpush1.msra.mxu0 0.0
      %672 = vmatprep.subr.mxu0 0.0
      %673 = vmatpush1.msra.mxu0 0.0
      %674 = vmatprep.subr.mxu0 0.0
      %675 = vmatpush1.msra.mxu0 0.0
      %676 = vmatprep.subr.mxu0 0.0
      %677 = vmatpush1.msra.mxu0 0.0
      %678 = vmatprep.subr.mxu0 0.0
      %679 = vmatpush1.msra.mxu0 0.0
      %680 = vmatprep.subr.mxu0 0.0
      %681 = vmatpush1.msra.mxu0 0.0
      %682 = vmatprep.subr.mxu0 0.0
      %683 = vmatpush1.msra.mxu0 0.0
      %684 = vmatprep.subr.mxu0 0.0
      %685 = vmatpush1.msra.mxu0 0.0
      %686 = vmatprep.subr.mxu0 %v661
      %687 = vmatpush1.msra.mxu0 %v660
      %688 = vmatprep.subr.mxu0 %v659
      %689 = vmatpush1.msra.mxu0 %v658
      %690 = vmatprep.subr.mxu0 %v657
      %691 = vmatpush1.msra.mxu0 %v656
      %692 = vmatprep.subr.mxu0 %v655
      %693 = vmatpush1.msra.mxu0 %v654
      %694 = vmatprep.subr.mxu0 0.0
      %695 = vmatpush2.msra.mxu0 0.0
      %696 = vmatprep.subr.mxu0 0.0
      %697 = vmatpush2.msra.mxu0 0.0
      %698 = vmatprep.subr.mxu0 0.0
      %699 = vmatpush2.msra.mxu0 0.0
      %700 = vmatprep.subr.mxu0 0.0
      %701 = vmatpush2.msra.mxu0 0.0
      %702 = vmatprep.subr.mxu0 0.0
      %703 = vmatpush2.msra.mxu0 0.0
      %704 = vmatprep.subr.mxu0 0.0
      %705 = vmatpush2.msra.mxu0 0.0
      %706 = vmatprep.subr.mxu0 0.0
      %707 = vmatpush2.msra.mxu0 0.0
      %708 = vmatprep.subr.mxu0 0.0
      %709 = vmatpush2.msra.mxu0 0.0
      %710 = vmatprep.subr.mxu0 0.0
      %711 = vmatpush2.msra.mxu0 0.0
      %712 = vmatprep.subr.mxu0 0.0
      %713 = vmatpush2.msra.mxu0 0.0
      %714 = vmatprep.subr.mxu0 0.0
      %715 = vmatpush2.msra.mxu0 0.0
      %716 = vmatprep.subr.mxu0 0.0
      %717 = vmatpush2.msra.mxu0 0.0
      %718 = vmatprep.subr.mxu0 0.0
      %719 = vmatpush2.msra.mxu0 0.0
      %720 = vmatprep.subr.mxu0 0.0
      %721 = vmatpush2.msra.mxu0 0.0
      %722 = vmatprep.subr.mxu0 0.0
      %723 = vmatpush2.msra.mxu0 0.0
      %724 = vmatprep.subr.mxu0 0.0
      %725 = vmatpush2.msra.mxu0 0.0
      %726 = vmatprep.mubr.f32.mxu0 0.0
      %727 = vmatmul.mubr.f32.gmra.mxu0 %v365
      %v728 = vpop.f32.mrf.mxu0
      %v729 = vadd.f32 0.0, %v728
      %v730 = vpop.f32.mrf.mxu0
      %v731 = vadd.f32 0.0, %v730
      %732 = vmatprep.mubr.f32.mxu0 0.0
      %733 = vmatmul.mubr.f32.gmra.mxu0 %v368
      %v734 = vpop.f32.mrf.mxu0
      %v735 = vadd.f32 0.0, %v734
      %v736 = vpop.f32.mrf.mxu0
      %v737 = vadd.f32 0.0, %v736
      %738 = vmatprep.mubr.f32.mxu0 0.0
      %739 = vmatmul.mubr.f32.gmra.mxu0 %v371
      %v740 = vpop.f32.mrf.mxu0
      %v741 = vadd.f32 0.0, %v740
      %v742 = vpop.f32.mrf.mxu0
      %v743 = vadd.f32 0.0, %v742
      %744 = vmatprep.mubr.f32.mxu0 0.0
      %745 = vmatmul.mubr.f32.gmra.mxu0 %v374
      %v746 = vpop.f32.mrf.mxu0
      %v747 = vadd.f32 0.0, %v746
      %v748 = vpop.f32.mrf.mxu0
      %v749 = vadd.f32 0.0, %v748
      %750 = vmatprep.mubr.f32.mxu0 0.0
      %751 = vmatmul.mubr.f32.gmra.mxu0 %v377
      %v752 = vpop.f32.mrf.mxu0
      %v753 = vadd.f32 0.0, %v752
      %v754 = vpop.f32.mrf.mxu0
      %v755 = vadd.f32 0.0, %v754
      %756 = vmatprep.mubr.f32.mxu0 0.0
      %757 = vmatmul.mubr.f32.gmra.mxu0 %v380
      %v758 = vpop.f32.mrf.mxu0
      %v759 = vadd.f32 0.0, %v758
      %v760 = vpop.f32.mrf.mxu0
      %v761 = vadd.f32 0.0, %v760
      %762 = vmatprep.mubr.f32.mxu0 0.0
      %763 = vmatmul.mubr.f32.gmra.mxu0 %v383
      %v764 = vpop.f32.mrf.mxu0
      %v765 = vadd.f32 0.0, %v764
      %v766 = vpop.f32.mrf.mxu0
      %v767 = vadd.f32 0.0, %v766
      %768 = vmatprep.mubr.f32.mxu0 0.0
      %769 = vmatmul.mubr.f32.gmra.mxu0 %v386
      %v770 = vpop.f32.mrf.mxu0
      %v771 = vadd.f32 0.0, %v770
      %v772 = vpop.f32.mrf.mxu0
      %v773 = vadd.f32 0.0, %v772
      %774 = vmatprep.mubr.f32.mxu0 0.0
      %775 = vmatmul.mubr.f32.gmra.mxu0 %v389
      %v776 = vpop.f32.mrf.mxu0
      %v777 = vadd.f32 0.0, %v776
      %v778 = vpop.f32.mrf.mxu0
      %v779 = vadd.f32 0.0, %v778
      %780 = vmatprep.mubr.f32.mxu0 0.0
      %781 = vmatmul.mubr.f32.gmra.mxu0 %v392
      %v782 = vpop.f32.mrf.mxu0
      %v783 = vadd.f32 0.0, %v782
      %v784 = vpop.f32.mrf.mxu0
      %v785 = vadd.f32 0.0, %v784
      %786 = vmatprep.mubr.f32.mxu0 0.0
      %787 = vmatmul.mubr.f32.gmra.mxu0 %v395
      %v788 = vpop.f32.mrf.mxu0
      %v789 = vadd.f32 0.0, %v788
      %v790 = vpop.f32.mrf.mxu0
      %v791 = vadd.f32 0.0, %v790
      %792 = vmatprep.mubr.f32.mxu0 0.0
      %793 = vmatmul.mubr.f32.gmra.mxu0 %v398
      %v794 = vpop.f32.mrf.mxu0
      %v795 = vadd.f32 0.0, %v794
      %v796 = vpop.f32.mrf.mxu0
      %v797 = vadd.f32 0.0, %v796
      %798 = vmatprep.mubr.f32.mxu0 0.0
      %799 = vmatmul.mubr.f32.gmra.mxu0 %v401
      %v800 = vpop.f32.mrf.mxu0
      %v801 = vadd.f32 0.0, %v800
      %v802 = vpop.f32.mrf.mxu0
      %v803 = vadd.f32 0.0, %v802
      %804 = vmatprep.mubr.f32.mxu0 0.0
      %805 = vmatmul.mubr.f32.gmra.mxu0 %v404
      %v806 = vpop.f32.mrf.mxu0
      %v807 = vadd.f32 0.0, %v806
      %v808 = vpop.f32.mrf.mxu0
      %v809 = vadd.f32 0.0, %v808
      %810 = vmatprep.mubr.f32.mxu0 0.0
      %811 = vmatmul.mubr.f32.gmra.mxu0 %v407
      %v812 = vpop.f32.mrf.mxu0
      %v813 = vadd.f32 0.0, %v812
      %v814 = vpop.f32.mrf.mxu0
      %v815 = vadd.f32 0.0, %v814
      %816 = vmatprep.mubr.f32.mxu0 0.0
      %817 = vmatmul.mubr.f32.gmra.mxu0 %v410
      %v818 = vpop.f32.mrf.mxu0
      %v819 = vadd.f32 0.0, %v818
      %v820 = vpop.f32.mrf.mxu0
      %v821 = vadd.f32 0.0, %v820
      %822 = vmatprep.mubr.f32.mxu0 0.0
      %823 = vmatmul.mubr.f32.gmra.mxu0 %v413
      %v824 = vpop.f32.mrf.mxu0
      %v825 = vadd.f32 0.0, %v824
      %v826 = vpop.f32.mrf.mxu0
      %v827 = vadd.f32 0.0, %v826
      %828 = vmatprep.mubr.f32.mxu0 0.0
      %829 = vmatmul.mubr.f32.gmra.mxu0 %v416
      %v830 = vpop.f32.mrf.mxu0
      %v831 = vadd.f32 0.0, %v830
      %v832 = vpop.f32.mrf.mxu0
      %v833 = vadd.f32 0.0, %v832
      %834 = vmatprep.mubr.f32.mxu0 0.0
      %835 = vmatmul.mubr.f32.gmra.mxu0 %v419
      %v836 = vpop.f32.mrf.mxu0
      %v837 = vadd.f32 0.0, %v836
      %v838 = vpop.f32.mrf.mxu0
      %v839 = vadd.f32 0.0, %v838
      %840 = vmatprep.mubr.f32.mxu0 0.0
      %841 = vmatmul.mubr.f32.gmra.mxu0 %v422
      %v842 = vpop.f32.mrf.mxu0
      %v843 = vadd.f32 0.0, %v842
      %v844 = vpop.f32.mrf.mxu0
      %v845 = vadd.f32 0.0, %v844
      %846 = vmatprep.mubr.f32.mxu0 0.0
      %847 = vmatmul.mubr.f32.gmra.mxu0 %v425
      %v848 = vpop.f32.mrf.mxu0
      %v849 = vadd.f32 0.0, %v848
      %v850 = vpop.f32.mrf.mxu0
      %v851 = vadd.f32 0.0, %v850
      %852 = vmatprep.mubr.f32.mxu0 0.0
      %853 = vmatmul.mubr.f32.gmra.mxu0 %v428
      %v854 = vpop.f32.mrf.mxu0
      %v855 = vadd.f32 0.0, %v854
      %v856 = vpop.f32.mrf.mxu0
      %v857 = vadd.f32 0.0, %v856
      %858 = vmatprep.mubr.f32.mxu0 0.0
      %859 = vmatmul.mubr.f32.gmra.mxu0 %v431
      %v860 = vpop.f32.mrf.mxu0
      %v861 = vadd.f32 0.0, %v860
      %v862 = vpop.f32.mrf.mxu0
      %v863 = vadd.f32 0.0, %v862
      %864 = vmatprep.mubr.f32.mxu0 0.0
      %865 = vmatmul.mubr.f32.gmra.mxu0 %v434
      %v866 = vpop.f32.mrf.mxu0
      %v867 = vadd.f32 0.0, %v866
      %v868 = vpop.f32.mrf.mxu0
      %v869 = vadd.f32 0.0, %v868
      %870 = vmatprep.mubr.f32.mxu0 0.0
      %871 = vmatmul.mubr.f32.gmra.mxu0 %v437
      %v872 = vpop.f32.mrf.mxu0
      %v873 = vadd.f32 0.0, %v872
      %v874 = vpop.f32.mrf.mxu0
      %v875 = vadd.f32 0.0, %v874
      %876 = vdwg.mxu0
      %877 = vst.msk [vmem:[#allocation2] sm:$0xff] %vm363, 0.0
      %878 = vst.msk [vmem:[#allocation2 + $0x8] sm:$0xff] %vm363, 0.0
      %879 = vst.msk [vmem:[#allocation2 + $0x10] sm:$0xff] %vm363, 0.0
      %880 = vst.msk [vmem:[#allocation2 + $0x18] sm:$0xff] %vm363, 0.0
      %881 = vst.msk [vmem:[#allocation2 + $0x20] sm:$0xff] %vm363, 0.0
      %882 = vst.msk [vmem:[#allocation2 + $0x28] sm:$0xff] %vm363, 0.0
      %883 = vst.msk [vmem:[#allocation2 + $0x30] sm:$0xff] %vm363, 0.0
      %884 = vst.msk [vmem:[#allocation2 + $0x38] sm:$0xff] %vm363, 0.0
      %885 = vst.msk [vmem:[#allocation2 + $0x40] sm:$0xff] %vm363, 0.0
      %886 = vst.msk [vmem:[#allocation2 + $0x48] sm:$0xff] %vm363, 0.0
      %887 = vst.msk [vmem:[#allocation2 + $0x50] sm:$0xff] %vm363, 0.0
      %888 = vst.msk [vmem:[#allocation2 + $0x58] sm:$0xff] %vm363, 0.0
      %889 = vst.msk [vmem:[#allocation2 + $0x60] sm:$0xff] %vm363, 0.0
      %890 = vst.msk [vmem:[#allocation2 + $0x68] sm:$0xff] %vm363, 0.0
      %891 = vst.msk [vmem:[#allocation2 + $0x70] sm:$0xff] %vm363, 0.0
      %892 = vst.msk [vmem:[#allocation2 + $0x78] sm:$0xff] %vm363, 0.0
      %893 = vst.msk [vmem:[#allocation2 + $0x80] sm:$0xff] %vm363, 0.0
      %894 = vst.msk [vmem:[#allocation2 + $0x88] sm:$0xff] %vm363, 0.0
      %895 = vst.msk [vmem:[#allocation2 + $0x90] sm:$0xff] %vm363, 0.0
      %896 = vst.msk [vmem:[#allocation2 + $0x98] sm:$0xff] %vm363, 0.0
      %897 = vst.msk [vmem:[#allocation2 + $0xa0] sm:$0xff] %vm363, 0.0
      %898 = vst.msk [vmem:[#allocation2 + $0xa8] sm:$0xff] %vm363, 0.0
      %899 = vst.msk [vmem:[#allocation2 + $0xb0] sm:$0xff] %vm363, 0.0
      %900 = vst.msk [vmem:[#allocation2 + $0xb8] sm:$0xff] %vm363, 0.0
      %vm901 = vcmask 257024
      %902 = vst.msk [vmem:[#allocation2 + $0xc0] sm:$0xf] %vm901, 0.0
      %v904 = vsel %vm363, %v506, 0
      %v907 = vsel %vm363, %v512, 0
      %v910 = vsel %vm363, %v518, 0
      %v913 = vsel %vm363, %v524, 0
      %v916 = vsel %vm363, %v530, 0
      %v919 = vsel %vm363, %v536, 0
      %v922 = vsel %vm363, %v542, 0
      %v925 = vsel %vm363, %v548, 0
      %v928 = vsel %vm363, %v554, 0
      %v931 = vsel %vm363, %v560, 0
      %v934 = vsel %vm363, %v566, 0
      %v937 = vsel %vm363, %v572, 0
      %v940 = vsel %vm363, %v578, 0
      %v943 = vsel %vm363, %v584, 0
      %v946 = vsel %vm363, %v590, 0
      %v949 = vsel %vm363, %v596, 0
      %v952 = vsel %vm363, %v602, 0
      %v955 = vsel %vm363, %v608, 0
      %v958 = vsel %vm363, %v614, 0
      %v961 = vsel %vm363, %v620, 0
      %v964 = vsel %vm363, %v626, 0
      %v967 = vsel %vm363, %v632, 0
      %v970 = vsel %vm363, %v638, 0
      %v973 = vsel %vm363, %v644, 0
      %v976 = vsel %vm363, %v650, 0
      %978 = vmatprep.subr.mxu0 0.0
      %979 = vmatpush1.msra.mxu0 0.0
      %980 = vmatprep.subr.mxu0 0.0
      %981 = vmatpush1.msra.mxu0 0.0
      %982 = vmatprep.subr.mxu0 0.0
      %983 = vmatpush1.msra.mxu0 0.0
      %984 = vmatprep.subr.mxu0 0.0
      %985 = vmatpush1.msra.mxu0 0.0
      %986 = vmatprep.subr.mxu0 0.0
      %987 = vmatpush1.msra.mxu0 0.0
      %988 = vmatprep.subr.mxu0 0.0
      %989 = vmatpush1.msra.mxu0 0.0
      %990 = vmatprep.subr.mxu0 0.0
      %991 = vmatpush1.msra.mxu0 0.0
      %992 = vmatprep.subr.mxu0 0.0
      %993 = vmatpush1.msra.mxu0 0.0
      %994 = vmatprep.subr.mxu0 0.0
      %995 = vmatpush1.msra.mxu0 0.0
      %996 = vmatprep.subr.mxu0 0.0
      %997 = vmatpush1.msra.mxu0 0.0
      %998 = vmatprep.subr.mxu0 0.0
      %999 = vmatpush1.msra.mxu0 0.0
      %1000 = vmatprep.subr.mxu0 0.0
      %1001 = vmatpush1.msra.mxu0 0.0
      %1002 = vmatprep.subr.mxu0 %v304
      %1003 = vmatpush1.msra.mxu0 %v303
      %1004 = vmatprep.subr.mxu0 %v302
      %1005 = vmatpush1.msra.mxu0 %v301
      %1006 = vmatprep.subr.mxu0 %v300
      %1007 = vmatpush1.msra.mxu0 %v299
      %1008 = vmatprep.subr.mxu0 %v298
      %1009 = vmatpush1.msra.mxu0 %v297
      %1010 = vmatprep.subr.mxu0 0.0
      %1011 = vmatpush2.msra.mxu0 0.0
      %1012 = vmatprep.subr.mxu0 0.0
      %1013 = vmatpush2.msra.mxu0 0.0
      %1014 = vmatprep.subr.mxu0 0.0
      %1015 = vmatpush2.msra.mxu0 0.0
      %1016 = vmatprep.subr.mxu0 0.0
      %1017 = vmatpush2.msra.mxu0 0.0
      %1018 = vmatprep.subr.mxu0 0.0
      %1019 = vmatpush2.msra.mxu0 0.0
      %1020 = vmatprep.subr.mxu0 0.0
      %1021 = vmatpush2.msra.mxu0 0.0
      %1022 = vmatprep.subr.mxu0 0.0
      %1023 = vmatpush2.msra.mxu0 0.0
      %1024 = vmatprep.subr.mxu0 0.0
      %1025 = vmatpush2.msra.mxu0 0.0
      %1026 = vmatprep.subr.mxu0 0.0
      %1027 = vmatpush2.msra.mxu0 0.0
      %1028 = vmatprep.subr.mxu0 0.0
      %1029 = vmatpush2.msra.mxu0 0.0
      %1030 = vmatprep.subr.mxu0 0.0
      %1031 = vmatpush2.msra.mxu0 0.0
      %1032 = vmatprep.subr.mxu0 0.0
      %1033 = vmatpush2.msra.mxu0 0.0
      %1034 = vmatprep.subr.mxu0 0.0
      %1035 = vmatpush2.msra.mxu0 0.0
      %1036 = vmatprep.subr.mxu0 0.0
      %1037 = vmatpush2.msra.mxu0 0.0
      %1038 = vmatprep.subr.mxu0 0.0
      %1039 = vmatpush2.msra.mxu0 0.0
      %1040 = vmatprep.subr.mxu0 0.0
      %1041 = vmatpush2.msra.mxu0 0.0
      %1042 = vmatprep.mubr.f32.mxu0 0.0
      %1043 = vmatmul.mubr.f32.gmra.mxu0 %v904
      %v1044 = vpop.f32.mrf.mxu0
      %v1045 = vadd.f32 %v305, %v1044
      %v1046 = vpop.f32.mrf.mxu0
      %v1047 = vadd.f32 %v306, %v1046
      %1048 = vmatprep.mubr.f32.mxu0 0.0
      %1049 = vmatmul.mubr.f32.gmra.mxu0 %v907
      %v1050 = vpop.f32.mrf.mxu0
      %v1051 = vadd.f32 %v307, %v1050
      %v1052 = vpop.f32.mrf.mxu0
      %v1053 = vadd.f32 %v308, %v1052
      %1054 = vmatprep.mubr.f32.mxu0 0.0
      %1055 = vmatmul.mubr.f32.gmra.mxu0 %v910
      %v1056 = vpop.f32.mrf.mxu0
      %v1057 = vadd.f32 %v309, %v1056
      %v1058 = vpop.f32.mrf.mxu0
      %v1059 = vadd.f32 %v310, %v1058
      %1060 = vmatprep.mubr.f32.mxu0 0.0
      %1061 = vmatmul.mubr.f32.gmra.mxu0 %v913
      %v1062 = vpop.f32.mrf.mxu0
      %v1063 = vadd.f32 %v311, %v1062
      %v1064 = vpop.f32.mrf.mxu0
      %v1065 = vadd.f32 %v312, %v1064
      %1066 = vmatprep.mubr.f32.mxu0 0.0
      %1067 = vmatmul.mubr.f32.gmra.mxu0 %v916
      %v1068 = vpop.f32.mrf.mxu0
      %v1069 = vadd.f32 %v313, %v1068
      %v1070 = vpop.f32.mrf.mxu0
      %v1071 = vadd.f32 %v314, %v1070
      %1072 = vmatprep.mubr.f32.mxu0 0.0
      %1073 = vmatmul.mubr.f32.gmra.mxu0 %v919
      %v1074 = vpop.f32.mrf.mxu0
      %v1075 = vadd.f32 %v315, %v1074
      %v1076 = vpop.f32.mrf.mxu0
      %v1077 = vadd.f32 %v316, %v1076
      %1078 = vmatprep.mubr.f32.mxu0 0.0
      %1079 = vmatmul.mubr.f32.gmra.mxu0 %v922
      %v1080 = vpop.f32.mrf.mxu0
      %v1081 = vadd.f32 %v317, %v1080
      %v1082 = vpop.f32.mrf.mxu0
      %v1083 = vadd.f32 %v318, %v1082
      %1084 = vmatprep.mubr.f32.mxu0 0.0
      %1085 = vmatmul.mubr.f32.gmra.mxu0 %v925
      %v1086 = vpop.f32.mrf.mxu0
      %v1087 = vadd.f32 %v319, %v1086
      %v1088 = vpop.f32.mrf.mxu0
      %v1089 = vadd.f32 %v320, %v1088
      %1090 = vmatprep.mubr.f32.mxu0 0.0
      %1091 = vmatmul.mubr.f32.gmra.mxu0 %v928
      %v1092 = vpop.f32.mrf.mxu0
      %v1093 = vadd.f32 %v321, %v1092
      %v1094 = vpop.f32.mrf.mxu0
      %v1095 = vadd.f32 %v322, %v1094
      %1096 = vmatprep.mubr.f32.mxu0 0.0
      %1097 = vmatmul.mubr.f32.gmra.mxu0 %v931
      %v1098 = vpop.f32.mrf.mxu0
      %v1099 = vadd.f32 %v323, %v1098
      %v1100 = vpop.f32.mrf.mxu0
      %v1101 = vadd.f32 %v324, %v1100
      %1102 = vmatprep.mubr.f32.mxu0 0.0
      %1103 = vmatmul.mubr.f32.gmra.mxu0 %v934
      %v1104 = vpop.f32.mrf.mxu0
      %v1105 = vadd.f32 %v325, %v1104
      %v1106 = vpop.f32.mrf.mxu0
      %v1107 = vadd.f32 %v326, %v1106
      %1108 = vmatprep.mubr.f32.mxu0 0.0
      %1109 = vmatmul.mubr.f32.gmra.mxu0 %v937
      %v1110 = vpop.f32.mrf.mxu0
      %v1111 = vadd.f32 %v327, %v1110
      %v1112 = vpop.f32.mrf.mxu0
      %v1113 = vadd.f32 %v328, %v1112
      %1114 = vmatprep.mubr.f32.mxu0 0.0
      %1115 = vmatmul.mubr.f32.gmra.mxu0 %v940
      %v1116 = vpop.f32.mrf.mxu0
      %v1117 = vadd.f32 %v329, %v1116
      %v1118 = vpop.f32.mrf.mxu0
      %v1119 = vadd.f32 %v330, %v1118
      %1120 = vmatprep.mubr.f32.mxu0 0.0
      %1121 = vmatmul.mubr.f32.gmra.mxu0 %v943
      %v1122 = vpop.f32.mrf.mxu0
      %v1123 = vadd.f32 %v331, %v1122
      %v1124 = vpop.f32.mrf.mxu0
      %v1125 = vadd.f32 %v332, %v1124
      %1126 = vmatprep.mubr.f32.mxu0 0.0
      %1127 = vmatmul.mubr.f32.gmra.mxu0 %v946
      %v1128 = vpop.f32.mrf.mxu0
      %v1129 = vadd.f32 %v333, %v1128
      %v1130 = vpop.f32.mrf.mxu0
      %v1131 = vadd.f32 %v334, %v1130
      %1132 = vmatprep.mubr.f32.mxu0 0.0
      %1133 = vmatmul.mubr.f32.gmra.mxu0 %v949
      %v1134 = vpop.f32.mrf.mxu0
      %v1135 = vadd.f32 %v335, %v1134
      %v1136 = vpop.f32.mrf.mxu0
      %v1137 = vadd.f32 %v336, %v1136
      %1138 = vmatprep.mubr.f32.mxu0 0.0
      %1139 = vmatmul.mubr.f32.gmra.mxu0 %v952
      %v1140 = vpop.f32.mrf.mxu0
      %v1141 = vadd.f32 %v337, %v1140
      %v1142 = vpop.f32.mrf.mxu0
      %v1143 = vadd.f32 %v338, %v1142
      %1144 = vmatprep.mubr.f32.mxu0 0.0
      %1145 = vmatmul.mubr.f32.gmra.mxu0 %v955
      %v1146 = vpop.f32.mrf.mxu0
      %v1147 = vadd.f32 %v339, %v1146
      %v1148 = vpop.f32.mrf.mxu0
      %v1149 = vadd.f32 %v340, %v1148
      %1150 = vmatprep.mubr.f32.mxu0 0.0
      %1151 = vmatmul.mubr.f32.gmra.mxu0 %v958
      %v1152 = vpop.f32.mrf.mxu0
      %v1153 = vadd.f32 %v341, %v1152
      %v1154 = vpop.f32.mrf.mxu0
      %v1155 = vadd.f32 %v342, %v1154
      %1156 = vmatprep.mubr.f32.mxu0 0.0
      %1157 = vmatmul.mubr.f32.gmra.mxu0 %v961
      %v1158 = vpop.f32.mrf.mxu0
      %v1159 = vadd.f32 %v343, %v1158
      %v1160 = vpop.f32.mrf.mxu0
      %v1161 = vadd.f32 %v344, %v1160
      %1162 = vmatprep.mubr.f32.mxu0 0.0
      %1163 = vmatmul.mubr.f32.gmra.mxu0 %v964
      %v1164 = vpop.f32.mrf.mxu0
      %v1165 = vadd.f32 %v345, %v1164
      %v1166 = vpop.f32.mrf.mxu0
      %v1167 = vadd.f32 %v346, %v1166
      %1168 = vmatprep.mubr.f32.mxu0 0.0
      %1169 = vmatmul.mubr.f32.gmra.mxu0 %v967
      %v1170 = vpop.f32.mrf.mxu0
      %v1171 = vadd.f32 %v347, %v1170
      %v1172 = vpop.f32.mrf.mxu0
      %v1173 = vadd.f32 %v348, %v1172
      %1174 = vmatprep.mubr.f32.mxu0 0.0
      %1175 = vmatmul.mubr.f32.gmra.mxu0 %v970
      %v1176 = vpop.f32.mrf.mxu0
      %v1177 = vadd.f32 %v349, %v1176
      %v1178 = vpop.f32.mrf.mxu0
      %v1179 = vadd.f32 %v350, %v1178
      %1180 = vmatprep.mubr.f32.mxu0 0.0
      %1181 = vmatmul.mubr.f32.gmra.mxu0 %v973
      %v1182 = vpop.f32.mrf.mxu0
      %v1183 = vadd.f32 %v351, %v1182
      %v1184 = vpop.f32.mrf.mxu0
      %v1185 = vadd.f32 %v352, %v1184
      %1186 = vmatprep.mubr.f32.mxu0 0.0
      %1187 = vmatmul.mubr.f32.gmra.mxu0 %v976
      %v1188 = vpop.f32.mrf.mxu0
      %v1189 = vadd.f32 %v353, %v1188
      %v1190 = vpop.f32.mrf.mxu0
      %v1191 = vadd.f32 %v354, %v1190
      %1192 = vdwg.mxu0
      %vm1193 = vcmask 556032
      %v1194 = vsel %vm1193, %v1047, -inf
      %v1195 = vmax.f32 %v1045, %v1194
      %1196 = vmax.xlane.f32.xlu0 %v1195
      %v1197 = vpop.xlane.xlu0 %1196
      %v1198 = vsel %vm1193, %v1053, -inf
      %v1199 = vmax.f32 %v1051, %v1198
      %1200 = vmax.xlane.f32.xlu0 %v1199
      %v1201 = vpop.xlane.xlu0 %1200
      %v1202 = vsel %vm1193, %v1059, -inf
      %v1203 = vmax.f32 %v1057, %v1202
      %1204 = vmax.xlane.f32.xlu0 %v1203
      %v1205 = vpop.xlane.xlu0 %1204
      %v1206 = vsel %vm1193, %v1065, -inf
      %v1207 = vmax.f32 %v1063, %v1206
      %1208 = vmax.xlane.f32.xlu0 %v1207
      %v1209 = vpop.xlane.xlu0 %1208
      %v1210 = vsel %vm1193, %v1071, -inf
      %v1211 = vmax.f32 %v1069, %v1210
      %1212 = vmax.xlane.f32.xlu0 %v1211
      %v1213 = vpop.xlane.xlu0 %1212
      %v1214 = vsel %vm1193, %v1077, -inf
      %v1215 = vmax.f32 %v1075, %v1214
      %1216 = vmax.xlane.f32.xlu0 %v1215
      %v1217 = vpop.xlane.xlu0 %1216
      %v1218 = vsel %vm1193, %v1083, -inf
      %v1219 = vmax.f32 %v1081, %v1218
      %1220 = vmax.xlane.f32.xlu0 %v1219
      %v1221 = vpop.xlane.xlu0 %1220
      %v1222 = vsel %vm1193, %v1089, -inf
      %v1223 = vmax.f32 %v1087, %v1222
      %1224 = vmax.xlane.f32.xlu0 %v1223
      %v1225 = vpop.xlane.xlu0 %1224
      %v1226 = vsel %vm1193, %v1095, -inf
      %v1227 = vmax.f32 %v1093, %v1226
      %1228 = vmax.xlane.f32.xlu0 %v1227
      %v1229 = vpop.xlane.xlu0 %1228
      %v1230 = vsel %vm1193, %v1101, -inf
      %v1231 = vmax.f32 %v1099, %v1230
      %1232 = vmax.xlane.f32.xlu0 %v1231
      %v1233 = vpop.xlane.xlu0 %1232
      %v1234 = vsel %vm1193, %v1107, -inf
      %v1235 = vmax.f32 %v1105, %v1234
      %1236 = vmax.xlane.f32.xlu0 %v1235
      %v1237 = vpop.xlane.xlu0 %1236
      %v1238 = vsel %vm1193, %v1113, -inf
      %v1239 = vmax.f32 %v1111, %v1238
      %1240 = vmax.xlane.f32.xlu0 %v1239
      %v1241 = vpop.xlane.xlu0 %1240
      %v1242 = vsel %vm1193, %v1119, -inf
      %v1243 = vmax.f32 %v1117, %v1242
      %1244 = vmax.xlane.f32.xlu0 %v1243
      %v1245 = vpop.xlane.xlu0 %1244
      %v1246 = vsel %vm1193, %v1125, -inf
      %v1247 = vmax.f32 %v1123, %v1246
      %1248 = vmax.xlane.f32.xlu0 %v1247
      %v1249 = vpop.xlane.xlu0 %1248
      %v1250 = vsel %vm1193, %v1131, -inf
      %v1251 = vmax.f32 %v1129, %v1250
      %1252 = vmax.xlane.f32.xlu0 %v1251
      %v1253 = vpop.xlane.xlu0 %1252
      %v1254 = vsel %vm1193, %v1137, -inf
      %v1255 = vmax.f32 %v1135, %v1254
      %1256 = vmax.xlane.f32.xlu0 %v1255
      %v1257 = vpop.xlane.xlu0 %1256
      %v1258 = vsel %vm1193, %v1143, -inf
      %v1259 = vmax.f32 %v1141, %v1258
      %1260 = vmax.xlane.f32.xlu0 %v1259
      %v1261 = vpop.xlane.xlu0 %1260
      %v1262 = vsel %vm1193, %v1149, -inf
      %v1263 = vmax.f32 %v1147, %v1262
      %1264 = vmax.xlane.f32.xlu0 %v1263
      %v1265 = vpop.xlane.xlu0 %1264
      %v1266 = vsel %vm1193, %v1155, -inf
      %v1267 = vmax.f32 %v1153, %v1266
      %1268 = vmax.xlane.f32.xlu0 %v1267
      %v1269 = vpop.xlane.xlu0 %1268
      %v1270 = vsel %vm1193, %v1161, -inf
      %v1271 = vmax.f32 %v1159, %v1270
      %1272 = vmax.xlane.f32.xlu0 %v1271
      %v1273 = vpop.xlane.xlu0 %1272
      %v1274 = vsel %vm1193, %v1167, -inf
      %v1275 = vmax.f32 %v1165, %v1274
      %1276 = vmax.xlane.f32.xlu0 %v1275
      %v1277 = vpop.xlane.xlu0 %1276
      %v1278 = vsel %vm1193, %v1173, -inf
      %v1279 = vmax.f32 %v1171, %v1278
      %1280 = vmax.xlane.f32.xlu0 %v1279
      %v1281 = vpop.xlane.xlu0 %1280
      %v1282 = vsel %vm1193, %v1179, -inf
      %v1283 = vmax.f32 %v1177, %v1282
      %1284 = vmax.xlane.f32.xlu0 %v1283
      %v1285 = vpop.xlane.xlu0 %1284
      %v1286 = vsel %vm1193, %v1185, -inf
      %v1287 = vmax.f32 %v1183, %v1286
      %1288 = vmax.xlane.f32.xlu0 %v1287
      %v1289 = vpop.xlane.xlu0 %1288
      %vm1290 = vcmask 1043456
      %v1291 = vsel %vm1290, %v1189, -inf
      %vm1292 = vcmask 551936
      %v1293 = vsel %vm1292, %v1191, -inf
      %v1294 = vmax.f32 %v1291, %v1293
      %1295 = vmax.xlane.f32.xlu0 %v1294
      %v1296 = vpop.xlane.xlu0 %1295
      %v1297 = vsub.f32 %v1045, %v1197
      %v1298 = vsub.f32 %v1047, %v1197
      %v1299 = vsub.f32 %v1051, %v1201
      %v1300 = vsub.f32 %v1053, %v1201
      %v1301 = vsub.f32 %v1057, %v1205
      %v1302 = vsub.f32 %v1059, %v1205
      %v1303 = vsub.f32 %v1063, %v1209
      %v1304 = vsub.f32 %v1065, %v1209
      %v1305 = vsub.f32 %v1069, %v1213
      %v1306 = vsub.f32 %v1071, %v1213
      %v1307 = vsub.f32 %v1075, %v1217
      %v1308 = vsub.f32 %v1077, %v1217
      %v1309 = vsub.f32 %v1081, %v1221
      %v1310 = vsub.f32 %v1083, %v1221
      %v1311 = vsub.f32 %v1087, %v1225
      %v1312 = vsub.f32 %v1089, %v1225
      %v1313 = vsub.f32 %v1093, %v1229
      %v1314 = vsub.f32 %v1095, %v1229
      %v1315 = vsub.f32 %v1099, %v1233
      %v1316 = vsub.f32 %v1101, %v1233
      %v1317 = vsub.f32 %v1105, %v1237
      %v1318 = vsub.f32 %v1107, %v1237
      %v1319 = vsub.f32 %v1111, %v1241
      %v1320 = vsub.f32 %v1113, %v1241
      %v1321 = vsub.f32 %v1117, %v1245
      %v1322 = vsub.f32 %v1119, %v1245
      %v1323 = vsub.f32 %v1123, %v1249
      %v1324 = vsub.f32 %v1125, %v1249
      %v1325 = vsub.f32 %v1129, %v1253
      %v1326 = vsub.f32 %v1131, %v1253
      %v1327 = vsub.f32 %v1135, %v1257
      %v1328 = vsub.f32 %v1137, %v1257
      %v1329 = vsub.f32 %v1141, %v1261
      %v1330 = vsub.f32 %v1143, %v1261
      %v1331 = vsub.f32 %v1147, %v1265
      %v1332 = vsub.f32 %v1149, %v1265
      %v1333 = vsub.f32 %v1153, %v1269
      %v1334 = vsub.f32 %v1155, %v1269
      %v1335 = vsub.f32 %v1159, %v1273
      %v1336 = vsub.f32 %v1161, %v1273
      %v1337 = vsub.f32 %v1165, %v1277
      %v1338 = vsub.f32 %v1167, %v1277
      %v1339 = vsub.f32 %v1171, %v1281
      %v1340 = vsub.f32 %v1173, %v1281
      %v1341 = vsub.f32 %v1177, %v1285
      %v1342 = vsub.f32 %v1179, %v1285
      %v1343 = vsub.f32 %v1183, %v1289
      %v1344 = vsub.f32 %v1185, %v1289
      %v1345 = vsub.f32 %v1189, %v1296
      %v1346 = vsub.f32 %v1191, %v1296
      %v1347 = vmul.f32 %v1297, 1.442695
      %v1348 = vpow.pop %v1347
      %v1349 = vmul.f32 %v1298, 1.442695
      %v1350 = vpow.pop %v1349
      %v1351 = vmul.f32 %v1299, 1.442695
      %v1352 = vpow.pop %v1351
      %v1353 = vmul.f32 %v1300, 1.442695
      %v1354 = vpow.pop %v1353
      %v1355 = vmul.f32 %v1301, 1.442695
      %v1356 = vpow.pop %v1355
      %v1357 = vmul.f32 %v1302, 1.442695
      %v1358 = vpow.pop %v1357
      %v1359 = vmul.f32 %v1303, 1.442695
      %v1360 = vpow.pop %v1359
      %v1361 = vmul.f32 %v1304, 1.442695
      %v1362 = vpow.pop %v1361
      %v1363 = vmul.f32 %v1305, 1.442695
      %v1364 = vpow.pop %v1363
      %v1365 = vmul.f32 %v1306, 1.442695
      %v1366 = vpow.pop %v1365
      %v1367 = vmul.f32 %v1307, 1.442695
      %v1368 = vpow.pop %v1367
      %v1369 = vmul.f32 %v1308, 1.442695
      %v1370 = vpow.pop %v1369
      %v1371 = vmul.f32 %v1309, 1.442695
      %v1372 = vpow.pop %v1371
      %v1373 = vmul.f32 %v1310, 1.442695
      %v1374 = vpow.pop %v1373
      %v1375 = vmul.f32 %v1311, 1.442695
      %v1376 = vpow.pop %v1375
      %v1377 = vmul.f32 %v1312, 1.442695
      %v1378 = vpow.pop %v1377
      %v1379 = vmul.f32 %v1313, 1.442695
      %v1380 = vpow.pop %v1379
      %v1381 = vmul.f32 %v1314, 1.442695
      %v1382 = vpow.pop %v1381
      %v1383 = vmul.f32 %v1315, 1.442695
      %v1384 = vpow.pop %v1383
      %v1385 = vmul.f32 %v1316, 1.442695
      %v1386 = vpow.pop %v1385
      %v1387 = vmul.f32 %v1317, 1.442695
      %v1388 = vpow.pop %v1387
      %v1389 = vmul.f32 %v1318, 1.442695
      %v1390 = vpow.pop %v1389
      %v1391 = vmul.f32 %v1319, 1.442695
      %v1392 = vpow.pop %v1391
      %v1393 = vmul.f32 %v1320, 1.442695
      %v1394 = vpow.pop %v1393
      %v1395 = vmul.f32 %v1321, 1.442695
      %v1396 = vpow.pop %v1395
      %v1397 = vmul.f32 %v1322, 1.442695
      %v1398 = vpow.pop %v1397
      %v1399 = vmul.f32 %v1323, 1.442695
      %v1400 = vpow.pop %v1399
      %v1401 = vmul.f32 %v1324, 1.442695
      %v1402 = vpow.pop %v1401
      %v1403 = vmul.f32 %v1325, 1.442695
      %v1404 = vpow.pop %v1403
      %v1405 = vmul.f32 %v1326, 1.442695
      %v1406 = vpow.pop %v1405
      %v1407 = vmul.f32 %v1327, 1.442695
      %v1408 = vpow.pop %v1407
      %v1409 = vmul.f32 %v1328, 1.442695
      %v1410 = vpow.pop %v1409
      %v1411 = vmul.f32 %v1329, 1.442695
      %v1412 = vpow.pop %v1411
      %v1413 = vmul.f32 %v1330, 1.442695
      %v1414 = vpow.pop %v1413
      %v1415 = vmul.f32 %v1331, 1.442695
      %v1416 = vpow.pop %v1415
      %v1417 = vmul.f32 %v1332, 1.442695
      %v1418 = vpow.pop %v1417
      %v1419 = vmul.f32 %v1333, 1.442695
      %v1420 = vpow.pop %v1419
      %v1421 = vmul.f32 %v1334, 1.442695
      %v1422 = vpow.pop %v1421
      %v1423 = vmul.f32 %v1335, 1.442695
      %v1424 = vpow.pop %v1423
      %v1425 = vmul.f32 %v1336, 1.442695
      %v1426 = vpow.pop %v1425
      %v1427 = vmul.f32 %v1337, 1.442695
      %v1428 = vpow.pop %v1427
      %v1429 = vmul.f32 %v1338, 1.442695
      %v1430 = vpow.pop %v1429
      %v1431 = vmul.f32 %v1339, 1.442695
      %v1432 = vpow.pop %v1431
      %v1433 = vmul.f32 %v1340, 1.442695
      %v1434 = vpow.pop %v1433
      %v1435 = vmul.f32 %v1341, 1.442695
      %v1436 = vpow.pop %v1435
      %v1437 = vmul.f32 %v1342, 1.442695
      %v1438 = vpow.pop %v1437
      %v1439 = vmul.f32 %v1343, 1.442695
      %v1440 = vpow.pop %v1439
      %v1441 = vmul.f32 %v1344, 1.442695
      %v1442 = vpow.pop %v1441
      %v1443 = vmul.f32 %v1345, 1.442695
      %v1444 = vpow.pop %v1443
      %v1445 = vmul.f32 %v1346, 1.442695
      %v1446 = vpow.pop %v1445
      %v1447 = vsel %vm1193, %v1350, 0.0
      %v1448 = vadd.f32 %v1348, %v1447
      %1449 = vadd.xlane.f32.xlu0 %v1448
      %v1450 = vpop.xlane.xlu0 %1449
      %v1451 = vsel %vm1193, %v1354, 0.0
      %v1452 = vadd.f32 %v1352, %v1451
      %1453 = vadd.xlane.f32.xlu0 %v1452
      %v1454 = vpop.xlane.xlu0 %1453
      %v1455 = vsel %vm1193, %v1358, 0.0
      %v1456 = vadd.f32 %v1356, %v1455
      %1457 = vadd.xlane.f32.xlu0 %v1456
      %v1458 = vpop.xlane.xlu0 %1457
      %v1459 = vsel %vm1193, %v1362, 0.0
      %v1460 = vadd.f32 %v1360, %v1459
      %1461 = vadd.xlane.f32.xlu0 %v1460
      %v1462 = vpop.xlane.xlu0 %1461
      %v1463 = vsel %vm1193, %v1366, 0.0
      %v1464 = vadd.f32 %v1364, %v1463
      %1465 = vadd.xlane.f32.xlu0 %v1464
      %v1466 = vpop.xlane.xlu0 %1465
      %v1467 = vsel %vm1193, %v1370, 0.0
      %v1468 = vadd.f32 %v1368, %v1467
      %1469 = vadd.xlane.f32.xlu0 %v1468
      %v1470 = vpop.xlane.xlu0 %1469
      %v1471 = vsel %vm1193, %v1374, 0.0
      %v1472 = vadd.f32 %v1372, %v1471
      %1473 = vadd.xlane.f32.xlu0 %v1472
      %v1474 = vpop.xlane.xlu0 %1473
      %v1475 = vsel %vm1193, %v1378, 0.0
      %v1476 = vadd.f32 %v1376, %v1475
      %1477 = vadd.xlane.f32.xlu0 %v1476
      %v1478 = vpop.xlane.xlu0 %1477
      %v1479 = vsel %vm1193, %v1382, 0.0
      %v1480 = vadd.f32 %v1380, %v1479
      %1481 = vadd.xlane.f32.xlu0 %v1480
      %v1482 = vpop.xlane.xlu0 %1481
      %v1483 = vsel %vm1193, %v1386, 0.0
      %v1484 = vadd.f32 %v1384, %v1483
      %1485 = vadd.xlane.f32.xlu0 %v1484
      %v1486 = vpop.xlane.xlu0 %1485
      %v1487 = vsel %vm1193, %v1390, 0.0
      %v1488 = vadd.f32 %v1388, %v1487
      %1489 = vadd.xlane.f32.xlu0 %v1488
      %v1490 = vpop.xlane.xlu0 %1489
      %v1491 = vsel %vm1193, %v1394, 0.0
      %v1492 = vadd.f32 %v1392, %v1491
      %1493 = vadd.xlane.f32.xlu0 %v1492
      %v1494 = vpop.xlane.xlu0 %1493
      %v1495 = vsel %vm1193, %v1398, 0.0
      %v1496 = vadd.f32 %v1396, %v1495
      %1497 = vadd.xlane.f32.xlu0 %v1496
      %v1498 = vpop.xlane.xlu0 %1497
      %v1499 = vsel %vm1193, %v1402, 0.0
      %v1500 = vadd.f32 %v1400, %v1499
      %1501 = vadd.xlane.f32.xlu0 %v1500
      %v1502 = vpop.xlane.xlu0 %1501
      %v1503 = vsel %vm1193, %v1406, 0.0
      %v1504 = vadd.f32 %v1404, %v1503
      %1505 = vadd.xlane.f32.xlu0 %v1504
      %v1506 = vpop.xlane.xlu0 %1505
      %v1507 = vsel %vm1193, %v1410, 0.0
      %v1508 = vadd.f32 %v1408, %v1507
      %1509 = vadd.xlane.f32.xlu0 %v1508
      %v1510 = vpop.xlane.xlu0 %1509
      %v1511 = vsel %vm1193, %v1414, 0.0
      %v1512 = vadd.f32 %v1412, %v1511
      %1513 = vadd.xlane.f32.xlu0 %v1512
      %v1514 = vpop.xlane.xlu0 %1513
      %v1515 = vsel %vm1193, %v1418, 0.0
      %v1516 = vadd.f32 %v1416, %v1515
      %1517 = vadd.xlane.f32.xlu0 %v1516
      %v1518 = vpop.xlane.xlu0 %1517
      %v1519 = vsel %vm1193, %v1422, 0.0
      %v1520 = vadd.f32 %v1420, %v1519
      %1521 = vadd.xlane.f32.xlu0 %v1520
      %v1522 = vpop.xlane.xlu0 %1521
      %v1523 = vsel %vm1193, %v1426, 0.0
      %v1524 = vadd.f32 %v1424, %v1523
      %1525 = vadd.xlane.f32.xlu0 %v1524
      %v1526 = vpop.xlane.xlu0 %1525
      %v1527 = vsel %vm1193, %v1430, 0.0
      %v1528 = vadd.f32 %v1428, %v1527
      %1529 = vadd.xlane.f32.xlu0 %v1528
      %v1530 = vpop.xlane.xlu0 %1529
      %v1531 = vsel %vm1193, %v1434, 0.0
      %v1532 = vadd.f32 %v1432, %v1531
      %1533 = vadd.xlane.f32.xlu0 %v1532
      %v1534 = vpop.xlane.xlu0 %1533
      %v1535 = vsel %vm1193, %v1438, 0.0
      %v1536 = vadd.f32 %v1436, %v1535
      %1537 = vadd.xlane.f32.xlu0 %v1536
      %v1538 = vpop.xlane.xlu0 %1537
      %v1539 = vsel %vm1193, %v1442, 0.0
      %v1540 = vadd.f32 %v1440, %v1539
      %1541 = vadd.xlane.f32.xlu0 %v1540
      %v1542 = vpop.xlane.xlu0 %1541
      %v1543 = vsel %vm1290, %v1444, 0.0
      %v1544 = vsel %vm1292, %v1446, 0.0
      %v1545 = vadd.f32 %v1543, %v1544
      %1546 = vadd.xlane.f32.xlu0 %v1545
      %v1547 = vpop.xlane.xlu0 %1546
      %v1549 = vsel %vm1193, %v1350, 0
      %v1552 = vsel %vm1193, %v1354, 0
      %v1555 = vsel %vm1193, %v1358, 0
      %v1558 = vsel %vm1193, %v1362, 0
      %v1561 = vsel %vm1193, %v1366, 0
      %v1564 = vsel %vm1193, %v1370, 0
      %v1567 = vsel %vm1193, %v1374, 0
      %v1570 = vsel %vm1193, %v1378, 0
      %v1573 = vsel %vm1193, %v1382, 0
      %v1576 = vsel %vm1193, %v1386, 0
      %v1579 = vsel %vm1193, %v1390, 0
      %v1582 = vsel %vm1193, %v1394, 0
      %v1585 = vsel %vm1193, %v1398, 0
      %v1588 = vsel %vm1193, %v1402, 0
      %v1591 = vsel %vm1193, %v1406, 0
      %v1594 = vsel %vm1193, %v1410, 0
      %v1597 = vsel %vm1193, %v1414, 0
      %v1600 = vsel %vm1193, %v1418, 0
      %v1603 = vsel %vm1193, %v1422, 0
      %v1606 = vsel %vm1193, %v1426, 0
      %v1609 = vsel %vm1193, %v1430, 0
      %v1612 = vsel %vm1193, %v1434, 0
      %v1615 = vsel %vm1193, %v1438, 0
      %v1618 = vsel %vm1193, %v1442, 0
      %v1621 = vsel %vm1193, %v1446, 0
      %v1624 = vsel %vm1290, %v873, 0
      %1626 = vmatprep.subr.mxu0 0.0
      %1627 = vmatpush1.msra.mxu0 %v819
      %1628 = vmatprep.subr.mxu0 0.0
      %1629 = vmatpush1.msra.mxu0 %v813
      %1630 = vmatprep.subr.mxu0 0.0
      %1631 = vmatpush1.msra.mxu0 %v807
      %1632 = vmatprep.subr.mxu0 0.0
      %1633 = vmatpush1.msra.mxu0 %v801
      %1634 = vmatprep.subr.mxu0 0.0
      %1635 = vmatpush1.msra.mxu0 %v795
      %1636 = vmatprep.subr.mxu0 0.0
      %1637 = vmatpush1.msra.mxu0 %v789
      %1638 = vmatprep.subr.mxu0 0.0
      %1639 = vmatpush1.msra.mxu0 %v783
      %1640 = vmatprep.subr.mxu0 0.0
      %1641 = vmatpush1.msra.mxu0 %v777
      %1642 = vmatprep.subr.mxu0 0.0
      %1643 = vmatpush1.msra.mxu0 %v771
      %1644 = vmatprep.subr.mxu0 0.0
      %1645 = vmatpush1.msra.mxu0 %v765
      %1646 = vmatprep.subr.mxu0 0.0
      %1647 = vmatpush1.msra.mxu0 %v759
      %1648 = vmatprep.subr.mxu0 0.0
      %1649 = vmatpush1.msra.mxu0 %v753
      %1650 = vmatprep.subr.mxu0 0.0
      %1651 = vmatpush1.msra.mxu0 %v747
      %1652 = vmatprep.subr.mxu0 0.0
      %1653 = vmatpush1.msra.mxu0 %v741
      %1654 = vmatprep.subr.mxu0 0.0
      %1655 = vmatpush1.msra.mxu0 %v735
      %1656 = vmatprep.subr.mxu0 0.0
      %1657 = vmatpush1.msra.mxu0 %v729
      %1658 = vmatprep.subr.mxu0 0.0
      %1659 = vmatpush2.msra.mxu0 0.0
      %1660 = vmatprep.subr.mxu0 0.0
      %1661 = vmatpush2.msra.mxu0 0.0
      %1662 = vmatprep.subr.mxu0 0.0
      %1663 = vmatpush2.msra.mxu0 0.0
      %1664 = vmatprep.subr.mxu0 0.0
      %1665 = vmatpush2.msra.mxu0 0.0
      %1666 = vmatprep.subr.mxu0 0.0
      %1667 = vmatpush2.msra.mxu0 0.0
      %1668 = vmatprep.subr.mxu0 0.0
      %1669 = vmatpush2.msra.mxu0 0.0
      %1670 = vmatprep.subr.mxu0 0.0
      %1671 = vmatpush2.msra.mxu0 0.0
      %1672 = vmatprep.subr.mxu0 0.0
      %1673 = vmatpush2.msra.mxu0 %v1624
      %1674 = vmatprep.subr.mxu0 0.0
      %1675 = vmatpush2.msra.mxu0 %v867
      %1676 = vmatprep.subr.mxu0 0.0
      %1677 = vmatpush2.msra.mxu0 %v861
      %1678 = vmatprep.subr.mxu0 0.0
      %1679 = vmatpush2.msra.mxu0 %v855
      %1680 = vmatprep.subr.mxu0 0.0
      %1681 = vmatpush2.msra.mxu0 %v849
      %1682 = vmatprep.subr.mxu0 0.0
      %1683 = vmatpush2.msra.mxu0 %v843
      %1684 = vmatprep.subr.mxu0 0.0
      %1685 = vmatpush2.msra.mxu0 %v837
      %1686 = vmatprep.subr.mxu0 0.0
      %1687 = vmatpush2.msra.mxu0 %v831
      %1688 = vmatprep.subr.mxu0 0.0
      %1689 = vmatpush2.msra.mxu0 %v825
      %1690 = vmatprep.mubr.f32.mxu0 %v1549
      %1691 = vmatmul.mubr.f32.gmra.mxu0 %v1348
      %v1692 = vpop.f32.mrf.mxu0
      %v1693 = vadd.f32 0.0, %v1692
      %v1694 = vpop.f32.mrf.mxu0
      %1695 = vmatprep.mubr.f32.mxu0 %v1552
      %1696 = vmatmul.mubr.f32.gmra.mxu0 %v1352
      %v1697 = vpop.f32.mrf.mxu0
      %v1698 = vadd.f32 0.0, %v1697
      %v1699 = vpop.f32.mrf.mxu0
      %1700 = vmatprep.mubr.f32.mxu0 %v1555
      %1701 = vmatmul.mubr.f32.gmra.mxu0 %v1356
      %v1702 = vpop.f32.mrf.mxu0
      %v1703 = vadd.f32 0.0, %v1702
      %v1704 = vpop.f32.mrf.mxu0
      %1705 = vmatprep.mubr.f32.mxu0 %v1558
      %1706 = vmatmul.mubr.f32.gmra.mxu0 %v1360
      %v1707 = vpop.f32.mrf.mxu0
      %v1708 = vadd.f32 0.0, %v1707
      %v1709 = vpop.f32.mrf.mxu0
      %1710 = vmatprep.mubr.f32.mxu0 %v1561
      %1711 = vmatmul.mubr.f32.gmra.mxu0 %v1364
      %v1712 = vpop.f32.mrf.mxu0
      %v1713 = vadd.f32 0.0, %v1712
      %v1714 = vpop.f32.mrf.mxu0
      %1715 = vmatprep.mubr.f32.mxu0 %v1564
      %1716 = vmatmul.mubr.f32.gmra.mxu0 %v1368
      %v1717 = vpop.f32.mrf.mxu0
      %v1718 = vadd.f32 0.0, %v1717
      %v1719 = vpop.f32.mrf.mxu0
      %1720 = vmatprep.mubr.f32.mxu0 %v1567
      %1721 = vmatmul.mubr.f32.gmra.mxu0 %v1372
      %v1722 = vpop.f32.mrf.mxu0
      %v1723 = vadd.f32 0.0, %v1722
      %v1724 = vpop.f32.mrf.mxu0
      %1725 = vmatprep.mubr.f32.mxu0 %v1570
      %1726 = vmatmul.mubr.f32.gmra.mxu0 %v1376
      %v1727 = vpop.f32.mrf.mxu0
      %v1728 = vadd.f32 0.0, %v1727
      %v1729 = vpop.f32.mrf.mxu0
      %1730 = vmatprep.mubr.f32.mxu0 %v1573
      %1731 = vmatmul.mubr.f32.gmra.mxu0 %v1380
      %v1732 = vpop.f32.mrf.mxu0
      %v1733 = vadd.f32 0.0, %v1732
      %v1734 = vpop.f32.mrf.mxu0
      %1735 = vmatprep.mubr.f32.mxu0 %v1576
      %1736 = vmatmul.mubr.f32.gmra.mxu0 %v1384
      %v1737 = vpop.f32.mrf.mxu0
      %v1738 = vadd.f32 0.0, %v1737
      %v1739 = vpop.f32.mrf.mxu0
      %1740 = vmatprep.mubr.f32.mxu0 %v1579
      %1741 = vmatmul.mubr.f32.gmra.mxu0 %v1388
      %v1742 = vpop.f32.mrf.mxu0
      %v1743 = vadd.f32 0.0, %v1742
      %v1744 = vpop.f32.mrf.mxu0
      %1745 = vmatprep.mubr.f32.mxu0 %v1582
      %1746 = vmatmul.mubr.f32.gmra.mxu0 %v1392
      %v1747 = vpop.f32.mrf.mxu0
      %v1748 = vadd.f32 0.0, %v1747
      %v1749 = vpop.f32.mrf.mxu0
      %1750 = vmatprep.mubr.f32.mxu0 %v1585
      %1751 = vmatmul.mubr.f32.gmra.mxu0 %v1396
      %v1752 = vpop.f32.mrf.mxu0
      %v1753 = vadd.f32 0.0, %v1752
      %v1754 = vpop.f32.mrf.mxu0
      %1755 = vmatprep.mubr.f32.mxu0 %v1588
      %1756 = vmatmul.mubr.f32.gmra.mxu0 %v1400
      %v1757 = vpop.f32.mrf.mxu0
      %v1758 = vadd.f32 0.0, %v1757
      %v1759 = vpop.f32.mrf.mxu0
      %1760 = vmatprep.mubr.f32.mxu0 %v1591
      %1761 = vmatmul.mubr.f32.gmra.mxu0 %v1404
      %v1762 = vpop.f32.mrf.mxu0
      %v1763 = vadd.f32 0.0, %v1762
      %v1764 = vpop.f32.mrf.mxu0
      %1765 = vmatprep.mubr.f32.mxu0 %v1594
      %1766 = vmatmul.mubr.f32.gmra.mxu0 %v1408
      %v1767 = vpop.f32.mrf.mxu0
      %v1768 = vadd.f32 0.0, %v1767
      %v1769 = vpop.f32.mrf.mxu0
      %1770 = vmatprep.mubr.f32.mxu0 %v1597
      %1771 = vmatmul.mubr.f32.gmra.mxu0 %v1412
      %v1772 = vpop.f32.mrf.mxu0
      %v1773 = vadd.f32 0.0, %v1772
      %v1774 = vpop.f32.mrf.mxu0
      %1775 = vmatprep.mubr.f32.mxu0 %v1600
      %1776 = vmatmul.mubr.f32.gmra.mxu0 %v1416
      %v1777 = vpop.f32.mrf.mxu0
      %v1778 = vadd.f32 0.0, %v1777
      %v1779 = vpop.f32.mrf.mxu0
      %1780 = vmatprep.mubr.f32.mxu0 %v1603
      %1781 = vmatmul.mubr.f32.gmra.mxu0 %v1420
      %v1782 = vpop.f32.mrf.mxu0
      %v1783 = vadd.f32 0.0, %v1782
      %v1784 = vpop.f32.mrf.mxu0
      %1785 = vmatprep.mubr.f32.mxu0 %v1606
      %1786 = vmatmul.mubr.f32.gmra.mxu0 %v1424
      %v1787 = vpop.f32.mrf.mxu0
      %v1788 = vadd.f32 0.0, %v1787
      %v1789 = vpop.f32.mrf.mxu0
      %1790 = vmatprep.mubr.f32.mxu0 %v1609
      %1791 = vmatmul.mubr.f32.gmra.mxu0 %v1428
      %v1792 = vpop.f32.mrf.mxu0
      %v1793 = vadd.f32 0.0, %v1792
      %v1794 = vpop.f32.mrf.mxu0
      %1795 = vmatprep.mubr.f32.mxu0 %v1612
      %1796 = vmatmul.mubr.f32.gmra.mxu0 %v1432
      %v1797 = vpop.f32.mrf.mxu0
      %v1798 = vadd.f32 0.0, %v1797
      %v1799 = vpop.f32.mrf.mxu0
      %1800 = vmatprep.mubr.f32.mxu0 %v1615
      %1801 = vmatmul.mubr.f32.gmra.mxu0 %v1436
      %v1802 = vpop.f32.mrf.mxu0
      %v1803 = vadd.f32 0.0, %v1802
      %v1804 = vpop.f32.mrf.mxu0
      %1805 = vmatprep.mubr.f32.mxu0 %v1618
      %1806 = vmatmul.mubr.f32.gmra.mxu0 %v1440
      %v1807 = vpop.f32.mrf.mxu0
      %v1808 = vadd.f32 0.0, %v1807
      %v1809 = vpop.f32.mrf.mxu0
      %1810 = vmatprep.mubr.f32.mxu0 %v1621
      %1811 = vmatmul.mubr.f32.gmra.mxu0 %v1444
      %v1812 = vpop.f32.mrf.mxu0
      %v1813 = vadd.f32 0.0, %v1812
      %v1814 = vpop.f32.mrf.mxu0
      %1815 = vdwg.mxu0
      %v1816 = vld [vmem:[#allocation2] sm:$0xff]
      %v1817 = vld [vmem:[#allocation2 + $0x8] sm:$0xff]
      %v1818 = vld [vmem:[#allocation2 + $0x10] sm:$0xff]
      %v1819 = vld [vmem:[#allocation2 + $0x18] sm:$0xff]
      %v1820 = vld [vmem:[#allocation2 + $0x20] sm:$0xff]
      %v1821 = vld [vmem:[#allocation2 + $0x28] sm:$0xff]
      %v1822 = vld [vmem:[#allocation2 + $0x30] sm:$0xff]
      %v1823 = vld [vmem:[#allocation2 + $0x38] sm:$0xff]
      %v1824 = vld [vmem:[#allocation2 + $0x40] sm:$0xff]
      %v1825 = vld [vmem:[#allocation2 + $0x48] sm:$0xff]
      %v1826 = vld [vmem:[#allocation2 + $0x50] sm:$0xff]
      %v1827 = vld [vmem:[#allocation2 + $0x58] sm:$0xff]
      %v1828 = vld [vmem:[#allocation2 + $0x60] sm:$0xff]
      %v1829 = vld [vmem:[#allocation2 + $0x68] sm:$0xff]
      %v1830 = vld [vmem:[#allocation2 + $0x70] sm:$0xff]
      %v1831 = vld [vmem:[#allocation2 + $0x78] sm:$0xff]
      %v1832 = vld [vmem:[#allocation2 + $0x80] sm:$0xff]
      %v1833 = vld [vmem:[#allocation2 + $0x88] sm:$0xff]
      %v1834 = vld [vmem:[#allocation2 + $0x90] sm:$0xff]
      %v1835 = vld [vmem:[#allocation2 + $0x98] sm:$0xff]
      %v1836 = vld [vmem:[#allocation2 + $0xa0] sm:$0xff]
      %v1837 = vld [vmem:[#allocation2 + $0xa8] sm:$0xff]
      %v1838 = vld [vmem:[#allocation2 + $0xb0] sm:$0xff]
      %v1839 = vld [vmem:[#allocation2 + $0xb8] sm:$0xff]
      %v1840 = vld [vmem:[#allocation2 + $0xc0] sm:$0xf]
      %v1841 = vrcp.pop %v1450
      %v1842 = vrcp.pop %v1454
      %v1843 = vrcp.pop %v1458
      %v1844 = vrcp.pop %v1462
      %v1845 = vrcp.pop %v1466
      %v1846 = vrcp.pop %v1470
      %v1847 = vrcp.pop %v1474
      %v1848 = vrcp.pop %v1478
      %v1849 = vrcp.pop %v1482
      %v1850 = vrcp.pop %v1486
      %v1851 = vrcp.pop %v1490
      %v1852 = vrcp.pop %v1494
      %v1853 = vrcp.pop %v1498
      %v1854 = vrcp.pop %v1502
      %v1855 = vrcp.pop %v1506
      %v1856 = vrcp.pop %v1510
      %v1857 = vrcp.pop %v1514
      %v1858 = vrcp.pop %v1518
      %v1859 = vrcp.pop %v1522
      %v1860 = vrcp.pop %v1526
      %v1861 = vrcp.pop %v1530
      %v1862 = vrcp.pop %v1534
      %v1863 = vrcp.pop %v1538
      %v1864 = vrcp.pop %v1542
      %v1865 = vrcp.pop %v1547
      %v1866 = vmul.f32 %v1693, %v1841
      %v1867 = vmul.f32 %v1698, %v1842
      %v1868 = vmul.f32 %v1703, %v1843
      %v1869 = vmul.f32 %v1708, %v1844
      %v1870 = vmul.f32 %v1713, %v1845
      %v1871 = vmul.f32 %v1718, %v1846
      %v1872 = vmul.f32 %v1723, %v1847
      %v1873 = vmul.f32 %v1728, %v1848
      %v1874 = vmul.f32 %v1733, %v1849
      %v1875 = vmul.f32 %v1738, %v1850
      %v1876 = vmul.f32 %v1743, %v1851
      %v1877 = vmul.f32 %v1748, %v1852
      %v1878 = vmul.f32 %v1753, %v1853
      %v1879 = vmul.f32 %v1758, %v1854
      %v1880 = vmul.f32 %v1763, %v1855
      %v1881 = vmul.f32 %v1768, %v1856
      %v1882 = vmul.f32 %v1773, %v1857
      %v1883 = vmul.f32 %v1778, %v1858
      %v1884 = vmul.f32 %v1783, %v1859
      %v1885 = vmul.f32 %v1788, %v1860
      %v1886 = vmul.f32 %v1793, %v1861
      %v1887 = vmul.f32 %v1798, %v1862
      %v1888 = vmul.f32 %v1803, %v1863
      %v1889 = vmul.f32 %v1808, %v1864
      %v1890 = vmul.f32 %v1813, %v1865
      %v1891 = vadd.f32 %v1816, %v1866
      %v1892 = vadd.f32 %v1817, %v1867
      %v1893 = vadd.f32 %v1818, %v1868
      %v1894 = vadd.f32 %v1819, %v1869
      %v1895 = vadd.f32 %v1820, %v1870
      %v1896 = vadd.f32 %v1821, %v1871
      %v1897 = vadd.f32 %v1822, %v1872
      %v1898 = vadd.f32 %v1823, %v1873
      %v1899 = vadd.f32 %v1824, %v1874
      %v1900 = vadd.f32 %v1825, %v1875
      %v1901 = vadd.f32 %v1826, %v1876
      %v1902 = vadd.f32 %v1827, %v1877
      %v1903 = vadd.f32 %v1828, %v1878
      %v1904 = vadd.f32 %v1829, %v1879
      %v1905 = vadd.f32 %v1830, %v1880
      %v1906 = vadd.f32 %v1831, %v1881
      %v1907 = vadd.f32 %v1832, %v1882
      %v1908 = vadd.f32 %v1833, %v1883
      %v1909 = vadd.f32 %v1834, %v1884
      %v1910 = vadd.f32 %v1835, %v1885
      %v1911 = vadd.f32 %v1836, %v1886
      %v1912 = vadd.f32 %v1837, %v1887
      %v1913 = vadd.f32 %v1838, %v1888
      %v1914 = vadd.f32 %v1839, %v1889
      %v1915 = vadd.f32 %v1840, %v1890
      %1916 = vst.msk [vmem:[#allocation2] sm:$0xff] %vm363, %v1891
      %1917 = vst.msk [vmem:[#allocation2 + $0x8] sm:$0xff] %vm363, %v1892
      %1918 = vst.msk [vmem:[#allocation2 + $0x10] sm:$0xff] %vm363, %v1893
      %1919 = vst.msk [vmem:[#allocation2 + $0x18] sm:$0xff] %vm363, %v1894
      %1920 = vst.msk [vmem:[#allocation2 + $0x20] sm:$0xff] %vm363, %v1895
      %1921 = vst.msk [vmem:[#allocation2 + $0x28] sm:$0xff] %vm363, %v1896
      %1922 = vst.msk [vmem:[#allocation2 + $0x30] sm:$0xff] %vm363, %v1897
      %1923 = vst.msk [vmem:[#allocation2 + $0x38] sm:$0xff] %vm363, %v1898
      %1924 = vst.msk [vmem:[#allocation2 + $0x40] sm:$0xff] %vm363, %v1899
      %1925 = vst.msk [vmem:[#allocation2 + $0x48] sm:$0xff] %vm363, %v1900
      %1926 = vst.msk [vmem:[#allocation2 + $0x50] sm:$0xff] %vm363, %v1901
      %1927 = vst.msk [vmem:[#allocation2 + $0x58] sm:$0xff] %vm363, %v1902
      %1928 = vst.msk [vmem:[#allocation2 + $0x60] sm:$0xff] %vm363, %v1903
      %1929 = vst.msk [vmem:[#allocation2 + $0x68] sm:$0xff] %vm363, %v1904
      %1930 = vst.msk [vmem:[#allocation2 + $0x70] sm:$0xff] %vm363, %v1905
      %1931 = vst.msk [vmem:[#allocation2 + $0x78] sm:$0xff] %vm363, %v1906
      %1932 = vst.msk [vmem:[#allocation2 + $0x80] sm:$0xff] %vm363, %v1907
      %1933 = vst.msk [vmem:[#allocation2 + $0x88] sm:$0xff] %vm363, %v1908
      %1934 = vst.msk [vmem:[#allocation2 + $0x90] sm:$0xff] %vm363, %v1909
      %1935 = vst.msk [vmem:[#allocation2 + $0x98] sm:$0xff] %vm363, %v1910
      %1936 = vst.msk [vmem:[#allocation2 + $0xa0] sm:$0xff] %vm363, %v1911
      %1937 = vst.msk [vmem:[#allocation2 + $0xa8] sm:$0xff] %vm363, %v1912
      %1938 = vst.msk [vmem:[#allocation2 + $0xb0] sm:$0xff] %vm363, %v1913
      %1939 = vst.msk [vmem:[#allocation2 + $0xb8] sm:$0xff] %vm363, %v1914
      %1940 = vst.msk [vmem:[#allocation2 + $0xc0] sm:$0xf] %vm901, %v1915
      %1941 = vrot.lane.b32.xlu0 %v506, 96
      %v1942 = vpop.permute.xlu0 %1941
      %1943 = vrot.lane.b32.xlu0 %v512, 96
      %v1944 = vpop.permute.xlu0 %1943
      %1945 = vrot.lane.b32.xlu0 %v518, 96
      %v1946 = vpop.permute.xlu0 %1945
      %1947 = vrot.lane.b32.xlu0 %v524, 96
      %v1948 = vpop.permute.xlu0 %1947
      %1949 = vrot.lane.b32.xlu0 %v530, 96
      %v1950 = vpop.permute.xlu0 %1949
      %1951 = vrot.lane.b32.xlu0 %v536, 96
      %v1952 = vpop.permute.xlu0 %1951
      %1953 = vrot.lane.b32.xlu0 %v542, 96
      %v1954 = vpop.permute.xlu0 %1953
      %1955 = vrot.lane.b32.xlu0 %v548, 96
      %v1956 = vpop.permute.xlu0 %1955
      %1957 = vrot.lane.b32.xlu0 %v554, 96
      %v1958 = vpop.permute.xlu0 %1957
      %1959 = vrot.lane.b32.xlu0 %v560, 96
      %v1960 = vpop.permute.xlu0 %1959
      %1961 = vrot.lane.b32.xlu0 %v566, 96
      %v1962 = vpop.permute.xlu0 %1961
      %1963 = vrot.lane.b32.xlu0 %v572, 96
      %v1964 = vpop.permute.xlu0 %1963
      %1965 = vrot.lane.b32.xlu0 %v578, 96
      %v1966 = vpop.permute.xlu0 %1965
      %1967 = vrot.lane.b32.xlu0 %v584, 96
      %v1968 = vpop.permute.xlu0 %1967
      %1969 = vrot.lane.b32.xlu0 %v590, 96
      %v1970 = vpop.permute.xlu0 %1969
      %1971 = vrot.lane.b32.xlu0 %v596, 96
      %v1972 = vpop.permute.xlu0 %1971
      %1973 = vrot.lane.b32.xlu0 %v602, 96
      %v1974 = vpop.permute.xlu0 %1973
      %1975 = vrot.lane.b32.xlu0 %v608, 96
      %v1976 = vpop.permute.xlu0 %1975
      %1977 = vrot.lane.b32.xlu0 %v614, 96
      %v1978 = vpop.permute.xlu0 %1977
      %1979 = vrot.lane.b32.xlu0 %v620, 96
      %v1980 = vpop.permute.xlu0 %1979
      %1981 = vrot.lane.b32.xlu0 %v626, 96
      %v1982 = vpop.permute.xlu0 %1981
      %1983 = vrot.lane.b32.xlu0 %v632, 96
      %v1984 = vpop.permute.xlu0 %1983
      %1985 = vrot.lane.b32.xlu0 %v638, 96
      %v1986 = vpop.permute.xlu0 %1985
      %1987 = vrot.lane.b32.xlu0 %v644, 96
      %v1988 = vpop.permute.xlu0 %1987
      %1989 = vrot.lane.b32.xlu0 %v650, 96
      %v1990 = vpop.permute.xlu0 %1989
      %v1991 = vsel %vm363, %v1942, 0
      %v1993 = vsel %vm363, %v1944, 0
      %v1995 = vsel %vm363, %v1946, 0
      %v1997 = vsel %vm363, %v1948, 0
      %v1999 = vsel %vm363, %v1950, 0
      %v2001 = vsel %vm363, %v1952, 0
      %v2003 = vsel %vm363, %v1954, 0
      %v2005 = vsel %vm363, %v1956, 0
      %v2007 = vsel %vm363, %v1958, 0
      %v2009 = vsel %vm363, %v1960, 0
      %v2011 = vsel %vm363, %v1962, 0
      %v2013 = vsel %vm363, %v1964, 0
      %v2015 = vsel %vm363, %v1966, 0
      %v2017 = vsel %vm363, %v1968, 0
      %v2019 = vsel %vm363, %v1970, 0
      %v2021 = vsel %vm363, %v1972, 0
      %v2023 = vsel %vm363, %v1974, 0
      %v2025 = vsel %vm363, %v1976, 0
      %v2027 = vsel %vm363, %v1978, 0
      %v2029 = vsel %vm363, %v1980, 0
      %v2031 = vsel %vm363, %v1982, 0
      %v2033 = vsel %vm363, %v1984, 0
      %v2035 = vsel %vm363, %v1986, 0
      %v2037 = vsel %vm363, %v1988, 0
      %v2039 = vsel %vm363, %v1990, 0
      %2041 = vmatprep.subr.mxu0 0.0
      %2042 = vmatpush1.msra.mxu0 0.0
      %2043 = vmatprep.subr.mxu0 0.0
      %2044 = vmatpush1.msra.mxu0 0.0
      %2045 = vmatprep.subr.mxu0 0.0
      %2046 = vmatpush1.msra.mxu0 0.0
      %2047 = vmatprep.subr.mxu0 0.0
      %2048 = vmatpush1.msra.mxu0 0.0
      %2049 = vmatprep.subr.mxu0 0.0
      %2050 = vmatpush1.msra.mxu0 0.0
      %2051 = vmatprep.subr.mxu0 0.0
      %2052 = vmatpush1.msra.mxu0 0.0
      %2053 = vmatprep.subr.mxu0 0.0
      %2054 = vmatpush1.msra.mxu0 0.0
      %2055 = vmatprep.subr.mxu0 0.0
      %2056 = vmatpush1.msra.mxu0 0.0
      %2057 = vmatprep.subr.mxu0 0.0
      %2058 = vmatpush1.msra.mxu0 0.0
      %2059 = vmatprep.subr.mxu0 0.0
      %2060 = vmatpush1.msra.mxu0 0.0
      %2061 = vmatprep.subr.mxu0 0.0
      %2062 = vmatpush1.msra.mxu0 0.0
      %2063 = vmatprep.subr.mxu0 0.0
      %2064 = vmatpush1.msra.mxu0 0.0
      %2065 = vmatprep.subr.mxu0 %v304
      %2066 = vmatpush1.msra.mxu0 %v303
      %2067 = vmatprep.subr.mxu0 %v302
      %2068 = vmatpush1.msra.mxu0 %v301
      %2069 = vmatprep.subr.mxu0 %v300
      %2070 = vmatpush1.msra.mxu0 %v299
      %2071 = vmatprep.subr.mxu0 %v298
      %2072 = vmatpush1.msra.mxu0 %v297
      %2073 = vmatprep.subr.mxu0 0.0
      %2074 = vmatpush2.msra.mxu0 0.0
      %2075 = vmatprep.subr.mxu0 0.0
      %2076 = vmatpush2.msra.mxu0 0.0
      %2077 = vmatprep.subr.mxu0 0.0
      %2078 = vmatpush2.msra.mxu0 0.0
      %2079 = vmatprep.subr.mxu0 0.0
      %2080 = vmatpush2.msra.mxu0 0.0
      %2081 = vmatprep.subr.mxu0 0.0
      %2082 = vmatpush2.msra.mxu0 0.0
      %2083 = vmatprep.subr.mxu0 0.0
      %2084 = vmatpush2.msra.mxu0 0.0
      %2085 = vmatprep.subr.mxu0 0.0
      %2086 = vmatpush2.msra.mxu0 0.0
      %2087 = vmatprep.subr.mxu0 0.0
      %2088 = vmatpush2.msra.mxu0 0.0
      %2089 = vmatprep.subr.mxu0 0.0
      %2090 = vmatpush2.msra.mxu0 0.0
      %2091 = vmatprep.subr.mxu0 0.0
      %2092 = vmatpush2.msra.mxu0 0.0
      %2093 = vmatprep.subr.mxu0 0.0
      %2094 = vmatpush2.msra.mxu0 0.0
      %2095 = vmatprep.subr.mxu0 0.0
      %2096 = vmatpush2.msra.mxu0 0.0
      %2097 = vmatprep.subr.mxu0 0.0
      %2098 = vmatpush2.msra.mxu0 0.0
      %2099 = vmatprep.subr.mxu0 0.0
      %2100 = vmatpush2.msra.mxu0 0.0
      %2101 = vmatprep.subr.mxu0 0.0
      %2102 = vmatpush2.msra.mxu0 0.0
      %2103 = vmatprep.subr.mxu0 0.0
      %2104 = vmatpush2.msra.mxu0 0.0
      %2105 = vmatprep.mubr.f32.mxu0 0.0
      %2106 = vmatmul.mubr.f32.gmra.mxu0 %v1991
      %v2107 = vpop.f32.mrf.mxu0
      %v2108 = vadd.f32 %v305, %v2107
      %v2109 = vpop.f32.mrf.mxu0
      %v2110 = vadd.f32 %v306, %v2109
      %2111 = vmatprep.mubr.f32.mxu0 0.0
      %2112 = vmatmul.mubr.f32.gmra.mxu0 %v1993
      %v2113 = vpop.f32.mrf.mxu0
      %v2114 = vadd.f32 %v307, %v2113
      %v2115 = vpop.f32.mrf.mxu0
      %v2116 = vadd.f32 %v308, %v2115
      %2117 = vmatprep.mubr.f32.mxu0 0.0
      %2118 = vmatmul.mubr.f32.gmra.mxu0 %v1995
      %v2119 = vpop.f32.mrf.mxu0
      %v2120 = vadd.f32 %v309, %v2119
      %v2121 = vpop.f32.mrf.mxu0
      %v2122 = vadd.f32 %v310, %v2121
      %2123 = vmatprep.mubr.f32.mxu0 0.0
      %2124 = vmatmul.mubr.f32.gmra.mxu0 %v1997
      %v2125 = vpop.f32.mrf.mxu0
      %v2126 = vadd.f32 %v311, %v2125
      %v2127 = vpop.f32.mrf.mxu0
      %v2128 = vadd.f32 %v312, %v2127
      %2129 = vmatprep.mubr.f32.mxu0 0.0
      %2130 = vmatmul.mubr.f32.gmra.mxu0 %v1999
      %v2131 = vpop.f32.mrf.mxu0
      %v2132 = vadd.f32 %v313, %v2131
      %v2133 = vpop.f32.mrf.mxu0
      %v2134 = vadd.f32 %v314, %v2133
      %2135 = vmatprep.mubr.f32.mxu0 0.0
      %2136 = vmatmul.mubr.f32.gmra.mxu0 %v2001
      %v2137 = vpop.f32.mrf.mxu0
      %v2138 = vadd.f32 %v315, %v2137
      %v2139 = vpop.f32.mrf.mxu0
      %v2140 = vadd.f32 %v316, %v2139
      %2141 = vmatprep.mubr.f32.mxu0 0.0
      %2142 = vmatmul.mubr.f32.gmra.mxu0 %v2003
      %v2143 = vpop.f32.mrf.mxu0
      %v2144 = vadd.f32 %v317, %v2143
      %v2145 = vpop.f32.mrf.mxu0
      %v2146 = vadd.f32 %v318, %v2145
      %2147 = vmatprep.mubr.f32.mxu0 0.0
      %2148 = vmatmul.mubr.f32.gmra.mxu0 %v2005
      %v2149 = vpop.f32.mrf.mxu0
      %v2150 = vadd.f32 %v319, %v2149
      %v2151 = vpop.f32.mrf.mxu0
      %v2152 = vadd.f32 %v320, %v2151
      %2153 = vmatprep.mubr.f32.mxu0 0.0
      %2154 = vmatmul.mubr.f32.gmra.mxu0 %v2007
      %v2155 = vpop.f32.mrf.mxu0
      %v2156 = vadd.f32 %v321, %v2155
      %v2157 = vpop.f32.mrf.mxu0
      %v2158 = vadd.f32 %v322, %v2157
      %2159 = vmatprep.mubr.f32.mxu0 0.0
      %2160 = vmatmul.mubr.f32.gmra.mxu0 %v2009
      %v2161 = vpop.f32.mrf.mxu0
      %v2162 = vadd.f32 %v323, %v2161
      %v2163 = vpop.f32.mrf.mxu0
      %v2164 = vadd.f32 %v324, %v2163
      %2165 = vmatprep.mubr.f32.mxu0 0.0
      %2166 = vmatmul.mubr.f32.gmra.mxu0 %v2011
      %v2167 = vpop.f32.mrf.mxu0
      %v2168 = vadd.f32 %v325, %v2167
      %v2169 = vpop.f32.mrf.mxu0
      %v2170 = vadd.f32 %v326, %v2169
      %2171 = vmatprep.mubr.f32.mxu0 0.0
      %2172 = vmatmul.mubr.f32.gmra.mxu0 %v2013
      %v2173 = vpop.f32.mrf.mxu0
      %v2174 = vadd.f32 %v327, %v2173
      %v2175 = vpop.f32.mrf.mxu0
      %v2176 = vadd.f32 %v328, %v2175
      %2177 = vmatprep.mubr.f32.mxu0 0.0
      %2178 = vmatmul.mubr.f32.gmra.mxu0 %v2015
      %v2179 = vpop.f32.mrf.mxu0
      %v2180 = vadd.f32 %v329, %v2179
      %v2181 = vpop.f32.mrf.mxu0
      %v2182 = vadd.f32 %v330, %v2181
      %2183 = vmatprep.mubr.f32.mxu0 0.0
      %2184 = vmatmul.mubr.f32.gmra.mxu0 %v2017
      %v2185 = vpop.f32.mrf.mxu0
      %v2186 = vadd.f32 %v331, %v2185
      %v2187 = vpop.f32.mrf.mxu0
      %v2188 = vadd.f32 %v332, %v2187
      %2189 = vmatprep.mubr.f32.mxu0 0.0
      %2190 = vmatmul.mubr.f32.gmra.mxu0 %v2019
      %v2191 = vpop.f32.mrf.mxu0
      %v2192 = vadd.f32 %v333, %v2191
      %v2193 = vpop.f32.mrf.mxu0
      %v2194 = vadd.f32 %v334, %v2193
      %2195 = vmatprep.mubr.f32.mxu0 0.0
      %2196 = vmatmul.mubr.f32.gmra.mxu0 %v2021
      %v2197 = vpop.f32.mrf.mxu0
      %v2198 = vadd.f32 %v335, %v2197
      %v2199 = vpop.f32.mrf.mxu0
      %v2200 = vadd.f32 %v336, %v2199
      %2201 = vmatprep.mubr.f32.mxu0 0.0
      %2202 = vmatmul.mubr.f32.gmra.mxu0 %v2023
      %v2203 = vpop.f32.mrf.mxu0
      %v2204 = vadd.f32 %v337, %v2203
      %v2205 = vpop.f32.mrf.mxu0
      %v2206 = vadd.f32 %v338, %v2205
      %2207 = vmatprep.mubr.f32.mxu0 0.0
      %2208 = vmatmul.mubr.f32.gmra.mxu0 %v2025
      %v2209 = vpop.f32.mrf.mxu0
      %v2210 = vadd.f32 %v339, %v2209
      %v2211 = vpop.f32.mrf.mxu0
      %v2212 = vadd.f32 %v340, %v2211
      %2213 = vmatprep.mubr.f32.mxu0 0.0
      %2214 = vmatmul.mubr.f32.gmra.mxu0 %v2027
      %v2215 = vpop.f32.mrf.mxu0
      %v2216 = vadd.f32 %v341, %v2215
      %v2217 = vpop.f32.mrf.mxu0
      %v2218 = vadd.f32 %v342, %v2217
      %2219 = vmatprep.mubr.f32.mxu0 0.0
      %2220 = vmatmul.mubr.f32.gmra.mxu0 %v2029
      %v2221 = vpop.f32.mrf.mxu0
      %v2222 = vadd.f32 %v343, %v2221
      %v2223 = vpop.f32.mrf.mxu0
      %v2224 = vadd.f32 %v344, %v2223
      %2225 = vmatprep.mubr.f32.mxu0 0.0
      %2226 = vmatmul.mubr.f32.gmra.mxu0 %v2031
      %v2227 = vpop.f32.mrf.mxu0
      %v2228 = vadd.f32 %v345, %v2227
      %v2229 = vpop.f32.mrf.mxu0
      %v2230 = vadd.f32 %v346, %v2229
      %2231 = vmatprep.mubr.f32.mxu0 0.0
      %2232 = vmatmul.mubr.f32.gmra.mxu0 %v2033
      %v2233 = vpop.f32.mrf.mxu0
      %v2234 = vadd.f32 %v347, %v2233
      %v2235 = vpop.f32.mrf.mxu0
      %v2236 = vadd.f32 %v348, %v2235
      %2237 = vmatprep.mubr.f32.mxu0 0.0
      %2238 = vmatmul.mubr.f32.gmra.mxu0 %v2035
      %v2239 = vpop.f32.mrf.mxu0
      %v2240 = vadd.f32 %v349, %v2239
      %v2241 = vpop.f32.mrf.mxu0
      %v2242 = vadd.f32 %v350, %v2241
      %2243 = vmatprep.mubr.f32.mxu0 0.0
      %2244 = vmatmul.mubr.f32.gmra.mxu0 %v2037
      %v2245 = vpop.f32.mrf.mxu0
      %v2246 = vadd.f32 %v351, %v2245
      %v2247 = vpop.f32.mrf.mxu0
      %v2248 = vadd.f32 %v352, %v2247
      %2249 = vmatprep.mubr.f32.mxu0 0.0
      %2250 = vmatmul.mubr.f32.gmra.mxu0 %v2039
      %v2251 = vpop.f32.mrf.mxu0
      %v2252 = vadd.f32 %v353, %v2251
      %v2253 = vpop.f32.mrf.mxu0
      %v2254 = vadd.f32 %v354, %v2253
      %2255 = vdwg.mxu0
      %v2256 = vsel %vm1193, %v2110, -inf
      %v2257 = vmax.f32 %v2108, %v2256
      %2258 = vmax.xlane.f32.xlu0 %v2257
      %v2259 = vpop.xlane.xlu0 %2258
      %v2260 = vsel %vm1193, %v2116, -inf
      %v2261 = vmax.f32 %v2114, %v2260
      %2262 = vmax.xlane.f32.xlu0 %v2261
      %v2263 = vpop.xlane.xlu0 %2262
      %v2264 = vsel %vm1193, %v2122, -inf
      %v2265 = vmax.f32 %v2120, %v2264
      %2266 = vmax.xlane.f32.xlu0 %v2265
      %v2267 = vpop.xlane.xlu0 %2266
      %v2268 = vsel %vm1193, %v2128, -inf
      %v2269 = vmax.f32 %v2126, %v2268
      %2270 = vmax.xlane.f32.xlu0 %v2269
      %v2271 = vpop.xlane.xlu0 %2270
      %v2272 = vsel %vm1193, %v2134, -inf
      %v2273 = vmax.f32 %v2132, %v2272
      %2274 = vmax.xlane.f32.xlu0 %v2273
      %v2275 = vpop.xlane.xlu0 %2274
      %v2276 = vsel %vm1193, %v2140, -inf
      %v2277 = vmax.f32 %v2138, %v2276
      %2278 = vmax.xlane.f32.xlu0 %v2277
      %v2279 = vpop.xlane.xlu0 %2278
      %v2280 = vsel %vm1193, %v2146, -inf
      %v2281 = vmax.f32 %v2144, %v2280
      %2282 = vmax.xlane.f32.xlu0 %v2281
      %v2283 = vpop.xlane.xlu0 %2282
      %v2284 = vsel %vm1193, %v2152, -inf
      %v2285 = vmax.f32 %v2150, %v2284
      %2286 = vmax.xlane.f32.xlu0 %v2285
      %v2287 = vpop.xlane.xlu0 %2286
      %v2288 = vsel %vm1193, %v2158, -inf
      %v2289 = vmax.f32 %v2156, %v2288
      %2290 = vmax.xlane.f32.xlu0 %v2289
      %v2291 = vpop.xlane.xlu0 %2290
      %v2292 = vsel %vm1193, %v2164, -inf
      %v2293 = vmax.f32 %v2162, %v2292
      %2294 = vmax.xlane.f32.xlu0 %v2293
      %v2295 = vpop.xlane.xlu0 %2294
      %v2296 = vsel %vm1193, %v2170, -inf
      %v2297 = vmax.f32 %v2168, %v2296
      %2298 = vmax.xlane.f32.xlu0 %v2297
      %v2299 = vpop.xlane.xlu0 %2298
      %v2300 = vsel %vm1193, %v2176, -inf
      %v2301 = vmax.f32 %v2174, %v2300
      %2302 = vmax.xlane.f32.xlu0 %v2301
      %v2303 = vpop.xlane.xlu0 %2302
      %v2304 = vsel %vm1193, %v2182, -inf
      %v2305 = vmax.f32 %v2180, %v2304
      %2306 = vmax.xlane.f32.xlu0 %v2305
      %v2307 = vpop.xlane.xlu0 %2306
      %v2308 = vsel %vm1193, %v2188, -inf
      %v2309 = vmax.f32 %v2186, %v2308
      %2310 = vmax.xlane.f32.xlu0 %v2309
      %v2311 = vpop.xlane.xlu0 %2310
      %v2312 = vsel %vm1193, %v2194, -inf
      %v2313 = vmax.f32 %v2192, %v2312
      %2314 = vmax.xlane.f32.xlu0 %v2313
      %v2315 = vpop.xlane.xlu0 %2314
      %v2316 = vsel %vm1193, %v2200, -inf
      %v2317 = vmax.f32 %v2198, %v2316
      %2318 = vmax.xlane.f32.xlu0 %v2317
      %v2319 = vpop.xlane.xlu0 %2318
      %v2320 = vsel %vm1193, %v2206, -inf
      %v2321 = vmax.f32 %v2204, %v2320
      %2322 = vmax.xlane.f32.xlu0 %v2321
      %v2323 = vpop.xlane.xlu0 %2322
      %v2324 = vsel %vm1193, %v2212, -inf
      %v2325 = vmax.f32 %v2210, %v2324
      %2326 = vmax.xlane.f32.xlu0 %v2325
      %v2327 = vpop.xlane.xlu0 %2326
      %v2328 = vsel %vm1193, %v2218, -inf
      %v2329 = vmax.f32 %v2216, %v2328
      %2330 = vmax.xlane.f32.xlu0 %v2329
      %v2331 = vpop.xlane.xlu0 %2330
      %v2332 = vsel %vm1193, %v2224, -inf
      %v2333 = vmax.f32 %v2222, %v2332
      %2334 = vmax.xlane.f32.xlu0 %v2333
      %v2335 = vpop.xlane.xlu0 %2334
      %v2336 = vsel %vm1193, %v2230, -inf
      %v2337 = vmax.f32 %v2228, %v2336
      %2338 = vmax.xlane.f32.xlu0 %v2337
      %v2339 = vpop.xlane.xlu0 %2338
      %v2340 = vsel %vm1193, %v2236, -inf
      %v2341 = vmax.f32 %v2234, %v2340
      %2342 = vmax.xlane.f32.xlu0 %v2341
      %v2343 = vpop.xlane.xlu0 %2342
      %v2344 = vsel %vm1193, %v2242, -inf
      %v2345 = vmax.f32 %v2240, %v2344
      %2346 = vmax.xlane.f32.xlu0 %v2345
      %v2347 = vpop.xlane.xlu0 %2346
      %v2348 = vsel %vm1193, %v2248, -inf
      %v2349 = vmax.f32 %v2246, %v2348
      %2350 = vmax.xlane.f32.xlu0 %v2349
      %v2351 = vpop.xlane.xlu0 %2350
      %v2352 = vsel %vm1290, %v2252, -inf
      %v2353 = vsel %vm1292, %v2254, -inf
      %v2354 = vmax.f32 %v2352, %v2353
      %2355 = vmax.xlane.f32.xlu0 %v2354
      %v2356 = vpop.xlane.xlu0 %2355
      %v2357 = vsub.f32 %v2108, %v2259
      %v2358 = vsub.f32 %v2110, %v2259
      %v2359 = vsub.f32 %v2114, %v2263
      %v2360 = vsub.f32 %v2116, %v2263
      %v2361 = vsub.f32 %v2120, %v2267
      %v2362 = vsub.f32 %v2122, %v2267
      %v2363 = vsub.f32 %v2126, %v2271
      %v2364 = vsub.f32 %v2128, %v2271
      %v2365 = vsub.f32 %v2132, %v2275
      %v2366 = vsub.f32 %v2134, %v2275
      %v2367 = vsub.f32 %v2138, %v2279
      %v2368 = vsub.f32 %v2140, %v2279
      %v2369 = vsub.f32 %v2144, %v2283
      %v2370 = vsub.f32 %v2146, %v2283
      %v2371 = vsub.f32 %v2150, %v2287
      %v2372 = vsub.f32 %v2152, %v2287
      %v2373 = vsub.f32 %v2156, %v2291
      %v2374 = vsub.f32 %v2158, %v2291
      %v2375 = vsub.f32 %v2162, %v2295
      %v2376 = vsub.f32 %v2164, %v2295
      %v2377 = vsub.f32 %v2168, %v2299
      %v2378 = vsub.f32 %v2170, %v2299
      %v2379 = vsub.f32 %v2174, %v2303
      %v2380 = vsub.f32 %v2176, %v2303
      %v2381 = vsub.f32 %v2180, %v2307
      %v2382 = vsub.f32 %v2182, %v2307
      %v2383 = vsub.f32 %v2186, %v2311
      %v2384 = vsub.f32 %v2188, %v2311
      %v2385 = vsub.f32 %v2192, %v2315
      %v2386 = vsub.f32 %v2194, %v2315
      %v2387 = vsub.f32 %v2198, %v2319
      %v2388 = vsub.f32 %v2200, %v2319
      %v2389 = vsub.f32 %v2204, %v2323
      %v2390 = vsub.f32 %v2206, %v2323
      %v2391 = vsub.f32 %v2210, %v2327
      %v2392 = vsub.f32 %v2212, %v2327
      %v2393 = vsub.f32 %v2216, %v2331
      %v2394 = vsub.f32 %v2218, %v2331
      %v2395 = vsub.f32 %v2222, %v2335
      %v2396 = vsub.f32 %v2224, %v2335
      %v2397 = vsub.f32 %v2228, %v2339
      %v2398 = vsub.f32 %v2230, %v2339
      %v2399 = vsub.f32 %v2234, %v2343
      %v2400 = vsub.f32 %v2236, %v2343
      %v2401 = vsub.f32 %v2240, %v2347
      %v2402 = vsub.f32 %v2242, %v2347
      %v2403 = vsub.f32 %v2246, %v2351
      %v2404 = vsub.f32 %v2248, %v2351
      %v2405 = vsub.f32 %v2252, %v2356
      %v2406 = vsub.f32 %v2254, %v2356
      %v2407 = vmul.f32 %v2357, 1.442695
      %v2408 = vpow.pop %v2407
      %v2409 = vmul.f32 %v2358, 1.442695
      %v2410 = vpow.pop %v2409
      %v2411 = vmul.f32 %v2359, 1.442695
      %v2412 = vpow.pop %v2411
      %v2413 = vmul.f32 %v2360, 1.442695
      %v2414 = vpow.pop %v2413
      %v2415 = vmul.f32 %v2361, 1.442695
      %v2416 = vpow.pop %v2415
      %v2417 = vmul.f32 %v2362, 1.442695
      %v2418 = vpow.pop %v2417
      %v2419 = vmul.f32 %v2363, 1.442695
      %v2420 = vpow.pop %v2419
      %v2421 = vmul.f32 %v2364, 1.442695
      %v2422 = vpow.pop %v2421
      %v2423 = vmul.f32 %v2365, 1.442695
      %v2424 = vpow.pop %v2423
      %v2425 = vmul.f32 %v2366, 1.442695
      %v2426 = vpow.pop %v2425
      %v2427 = vmul.f32 %v2367, 1.442695
      %v2428 = vpow.pop %v2427
      %v2429 = vmul.f32 %v2368, 1.442695
      %v2430 = vpow.pop %v2429
      %v2431 = vmul.f32 %v2369, 1.442695
      %v2432 = vpow.pop %v2431
      %v2433 = vmul.f32 %v2370, 1.442695
      %v2434 = vpow.pop %v2433
      %v2435 = vmul.f32 %v2371, 1.442695
      %v2436 = vpow.pop %v2435
      %v2437 = vmul.f32 %v2372, 1.442695
      %v2438 = vpow.pop %v2437
      %v2439 = vmul.f32 %v2373, 1.442695
      %v2440 = vpow.pop %v2439
      %v2441 = vmul.f32 %v2374, 1.442695
      %v2442 = vpow.pop %v2441
      %v2443 = vmul.f32 %v2375, 1.442695
      %v2444 = vpow.pop %v2443
      %v2445 = vmul.f32 %v2376, 1.442695
      %v2446 = vpow.pop %v2445
      %v2447 = vmul.f32 %v2377, 1.442695
      %v2448 = vpow.pop %v2447
      %v2449 = vmul.f32 %v2378, 1.442695
      %v2450 = vpow.pop %v2449
      %v2451 = vmul.f32 %v2379, 1.442695
      %v2452 = vpow.pop %v2451
      %v2453 = vmul.f32 %v2380, 1.442695
      %v2454 = vpow.pop %v2453
      %v2455 = vmul.f32 %v2381, 1.442695
      %v2456 = vpow.pop %v2455
      %v2457 = vmul.f32 %v2382, 1.442695
      %v2458 = vpow.pop %v2457
      %v2459 = vmul.f32 %v2383, 1.442695
      %v2460 = vpow.pop %v2459
      %v2461 = vmul.f32 %v2384, 1.442695
      %v2462 = vpow.pop %v2461
      %v2463 = vmul.f32 %v2385, 1.442695
      %v2464 = vpow.pop %v2463
      %v2465 = vmul.f32 %v2386, 1.442695
      %v2466 = vpow.pop %v2465
      %v2467 = vmul.f32 %v2387, 1.442695
      %v2468 = vpow.pop %v2467
      %v2469 = vmul.f32 %v2388, 1.442695
      %v2470 = vpow.pop %v2469
      %v2471 = vmul.f32 %v2389, 1.442695
      %v2472 = vpow.pop %v2471
      %v2473 = vmul.f32 %v2390, 1.442695
      %v2474 = vpow.pop %v2473
      %v2475 = vmul.f32 %v2391, 1.442695
      %v2476 = vpow.pop %v2475
      %v2477 = vmul.f32 %v2392, 1.442695
      %v2478 = vpow.pop %v2477
      %v2479 = vmul.f32 %v2393, 1.442695
      %v2480 = vpow.pop %v2479
      %v2481 = vmul.f32 %v2394, 1.442695
      %v2482 = vpow.pop %v2481
      %v2483 = vmul.f32 %v2395, 1.442695
      %v2484 = vpow.pop %v2483
      %v2485 = vmul.f32 %v2396, 1.442695
      %v2486 = vpow.pop %v2485
      %v2487 = vmul.f32 %v2397, 1.442695
      %v2488 = vpow.pop %v2487
      %v2489 = vmul.f32 %v2398, 1.442695
      %v2490 = vpow.pop %v2489
      %v2491 = vmul.f32 %v2399, 1.442695
      %v2492 = vpow.pop %v2491
      %v2493 = vmul.f32 %v2400, 1.442695
      %v2494 = vpow.pop %v2493
      %v2495 = vmul.f32 %v2401, 1.442695
      %v2496 = vpow.pop %v2495
      %v2497 = vmul.f32 %v2402, 1.442695
      %v2498 = vpow.pop %v2497
      %v2499 = vmul.f32 %v2403, 1.442695
      %v2500 = vpow.pop %v2499
      %v2501 = vmul.f32 %v2404, 1.442695
      %v2502 = vpow.pop %v2501
      %v2503 = vmul.f32 %v2405, 1.442695
      %v2504 = vpow.pop %v2503
      %v2505 = vmul.f32 %v2406, 1.442695
      %v2506 = vpow.pop %v2505
      %v2507 = vsel %vm1193, %v2410, 0.0
      %v2508 = vadd.f32 %v2408, %v2507
      %2509 = vadd.xlane.f32.xlu0 %v2508
      %v2510 = vpop.xlane.xlu0 %2509
      %v2511 = vsel %vm1193, %v2414, 0.0
      %v2512 = vadd.f32 %v2412, %v2511
      %2513 = vadd.xlane.f32.xlu0 %v2512
      %v2514 = vpop.xlane.xlu0 %2513
      %v2515 = vsel %vm1193, %v2418, 0.0
      %v2516 = vadd.f32 %v2416, %v2515
      %2517 = vadd.xlane.f32.xlu0 %v2516
      %v2518 = vpop.xlane.xlu0 %2517
      %v2519 = vsel %vm1193, %v2422, 0.0
      %v2520 = vadd.f32 %v2420, %v2519
      %2521 = vadd.xlane.f32.xlu0 %v2520
      %v2522 = vpop.xlane.xlu0 %2521
      %v2523 = vsel %vm1193, %v2426, 0.0
      %v2524 = vadd.f32 %v2424, %v2523
      %2525 = vadd.xlane.f32.xlu0 %v2524
      %v2526 = vpop.xlane.xlu0 %2525
      %v2527 = vsel %vm1193, %v2430, 0.0
      %v2528 = vadd.f32 %v2428, %v2527
      %2529 = vadd.xlane.f32.xlu0 %v2528
      %v2530 = vpop.xlane.xlu0 %2529
      %v2531 = vsel %vm1193, %v2434, 0.0
      %v2532 = vadd.f32 %v2432, %v2531
      %2533 = vadd.xlane.f32.xlu0 %v2532
      %v2534 = vpop.xlane.xlu0 %2533
      %v2535 = vsel %vm1193, %v2438, 0.0
      %v2536 = vadd.f32 %v2436, %v2535
      %2537 = vadd.xlane.f32.xlu0 %v2536
      %v2538 = vpop.xlane.xlu0 %2537
      %v2539 = vsel %vm1193, %v2442, 0.0
      %v2540 = vadd.f32 %v2440, %v2539
      %2541 = vadd.xlane.f32.xlu0 %v2540
      %v2542 = vpop.xlane.xlu0 %2541
      %v2543 = vsel %vm1193, %v2446, 0.0
      %v2544 = vadd.f32 %v2444, %v2543
      %2545 = vadd.xlane.f32.xlu0 %v2544
      %v2546 = vpop.xlane.xlu0 %2545
      %v2547 = vsel %vm1193, %v2450, 0.0
      %v2548 = vadd.f32 %v2448, %v2547
      %2549 = vadd.xlane.f32.xlu0 %v2548
      %v2550 = vpop.xlane.xlu0 %2549
      %v2551 = vsel %vm1193, %v2454, 0.0
      %v2552 = vadd.f32 %v2452, %v2551
      %2553 = vadd.xlane.f32.xlu0 %v2552
      %v2554 = vpop.xlane.xlu0 %2553
      %v2555 = vsel %vm1193, %v2458, 0.0
      %v2556 = vadd.f32 %v2456, %v2555
      %2557 = vadd.xlane.f32.xlu0 %v2556
      %v2558 = vpop.xlane.xlu0 %2557
      %v2559 = vsel %vm1193, %v2462, 0.0
      %v2560 = vadd.f32 %v2460, %v2559
      %2561 = vadd.xlane.f32.xlu0 %v2560
      %v2562 = vpop.xlane.xlu0 %2561
      %v2563 = vsel %vm1193, %v2466, 0.0
      %v2564 = vadd.f32 %v2464, %v2563
      %2565 = vadd.xlane.f32.xlu0 %v2564
      %v2566 = vpop.xlane.xlu0 %2565
      %v2567 = vsel %vm1193, %v2470, 0.0
      %v2568 = vadd.f32 %v2468, %v2567
      %2569 = vadd.xlane.f32.xlu0 %v2568
      %v2570 = vpop.xlane.xlu0 %2569
      %v2571 = vsel %vm1193, %v2474, 0.0
      %v2572 = vadd.f32 %v2472, %v2571
      %2573 = vadd.xlane.f32.xlu0 %v2572
      %v2574 = vpop.xlane.xlu0 %2573
      %v2575 = vsel %vm1193, %v2478, 0.0
      %v2576 = vadd.f32 %v2476, %v2575
      %2577 = vadd.xlane.f32.xlu0 %v2576
      %v2578 = vpop.xlane.xlu0 %2577
      %v2579 = vsel %vm1193, %v2482, 0.0
      %v2580 = vadd.f32 %v2480, %v2579
      %2581 = vadd.xlane.f32.xlu0 %v2580
      %v2582 = vpop.xlane.xlu0 %2581
      %v2583 = vsel %vm1193, %v2486, 0.0
      %v2584 = vadd.f32 %v2484, %v2583
      %2585 = vadd.xlane.f32.xlu0 %v2584
      %v2586 = vpop.xlane.xlu0 %2585
      %v2587 = vsel %vm1193, %v2490, 0.0
      %v2588 = vadd.f32 %v2488, %v2587
      %2589 = vadd.xlane.f32.xlu0 %v2588
      %v2590 = vpop.xlane.xlu0 %2589
      %v2591 = vsel %vm1193, %v2494, 0.0
      %v2592 = vadd.f32 %v2492, %v2591
      %2593 = vadd.xlane.f32.xlu0 %v2592
      %v2594 = vpop.xlane.xlu0 %2593
      %v2595 = vsel %vm1193, %v2498, 0.0
      %v2596 = vadd.f32 %v2496, %v2595
      %2597 = vadd.xlane.f32.xlu0 %v2596
      %v2598 = vpop.xlane.xlu0 %2597
      %v2599 = vsel %vm1193, %v2502, 0.0
      %v2600 = vadd.f32 %v2500, %v2599
      %2601 = vadd.xlane.f32.xlu0 %v2600
      %v2602 = vpop.xlane.xlu0 %2601
      %v2603 = vsel %vm1290, %v2504, 0.0
      %v2604 = vsel %vm1292, %v2506, 0.0
      %v2605 = vadd.f32 %v2603, %v2604
      %2606 = vadd.xlane.f32.xlu0 %v2605
      %v2607 = vpop.xlane.xlu0 %2606
      %2632 = vrot.lane.b32.xlu0 %v729, 96
      %v2633 = vpop.permute.xlu0 %2632
      %2634 = vrot.lane.b32.xlu0 %v735, 96
      %v2635 = vpop.permute.xlu0 %2634
      %2636 = vrot.lane.b32.xlu0 %v741, 96
      %v2637 = vpop.permute.xlu0 %2636
      %2638 = vrot.lane.b32.xlu0 %v747, 96
      %v2639 = vpop.permute.xlu0 %2638
      %2640 = vrot.lane.b32.xlu0 %v753, 96
      %v2641 = vpop.permute.xlu0 %2640
      %2642 = vrot.lane.b32.xlu0 %v759, 96
      %v2643 = vpop.permute.xlu0 %2642
      %2644 = vrot.lane.b32.xlu0 %v765, 96
      %v2645 = vpop.permute.xlu0 %2644
      %2646 = vrot.lane.b32.xlu0 %v771, 96
      %v2647 = vpop.permute.xlu0 %2646
      %2648 = vrot.lane.b32.xlu0 %v777, 96
      %v2649 = vpop.permute.xlu0 %2648
      %2650 = vrot.lane.b32.xlu0 %v783, 96
      %v2651 = vpop.permute.xlu0 %2650
      %2652 = vrot.lane.b32.xlu0 %v789, 96
      %v2653 = vpop.permute.xlu0 %2652
      %2654 = vrot.lane.b32.xlu0 %v795, 96
      %v2655 = vpop.permute.xlu0 %2654
      %2656 = vrot.lane.b32.xlu0 %v801, 96
      %v2657 = vpop.permute.xlu0 %2656
      %2658 = vrot.lane.b32.xlu0 %v807, 96
      %v2659 = vpop.permute.xlu0 %2658
      %2660 = vrot.lane.b32.xlu0 %v813, 96
      %v2661 = vpop.permute.xlu0 %2660
      %2662 = vrot.lane.b32.xlu0 %v819, 96
      %v2663 = vpop.permute.xlu0 %2662
      %2664 = vrot.lane.b32.xlu0 %v825, 96
      %v2665 = vpop.permute.xlu0 %2664
      %2666 = vrot.lane.b32.xlu0 %v831, 96
      %v2667 = vpop.permute.xlu0 %2666
      %2668 = vrot.lane.b32.xlu0 %v837, 96
      %v2669 = vpop.permute.xlu0 %2668
      %2670 = vrot.lane.b32.xlu0 %v843, 96
      %v2671 = vpop.permute.xlu0 %2670
      %2672 = vrot.lane.b32.xlu0 %v849, 96
      %v2673 = vpop.permute.xlu0 %2672
      %2674 = vrot.lane.b32.xlu0 %v855, 96
      %v2675 = vpop.permute.xlu0 %2674
      %2676 = vrot.lane.b32.xlu0 %v861, 96
      %v2677 = vpop.permute.xlu0 %2676
      %2678 = vrot.lane.b32.xlu0 %v867, 96
      %v2679 = vpop.permute.xlu0 %2678
      %2680 = vrot.lane.b32.xlu0 %v873, 96
      %v2681 = vpop.permute.xlu0 %2680
      %v2707 = vsel %vm1193, %v2410, 0
      %v2710 = vsel %vm1193, %v2414, 0
      %v2713 = vsel %vm1193, %v2418, 0
      %v2716 = vsel %vm1193, %v2422, 0
      %v2719 = vsel %vm1193, %v2426, 0
      %v2722 = vsel %vm1193, %v2430, 0
      %v2725 = vsel %vm1193, %v2434, 0
      %v2728 = vsel %vm1193, %v2438, 0
      %v2731 = vsel %vm1193, %v2442, 0
      %v2734 = vsel %vm1193, %v2446, 0
      %v2737 = vsel %vm1193, %v2450, 0
      %v2740 = vsel %vm1193, %v2454, 0
      %v2743 = vsel %vm1193, %v2458, 0
      %v2746 = vsel %vm1193, %v2462, 0
      %v2749 = vsel %vm1193, %v2466, 0
      %v2752 = vsel %vm1193, %v2470, 0
      %v2755 = vsel %vm1193, %v2474, 0
      %v2758 = vsel %vm1193, %v2478, 0
      %v2761 = vsel %vm1193, %v2482, 0
      %v2764 = vsel %vm1193, %v2486, 0
      %v2767 = vsel %vm1193, %v2490, 0
      %v2770 = vsel %vm1193, %v2494, 0
      %v2773 = vsel %vm1193, %v2498, 0
      %v2776 = vsel %vm1193, %v2502, 0
      %v2779 = vsel %vm1193, %v2506, 0
      %v2781 = vsel %vm1290, %v2681, 0
      %2783 = vmatprep.subr.mxu0 0.0
      %2784 = vmatpush1.msra.mxu0 %v2663
      %2785 = vmatprep.subr.mxu0 0.0
      %2786 = vmatpush1.msra.mxu0 %v2661
      %2787 = vmatprep.subr.mxu0 0.0
      %2788 = vmatpush1.msra.mxu0 %v2659
      %2789 = vmatprep.subr.mxu0 0.0
      %2790 = vmatpush1.msra.mxu0 %v2657
      %2791 = vmatprep.subr.mxu0 0.0
      %2792 = vmatpush1.msra.mxu0 %v2655
      %2793 = vmatprep.subr.mxu0 0.0
      %2794 = vmatpush1.msra.mxu0 %v2653
      %2795 = vmatprep.subr.mxu0 0.0
      %2796 = vmatpush1.msra.mxu0 %v2651
      %2797 = vmatprep.subr.mxu0 0.0
      %2798 = vmatpush1.msra.mxu0 %v2649
      %2799 = vmatprep.subr.mxu0 0.0
      %2800 = vmatpush1.msra.mxu0 %v2647
      %2801 = vmatprep.subr.mxu0 0.0
      %2802 = vmatpush1.msra.mxu0 %v2645
      %2803 = vmatprep.subr.mxu0 0.0
      %2804 = vmatpush1.msra.mxu0 %v2643
      %2805 = vmatprep.subr.mxu0 0.0
      %2806 = vmatpush1.msra.mxu0 %v2641
      %2807 = vmatprep.subr.mxu0 0.0
      %2808 = vmatpush1.msra.mxu0 %v2639
      %2809 = vmatprep.subr.mxu0 0.0
      %2810 = vmatpush1.msra.mxu0 %v2637
      %2811 = vmatprep.subr.mxu0 0.0
      %2812 = vmatpush1.msra.mxu0 %v2635
      %2813 = vmatprep.subr.mxu0 0.0
      %2814 = vmatpush1.msra.mxu0 %v2633
      %2815 = vmatprep.subr.mxu0 0.0
      %2816 = vmatpush2.msra.mxu0 0.0
      %2817 = vmatprep.subr.mxu0 0.0
      %2818 = vmatpush2.msra.mxu0 0.0
      %2819 = vmatprep.subr.mxu0 0.0
      %2820 = vmatpush2.msra.mxu0 0.0
      %2821 = vmatprep.subr.mxu0 0.0
      %2822 = vmatpush2.msra.mxu0 0.0
      %2823 = vmatprep.subr.mxu0 0.0
      %2824 = vmatpush2.msra.mxu0 0.0
      %2825 = vmatprep.subr.mxu0 0.0
      %2826 = vmatpush2.msra.mxu0 0.0
      %2827 = vmatprep.subr.mxu0 0.0
      %2828 = vmatpush2.msra.mxu0 0.0
      %2829 = vmatprep.subr.mxu0 0.0
      %2830 = vmatpush2.msra.mxu0 %v2781
      %2831 = vmatprep.subr.mxu0 0.0
      %2832 = vmatpush2.msra.mxu0 %v2679
      %2833 = vmatprep.subr.mxu0 0.0
      %2834 = vmatpush2.msra.mxu0 %v2677
      %2835 = vmatprep.subr.mxu0 0.0
      %2836 = vmatpush2.msra.mxu0 %v2675
      %2837 = vmatprep.subr.mxu0 0.0
      %2838 = vmatpush2.msra.mxu0 %v2673
      %2839 = vmatprep.subr.mxu0 0.0
      %2840 = vmatpush2.msra.mxu0 %v2671
      %2841 = vmatprep.subr.mxu0 0.0
      %2842 = vmatpush2.msra.mxu0 %v2669
      %2843 = vmatprep.subr.mxu0 0.0
      %2844 = vmatpush2.msra.mxu0 %v2667
      %2845 = vmatprep.subr.mxu0 0.0
      %2846 = vmatpush2.msra.mxu0 %v2665
      %2847 = vmatprep.mubr.f32.mxu0 %v2707
      %2848 = vmatmul.mubr.f32.gmra.mxu0 %v2408
      %v2849 = vpop.f32.mrf.mxu0
      %v2850 = vadd.f32 0.0, %v2849
      %v2851 = vpop.f32.mrf.mxu0
      %2852 = vmatprep.mubr.f32.mxu0 %v2710
      %2853 = vmatmul.mubr.f32.gmra.mxu0 %v2412
      %v2854 = vpop.f32.mrf.mxu0
      %v2855 = vadd.f32 0.0, %v2854
      %v2856 = vpop.f32.mrf.mxu0
      %2857 = vmatprep.mubr.f32.mxu0 %v2713
      %2858 = vmatmul.mubr.f32.gmra.mxu0 %v2416
      %v2859 = vpop.f32.mrf.mxu0
      %v2860 = vadd.f32 0.0, %v2859
      %v2861 = vpop.f32.mrf.mxu0
      %2862 = vmatprep.mubr.f32.mxu0 %v2716
      %2863 = vmatmul.mubr.f32.gmra.mxu0 %v2420
      %v2864 = vpop.f32.mrf.mxu0
      %v2865 = vadd.f32 0.0, %v2864
      %v2866 = vpop.f32.mrf.mxu0
      %2867 = vmatprep.mubr.f32.mxu0 %v2719
      %2868 = vmatmul.mubr.f32.gmra.mxu0 %v2424
      %v2869 = vpop.f32.mrf.mxu0
      %v2870 = vadd.f32 0.0, %v2869
      %v2871 = vpop.f32.mrf.mxu0
      %2872 = vmatprep.mubr.f32.mxu0 %v2722
      %2873 = vmatmul.mubr.f32.gmra.mxu0 %v2428
      %v2874 = vpop.f32.mrf.mxu0
      %v2875 = vadd.f32 0.0, %v2874
      %v2876 = vpop.f32.mrf.mxu0
      %2877 = vmatprep.mubr.f32.mxu0 %v2725
      %2878 = vmatmul.mubr.f32.gmra.mxu0 %v2432
      %v2879 = vpop.f32.mrf.mxu0
      %v2880 = vadd.f32 0.0, %v2879
      %v2881 = vpop.f32.mrf.mxu0
      %2882 = vmatprep.mubr.f32.mxu0 %v2728
      %2883 = vmatmul.mubr.f32.gmra.mxu0 %v2436
      %v2884 = vpop.f32.mrf.mxu0
      %v2885 = vadd.f32 0.0, %v2884
      %v2886 = vpop.f32.mrf.mxu0
      %2887 = vmatprep.mubr.f32.mxu0 %v2731
      %2888 = vmatmul.mubr.f32.gmra.mxu0 %v2440
      %v2889 = vpop.f32.mrf.mxu0
      %v2890 = vadd.f32 0.0, %v2889
      %v2891 = vpop.f32.mrf.mxu0
      %2892 = vmatprep.mubr.f32.mxu0 %v2734
      %2893 = vmatmul.mubr.f32.gmra.mxu0 %v2444
      %v2894 = vpop.f32.mrf.mxu0
      %v2895 = vadd.f32 0.0, %v2894
      %v2896 = vpop.f32.mrf.mxu0
      %2897 = vmatprep.mubr.f32.mxu0 %v2737
      %2898 = vmatmul.mubr.f32.gmra.mxu0 %v2448
      %v2899 = vpop.f32.mrf.mxu0
      %v2900 = vadd.f32 0.0, %v2899
      %v2901 = vpop.f32.mrf.mxu0
      %2902 = vmatprep.mubr.f32.mxu0 %v2740
      %2903 = vmatmul.mubr.f32.gmra.mxu0 %v2452
      %v2904 = vpop.f32.mrf.mxu0
      %v2905 = vadd.f32 0.0, %v2904
      %v2906 = vpop.f32.mrf.mxu0
      %2907 = vmatprep.mubr.f32.mxu0 %v2743
      %2908 = vmatmul.mubr.f32.gmra.mxu0 %v2456
      %v2909 = vpop.f32.mrf.mxu0
      %v2910 = vadd.f32 0.0, %v2909
      %v2911 = vpop.f32.mrf.mxu0
      %2912 = vmatprep.mubr.f32.mxu0 %v2746
      %2913 = vmatmul.mubr.f32.gmra.mxu0 %v2460
      %v2914 = vpop.f32.mrf.mxu0
      %v2915 = vadd.f32 0.0, %v2914
      %v2916 = vpop.f32.mrf.mxu0
      %2917 = vmatprep.mubr.f32.mxu0 %v2749
      %2918 = vmatmul.mubr.f32.gmra.mxu0 %v2464
      %v2919 = vpop.f32.mrf.mxu0
      %v2920 = vadd.f32 0.0, %v2919
      %v2921 = vpop.f32.mrf.mxu0
      %2922 = vmatprep.mubr.f32.mxu0 %v2752
      %2923 = vmatmul.mubr.f32.gmra.mxu0 %v2468
      %v2924 = vpop.f32.mrf.mxu0
      %v2925 = vadd.f32 0.0, %v2924
      %v2926 = vpop.f32.mrf.mxu0
      %2927 = vmatprep.mubr.f32.mxu0 %v2755
      %2928 = vmatmul.mubr.f32.gmra.mxu0 %v2472
      %v2929 = vpop.f32.mrf.mxu0
      %v2930 = vadd.f32 0.0, %v2929
      %v2931 = vpop.f32.mrf.mxu0
      %2932 = vmatprep.mubr.f32.mxu0 %v2758
      %2933 = vmatmul.mubr.f32.gmra.mxu0 %v2476
      %v2934 = vpop.f32.mrf.mxu0
      %v2935 = vadd.f32 0.0, %v2934
      %v2936 = vpop.f32.mrf.mxu0
      %2937 = vmatprep.mubr.f32.mxu0 %v2761
      %2938 = vmatmul.mubr.f32.gmra.mxu0 %v2480
      %v2939 = vpop.f32.mrf.mxu0
      %v2940 = vadd.f32 0.0, %v2939
      %v2941 = vpop.f32.mrf.mxu0
      %2942 = vmatprep.mubr.f32.mxu0 %v2764
      %2943 = vmatmul.mubr.f32.gmra.mxu0 %v2484
      %v2944 = vpop.f32.mrf.mxu0
      %v2945 = vadd.f32 0.0, %v2944
      %v2946 = vpop.f32.mrf.mxu0
      %2947 = vmatprep.mubr.f32.mxu0 %v2767
      %2948 = vmatmul.mubr.f32.gmra.mxu0 %v2488
      %v2949 = vpop.f32.mrf.mxu0
      %v2950 = vadd.f32 0.0, %v2949
      %v2951 = vpop.f32.mrf.mxu0
      %2952 = vmatprep.mubr.f32.mxu0 %v2770
      %2953 = vmatmul.mubr.f32.gmra.mxu0 %v2492
      %v2954 = vpop.f32.mrf.mxu0
      %v2955 = vadd.f32 0.0, %v2954
      %v2956 = vpop.f32.mrf.mxu0
      %2957 = vmatprep.mubr.f32.mxu0 %v2773
      %2958 = vmatmul.mubr.f32.gmra.mxu0 %v2496
      %v2959 = vpop.f32.mrf.mxu0
      %v2960 = vadd.f32 0.0, %v2959
      %v2961 = vpop.f32.mrf.mxu0
      %2962 = vmatprep.mubr.f32.mxu0 %v2776
      %2963 = vmatmul.mubr.f32.gmra.mxu0 %v2500
      %v2964 = vpop.f32.mrf.mxu0
      %v2965 = vadd.f32 0.0, %v2964
      %v2966 = vpop.f32.mrf.mxu0
      %2967 = vmatprep.mubr.f32.mxu0 %v2779
      %2968 = vmatmul.mubr.f32.gmra.mxu0 %v2504
      %v2969 = vpop.f32.mrf.mxu0
      %v2970 = vadd.f32 0.0, %v2969
      %v2971 = vpop.f32.mrf.mxu0
      %2972 = vdwg.mxu0
      %v2973 = vld [vmem:[#allocation2] sm:$0xff]
      %v2974 = vld [vmem:[#allocation2 + $0x8] sm:$0xff]
      %v2975 = vld [vmem:[#allocation2 + $0x10] sm:$0xff]
      %v2976 = vld [vmem:[#allocation2 + $0x18] sm:$0xff]
      %v2977 = vld [vmem:[#allocation2 + $0x20] sm:$0xff]
      %v2978 = vld [vmem:[#allocation2 + $0x28] sm:$0xff]
      %v2979 = vld [vmem:[#allocation2 + $0x30] sm:$0xff]
      %v2980 = vld [vmem:[#allocation2 + $0x38] sm:$0xff]
      %v2981 = vld [vmem:[#allocation2 + $0x40] sm:$0xff]
      %v2982 = vld [vmem:[#allocation2 + $0x48] sm:$0xff]
      %v2983 = vld [vmem:[#allocation2 + $0x50] sm:$0xff]
      %v2984 = vld [vmem:[#allocation2 + $0x58] sm:$0xff]
      %v2985 = vld [vmem:[#allocation2 + $0x60] sm:$0xff]
      %v2986 = vld [vmem:[#allocation2 + $0x68] sm:$0xff]
      %v2987 = vld [vmem:[#allocation2 + $0x70] sm:$0xff]
      %v2988 = vld [vmem:[#allocation2 + $0x78] sm:$0xff]
      %v2989 = vld [vmem:[#allocation2 + $0x80] sm:$0xff]
      %v2990 = vld [vmem:[#allocation2 + $0x88] sm:$0xff]
      %v2991 = vld [vmem:[#allocation2 + $0x90] sm:$0xff]
      %v2992 = vld [vmem:[#allocation2 + $0x98] sm:$0xff]
      %v2993 = vld [vmem:[#allocation2 + $0xa0] sm:$0xff]
      %v2994 = vld [vmem:[#allocation2 + $0xa8] sm:$0xff]
      %v2995 = vld [vmem:[#allocation2 + $0xb0] sm:$0xff]
      %v2996 = vld [vmem:[#allocation2 + $0xb8] sm:$0xff]
      %v2997 = vld [vmem:[#allocation2 + $0xc0] sm:$0xf]
      %v2998 = vrcp.pop %v2510
      %v2999 = vrcp.pop %v2514
      %v3000 = vrcp.pop %v2518
      %v3001 = vrcp.pop %v2522
      %v3002 = vrcp.pop %v2526
      %v3003 = vrcp.pop %v2530
      %v3004 = vrcp.pop %v2534
      %v3005 = vrcp.pop %v2538
      %v3006 = vrcp.pop %v2542
      %v3007 = vrcp.pop %v2546
      %v3008 = vrcp.pop %v2550
      %v3009 = vrcp.pop %v2554
      %v3010 = vrcp.pop %v2558
      %v3011 = vrcp.pop %v2562
      %v3012 = vrcp.pop %v2566
      %v3013 = vrcp.pop %v2570
      %v3014 = vrcp.pop %v2574
      %v3015 = vrcp.pop %v2578
      %v3016 = vrcp.pop %v2582
      %v3017 = vrcp.pop %v2586
      %v3018 = vrcp.pop %v2590
      %v3019 = vrcp.pop %v2594
      %v3020 = vrcp.pop %v2598
      %v3021 = vrcp.pop %v2602
      %v3022 = vrcp.pop %v2607
      %v3023 = vmul.f32 %v2850, %v2998
      %v3024 = vmul.f32 %v2855, %v2999
      %v3025 = vmul.f32 %v2860, %v3000
      %v3026 = vmul.f32 %v2865, %v3001
      %v3027 = vmul.f32 %v2870, %v3002
      %v3028 = vmul.f32 %v2875, %v3003
      %v3029 = vmul.f32 %v2880, %v3004
      %v3030 = vmul.f32 %v2885, %v3005
      %v3031 = vmul.f32 %v2890, %v3006
      %v3032 = vmul.f32 %v2895, %v3007
      %v3033 = vmul.f32 %v2900, %v3008
      %v3034 = vmul.f32 %v2905, %v3009
      %v3035 = vmul.f32 %v2910, %v3010
      %v3036 = vmul.f32 %v2915, %v3011
      %v3037 = vmul.f32 %v2920, %v3012
      %v3038 = vmul.f32 %v2925, %v3013
      %v3039 = vmul.f32 %v2930, %v3014
      %v3040 = vmul.f32 %v2935, %v3015
      %v3041 = vmul.f32 %v2940, %v3016
      %v3042 = vmul.f32 %v2945, %v3017
      %v3043 = vmul.f32 %v2950, %v3018
      %v3044 = vmul.f32 %v2955, %v3019
      %v3045 = vmul.f32 %v2960, %v3020
      %v3046 = vmul.f32 %v2965, %v3021
      %v3047 = vmul.f32 %v2970, %v3022
      %v3048 = vadd.f32 %v2973, %v3023
      %v3049 = vadd.f32 %v2974, %v3024
      %v3050 = vadd.f32 %v2975, %v3025
      %v3051 = vadd.f32 %v2976, %v3026
      %v3052 = vadd.f32 %v2977, %v3027
      %v3053 = vadd.f32 %v2978, %v3028
      %v3054 = vadd.f32 %v2979, %v3029
      %v3055 = vadd.f32 %v2980, %v3030
      %v3056 = vadd.f32 %v2981, %v3031
      %v3057 = vadd.f32 %v2982, %v3032
      %v3058 = vadd.f32 %v2983, %v3033
      %v3059 = vadd.f32 %v2984, %v3034
      %v3060 = vadd.f32 %v2985, %v3035
      %v3061 = vadd.f32 %v2986, %v3036
      %v3062 = vadd.f32 %v2987, %v3037
      %v3063 = vadd.f32 %v2988, %v3038
      %v3064 = vadd.f32 %v2989, %v3039
      %v3065 = vadd.f32 %v2990, %v3040
      %v3066 = vadd.f32 %v2991, %v3041
      %v3067 = vadd.f32 %v2992, %v3042
      %v3068 = vadd.f32 %v2993, %v3043
      %v3069 = vadd.f32 %v2994, %v3044
      %v3070 = vadd.f32 %v2995, %v3045
      %v3071 = vadd.f32 %v2996, %v3046
      %v3072 = vadd.f32 %v2997, %v3047
      %3073 = vst.msk [vmem:[#allocation2] sm:$0xff] %vm363, %v3048
      %3074 = vst.msk [vmem:[#allocation2 + $0x8] sm:$0xff] %vm363, %v3049
      %3075 = vst.msk [vmem:[#allocation2 + $0x10] sm:$0xff] %vm363, %v3050
      %3076 = vst.msk [vmem:[#allocation2 + $0x18] sm:$0xff] %vm363, %v3051
      %3077 = vst.msk [vmem:[#allocation2 + $0x20] sm:$0xff] %vm363, %v3052
      %3078 = vst.msk [vmem:[#allocation2 + $0x28] sm:$0xff] %vm363, %v3053
      %3079 = vst.msk [vmem:[#allocation2 + $0x30] sm:$0xff] %vm363, %v3054
      %3080 = vst.msk [vmem:[#allocation2 + $0x38] sm:$0xff] %vm363, %v3055
      %3081 = vst.msk [vmem:[#allocation2 + $0x40] sm:$0xff] %vm363, %v3056
      %3082 = vst.msk [vmem:[#allocation2 + $0x48] sm:$0xff] %vm363, %v3057
      %3083 = vst.msk [vmem:[#allocation2 + $0x50] sm:$0xff] %vm363, %v3058
      %3084 = vst.msk [vmem:[#allocation2 + $0x58] sm:$0xff] %vm363, %v3059
      %3085 = vst.msk [vmem:[#allocation2 + $0x60] sm:$0xff] %vm363, %v3060
      %3086 = vst.msk [vmem:[#allocation2 + $0x68] sm:$0xff] %vm363, %v3061
      %3087 = vst.msk [vmem:[#allocation2 + $0x70] sm:$0xff] %vm363, %v3062
      %3088 = vst.msk [vmem:[#allocation2 + $0x78] sm:$0xff] %vm363, %v3063
      %3089 = vst.msk [vmem:[#allocation2 + $0x80] sm:$0xff] %vm363, %v3064
      %3090 = vst.msk [vmem:[#allocation2 + $0x88] sm:$0xff] %vm363, %v3065
      %3091 = vst.msk [vmem:[#allocation2 + $0x90] sm:$0xff] %vm363, %v3066
      %3092 = vst.msk [vmem:[#allocation2 + $0x98] sm:$0xff] %vm363, %v3067
      %3093 = vst.msk [vmem:[#allocation2 + $0xa0] sm:$0xff] %vm363, %v3068
      %3094 = vst.msk [vmem:[#allocation2 + $0xa8] sm:$0xff] %vm363, %v3069
      %3095 = vst.msk [vmem:[#allocation2 + $0xb0] sm:$0xff] %vm363, %v3070
      %3096 = vst.msk [vmem:[#allocation2 + $0xb8] sm:$0xff] %vm363, %v3071
      %3097 = vst.msk [vmem:[#allocation2 + $0xc0] sm:$0xf] %vm901, %v3072
      %3098 = vrot.lane.b32.xlu0 %v506, 64
      %v3099 = vpop.permute.xlu0 %3098
      %3100 = vrot.lane.b32.xlu0 %v512, 64
      %v3101 = vpop.permute.xlu0 %3100
      %3102 = vrot.lane.b32.xlu0 %v518, 64
      %v3103 = vpop.permute.xlu0 %3102
      %3104 = vrot.lane.b32.xlu0 %v524, 64
      %v3105 = vpop.permute.xlu0 %3104
      %3106 = vrot.lane.b32.xlu0 %v530, 64
      %v3107 = vpop.permute.xlu0 %3106
      %3108 = vrot.lane.b32.xlu0 %v536, 64
      %v3109 = vpop.permute.xlu0 %3108
      %3110 = vrot.lane.b32.xlu0 %v542, 64
      %v3111 = vpop.permute.xlu0 %3110
      %3112 = vrot.lane.b32.xlu0 %v548, 64
      %v3113 = vpop.permute.xlu0 %3112
      %3114 = vrot.lane.b32.xlu0 %v554, 64
      %v3115 = vpop.permute.xlu0 %3114
      %3116 = vrot.lane.b32.xlu0 %v560, 64
      %v3117 = vpop.permute.xlu0 %3116
      %3118 = vrot.lane.b32.xlu0 %v566, 64
      %v3119 = vpop.permute.xlu0 %3118
      %3120 = vrot.lane.b32.xlu0 %v572, 64
      %v3121 = vpop.permute.xlu0 %3120
      %3122 = vrot.lane.b32.xlu0 %v578, 64
      %v3123 = vpop.permute.xlu0 %3122
      %3124 = vrot.lane.b32.xlu0 %v584, 64
      %v3125 = vpop.permute.xlu0 %3124
      %3126 = vrot.lane.b32.xlu0 %v590, 64
      %v3127 = vpop.permute.xlu0 %3126
      %3128 = vrot.lane.b32.xlu0 %v596, 64
      %v3129 = vpop.permute.xlu0 %3128
      %3130 = vrot.lane.b32.xlu0 %v602, 64
      %v3131 = vpop.permute.xlu0 %3130
      %3132 = vrot.lane.b32.xlu0 %v608, 64
      %v3133 = vpop.permute.xlu0 %3132
      %3134 = vrot.lane.b32.xlu0 %v614, 64
      %v3135 = vpop.permute.xlu0 %3134
      %3136 = vrot.lane.b32.xlu0 %v620, 64
      %v3137 = vpop.permute.xlu0 %3136
      %3138 = vrot.lane.b32.xlu0 %v626, 64
      %v3139 = vpop.permute.xlu0 %3138
      %3140 = vrot.lane.b32.xlu0 %v632, 64
      %v3141 = vpop.permute.xlu0 %3140
      %3142 = vrot.lane.b32.xlu0 %v638, 64
      %v3143 = vpop.permute.xlu0 %3142
      %3144 = vrot.lane.b32.xlu0 %v644, 64
      %v3145 = vpop.permute.xlu0 %3144
      %3146 = vrot.lane.b32.xlu0 %v650, 64
      %v3147 = vpop.permute.xlu0 %3146
      %v3148 = vsel %vm363, %v3099, 0
      %v3150 = vsel %vm363, %v3101, 0
      %v3152 = vsel %vm363, %v3103, 0
      %v3154 = vsel %vm363, %v3105, 0
      %v3156 = vsel %vm363, %v3107, 0
      %v3158 = vsel %vm363, %v3109, 0
      %v3160 = vsel %vm363, %v3111, 0
      %v3162 = vsel %vm363, %v3113, 0
      %v3164 = vsel %vm363, %v3115, 0
      %v3166 = vsel %vm363, %v3117, 0
      %v3168 = vsel %vm363, %v3119, 0
      %v3170 = vsel %vm363, %v3121, 0
      %v3172 = vsel %vm363, %v3123, 0
      %v3174 = vsel %vm363, %v3125, 0
      %v3176 = vsel %vm363, %v3127, 0
      %v3178 = vsel %vm363, %v3129, 0
      %v3180 = vsel %vm363, %v3131, 0
      %v3182 = vsel %vm363, %v3133, 0
      %v3184 = vsel %vm363, %v3135, 0
      %v3186 = vsel %vm363, %v3137, 0
      %v3188 = vsel %vm363, %v3139, 0
      %v3190 = vsel %vm363, %v3141, 0
      %v3192 = vsel %vm363, %v3143, 0
      %v3194 = vsel %vm363, %v3145, 0
      %v3196 = vsel %vm363, %v3147, 0
      %3198 = vmatprep.subr.mxu0 0.0
      %3199 = vmatpush1.msra.mxu0 0.0
      %3200 = vmatprep.subr.mxu0 0.0
      %3201 = vmatpush1.msra.mxu0 0.0
      %3202 = vmatprep.subr.mxu0 0.0
      %3203 = vmatpush1.msra.mxu0 0.0
      %3204 = vmatprep.subr.mxu0 0.0
      %3205 = vmatpush1.msra.mxu0 0.0
      %3206 = vmatprep.subr.mxu0 0.0
      %3207 = vmatpush1.msra.mxu0 0.0
      %3208 = vmatprep.subr.mxu0 0.0
      %3209 = vmatpush1.msra.mxu0 0.0
      %3210 = vmatprep.subr.mxu0 0.0
      %3211 = vmatpush1.msra.mxu0 0.0
      %3212 = vmatprep.subr.mxu0 0.0
      %3213 = vmatpush1.msra.mxu0 0.0
      %3214 = vmatprep.subr.mxu0 0.0
      %3215 = vmatpush1.msra.mxu0 0.0
      %3216 = vmatprep.subr.mxu0 0.0
      %3217 = vmatpush1.msra.mxu0 0.0
      %3218 = vmatprep.subr.mxu0 0.0
      %3219 = vmatpush1.msra.mxu0 0.0
      %3220 = vmatprep.subr.mxu0 0.0
      %3221 = vmatpush1.msra.mxu0 0.0
      %3222 = vmatprep.subr.mxu0 %v304
      %3223 = vmatpush1.msra.mxu0 %v303
      %3224 = vmatprep.subr.mxu0 %v302
      %3225 = vmatpush1.msra.mxu0 %v301
      %3226 = vmatprep.subr.mxu0 %v300
      %3227 = vmatpush1.msra.mxu0 %v299
      %3228 = vmatprep.subr.mxu0 %v298
      %3229 = vmatpush1.msra.mxu0 %v297
      %3230 = vmatprep.subr.mxu0 0.0
      %3231 = vmatpush2.msra.mxu0 0.0
      %3232 = vmatprep.subr.mxu0 0.0
      %3233 = vmatpush2.msra.mxu0 0.0
      %3234 = vmatprep.subr.mxu0 0.0
      %3235 = vmatpush2.msra.mxu0 0.0
      %3236 = vmatprep.subr.mxu0 0.0
      %3237 = vmatpush2.msra.mxu0 0.0
      %3238 = vmatprep.subr.mxu0 0.0
      %3239 = vmatpush2.msra.mxu0 0.0
      %3240 = vmatprep.subr.mxu0 0.0
      %3241 = vmatpush2.msra.mxu0 0.0
      %3242 = vmatprep.subr.mxu0 0.0
      %3243 = vmatpush2.msra.mxu0 0.0
      %3244 = vmatprep.subr.mxu0 0.0
      %3245 = vmatpush2.msra.mxu0 0.0
      %3246 = vmatprep.subr.mxu0 0.0
      %3247 = vmatpush2.msra.mxu0 0.0
      %3248 = vmatprep.subr.mxu0 0.0
      %3249 = vmatpush2.msra.mxu0 0.0
      %3250 = vmatprep.subr.mxu0 0.0
      %3251 = vmatpush2.msra.mxu0 0.0
      %3252 = vmatprep.subr.mxu0 0.0
      %3253 = vmatpush2.msra.mxu0 0.0
      %3254 = vmatprep.subr.mxu0 0.0
      %3255 = vmatpush2.msra.mxu0 0.0
      %3256 = vmatprep.subr.mxu0 0.0
      %3257 = vmatpush2.msra.mxu0 0.0
      %3258 = vmatprep.subr.mxu0 0.0
      %3259 = vmatpush2.msra.mxu0 0.0
      %3260 = vmatprep.subr.mxu0 0.0
      %3261 = vmatpush2.msra.mxu0 0.0
      %3262 = vmatprep.mubr.f32.mxu0 0.0
      %3263 = vmatmul.mubr.f32.gmra.mxu0 %v3148
      %v3264 = vpop.f32.mrf.mxu0
      %v3265 = vadd.f32 %v305, %v3264
      %v3266 = vpop.f32.mrf.mxu0
      %v3267 = vadd.f32 %v306, %v3266
      %3268 = vmatprep.mubr.f32.mxu0 0.0
      %3269 = vmatmul.mubr.f32.gmra.mxu0 %v3150
      %v3270 = vpop.f32.mrf.mxu0
      %v3271 = vadd.f32 %v307, %v3270
      %v3272 = vpop.f32.mrf.mxu0
      %v3273 = vadd.f32 %v308, %v3272
      %3274 = vmatprep.mubr.f32.mxu0 0.0
      %3275 = vmatmul.mubr.f32.gmra.mxu0 %v3152
      %v3276 = vpop.f32.mrf.mxu0
      %v3277 = vadd.f32 %v309, %v3276
      %v3278 = vpop.f32.mrf.mxu0
      %v3279 = vadd.f32 %v310, %v3278
      %3280 = vmatprep.mubr.f32.mxu0 0.0
      %3281 = vmatmul.mubr.f32.gmra.mxu0 %v3154
      %v3282 = vpop.f32.mrf.mxu0
      %v3283 = vadd.f32 %v311, %v3282
      %v3284 = vpop.f32.mrf.mxu0
      %v3285 = vadd.f32 %v312, %v3284
      %3286 = vmatprep.mubr.f32.mxu0 0.0
      %3287 = vmatmul.mubr.f32.gmra.mxu0 %v3156
      %v3288 = vpop.f32.mrf.mxu0
      %v3289 = vadd.f32 %v313, %v3288
      %v3290 = vpop.f32.mrf.mxu0
      %v3291 = vadd.f32 %v314, %v3290
      %3292 = vmatprep.mubr.f32.mxu0 0.0
      %3293 = vmatmul.mubr.f32.gmra.mxu0 %v3158
      %v3294 = vpop.f32.mrf.mxu0
      %v3295 = vadd.f32 %v315, %v3294
      %v3296 = vpop.f32.mrf.mxu0
      %v3297 = vadd.f32 %v316, %v3296
      %3298 = vmatprep.mubr.f32.mxu0 0.0
      %3299 = vmatmul.mubr.f32.gmra.mxu0 %v3160
      %v3300 = vpop.f32.mrf.mxu0
      %v3301 = vadd.f32 %v317, %v3300
      %v3302 = vpop.f32.mrf.mxu0
      %v3303 = vadd.f32 %v318, %v3302
      %3304 = vmatprep.mubr.f32.mxu0 0.0
      %3305 = vmatmul.mubr.f32.gmra.mxu0 %v3162
      %v3306 = vpop.f32.mrf.mxu0
      %v3307 = vadd.f32 %v319, %v3306
      %v3308 = vpop.f32.mrf.mxu0
      %v3309 = vadd.f32 %v320, %v3308
      %3310 = vmatprep.mubr.f32.mxu0 0.0
      %3311 = vmatmul.mubr.f32.gmra.mxu0 %v3164
      %v3312 = vpop.f32.mrf.mxu0
      %v3313 = vadd.f32 %v321, %v3312
      %v3314 = vpop.f32.mrf.mxu0
      %v3315 = vadd.f32 %v322, %v3314
      %3316 = vmatprep.mubr.f32.mxu0 0.0
      %3317 = vmatmul.mubr.f32.gmra.mxu0 %v3166
      %v3318 = vpop.f32.mrf.mxu0
      %v3319 = vadd.f32 %v323, %v3318
      %v3320 = vpop.f32.mrf.mxu0
      %v3321 = vadd.f32 %v324, %v3320
      %3322 = vmatprep.mubr.f32.mxu0 0.0
      %3323 = vmatmul.mubr.f32.gmra.mxu0 %v3168
      %v3324 = vpop.f32.mrf.mxu0
      %v3325 = vadd.f32 %v325, %v3324
      %v3326 = vpop.f32.mrf.mxu0
      %v3327 = vadd.f32 %v326, %v3326
      %3328 = vmatprep.mubr.f32.mxu0 0.0
      %3329 = vmatmul.mubr.f32.gmra.mxu0 %v3170
      %v3330 = vpop.f32.mrf.mxu0
      %v3331 = vadd.f32 %v327, %v3330
      %v3332 = vpop.f32.mrf.mxu0
      %v3333 = vadd.f32 %v328, %v3332
      %3334 = vmatprep.mubr.f32.mxu0 0.0
      %3335 = vmatmul.mubr.f32.gmra.mxu0 %v3172
      %v3336 = vpop.f32.mrf.mxu0
      %v3337 = vadd.f32 %v329, %v3336
      %v3338 = vpop.f32.mrf.mxu0
      %v3339 = vadd.f32 %v330, %v3338
      %3340 = vmatprep.mubr.f32.mxu0 0.0
      %3341 = vmatmul.mubr.f32.gmra.mxu0 %v3174
      %v3342 = vpop.f32.mrf.mxu0
      %v3343 = vadd.f32 %v331, %v3342
      %v3344 = vpop.f32.mrf.mxu0
      %v3345 = vadd.f32 %v332, %v3344
      %3346 = vmatprep.mubr.f32.mxu0 0.0
      %3347 = vmatmul.mubr.f32.gmra.mxu0 %v3176
      %v3348 = vpop.f32.mrf.mxu0
      %v3349 = vadd.f32 %v333, %v3348
      %v3350 = vpop.f32.mrf.mxu0
      %v3351 = vadd.f32 %v334, %v3350
      %3352 = vmatprep.mubr.f32.mxu0 0.0
      %3353 = vmatmul.mubr.f32.gmra.mxu0 %v3178
      %v3354 = vpop.f32.mrf.mxu0
      %v3355 = vadd.f32 %v335, %v3354
      %v3356 = vpop.f32.mrf.mxu0
      %v3357 = vadd.f32 %v336, %v3356
      %3358 = vmatprep.mubr.f32.mxu0 0.0
      %3359 = vmatmul.mubr.f32.gmra.mxu0 %v3180
      %v3360 = vpop.f32.mrf.mxu0
      %v3361 = vadd.f32 %v337, %v3360
      %v3362 = vpop.f32.mrf.mxu0
      %v3363 = vadd.f32 %v338, %v3362
      %3364 = vmatprep.mubr.f32.mxu0 0.0
      %3365 = vmatmul.mubr.f32.gmra.mxu0 %v3182
      %v3366 = vpop.f32.mrf.mxu0
      %v3367 = vadd.f32 %v339, %v3366
      %v3368 = vpop.f32.mrf.mxu0
      %v3369 = vadd.f32 %v340, %v3368
      %3370 = vmatprep.mubr.f32.mxu0 0.0
      %3371 = vmatmul.mubr.f32.gmra.mxu0 %v3184
      %v3372 = vpop.f32.mrf.mxu0
      %v3373 = vadd.f32 %v341, %v3372
      %v3374 = vpop.f32.mrf.mxu0
      %v3375 = vadd.f32 %v342, %v3374
      %3376 = vmatprep.mubr.f32.mxu0 0.0
      %3377 = vmatmul.mubr.f32.gmra.mxu0 %v3186
      %v3378 = vpop.f32.mrf.mxu0
      %v3379 = vadd.f32 %v343, %v3378
      %v3380 = vpop.f32.mrf.mxu0
      %v3381 = vadd.f32 %v344, %v3380
      %3382 = vmatprep.mubr.f32.mxu0 0.0
      %3383 = vmatmul.mubr.f32.gmra.mxu0 %v3188
      %v3384 = vpop.f32.mrf.mxu0
      %v3385 = vadd.f32 %v345, %v3384
      %v3386 = vpop.f32.mrf.mxu0
      %v3387 = vadd.f32 %v346, %v3386
      %3388 = vmatprep.mubr.f32.mxu0 0.0
      %3389 = vmatmul.mubr.f32.gmra.mxu0 %v3190
      %v3390 = vpop.f32.mrf.mxu0
      %v3391 = vadd.f32 %v347, %v3390
      %v3392 = vpop.f32.mrf.mxu0
      %v3393 = vadd.f32 %v348, %v3392
      %3394 = vmatprep.mubr.f32.mxu0 0.0
      %3395 = vmatmul.mubr.f32.gmra.mxu0 %v3192
      %v3396 = vpop.f32.mrf.mxu0
      %v3397 = vadd.f32 %v349, %v3396
      %v3398 = vpop.f32.mrf.mxu0
      %v3399 = vadd.f32 %v350, %v3398
      %3400 = vmatprep.mubr.f32.mxu0 0.0
      %3401 = vmatmul.mubr.f32.gmra.mxu0 %v3194
      %v3402 = vpop.f32.mrf.mxu0
      %v3403 = vadd.f32 %v351, %v3402
      %v3404 = vpop.f32.mrf.mxu0
      %v3405 = vadd.f32 %v352, %v3404
      %3406 = vmatprep.mubr.f32.mxu0 0.0
      %3407 = vmatmul.mubr.f32.gmra.mxu0 %v3196
      %v3408 = vpop.f32.mrf.mxu0
      %v3409 = vadd.f32 %v353, %v3408
      %v3410 = vpop.f32.mrf.mxu0
      %v3411 = vadd.f32 %v354, %v3410
      %3412 = vdwg.mxu0
      %v3413 = vsel %vm1193, %v3267, -inf
      %v3414 = vmax.f32 %v3265, %v3413
      %3415 = vmax.xlane.f32.xlu0 %v3414
      %v3416 = vpop.xlane.xlu0 %3415
      %v3417 = vsel %vm1193, %v3273, -inf
      %v3418 = vmax.f32 %v3271, %v3417
      %3419 = vmax.xlane.f32.xlu0 %v3418
      %v3420 = vpop.xlane.xlu0 %3419
      %v3421 = vsel %vm1193, %v3279, -inf
      %v3422 = vmax.f32 %v3277, %v3421
      %3423 = vmax.xlane.f32.xlu0 %v3422
      %v3424 = vpop.xlane.xlu0 %3423
      %v3425 = vsel %vm1193, %v3285, -inf
      %v3426 = vmax.f32 %v3283, %v3425
      %3427 = vmax.xlane.f32.xlu0 %v3426
      %v3428 = vpop.xlane.xlu0 %3427
      %v3429 = vsel %vm1193, %v3291, -inf
      %v3430 = vmax.f32 %v3289, %v3429
      %3431 = vmax.xlane.f32.xlu0 %v3430
      %v3432 = vpop.xlane.xlu0 %3431
      %v3433 = vsel %vm1193, %v3297, -inf
      %v3434 = vmax.f32 %v3295, %v3433
      %3435 = vmax.xlane.f32.xlu0 %v3434
      %v3436 = vpop.xlane.xlu0 %3435
      %v3437 = vsel %vm1193, %v3303, -inf
      %v3438 = vmax.f32 %v3301, %v3437
      %3439 = vmax.xlane.f32.xlu0 %v3438
      %v3440 = vpop.xlane.xlu0 %3439
      %v3441 = vsel %vm1193, %v3309, -inf
      %v3442 = vmax.f32 %v3307, %v3441
      %3443 = vmax.xlane.f32.xlu0 %v3442
      %v3444 = vpop.xlane.xlu0 %3443
      %v3445 = vsel %vm1193, %v3315, -inf
      %v3446 = vmax.f32 %v3313, %v3445
      %3447 = vmax.xlane.f32.xlu0 %v3446
      %v3448 = vpop.xlane.xlu0 %3447
      %v3449 = vsel %vm1193, %v3321, -inf
      %v3450 = vmax.f32 %v3319, %v3449
      %3451 = vmax.xlane.f32.xlu0 %v3450
      %v3452 = vpop.xlane.xlu0 %3451
      %v3453 = vsel %vm1193, %v3327, -inf
      %v3454 = vmax.f32 %v3325, %v3453
      %3455 = vmax.xlane.f32.xlu0 %v3454
      %v3456 = vpop.xlane.xlu0 %3455
      %v3457 = vsel %vm1193, %v3333, -inf
      %v3458 = vmax.f32 %v3331, %v3457
      %3459 = vmax.xlane.f32.xlu0 %v3458
      %v3460 = vpop.xlane.xlu0 %3459
      %v3461 = vsel %vm1193, %v3339, -inf
      %v3462 = vmax.f32 %v3337, %v3461
      %3463 = vmax.xlane.f32.xlu0 %v3462
      %v3464 = vpop.xlane.xlu0 %3463
      %v3465 = vsel %vm1193, %v3345, -inf
      %v3466 = vmax.f32 %v3343, %v3465
      %3467 = vmax.xlane.f32.xlu0 %v3466
      %v3468 = vpop.xlane.xlu0 %3467
      %v3469 = vsel %vm1193, %v3351, -inf
      %v3470 = vmax.f32 %v3349, %v3469
      %3471 = vmax.xlane.f32.xlu0 %v3470
      %v3472 = vpop.xlane.xlu0 %3471
      %v3473 = vsel %vm1193, %v3357, -inf
      %v3474 = vmax.f32 %v3355, %v3473
      %3475 = vmax.xlane.f32.xlu0 %v3474
      %v3476 = vpop.xlane.xlu0 %3475
      %v3477 = vsel %vm1193, %v3363, -inf
      %v3478 = vmax.f32 %v3361, %v3477
      %3479 = vmax.xlane.f32.xlu0 %v3478
      %v3480 = vpop.xlane.xlu0 %3479
      %v3481 = vsel %vm1193, %v3369, -inf
      %v3482 = vmax.f32 %v3367, %v3481
      %3483 = vmax.xlane.f32.xlu0 %v3482
      %v3484 = vpop.xlane.xlu0 %3483
      %v3485 = vsel %vm1193, %v3375, -inf
      %v3486 = vmax.f32 %v3373, %v3485
      %3487 = vmax.xlane.f32.xlu0 %v3486
      %v3488 = vpop.xlane.xlu0 %3487
      %v3489 = vsel %vm1193, %v3381, -inf
      %v3490 = vmax.f32 %v3379, %v3489
      %3491 = vmax.xlane.f32.xlu0 %v3490
      %v3492 = vpop.xlane.xlu0 %3491
      %v3493 = vsel %vm1193, %v3387, -inf
      %v3494 = vmax.f32 %v3385, %v3493
      %3495 = vmax.xlane.f32.xlu0 %v3494
      %v3496 = vpop.xlane.xlu0 %3495
      %v3497 = vsel %vm1193, %v3393, -inf
      %v3498 = vmax.f32 %v3391, %v3497
      %3499 = vmax.xlane.f32.xlu0 %v3498
      %v3500 = vpop.xlane.xlu0 %3499
      %v3501 = vsel %vm1193, %v3399, -inf
      %v3502 = vmax.f32 %v3397, %v3501
      %3503 = vmax.xlane.f32.xlu0 %v3502
      %v3504 = vpop.xlane.xlu0 %3503
      %v3505 = vsel %vm1193, %v3405, -inf
      %v3506 = vmax.f32 %v3403, %v3505
      %3507 = vmax.xlane.f32.xlu0 %v3506
      %v3508 = vpop.xlane.xlu0 %3507
      %v3509 = vsel %vm1290, %v3409, -inf
      %v3510 = vsel %vm1292, %v3411, -inf
      %v3511 = vmax.f32 %v3509, %v3510
      %3512 = vmax.xlane.f32.xlu0 %v3511
      %v3513 = vpop.xlane.xlu0 %3512
      %v3514 = vsub.f32 %v3265, %v3416
      %v3515 = vsub.f32 %v3267, %v3416
      %v3516 = vsub.f32 %v3271, %v3420
      %v3517 = vsub.f32 %v3273, %v3420
      %v3518 = vsub.f32 %v3277, %v3424
      %v3519 = vsub.f32 %v3279, %v3424
      %v3520 = vsub.f32 %v3283, %v3428
      %v3521 = vsub.f32 %v3285, %v3428
      %v3522 = vsub.f32 %v3289, %v3432
      %v3523 = vsub.f32 %v3291, %v3432
      %v3524 = vsub.f32 %v3295, %v3436
      %v3525 = vsub.f32 %v3297, %v3436
      %v3526 = vsub.f32 %v3301, %v3440
      %v3527 = vsub.f32 %v3303, %v3440
      %v3528 = vsub.f32 %v3307, %v3444
      %v3529 = vsub.f32 %v3309, %v3444
      %v3530 = vsub.f32 %v3313, %v3448
      %v3531 = vsub.f32 %v3315, %v3448
      %v3532 = vsub.f32 %v3319, %v3452
      %v3533 = vsub.f32 %v3321, %v3452
      %v3534 = vsub.f32 %v3325, %v3456
      %v3535 = vsub.f32 %v3327, %v3456
      %v3536 = vsub.f32 %v3331, %v3460
      %v3537 = vsub.f32 %v3333, %v3460
      %v3538 = vsub.f32 %v3337, %v3464
      %v3539 = vsub.f32 %v3339, %v3464
      %v3540 = vsub.f32 %v3343, %v3468
      %v3541 = vsub.f32 %v3345, %v3468
      %v3542 = vsub.f32 %v3349, %v3472
      %v3543 = vsub.f32 %v3351, %v3472
      %v3544 = vsub.f32 %v3355, %v3476
      %v3545 = vsub.f32 %v3357, %v3476
      %v3546 = vsub.f32 %v3361, %v3480
      %v3547 = vsub.f32 %v3363, %v3480
      %v3548 = vsub.f32 %v3367, %v3484
      %v3549 = vsub.f32 %v3369, %v3484
      %v3550 = vsub.f32 %v3373, %v3488
      %v3551 = vsub.f32 %v3375, %v3488
      %v3552 = vsub.f32 %v3379, %v3492
      %v3553 = vsub.f32 %v3381, %v3492
      %v3554 = vsub.f32 %v3385, %v3496
      %v3555 = vsub.f32 %v3387, %v3496
      %v3556 = vsub.f32 %v3391, %v3500
      %v3557 = vsub.f32 %v3393, %v3500
      %v3558 = vsub.f32 %v3397, %v3504
      %v3559 = vsub.f32 %v3399, %v3504
      %v3560 = vsub.f32 %v3403, %v3508
      %v3561 = vsub.f32 %v3405, %v3508
      %v3562 = vsub.f32 %v3409, %v3513
      %v3563 = vsub.f32 %v3411, %v3513
      %v3564 = vmul.f32 %v3514, 1.442695
      %v3565 = vpow.pop %v3564
      %v3566 = vmul.f32 %v3515, 1.442695
      %v3567 = vpow.pop %v3566
      %v3568 = vmul.f32 %v3516, 1.442695
      %v3569 = vpow.pop %v3568
      %v3570 = vmul.f32 %v3517, 1.442695
      %v3571 = vpow.pop %v3570
      %v3572 = vmul.f32 %v3518, 1.442695
      %v3573 = vpow.pop %v3572
      %v3574 = vmul.f32 %v3519, 1.442695
      %v3575 = vpow.pop %v3574
      %v3576 = vmul.f32 %v3520, 1.442695
      %v3577 = vpow.pop %v3576
      %v3578 = vmul.f32 %v3521, 1.442695
      %v3579 = vpow.pop %v3578
      %v3580 = vmul.f32 %v3522, 1.442695
      %v3581 = vpow.pop %v3580
      %v3582 = vmul.f32 %v3523, 1.442695
      %v3583 = vpow.pop %v3582
      %v3584 = vmul.f32 %v3524, 1.442695
      %v3585 = vpow.pop %v3584
      %v3586 = vmul.f32 %v3525, 1.442695
      %v3587 = vpow.pop %v3586
      %v3588 = vmul.f32 %v3526, 1.442695
      %v3589 = vpow.pop %v3588
      %v3590 = vmul.f32 %v3527, 1.442695
      %v3591 = vpow.pop %v3590
      %v3592 = vmul.f32 %v3528, 1.442695
      %v3593 = vpow.pop %v3592
      %v3594 = vmul.f32 %v3529, 1.442695
      %v3595 = vpow.pop %v3594
      %v3596 = vmul.f32 %v3530, 1.442695
      %v3597 = vpow.pop %v3596
      %v3598 = vmul.f32 %v3531, 1.442695
      %v3599 = vpow.pop %v3598
      %v3600 = vmul.f32 %v3532, 1.442695
      %v3601 = vpow.pop %v3600
      %v3602 = vmul.f32 %v3533, 1.442695
      %v3603 = vpow.pop %v3602
      %v3604 = vmul.f32 %v3534, 1.442695
      %v3605 = vpow.pop %v3604
      %v3606 = vmul.f32 %v3535, 1.442695
      %v3607 = vpow.pop %v3606
      %v3608 = vmul.f32 %v3536, 1.442695
      %v3609 = vpow.pop %v3608
      %v3610 = vmul.f32 %v3537, 1.442695
      %v3611 = vpow.pop %v3610
      %v3612 = vmul.f32 %v3538, 1.442695
      %v3613 = vpow.pop %v3612
      %v3614 = vmul.f32 %v3539, 1.442695
      %v3615 = vpow.pop %v3614
      %v3616 = vmul.f32 %v3540, 1.442695
      %v3617 = vpow.pop %v3616
      %v3618 = vmul.f32 %v3541, 1.442695
      %v3619 = vpow.pop %v3618
      %v3620 = vmul.f32 %v3542, 1.442695
      %v3621 = vpow.pop %v3620
      %v3622 = vmul.f32 %v3543, 1.442695
      %v3623 = vpow.pop %v3622
      %v3624 = vmul.f32 %v3544, 1.442695
      %v3625 = vpow.pop %v3624
      %v3626 = vmul.f32 %v3545, 1.442695
      %v3627 = vpow.pop %v3626
      %v3628 = vmul.f32 %v3546, 1.442695
      %v3629 = vpow.pop %v3628
      %v3630 = vmul.f32 %v3547, 1.442695
      %v3631 = vpow.pop %v3630
      %v3632 = vmul.f32 %v3548, 1.442695
      %v3633 = vpow.pop %v3632
      %v3634 = vmul.f32 %v3549, 1.442695
      %v3635 = vpow.pop %v3634
      %v3636 = vmul.f32 %v3550, 1.442695
      %v3637 = vpow.pop %v3636
      %v3638 = vmul.f32 %v3551, 1.442695
      %v3639 = vpow.pop %v3638
      %v3640 = vmul.f32 %v3552, 1.442695
      %v3641 = vpow.pop %v3640
      %v3642 = vmul.f32 %v3553, 1.442695
      %v3643 = vpow.pop %v3642
      %v3644 = vmul.f32 %v3554, 1.442695
      %v3645 = vpow.pop %v3644
      %v3646 = vmul.f32 %v3555, 1.442695
      %v3647 = vpow.pop %v3646
      %v3648 = vmul.f32 %v3556, 1.442695
      %v3649 = vpow.pop %v3648
      %v3650 = vmul.f32 %v3557, 1.442695
      %v3651 = vpow.pop %v3650
      %v3652 = vmul.f32 %v3558, 1.442695
      %v3653 = vpow.pop %v3652
      %v3654 = vmul.f32 %v3559, 1.442695
      %v3655 = vpow.pop %v3654
      %v3656 = vmul.f32 %v3560, 1.442695
      %v3657 = vpow.pop %v3656
      %v3658 = vmul.f32 %v3561, 1.442695
      %v3659 = vpow.pop %v3658
      %v3660 = vmul.f32 %v3562, 1.442695
      %v3661 = vpow.pop %v3660
      %v3662 = vmul.f32 %v3563, 1.442695
      %v3663 = vpow.pop %v3662
      %v3664 = vsel %vm1193, %v3567, 0.0
      %v3665 = vadd.f32 %v3565, %v3664
      %3666 = vadd.xlane.f32.xlu0 %v3665
      %v3667 = vpop.xlane.xlu0 %3666
      %v3668 = vsel %vm1193, %v3571, 0.0
      %v3669 = vadd.f32 %v3569, %v3668
      %3670 = vadd.xlane.f32.xlu0 %v3669
      %v3671 = vpop.xlane.xlu0 %3670
      %v3672 = vsel %vm1193, %v3575, 0.0
      %v3673 = vadd.f32 %v3573, %v3672
      %3674 = vadd.xlane.f32.xlu0 %v3673
      %v3675 = vpop.xlane.xlu0 %3674
      %v3676 = vsel %vm1193, %v3579, 0.0
      %v3677 = vadd.f32 %v3577, %v3676
      %3678 = vadd.xlane.f32.xlu0 %v3677
      %v3679 = vpop.xlane.xlu0 %3678
      %v3680 = vsel %vm1193, %v3583, 0.0
      %v3681 = vadd.f32 %v3581, %v3680
      %3682 = vadd.xlane.f32.xlu0 %v3681
      %v3683 = vpop.xlane.xlu0 %3682
      %v3684 = vsel %vm1193, %v3587, 0.0
      %v3685 = vadd.f32 %v3585, %v3684
      %3686 = vadd.xlane.f32.xlu0 %v3685
      %v3687 = vpop.xlane.xlu0 %3686
      %v3688 = vsel %vm1193, %v3591, 0.0
      %v3689 = vadd.f32 %v3589, %v3688
      %3690 = vadd.xlane.f32.xlu0 %v3689
      %v3691 = vpop.xlane.xlu0 %3690
      %v3692 = vsel %vm1193, %v3595, 0.0
      %v3693 = vadd.f32 %v3593, %v3692
      %3694 = vadd.xlane.f32.xlu0 %v3693
      %v3695 = vpop.xlane.xlu0 %3694
      %v3696 = vsel %vm1193, %v3599, 0.0
      %v3697 = vadd.f32 %v3597, %v3696
      %3698 = vadd.xlane.f32.xlu0 %v3697
      %v3699 = vpop.xlane.xlu0 %3698
      %v3700 = vsel %vm1193, %v3603, 0.0
      %v3701 = vadd.f32 %v3601, %v3700
      %3702 = vadd.xlane.f32.xlu0 %v3701
      %v3703 = vpop.xlane.xlu0 %3702
      %v3704 = vsel %vm1193, %v3607, 0.0
      %v3705 = vadd.f32 %v3605, %v3704
      %3706 = vadd.xlane.f32.xlu0 %v3705
      %v3707 = vpop.xlane.xlu0 %3706
      %v3708 = vsel %vm1193, %v3611, 0.0
      %v3709 = vadd.f32 %v3609, %v3708
      %3710 = vadd.xlane.f32.xlu0 %v3709
      %v3711 = vpop.xlane.xlu0 %3710
      %v3712 = vsel %vm1193, %v3615, 0.0
      %v3713 = vadd.f32 %v3613, %v3712
      %3714 = vadd.xlane.f32.xlu0 %v3713
      %v3715 = vpop.xlane.xlu0 %3714
      %v3716 = vsel %vm1193, %v3619, 0.0
      %v3717 = vadd.f32 %v3617, %v3716
      %3718 = vadd.xlane.f32.xlu0 %v3717
      %v3719 = vpop.xlane.xlu0 %3718
      %v3720 = vsel %vm1193, %v3623, 0.0
      %v3721 = vadd.f32 %v3621, %v3720
      %3722 = vadd.xlane.f32.xlu0 %v3721
      %v3723 = vpop.xlane.xlu0 %3722
      %v3724 = vsel %vm1193, %v3627, 0.0
      %v3725 = vadd.f32 %v3625, %v3724
      %3726 = vadd.xlane.f32.xlu0 %v3725
      %v3727 = vpop.xlane.xlu0 %3726
      %v3728 = vsel %vm1193, %v3631, 0.0
      %v3729 = vadd.f32 %v3629, %v3728
      %3730 = vadd.xlane.f32.xlu0 %v3729
      %v3731 = vpop.xlane.xlu0 %3730
      %v3732 = vsel %vm1193, %v3635, 0.0
      %v3733 = vadd.f32 %v3633, %v3732
      %3734 = vadd.xlane.f32.xlu0 %v3733
      %v3735 = vpop.xlane.xlu0 %3734
      %v3736 = vsel %vm1193, %v3639, 0.0
      %v3737 = vadd.f32 %v3637, %v3736
      %3738 = vadd.xlane.f32.xlu0 %v3737
      %v3739 = vpop.xlane.xlu0 %3738
      %v3740 = vsel %vm1193, %v3643, 0.0
      %v3741 = vadd.f32 %v3641, %v3740
      %3742 = vadd.xlane.f32.xlu0 %v3741
      %v3743 = vpop.xlane.xlu0 %3742
      %v3744 = vsel %vm1193, %v3647, 0.0
      %v3745 = vadd.f32 %v3645, %v3744
      %3746 = vadd.xlane.f32.xlu0 %v3745
      %v3747 = vpop.xlane.xlu0 %3746
      %v3748 = vsel %vm1193, %v3651, 0.0
      %v3749 = vadd.f32 %v3649, %v3748
      %3750 = vadd.xlane.f32.xlu0 %v3749
      %v3751 = vpop.xlane.xlu0 %3750
      %v3752 = vsel %vm1193, %v3655, 0.0
      %v3753 = vadd.f32 %v3653, %v3752
      %3754 = vadd.xlane.f32.xlu0 %v3753
      %v3755 = vpop.xlane.xlu0 %3754
      %v3756 = vsel %vm1193, %v3659, 0.0
      %v3757 = vadd.f32 %v3657, %v3756
      %3758 = vadd.xlane.f32.xlu0 %v3757
      %v3759 = vpop.xlane.xlu0 %3758
      %v3760 = vsel %vm1290, %v3661, 0.0
      %v3761 = vsel %vm1292, %v3663, 0.0
      %v3762 = vadd.f32 %v3760, %v3761
      %3763 = vadd.xlane.f32.xlu0 %v3762
      %v3764 = vpop.xlane.xlu0 %3763
      %3765 = vrot.lane.b32.xlu0 %v729, 64
      %v3766 = vpop.permute.xlu0 %3765
      %3767 = vrot.lane.b32.xlu0 %v735, 64
      %v3768 = vpop.permute.xlu0 %3767
      %3769 = vrot.lane.b32.xlu0 %v741, 64
      %v3770 = vpop.permute.xlu0 %3769
      %3771 = vrot.lane.b32.xlu0 %v747, 64
      %v3772 = vpop.permute.xlu0 %3771
      %3773 = vrot.lane.b32.xlu0 %v753, 64
      %v3774 = vpop.permute.xlu0 %3773
      %3775 = vrot.lane.b32.xlu0 %v759, 64
      %v3776 = vpop.permute.xlu0 %3775
      %3777 = vrot.lane.b32.xlu0 %v765, 64
      %v3778 = vpop.permute.xlu0 %3777
      %3779 = vrot.lane.b32.xlu0 %v771, 64
      %v3780 = vpop.permute.xlu0 %3779
      %3781 = vrot.lane.b32.xlu0 %v777, 64
      %v3782 = vpop.permute.xlu0 %3781
      %3783 = vrot.lane.b32.xlu0 %v783, 64
      %v3784 = vpop.permute.xlu0 %3783
      %3785 = vrot.lane.b32.xlu0 %v789, 64
      %v3786 = vpop.permute.xlu0 %3785
      %3787 = vrot.lane.b32.xlu0 %v795, 64
      %v3788 = vpop.permute.xlu0 %3787
      %3789 = vrot.lane.b32.xlu0 %v801, 64
      %v3790 = vpop.permute.xlu0 %3789
      %3791 = vrot.lane.b32.xlu0 %v807, 64
      %v3792 = vpop.permute.xlu0 %3791
      %3793 = vrot.lane.b32.xlu0 %v813, 64
      %v3794 = vpop.permute.xlu0 %3793
      %3795 = vrot.lane.b32.xlu0 %v819, 64
      %v3796 = vpop.permute.xlu0 %3795
      %3797 = vrot.lane.b32.xlu0 %v825, 64
      %v3798 = vpop.permute.xlu0 %3797
      %3799 = vrot.lane.b32.xlu0 %v831, 64
      %v3800 = vpop.permute.xlu0 %3799
      %3801 = vrot.lane.b32.xlu0 %v837, 64
      %v3802 = vpop.permute.xlu0 %3801
      %3803 = vrot.lane.b32.xlu0 %v843, 64
      %v3804 = vpop.permute.xlu0 %3803
      %3805 = vrot.lane.b32.xlu0 %v849, 64
      %v3806 = vpop.permute.xlu0 %3805
      %3807 = vrot.lane.b32.xlu0 %v855, 64
      %v3808 = vpop.permute.xlu0 %3807
      %3809 = vrot.lane.b32.xlu0 %v861, 64
      %v3810 = vpop.permute.xlu0 %3809
      %3811 = vrot.lane.b32.xlu0 %v867, 64
      %v3812 = vpop.permute.xlu0 %3811
      %3813 = vrot.lane.b32.xlu0 %v873, 64
      %v3814 = vpop.permute.xlu0 %3813
      %v3840 = vsel %vm1193, %v3567, 0
      %v3843 = vsel %vm1193, %v3571, 0
      %v3846 = vsel %vm1193, %v3575, 0
      %v3849 = vsel %vm1193, %v3579, 0
      %v3852 = vsel %vm1193, %v3583, 0
      %v3855 = vsel %vm1193, %v3587, 0
      %v3858 = vsel %vm1193, %v3591, 0
      %v3861 = vsel %vm1193, %v3595, 0
      %v3864 = vsel %vm1193, %v3599, 0
      %v3867 = vsel %vm1193, %v3603, 0
      %v3870 = vsel %vm1193, %v3607, 0
      %v3873 = vsel %vm1193, %v3611, 0
      %v3876 = vsel %vm1193, %v3615, 0
      %v3879 = vsel %vm1193, %v3619, 0
      %v3882 = vsel %vm1193, %v3623, 0
      %v3885 = vsel %vm1193, %v3627, 0
      %v3888 = vsel %vm1193, %v3631, 0
      %v3891 = vsel %vm1193, %v3635, 0
      %v3894 = vsel %vm1193, %v3639, 0
      %v3897 = vsel %vm1193, %v3643, 0
      %v3900 = vsel %vm1193, %v3647, 0
      %v3903 = vsel %vm1193, %v3651, 0
      %v3906 = vsel %vm1193, %v3655, 0
      %v3909 = vsel %vm1193, %v3659, 0
      %v3912 = vsel %vm1193, %v3663, 0
      %v3914 = vsel %vm1290, %v3814, 0
      %3916 = vmatprep.subr.mxu0 0.0
      %3917 = vmatpush1.msra.mxu0 %v3796
      %3918 = vmatprep.subr.mxu0 0.0
      %3919 = vmatpush1.msra.mxu0 %v3794
      %3920 = vmatprep.subr.mxu0 0.0
      %3921 = vmatpush1.msra.mxu0 %v3792
      %3922 = vmatprep.subr.mxu0 0.0
      %3923 = vmatpush1.msra.mxu0 %v3790
      %3924 = vmatprep.subr.mxu0 0.0
      %3925 = vmatpush1.msra.mxu0 %v3788
      %3926 = vmatprep.subr.mxu0 0.0
      %3927 = vmatpush1.msra.mxu0 %v3786
      %3928 = vmatprep.subr.mxu0 0.0
      %3929 = vmatpush1.msra.mxu0 %v3784
      %3930 = vmatprep.subr.mxu0 0.0
      %3931 = vmatpush1.msra.mxu0 %v3782
      %3932 = vmatprep.subr.mxu0 0.0
      %3933 = vmatpush1.msra.mxu0 %v3780
      %3934 = vmatprep.subr.mxu0 0.0
      %3935 = vmatpush1.msra.mxu0 %v3778
      %3936 = vmatprep.subr.mxu0 0.0
      %3937 = vmatpush1.msra.mxu0 %v3776
      %3938 = vmatprep.subr.mxu0 0.0
      %3939 = vmatpush1.msra.mxu0 %v3774
      %3940 = vmatprep.subr.mxu0 0.0
      %3941 = vmatpush1.msra.mxu0 %v3772
      %3942 = vmatprep.subr.mxu0 0.0
      %3943 = vmatpush1.msra.mxu0 %v3770
      %3944 = vmatprep.subr.mxu0 0.0
      %3945 = vmatpush1.msra.mxu0 %v3768
      %3946 = vmatprep.subr.mxu0 0.0
      %3947 = vmatpush1.msra.mxu0 %v3766
      %3948 = vmatprep.subr.mxu0 0.0
      %3949 = vmatpush2.msra.mxu0 0.0
      %3950 = vmatprep.subr.mxu0 0.0
      %3951 = vmatpush2.msra.mxu0 0.0
      %3952 = vmatprep.subr.mxu0 0.0
      %3953 = vmatpush2.msra.mxu0 0.0
      %3954 = vmatprep.subr.mxu0 0.0
      %3955 = vmatpush2.msra.mxu0 0.0
      %3956 = vmatprep.subr.mxu0 0.0
      %3957 = vmatpush2.msra.mxu0 0.0
      %3958 = vmatprep.subr.mxu0 0.0
      %3959 = vmatpush2.msra.mxu0 0.0
      %3960 = vmatprep.subr.mxu0 0.0
      %3961 = vmatpush2.msra.mxu0 0.0
      %3962 = vmatprep.subr.mxu0 0.0
      %3963 = vmatpush2.msra.mxu0 %v3914
      %3964 = vmatprep.subr.mxu0 0.0
      %3965 = vmatpush2.msra.mxu0 %v3812
      %3966 = vmatprep.subr.mxu0 0.0
      %3967 = vmatpush2.msra.mxu0 %v3810
      %3968 = vmatprep.subr.mxu0 0.0
      %3969 = vmatpush2.msra.mxu0 %v3808
      %3970 = vmatprep.subr.mxu0 0.0
      %3971 = vmatpush2.msra.mxu0 %v3806
      %3972 = vmatprep.subr.mxu0 0.0
      %3973 = vmatpush2.msra.mxu0 %v3804
      %3974 = vmatprep.subr.mxu0 0.0
      %3975 = vmatpush2.msra.mxu0 %v3802
      %3976 = vmatprep.subr.mxu0 0.0
      %3977 = vmatpush2.msra.mxu0 %v3800
      %3978 = vmatprep.subr.mxu0 0.0
      %3979 = vmatpush2.msra.mxu0 %v3798
      %3980 = vmatprep.mubr.f32.mxu0 %v3840
      %3981 = vmatmul.mubr.f32.gmra.mxu0 %v3565
      %v3982 = vpop.f32.mrf.mxu0
      %v3983 = vadd.f32 0.0, %v3982
      %v3984 = vpop.f32.mrf.mxu0
      %3985 = vmatprep.mubr.f32.mxu0 %v3843
      %3986 = vmatmul.mubr.f32.gmra.mxu0 %v3569
      %v3987 = vpop.f32.mrf.mxu0
      %v3988 = vadd.f32 0.0, %v3987
      %v3989 = vpop.f32.mrf.mxu0
      %3990 = vmatprep.mubr.f32.mxu0 %v3846
      %3991 = vmatmul.mubr.f32.gmra.mxu0 %v3573
      %v3992 = vpop.f32.mrf.mxu0
      %v3993 = vadd.f32 0.0, %v3992
      %v3994 = vpop.f32.mrf.mxu0
      %3995 = vmatprep.mubr.f32.mxu0 %v3849
      %3996 = vmatmul.mubr.f32.gmra.mxu0 %v3577
      %v3997 = vpop.f32.mrf.mxu0
      %v3998 = vadd.f32 0.0, %v3997
      %v3999 = vpop.f32.mrf.mxu0
      %4000 = vmatprep.mubr.f32.mxu0 %v3852
      %4001 = vmatmul.mubr.f32.gmra.mxu0 %v3581
      %v4002 = vpop.f32.mrf.mxu0
      %v4003 = vadd.f32 0.0, %v4002
      %v4004 = vpop.f32.mrf.mxu0
      %4005 = vmatprep.mubr.f32.mxu0 %v3855
      %4006 = vmatmul.mubr.f32.gmra.mxu0 %v3585
      %v4007 = vpop.f32.mrf.mxu0
      %v4008 = vadd.f32 0.0, %v4007
      %v4009 = vpop.f32.mrf.mxu0
      %4010 = vmatprep.mubr.f32.mxu0 %v3858
      %4011 = vmatmul.mubr.f32.gmra.mxu0 %v3589
      %v4012 = vpop.f32.mrf.mxu0
      %v4013 = vadd.f32 0.0, %v4012
      %v4014 = vpop.f32.mrf.mxu0
      %4015 = vmatprep.mubr.f32.mxu0 %v3861
      %4016 = vmatmul.mubr.f32.gmra.mxu0 %v3593
      %v4017 = vpop.f32.mrf.mxu0
      %v4018 = vadd.f32 0.0, %v4017
      %v4019 = vpop.f32.mrf.mxu0
      %4020 = vmatprep.mubr.f32.mxu0 %v3864
      %4021 = vmatmul.mubr.f32.gmra.mxu0 %v3597
      %v4022 = vpop.f32.mrf.mxu0
      %v4023 = vadd.f32 0.0, %v4022
      %v4024 = vpop.f32.mrf.mxu0
      %4025 = vmatprep.mubr.f32.mxu0 %v3867
      %4026 = vmatmul.mubr.f32.gmra.mxu0 %v3601
      %v4027 = vpop.f32.mrf.mxu0
      %v4028 = vadd.f32 0.0, %v4027
      %v4029 = vpop.f32.mrf.mxu0
      %4030 = vmatprep.mubr.f32.mxu0 %v3870
      %4031 = vmatmul.mubr.f32.gmra.mxu0 %v3605
      %v4032 = vpop.f32.mrf.mxu0
      %v4033 = vadd.f32 0.0, %v4032
      %v4034 = vpop.f32.mrf.mxu0
      %4035 = vmatprep.mubr.f32.mxu0 %v3873
      %4036 = vmatmul.mubr.f32.gmra.mxu0 %v3609
      %v4037 = vpop.f32.mrf.mxu0
      %v4038 = vadd.f32 0.0, %v4037
      %v4039 = vpop.f32.mrf.mxu0
      %4040 = vmatprep.mubr.f32.mxu0 %v3876
      %4041 = vmatmul.mubr.f32.gmra.mxu0 %v3613
      %v4042 = vpop.f32.mrf.mxu0
      %v4043 = vadd.f32 0.0, %v4042
      %v4044 = vpop.f32.mrf.mxu0
      %4045 = vmatprep.mubr.f32.mxu0 %v3879
      %4046 = vmatmul.mubr.f32.gmra.mxu0 %v3617
      %v4047 = vpop.f32.mrf.mxu0
      %v4048 = vadd.f32 0.0, %v4047
      %v4049 = vpop.f32.mrf.mxu0
      %4050 = vmatprep.mubr.f32.mxu0 %v3882
      %4051 = vmatmul.mubr.f32.gmra.mxu0 %v3621
      %v4052 = vpop.f32.mrf.mxu0
      %v4053 = vadd.f32 0.0, %v4052
      %v4054 = vpop.f32.mrf.mxu0
      %4055 = vmatprep.mubr.f32.mxu0 %v3885
      %4056 = vmatmul.mubr.f32.gmra.mxu0 %v3625
      %v4057 = vpop.f32.mrf.mxu0
      %v4058 = vadd.f32 0.0, %v4057
      %v4059 = vpop.f32.mrf.mxu0
      %4060 = vmatprep.mubr.f32.mxu0 %v3888
      %4061 = vmatmul.mubr.f32.gmra.mxu0 %v3629
      %v4062 = vpop.f32.mrf.mxu0
      %v4063 = vadd.f32 0.0, %v4062
      %v4064 = vpop.f32.mrf.mxu0
      %4065 = vmatprep.mubr.f32.mxu0 %v3891
      %4066 = vmatmul.mubr.f32.gmra.mxu0 %v3633
      %v4067 = vpop.f32.mrf.mxu0
      %v4068 = vadd.f32 0.0, %v4067
      %v4069 = vpop.f32.mrf.mxu0
      %4070 = vmatprep.mubr.f32.mxu0 %v3894
      %4071 = vmatmul.mubr.f32.gmra.mxu0 %v3637
      %v4072 = vpop.f32.mrf.mxu0
      %v4073 = vadd.f32 0.0, %v4072
      %v4074 = vpop.f32.mrf.mxu0
      %4075 = vmatprep.mubr.f32.mxu0 %v3897
      %4076 = vmatmul.mubr.f32.gmra.mxu0 %v3641
      %v4077 = vpop.f32.mrf.mxu0
      %v4078 = vadd.f32 0.0, %v4077
      %v4079 = vpop.f32.mrf.mxu0
      %4080 = vmatprep.mubr.f32.mxu0 %v3900
      %4081 = vmatmul.mubr.f32.gmra.mxu0 %v3645
      %v4082 = vpop.f32.mrf.mxu0
      %v4083 = vadd.f32 0.0, %v4082
      %v4084 = vpop.f32.mrf.mxu0
      %4085 = vmatprep.mubr.f32.mxu0 %v3903
      %4086 = vmatmul.mubr.f32.gmra.mxu0 %v3649
      %v4087 = vpop.f32.mrf.mxu0
      %v4088 = vadd.f32 0.0, %v4087
      %v4089 = vpop.f32.mrf.mxu0
      %4090 = vmatprep.mubr.f32.mxu0 %v3906
      %4091 = vmatmul.mubr.f32.gmra.mxu0 %v3653
      %v4092 = vpop.f32.mrf.mxu0
      %v4093 = vadd.f32 0.0, %v4092
      %v4094 = vpop.f32.mrf.mxu0
      %4095 = vmatprep.mubr.f32.mxu0 %v3909
      %4096 = vmatmul.mubr.f32.gmra.mxu0 %v3657
      %v4097 = vpop.f32.mrf.mxu0
      %v4098 = vadd.f32 0.0, %v4097
      %v4099 = vpop.f32.mrf.mxu0
      %4100 = vmatprep.mubr.f32.mxu0 %v3912
      %4101 = vmatmul.mubr.f32.gmra.mxu0 %v3661
      %v4102 = vpop.f32.mrf.mxu0
      %v4103 = vadd.f32 0.0, %v4102
      %v4104 = vpop.f32.mrf.mxu0
      %4105 = vdwg.mxu0
      %v4106 = vld [vmem:[#allocation2] sm:$0xff]
      %v4107 = vld [vmem:[#allocation2 + $0x8] sm:$0xff]
      %v4108 = vld [vmem:[#allocation2 + $0x10] sm:$0xff]
      %v4109 = vld [vmem:[#allocation2 + $0x18] sm:$0xff]
      %v4110 = vld [vmem:[#allocation2 + $0x20] sm:$0xff]
      %v4111 = vld [vmem:[#allocation2 + $0x28] sm:$0xff]
      %v4112 = vld [vmem:[#allocation2 + $0x30] sm:$0xff]
      %v4113 = vld [vmem:[#allocation2 + $0x38] sm:$0xff]
      %v4114 = vld [vmem:[#allocation2 + $0x40] sm:$0xff]
      %v4115 = vld [vmem:[#allocation2 + $0x48] sm:$0xff]
      %v4116 = vld [vmem:[#allocation2 + $0x50] sm:$0xff]
      %v4117 = vld [vmem:[#allocation2 + $0x58] sm:$0xff]
      %v4118 = vld [vmem:[#allocation2 + $0x60] sm:$0xff]
      %v4119 = vld [vmem:[#allocation2 + $0x68] sm:$0xff]
      %v4120 = vld [vmem:[#allocation2 + $0x70] sm:$0xff]
      %v4121 = vld [vmem:[#allocation2 + $0x78] sm:$0xff]
      %v4122 = vld [vmem:[#allocation2 + $0x80] sm:$0xff]
      %v4123 = vld [vmem:[#allocation2 + $0x88] sm:$0xff]
      %v4124 = vld [vmem:[#allocation2 + $0x90] sm:$0xff]
      %v4125 = vld [vmem:[#allocation2 + $0x98] sm:$0xff]
      %v4126 = vld [vmem:[#allocation2 + $0xa0] sm:$0xff]
      %v4127 = vld [vmem:[#allocation2 + $0xa8] sm:$0xff]
      %v4128 = vld [vmem:[#allocation2 + $0xb0] sm:$0xff]
      %v4129 = vld [vmem:[#allocation2 + $0xb8] sm:$0xff]
      %v4130 = vld [vmem:[#allocation2 + $0xc0] sm:$0xf]
      %v4131 = vrcp.pop %v3667
      %v4132 = vrcp.pop %v3671
      %v4133 = vrcp.pop %v3675
      %v4134 = vrcp.pop %v3679
      %v4135 = vrcp.pop %v3683
      %v4136 = vrcp.pop %v3687
      %v4137 = vrcp.pop %v3691
      %v4138 = vrcp.pop %v3695
      %v4139 = vrcp.pop %v3699
      %v4140 = vrcp.pop %v3703
      %v4141 = vrcp.pop %v3707
      %v4142 = vrcp.pop %v3711
      %v4143 = vrcp.pop %v3715
      %v4144 = vrcp.pop %v3719
      %v4145 = vrcp.pop %v3723
      %v4146 = vrcp.pop %v3727
      %v4147 = vrcp.pop %v3731
      %v4148 = vrcp.pop %v3735
      %v4149 = vrcp.pop %v3739
      %v4150 = vrcp.pop %v3743
      %v4151 = vrcp.pop %v3747
      %v4152 = vrcp.pop %v3751
      %v4153 = vrcp.pop %v3755
      %v4154 = vrcp.pop %v3759
      %v4155 = vrcp.pop %v3764
      %v4156 = vmul.f32 %v3983, %v4131
      %v4157 = vmul.f32 %v3988, %v4132
      %v4158 = vmul.f32 %v3993, %v4133
      %v4159 = vmul.f32 %v3998, %v4134
      %v4160 = vmul.f32 %v4003, %v4135
      %v4161 = vmul.f32 %v4008, %v4136
      %v4162 = vmul.f32 %v4013, %v4137
      %v4163 = vmul.f32 %v4018, %v4138
      %v4164 = vmul.f32 %v4023, %v4139
      %v4165 = vmul.f32 %v4028, %v4140
      %v4166 = vmul.f32 %v4033, %v4141
      %v4167 = vmul.f32 %v4038, %v4142
      %v4168 = vmul.f32 %v4043, %v4143
      %v4169 = vmul.f32 %v4048, %v4144
      %v4170 = vmul.f32 %v4053, %v4145
      %v4171 = vmul.f32 %v4058, %v4146
      %v4172 = vmul.f32 %v4063, %v4147
      %v4173 = vmul.f32 %v4068, %v4148
      %v4174 = vmul.f32 %v4073, %v4149
      %v4175 = vmul.f32 %v4078, %v4150
      %v4176 = vmul.f32 %v4083, %v4151
      %v4177 = vmul.f32 %v4088, %v4152
      %v4178 = vmul.f32 %v4093, %v4153
      %v4179 = vmul.f32 %v4098, %v4154
      %v4180 = vmul.f32 %v4103, %v4155
      %v4181 = vadd.f32 %v4106, %v4156
      %v4182 = vadd.f32 %v4107, %v4157
      %v4183 = vadd.f32 %v4108, %v4158
      %v4184 = vadd.f32 %v4109, %v4159
      %v4185 = vadd.f32 %v4110, %v4160
      %v4186 = vadd.f32 %v4111, %v4161
      %v4187 = vadd.f32 %v4112, %v4162
      %v4188 = vadd.f32 %v4113, %v4163
      %v4189 = vadd.f32 %v4114, %v4164
      %v4190 = vadd.f32 %v4115, %v4165
      %v4191 = vadd.f32 %v4116, %v4166
      %v4192 = vadd.f32 %v4117, %v4167
      %v4193 = vadd.f32 %v4118, %v4168
      %v4194 = vadd.f32 %v4119, %v4169
      %v4195 = vadd.f32 %v4120, %v4170
      %v4196 = vadd.f32 %v4121, %v4171
      %v4197 = vadd.f32 %v4122, %v4172
      %v4198 = vadd.f32 %v4123, %v4173
      %v4199 = vadd.f32 %v4124, %v4174
      %v4200 = vadd.f32 %v4125, %v4175
      %v4201 = vadd.f32 %v4126, %v4176
      %v4202 = vadd.f32 %v4127, %v4177
      %v4203 = vadd.f32 %v4128, %v4178
      %v4204 = vadd.f32 %v4129, %v4179
      %v4205 = vadd.f32 %v4130, %v4180
      %4206 = vst.msk [vmem:[#allocation2] sm:$0xff] %vm363, %v4181
      %4207 = vst.msk [vmem:[#allocation2 + $0x8] sm:$0xff] %vm363, %v4182
      %4208 = vst.msk [vmem:[#allocation2 + $0x10] sm:$0xff] %vm363, %v4183
      %4209 = vst.msk [vmem:[#allocation2 + $0x18] sm:$0xff] %vm363, %v4184
      %4210 = vst.msk [vmem:[#allocation2 + $0x20] sm:$0xff] %vm363, %v4185
      %4211 = vst.msk [vmem:[#allocation2 + $0x28] sm:$0xff] %vm363, %v4186
      %4212 = vst.msk [vmem:[#allocation2 + $0x30] sm:$0xff] %vm363, %v4187
      %4213 = vst.msk [vmem:[#allocation2 + $0x38] sm:$0xff] %vm363, %v4188
      %4214 = vst.msk [vmem:[#allocation2 + $0x40] sm:$0xff] %vm363, %v4189
      %4215 = vst.msk [vmem:[#allocation2 + $0x48] sm:$0xff] %vm363, %v4190
      %4216 = vst.msk [vmem:[#allocation2 + $0x50] sm:$0xff] %vm363, %v4191
      %4217 = vst.msk [vmem:[#allocation2 + $0x58] sm:$0xff] %vm363, %v4192
      %4218 = vst.msk [vmem:[#allocation2 + $0x60] sm:$0xff] %vm363, %v4193
      %4219 = vst.msk [vmem:[#allocation2 + $0x68] sm:$0xff] %vm363, %v4194
      %4220 = vst.msk [vmem:[#allocation2 + $0x70] sm:$0xff] %vm363, %v4195
      %4221 = vst.msk [vmem:[#allocation2 + $0x78] sm:$0xff] %vm363, %v4196
      %4222 = vst.msk [vmem:[#allocation2 + $0x80] sm:$0xff] %vm363, %v4197
      %4223 = vst.msk [vmem:[#allocation2 + $0x88] sm:$0xff] %vm363, %v4198
      %4224 = vst.msk [vmem:[#allocation2 + $0x90] sm:$0xff] %vm363, %v4199
      %4225 = vst.msk [vmem:[#allocation2 + $0x98] sm:$0xff] %vm363, %v4200
      %4226 = vst.msk [vmem:[#allocation2 + $0xa0] sm:$0xff] %vm363, %v4201
      %4227 = vst.msk [vmem:[#allocation2 + $0xa8] sm:$0xff] %vm363, %v4202
      %4228 = vst.msk [vmem:[#allocation2 + $0xb0] sm:$0xff] %vm363, %v4203
      %4229 = vst.msk [vmem:[#allocation2 + $0xb8] sm:$0xff] %vm363, %v4204
      %4230 = vst.msk [vmem:[#allocation2 + $0xc0] sm:$0xf] %vm901, %v4205
      %4231 = vrot.lane.b32.xlu0 %v506, 32
      %v4232 = vpop.permute.xlu0 %4231
      %4233 = vrot.lane.b32.xlu0 %v512, 32
      %v4234 = vpop.permute.xlu0 %4233
      %4235 = vrot.lane.b32.xlu0 %v518, 32
      %v4236 = vpop.permute.xlu0 %4235
      %4237 = vrot.lane.b32.xlu0 %v524, 32
      %v4238 = vpop.permute.xlu0 %4237
      %4239 = vrot.lane.b32.xlu0 %v530, 32
      %v4240 = vpop.permute.xlu0 %4239
      %4241 = vrot.lane.b32.xlu0 %v536, 32
      %v4242 = vpop.permute.xlu0 %4241
      %4243 = vrot.lane.b32.xlu0 %v542, 32
      %v4244 = vpop.permute.xlu0 %4243
      %4245 = vrot.lane.b32.xlu0 %v548, 32
      %v4246 = vpop.permute.xlu0 %4245
      %4247 = vrot.lane.b32.xlu0 %v554, 32
      %v4248 = vpop.permute.xlu0 %4247
      %4249 = vrot.lane.b32.xlu0 %v560, 32
      %v4250 = vpop.permute.xlu0 %4249
      %4251 = vrot.lane.b32.xlu0 %v566, 32
      %v4252 = vpop.permute.xlu0 %4251
      %4253 = vrot.lane.b32.xlu0 %v572, 32
      %v4254 = vpop.permute.xlu0 %4253
      %4255 = vrot.lane.b32.xlu0 %v578, 32
      %v4256 = vpop.permute.xlu0 %4255
      %4257 = vrot.lane.b32.xlu0 %v584, 32
      %v4258 = vpop.permute.xlu0 %4257
      %4259 = vrot.lane.b32.xlu0 %v590, 32
      %v4260 = vpop.permute.xlu0 %4259
      %4261 = vrot.lane.b32.xlu0 %v596, 32
      %v4262 = vpop.permute.xlu0 %4261
      %4263 = vrot.lane.b32.xlu0 %v602, 32
      %v4264 = vpop.permute.xlu0 %4263
      %4265 = vrot.lane.b32.xlu0 %v608, 32
      %v4266 = vpop.permute.xlu0 %4265
      %4267 = vrot.lane.b32.xlu0 %v614, 32
      %v4268 = vpop.permute.xlu0 %4267
      %4269 = vrot.lane.b32.xlu0 %v620, 32
      %v4270 = vpop.permute.xlu0 %4269
      %4271 = vrot.lane.b32.xlu0 %v626, 32
      %v4272 = vpop.permute.xlu0 %4271
      %4273 = vrot.lane.b32.xlu0 %v632, 32
      %v4274 = vpop.permute.xlu0 %4273
      %4275 = vrot.lane.b32.xlu0 %v638, 32
      %v4276 = vpop.permute.xlu0 %4275
      %4277 = vrot.lane.b32.xlu0 %v644, 32
      %v4278 = vpop.permute.xlu0 %4277
      %4279 = vrot.lane.b32.xlu0 %v650, 32
      %v4280 = vpop.permute.xlu0 %4279
      %v4281 = vsel %vm363, %v4232, 0
      %v4283 = vsel %vm363, %v4234, 0
      %v4285 = vsel %vm363, %v4236, 0
      %v4287 = vsel %vm363, %v4238, 0
      %v4289 = vsel %vm363, %v4240, 0
      %v4291 = vsel %vm363, %v4242, 0
      %v4293 = vsel %vm363, %v4244, 0
      %v4295 = vsel %vm363, %v4246, 0
      %v4297 = vsel %vm363, %v4248, 0
      %v4299 = vsel %vm363, %v4250, 0
      %v4301 = vsel %vm363, %v4252, 0
      %v4303 = vsel %vm363, %v4254, 0
      %v4305 = vsel %vm363, %v4256, 0
      %v4307 = vsel %vm363, %v4258, 0
      %v4309 = vsel %vm363, %v4260, 0
      %v4311 = vsel %vm363, %v4262, 0
      %v4313 = vsel %vm363, %v4264, 0
      %v4315 = vsel %vm363, %v4266, 0
      %v4317 = vsel %vm363, %v4268, 0
      %v4319 = vsel %vm363, %v4270, 0
      %v4321 = vsel %vm363, %v4272, 0
      %v4323 = vsel %vm363, %v4274, 0
      %v4325 = vsel %vm363, %v4276, 0
      %v4327 = vsel %vm363, %v4278, 0
      %v4329 = vsel %vm363, %v4280, 0
      %4331 = vmatprep.subr.mxu0 0.0
      %4332 = vmatpush1.msra.mxu0 0.0
      %4333 = vmatprep.subr.mxu0 0.0
      %4334 = vmatpush1.msra.mxu0 0.0
      %4335 = vmatprep.subr.mxu0 0.0
      %4336 = vmatpush1.msra.mxu0 0.0
      %4337 = vmatprep.subr.mxu0 0.0
      %4338 = vmatpush1.msra.mxu0 0.0
      %4339 = vmatprep.subr.mxu0 0.0
      %4340 = vmatpush1.msra.mxu0 0.0
      %4341 = vmatprep.subr.mxu0 0.0
      %4342 = vmatpush1.msra.mxu0 0.0
      %4343 = vmatprep.subr.mxu0 0.0
      %4344 = vmatpush1.msra.mxu0 0.0
      %4345 = vmatprep.subr.mxu0 0.0
      %4346 = vmatpush1.msra.mxu0 0.0
      %4347 = vmatprep.subr.mxu0 0.0
      %4348 = vmatpush1.msra.mxu0 0.0
      %4349 = vmatprep.subr.mxu0 0.0
      %4350 = vmatpush1.msra.mxu0 0.0
      %4351 = vmatprep.subr.mxu0 0.0
      %4352 = vmatpush1.msra.mxu0 0.0
      %4353 = vmatprep.subr.mxu0 0.0
      %4354 = vmatpush1.msra.mxu0 0.0
      %4355 = vmatprep.subr.mxu0 %v304
      %4356 = vmatpush1.msra.mxu0 %v303
      %4357 = vmatprep.subr.mxu0 %v302
      %4358 = vmatpush1.msra.mxu0 %v301
      %4359 = vmatprep.subr.mxu0 %v300
      %4360 = vmatpush1.msra.mxu0 %v299
      %4361 = vmatprep.subr.mxu0 %v298
      %4362 = vmatpush1.msra.mxu0 %v297
      %4363 = vmatprep.subr.mxu0 0.0
      %4364 = vmatpush2.msra.mxu0 0.0
      %4365 = vmatprep.subr.mxu0 0.0
      %4366 = vmatpush2.msra.mxu0 0.0
      %4367 = vmatprep.subr.mxu0 0.0
      %4368 = vmatpush2.msra.mxu0 0.0
      %4369 = vmatprep.subr.mxu0 0.0
      %4370 = vmatpush2.msra.mxu0 0.0
      %4371 = vmatprep.subr.mxu0 0.0
      %4372 = vmatpush2.msra.mxu0 0.0
      %4373 = vmatprep.subr.mxu0 0.0
      %4374 = vmatpush2.msra.mxu0 0.0
      %4375 = vmatprep.subr.mxu0 0.0
      %4376 = vmatpush2.msra.mxu0 0.0
      %4377 = vmatprep.subr.mxu0 0.0
      %4378 = vmatpush2.msra.mxu0 0.0
      %4379 = vmatprep.subr.mxu0 0.0
      %4380 = vmatpush2.msra.mxu0 0.0
      %4381 = vmatprep.subr.mxu0 0.0
      %4382 = vmatpush2.msra.mxu0 0.0
      %4383 = vmatprep.subr.mxu0 0.0
      %4384 = vmatpush2.msra.mxu0 0.0
      %4385 = vmatprep.subr.mxu0 0.0
      %4386 = vmatpush2.msra.mxu0 0.0
      %4387 = vmatprep.subr.mxu0 0.0
      %4388 = vmatpush2.msra.mxu0 0.0
      %4389 = vmatprep.subr.mxu0 0.0
      %4390 = vmatpush2.msra.mxu0 0.0
      %4391 = vmatprep.subr.mxu0 0.0
      %4392 = vmatpush2.msra.mxu0 0.0
      %4393 = vmatprep.subr.mxu0 0.0
      %4394 = vmatpush2.msra.mxu0 0.0
      %4395 = vmatprep.mubr.f32.mxu0 0.0
      %4396 = vmatmul.mubr.f32.gmra.mxu0 %v4281
      %v4397 = vpop.f32.mrf.mxu0
      %v4398 = vadd.f32 %v305, %v4397
      %v4399 = vpop.f32.mrf.mxu0
      %v4400 = vadd.f32 %v306, %v4399
      %4401 = vmatprep.mubr.f32.mxu0 0.0
      %4402 = vmatmul.mubr.f32.gmra.mxu0 %v4283
      %v4403 = vpop.f32.mrf.mxu0
      %v4404 = vadd.f32 %v307, %v4403
      %v4405 = vpop.f32.mrf.mxu0
      %v4406 = vadd.f32 %v308, %v4405
      %4407 = vmatprep.mubr.f32.mxu0 0.0
      %4408 = vmatmul.mubr.f32.gmra.mxu0 %v4285
      %v4409 = vpop.f32.mrf.mxu0
      %v4410 = vadd.f32 %v309, %v4409
      %v4411 = vpop.f32.mrf.mxu0
      %v4412 = vadd.f32 %v310, %v4411
      %4413 = vmatprep.mubr.f32.mxu0 0.0
      %4414 = vmatmul.mubr.f32.gmra.mxu0 %v4287
      %v4415 = vpop.f32.mrf.mxu0
      %v4416 = vadd.f32 %v311, %v4415
      %v4417 = vpop.f32.mrf.mxu0
      %v4418 = vadd.f32 %v312, %v4417
      %4419 = vmatprep.mubr.f32.mxu0 0.0
      %4420 = vmatmul.mubr.f32.gmra.mxu0 %v4289
      %v4421 = vpop.f32.mrf.mxu0
      %v4422 = vadd.f32 %v313, %v4421
      %v4423 = vpop.f32.mrf.mxu0
      %v4424 = vadd.f32 %v314, %v4423
      %4425 = vmatprep.mubr.f32.mxu0 0.0
      %4426 = vmatmul.mubr.f32.gmra.mxu0 %v4291
      %v4427 = vpop.f32.mrf.mxu0
      %v4428 = vadd.f32 %v315, %v4427
      %v4429 = vpop.f32.mrf.mxu0
      %v4430 = vadd.f32 %v316, %v4429
      %4431 = vmatprep.mubr.f32.mxu0 0.0
      %4432 = vmatmul.mubr.f32.gmra.mxu0 %v4293
      %v4433 = vpop.f32.mrf.mxu0
      %v4434 = vadd.f32 %v317, %v4433
      %v4435 = vpop.f32.mrf.mxu0
      %v4436 = vadd.f32 %v318, %v4435
      %4437 = vmatprep.mubr.f32.mxu0 0.0
      %4438 = vmatmul.mubr.f32.gmra.mxu0 %v4295
      %v4439 = vpop.f32.mrf.mxu0
      %v4440 = vadd.f32 %v319, %v4439
      %v4441 = vpop.f32.mrf.mxu0
      %v4442 = vadd.f32 %v320, %v4441
      %4443 = vmatprep.mubr.f32.mxu0 0.0
      %4444 = vmatmul.mubr.f32.gmra.mxu0 %v4297
      %v4445 = vpop.f32.mrf.mxu0
      %v4446 = vadd.f32 %v321, %v4445
      %v4447 = vpop.f32.mrf.mxu0
      %v4448 = vadd.f32 %v322, %v4447
      %4449 = vmatprep.mubr.f32.mxu0 0.0
      %4450 = vmatmul.mubr.f32.gmra.mxu0 %v4299
      %v4451 = vpop.f32.mrf.mxu0
      %v4452 = vadd.f32 %v323, %v4451
      %v4453 = vpop.f32.mrf.mxu0
      %v4454 = vadd.f32 %v324, %v4453
      %4455 = vmatprep.mubr.f32.mxu0 0.0
      %4456 = vmatmul.mubr.f32.gmra.mxu0 %v4301
      %v4457 = vpop.f32.mrf.mxu0
      %v4458 = vadd.f32 %v325, %v4457
      %v4459 = vpop.f32.mrf.mxu0
      %v4460 = vadd.f32 %v326, %v4459
      %4461 = vmatprep.mubr.f32.mxu0 0.0
      %4462 = vmatmul.mubr.f32.gmra.mxu0 %v4303
      %v4463 = vpop.f32.mrf.mxu0
      %v4464 = vadd.f32 %v327, %v4463
      %v4465 = vpop.f32.mrf.mxu0
      %v4466 = vadd.f32 %v328, %v4465
      %4467 = vmatprep.mubr.f32.mxu0 0.0
      %4468 = vmatmul.mubr.f32.gmra.mxu0 %v4305
      %v4469 = vpop.f32.mrf.mxu0
      %v4470 = vadd.f32 %v329, %v4469
      %v4471 = vpop.f32.mrf.mxu0
      %v4472 = vadd.f32 %v330, %v4471
      %4473 = vmatprep.mubr.f32.mxu0 0.0
      %4474 = vmatmul.mubr.f32.gmra.mxu0 %v4307
      %v4475 = vpop.f32.mrf.mxu0
      %v4476 = vadd.f32 %v331, %v4475
      %v4477 = vpop.f32.mrf.mxu0
      %v4478 = vadd.f32 %v332, %v4477
      %4479 = vmatprep.mubr.f32.mxu0 0.0
      %4480 = vmatmul.mubr.f32.gmra.mxu0 %v4309
      %v4481 = vpop.f32.mrf.mxu0
      %v4482 = vadd.f32 %v333, %v4481
      %v4483 = vpop.f32.mrf.mxu0
      %v4484 = vadd.f32 %v334, %v4483
      %4485 = vmatprep.mubr.f32.mxu0 0.0
      %4486 = vmatmul.mubr.f32.gmra.mxu0 %v4311
      %v4487 = vpop.f32.mrf.mxu0
      %v4488 = vadd.f32 %v335, %v4487
      %v4489 = vpop.f32.mrf.mxu0
      %v4490 = vadd.f32 %v336, %v4489
      %4491 = vmatprep.mubr.f32.mxu0 0.0
      %4492 = vmatmul.mubr.f32.gmra.mxu0 %v4313
      %v4493 = vpop.f32.mrf.mxu0
      %v4494 = vadd.f32 %v337, %v4493
      %v4495 = vpop.f32.mrf.mxu0
      %v4496 = vadd.f32 %v338, %v4495
      %4497 = vmatprep.mubr.f32.mxu0 0.0
      %4498 = vmatmul.mubr.f32.gmra.mxu0 %v4315
      %v4499 = vpop.f32.mrf.mxu0
      %v4500 = vadd.f32 %v339, %v4499
      %v4501 = vpop.f32.mrf.mxu0
      %v4502 = vadd.f32 %v340, %v4501
      %4503 = vmatprep.mubr.f32.mxu0 0.0
      %4504 = vmatmul.mubr.f32.gmra.mxu0 %v4317
      %v4505 = vpop.f32.mrf.mxu0
      %v4506 = vadd.f32 %v341, %v4505
      %v4507 = vpop.f32.mrf.mxu0
      %v4508 = vadd.f32 %v342, %v4507
      %4509 = vmatprep.mubr.f32.mxu0 0.0
      %4510 = vmatmul.mubr.f32.gmra.mxu0 %v4319
      %v4511 = vpop.f32.mrf.mxu0
      %v4512 = vadd.f32 %v343, %v4511
      %v4513 = vpop.f32.mrf.mxu0
      %v4514 = vadd.f32 %v344, %v4513
      %4515 = vmatprep.mubr.f32.mxu0 0.0
      %4516 = vmatmul.mubr.f32.gmra.mxu0 %v4321
      %v4517 = vpop.f32.mrf.mxu0
      %v4518 = vadd.f32 %v345, %v4517
      %v4519 = vpop.f32.mrf.mxu0
      %v4520 = vadd.f32 %v346, %v4519
      %4521 = vmatprep.mubr.f32.mxu0 0.0
      %4522 = vmatmul.mubr.f32.gmra.mxu0 %v4323
      %v4523 = vpop.f32.mrf.mxu0
      %v4524 = vadd.f32 %v347, %v4523
      %v4525 = vpop.f32.mrf.mxu0
      %v4526 = vadd.f32 %v348, %v4525
      %4527 = vmatprep.mubr.f32.mxu0 0.0
      %4528 = vmatmul.mubr.f32.gmra.mxu0 %v4325
      %v4529 = vpop.f32.mrf.mxu0
      %v4530 = vadd.f32 %v349, %v4529
      %v4531 = vpop.f32.mrf.mxu0
      %v4532 = vadd.f32 %v350, %v4531
      %4533 = vmatprep.mubr.f32.mxu0 0.0
      %4534 = vmatmul.mubr.f32.gmra.mxu0 %v4327
      %v4535 = vpop.f32.mrf.mxu0
      %v4536 = vadd.f32 %v351, %v4535
      %v4537 = vpop.f32.mrf.mxu0
      %v4538 = vadd.f32 %v352, %v4537
      %4539 = vmatprep.mubr.f32.mxu0 0.0
      %4540 = vmatmul.mubr.f32.gmra.mxu0 %v4329
      %v4541 = vpop.f32.mrf.mxu0
      %v4542 = vadd.f32 %v353, %v4541
      %v4543 = vpop.f32.mrf.mxu0
      %v4544 = vadd.f32 %v354, %v4543
      %4545 = vdwg.mxu0
      %v4546 = vsel %vm1193, %v4400, -inf
      %v4547 = vmax.f32 %v4398, %v4546
      %4548 = vmax.xlane.f32.xlu0 %v4547
      %v4549 = vpop.xlane.xlu0 %4548
      %v4550 = vsel %vm1193, %v4406, -inf
      %v4551 = vmax.f32 %v4404, %v4550
      %4552 = vmax.xlane.f32.xlu0 %v4551
      %v4553 = vpop.xlane.xlu0 %4552
      %v4554 = vsel %vm1193, %v4412, -inf
      %v4555 = vmax.f32 %v4410, %v4554
      %4556 = vmax.xlane.f32.xlu0 %v4555
      %v4557 = vpop.xlane.xlu0 %4556
      %v4558 = vsel %vm1193, %v4418, -inf
      %v4559 = vmax.f32 %v4416, %v4558
      %4560 = vmax.xlane.f32.xlu0 %v4559
      %v4561 = vpop.xlane.xlu0 %4560
      %v4562 = vsel %vm1193, %v4424, -inf
      %v4563 = vmax.f32 %v4422, %v4562
      %4564 = vmax.xlane.f32.xlu0 %v4563
      %v4565 = vpop.xlane.xlu0 %4564
      %v4566 = vsel %vm1193, %v4430, -inf
      %v4567 = vmax.f32 %v4428, %v4566
      %4568 = vmax.xlane.f32.xlu0 %v4567
      %v4569 = vpop.xlane.xlu0 %4568
      %v4570 = vsel %vm1193, %v4436, -inf
      %v4571 = vmax.f32 %v4434, %v4570
      %4572 = vmax.xlane.f32.xlu0 %v4571
      %v4573 = vpop.xlane.xlu0 %4572
      %v4574 = vsel %vm1193, %v4442, -inf
      %v4575 = vmax.f32 %v4440, %v4574
      %4576 = vmax.xlane.f32.xlu0 %v4575
      %v4577 = vpop.xlane.xlu0 %4576
      %v4578 = vsel %vm1193, %v4448, -inf
      %v4579 = vmax.f32 %v4446, %v4578
      %4580 = vmax.xlane.f32.xlu0 %v4579
      %v4581 = vpop.xlane.xlu0 %4580
      %v4582 = vsel %vm1193, %v4454, -inf
      %v4583 = vmax.f32 %v4452, %v4582
      %4584 = vmax.xlane.f32.xlu0 %v4583
      %v4585 = vpop.xlane.xlu0 %4584
      %v4586 = vsel %vm1193, %v4460, -inf
      %v4587 = vmax.f32 %v4458, %v4586
      %4588 = vmax.xlane.f32.xlu0 %v4587
      %v4589 = vpop.xlane.xlu0 %4588
      %v4590 = vsel %vm1193, %v4466, -inf
      %v4591 = vmax.f32 %v4464, %v4590
      %4592 = vmax.xlane.f32.xlu0 %v4591
      %v4593 = vpop.xlane.xlu0 %4592
      %v4594 = vsel %vm1193, %v4472, -inf
      %v4595 = vmax.f32 %v4470, %v4594
      %4596 = vmax.xlane.f32.xlu0 %v4595
      %v4597 = vpop.xlane.xlu0 %4596
      %v4598 = vsel %vm1193, %v4478, -inf
      %v4599 = vmax.f32 %v4476, %v4598
      %4600 = vmax.xlane.f32.xlu0 %v4599
      %v4601 = vpop.xlane.xlu0 %4600
      %v4602 = vsel %vm1193, %v4484, -inf
      %v4603 = vmax.f32 %v4482, %v4602
      %4604 = vmax.xlane.f32.xlu0 %v4603
      %v4605 = vpop.xlane.xlu0 %4604
      %v4606 = vsel %vm1193, %v4490, -inf
      %v4607 = vmax.f32 %v4488, %v4606
      %4608 = vmax.xlane.f32.xlu0 %v4607
      %v4609 = vpop.xlane.xlu0 %4608
      %v4610 = vsel %vm1193, %v4496, -inf
      %v4611 = vmax.f32 %v4494, %v4610
      %4612 = vmax.xlane.f32.xlu0 %v4611
      %v4613 = vpop.xlane.xlu0 %4612
      %v4614 = vsel %vm1193, %v4502, -inf
      %v4615 = vmax.f32 %v4500, %v4614
      %4616 = vmax.xlane.f32.xlu0 %v4615
      %v4617 = vpop.xlane.xlu0 %4616
      %v4618 = vsel %vm1193, %v4508, -inf
      %v4619 = vmax.f32 %v4506, %v4618
      %4620 = vmax.xlane.f32.xlu0 %v4619
      %v4621 = vpop.xlane.xlu0 %4620
      %v4622 = vsel %vm1193, %v4514, -inf
      %v4623 = vmax.f32 %v4512, %v4622
      %4624 = vmax.xlane.f32.xlu0 %v4623
      %v4625 = vpop.xlane.xlu0 %4624
      %v4626 = vsel %vm1193, %v4520, -inf
      %v4627 = vmax.f32 %v4518, %v4626
      %4628 = vmax.xlane.f32.xlu0 %v4627
      %v4629 = vpop.xlane.xlu0 %4628
      %v4630 = vsel %vm1193, %v4526, -inf
      %v4631 = vmax.f32 %v4524, %v4630
      %4632 = vmax.xlane.f32.xlu0 %v4631
      %v4633 = vpop.xlane.xlu0 %4632
      %v4634 = vsel %vm1193, %v4532, -inf
      %v4635 = vmax.f32 %v4530, %v4634
      %4636 = vmax.xlane.f32.xlu0 %v4635
      %v4637 = vpop.xlane.xlu0 %4636
      %v4638 = vsel %vm1193, %v4538, -inf
      %v4639 = vmax.f32 %v4536, %v4638
      %4640 = vmax.xlane.f32.xlu0 %v4639
      %v4641 = vpop.xlane.xlu0 %4640
      %v4642 = vsel %vm1290, %v4542, -inf
      %v4643 = vsel %vm1292, %v4544, -inf
      %v4644 = vmax.f32 %v4642, %v4643
      %4645 = vmax.xlane.f32.xlu0 %v4644
      %v4646 = vpop.xlane.xlu0 %4645
      %v4647 = vsub.f32 %v4398, %v4549
      %v4648 = vsub.f32 %v4400, %v4549
      %v4649 = vsub.f32 %v4404, %v4553
      %v4650 = vsub.f32 %v4406, %v4553
      %v4651 = vsub.f32 %v4410, %v4557
      %v4652 = vsub.f32 %v4412, %v4557
      %v4653 = vsub.f32 %v4416, %v4561
      %v4654 = vsub.f32 %v4418, %v4561
      %v4655 = vsub.f32 %v4422, %v4565
      %v4656 = vsub.f32 %v4424, %v4565
      %v4657 = vsub.f32 %v4428, %v4569
      %v4658 = vsub.f32 %v4430, %v4569
      %v4659 = vsub.f32 %v4434, %v4573
      %v4660 = vsub.f32 %v4436, %v4573
      %v4661 = vsub.f32 %v4440, %v4577
      %v4662 = vsub.f32 %v4442, %v4577
      %v4663 = vsub.f32 %v4446, %v4581
      %v4664 = vsub.f32 %v4448, %v4581
      %v4665 = vsub.f32 %v4452, %v4585
      %v4666 = vsub.f32 %v4454, %v4585
      %v4667 = vsub.f32 %v4458, %v4589
      %v4668 = vsub.f32 %v4460, %v4589
      %v4669 = vsub.f32 %v4464, %v4593
      %v4670 = vsub.f32 %v4466, %v4593
      %v4671 = vsub.f32 %v4470, %v4597
      %v4672 = vsub.f32 %v4472, %v4597
      %v4673 = vsub.f32 %v4476, %v4601
      %v4674 = vsub.f32 %v4478, %v4601
      %v4675 = vsub.f32 %v4482, %v4605
      %v4676 = vsub.f32 %v4484, %v4605
      %v4677 = vsub.f32 %v4488, %v4609
      %v4678 = vsub.f32 %v4490, %v4609
      %v4679 = vsub.f32 %v4494, %v4613
      %v4680 = vsub.f32 %v4496, %v4613
      %v4681 = vsub.f32 %v4500, %v4617
      %v4682 = vsub.f32 %v4502, %v4617
      %v4683 = vsub.f32 %v4506, %v4621
      %v4684 = vsub.f32 %v4508, %v4621
      %v4685 = vsub.f32 %v4512, %v4625
      %v4686 = vsub.f32 %v4514, %v4625
      %v4687 = vsub.f32 %v4518, %v4629
      %v4688 = vsub.f32 %v4520, %v4629
      %v4689 = vsub.f32 %v4524, %v4633
      %v4690 = vsub.f32 %v4526, %v4633
      %v4691 = vsub.f32 %v4530, %v4637
      %v4692 = vsub.f32 %v4532, %v4637
      %v4693 = vsub.f32 %v4536, %v4641
      %v4694 = vsub.f32 %v4538, %v4641
      %v4695 = vsub.f32 %v4542, %v4646
      %v4696 = vsub.f32 %v4544, %v4646
      %v4697 = vmul.f32 %v4647, 1.442695
      %v4698 = vpow.pop %v4697
      %v4699 = vmul.f32 %v4648, 1.442695
      %v4700 = vpow.pop %v4699
      %v4701 = vmul.f32 %v4649, 1.442695
      %v4702 = vpow.pop %v4701
      %v4703 = vmul.f32 %v4650, 1.442695
      %v4704 = vpow.pop %v4703
      %v4705 = vmul.f32 %v4651, 1.442695
      %v4706 = vpow.pop %v4705
      %v4707 = vmul.f32 %v4652, 1.442695
      %v4708 = vpow.pop %v4707
      %v4709 = vmul.f32 %v4653, 1.442695
      %v4710 = vpow.pop %v4709
      %v4711 = vmul.f32 %v4654, 1.442695
      %v4712 = vpow.pop %v4711
      %v4713 = vmul.f32 %v4655, 1.442695
      %v4714 = vpow.pop %v4713
      %v4715 = vmul.f32 %v4656, 1.442695
      %v4716 = vpow.pop %v4715
      %v4717 = vmul.f32 %v4657, 1.442695
      %v4718 = vpow.pop %v4717
      %v4719 = vmul.f32 %v4658, 1.442695
      %v4720 = vpow.pop %v4719
      %v4721 = vmul.f32 %v4659, 1.442695
      %v4722 = vpow.pop %v4721
      %v4723 = vmul.f32 %v4660, 1.442695
      %v4724 = vpow.pop %v4723
      %v4725 = vmul.f32 %v4661, 1.442695
      %v4726 = vpow.pop %v4725
      %v4727 = vmul.f32 %v4662, 1.442695
      %v4728 = vpow.pop %v4727
      %v4729 = vmul.f32 %v4663, 1.442695
      %v4730 = vpow.pop %v4729
      %v4731 = vmul.f32 %v4664, 1.442695
      %v4732 = vpow.pop %v4731
      %v4733 = vmul.f32 %v4665, 1.442695
      %v4734 = vpow.pop %v4733
      %v4735 = vmul.f32 %v4666, 1.442695
      %v4736 = vpow.pop %v4735
      %v4737 = vmul.f32 %v4667, 1.442695
      %v4738 = vpow.pop %v4737
      %v4739 = vmul.f32 %v4668, 1.442695
      %v4740 = vpow.pop %v4739
      %v4741 = vmul.f32 %v4669, 1.442695
      %v4742 = vpow.pop %v4741
      %v4743 = vmul.f32 %v4670, 1.442695
      %v4744 = vpow.pop %v4743
      %v4745 = vmul.f32 %v4671, 1.442695
      %v4746 = vpow.pop %v4745
      %v4747 = vmul.f32 %v4672, 1.442695
      %v4748 = vpow.pop %v4747
      %v4749 = vmul.f32 %v4673, 1.442695
      %v4750 = vpow.pop %v4749
      %v4751 = vmul.f32 %v4674, 1.442695
      %v4752 = vpow.pop %v4751
      %v4753 = vmul.f32 %v4675, 1.442695
      %v4754 = vpow.pop %v4753
      %v4755 = vmul.f32 %v4676, 1.442695
      %v4756 = vpow.pop %v4755
      %v4757 = vmul.f32 %v4677, 1.442695
      %v4758 = vpow.pop %v4757
      %v4759 = vmul.f32 %v4678, 1.442695
      %v4760 = vpow.pop %v4759
      %v4761 = vmul.f32 %v4679, 1.442695
      %v4762 = vpow.pop %v4761
      %v4763 = vmul.f32 %v4680, 1.442695
      %v4764 = vpow.pop %v4763
      %v4765 = vmul.f32 %v4681, 1.442695
      %v4766 = vpow.pop %v4765
      %v4767 = vmul.f32 %v4682, 1.442695
      %v4768 = vpow.pop %v4767
      %v4769 = vmul.f32 %v4683, 1.442695
      %v4770 = vpow.pop %v4769
      %v4771 = vmul.f32 %v4684, 1.442695
      %v4772 = vpow.pop %v4771
      %v4773 = vmul.f32 %v4685, 1.442695
      %v4774 = vpow.pop %v4773
      %v4775 = vmul.f32 %v4686, 1.442695
      %v4776 = vpow.pop %v4775
      %v4777 = vmul.f32 %v4687, 1.442695
      %v4778 = vpow.pop %v4777
      %v4779 = vmul.f32 %v4688, 1.442695
      %v4780 = vpow.pop %v4779
      %v4781 = vmul.f32 %v4689, 1.442695
      %v4782 = vpow.pop %v4781
      %v4783 = vmul.f32 %v4690, 1.442695
      %v4784 = vpow.pop %v4783
      %v4785 = vmul.f32 %v4691, 1.442695
      %v4786 = vpow.pop %v4785
      %v4787 = vmul.f32 %v4692, 1.442695
      %v4788 = vpow.pop %v4787
      %v4789 = vmul.f32 %v4693, 1.442695
      %v4790 = vpow.pop %v4789
      %v4791 = vmul.f32 %v4694, 1.442695
      %v4792 = vpow.pop %v4791
      %v4793 = vmul.f32 %v4695, 1.442695
      %v4794 = vpow.pop %v4793
      %v4795 = vmul.f32 %v4696, 1.442695
      %v4796 = vpow.pop %v4795
      %v4797 = vsel %vm1193, %v4700, 0.0
      %v4798 = vadd.f32 %v4698, %v4797
      %4799 = vadd.xlane.f32.xlu0 %v4798
      %v4800 = vpop.xlane.xlu0 %4799
      %v4801 = vsel %vm1193, %v4704, 0.0
      %v4802 = vadd.f32 %v4702, %v4801
      %4803 = vadd.xlane.f32.xlu0 %v4802
      %v4804 = vpop.xlane.xlu0 %4803
      %v4805 = vsel %vm1193, %v4708, 0.0
      %v4806 = vadd.f32 %v4706, %v4805
      %4807 = vadd.xlane.f32.xlu0 %v4806
      %v4808 = vpop.xlane.xlu0 %4807
      %v4809 = vsel %vm1193, %v4712, 0.0
      %v4810 = vadd.f32 %v4710, %v4809
      %4811 = vadd.xlane.f32.xlu0 %v4810
      %v4812 = vpop.xlane.xlu0 %4811
      %v4813 = vsel %vm1193, %v4716, 0.0
      %v4814 = vadd.f32 %v4714, %v4813
      %4815 = vadd.xlane.f32.xlu0 %v4814
      %v4816 = vpop.xlane.xlu0 %4815
      %v4817 = vsel %vm1193, %v4720, 0.0
      %v4818 = vadd.f32 %v4718, %v4817
      %4819 = vadd.xlane.f32.xlu0 %v4818
      %v4820 = vpop.xlane.xlu0 %4819
      %v4821 = vsel %vm1193, %v4724, 0.0
      %v4822 = vadd.f32 %v4722, %v4821
      %4823 = vadd.xlane.f32.xlu0 %v4822
      %v4824 = vpop.xlane.xlu0 %4823
      %v4825 = vsel %vm1193, %v4728, 0.0
      %v4826 = vadd.f32 %v4726, %v4825
      %4827 = vadd.xlane.f32.xlu0 %v4826
      %v4828 = vpop.xlane.xlu0 %4827
      %v4829 = vsel %vm1193, %v4732, 0.0
      %v4830 = vadd.f32 %v4730, %v4829
      %4831 = vadd.xlane.f32.xlu0 %v4830
      %v4832 = vpop.xlane.xlu0 %4831
      %v4833 = vsel %vm1193, %v4736, 0.0
      %v4834 = vadd.f32 %v4734, %v4833
      %4835 = vadd.xlane.f32.xlu0 %v4834
      %v4836 = vpop.xlane.xlu0 %4835
      %v4837 = vsel %vm1193, %v4740, 0.0
      %v4838 = vadd.f32 %v4738, %v4837
      %4839 = vadd.xlane.f32.xlu0 %v4838
      %v4840 = vpop.xlane.xlu0 %4839
      %v4841 = vsel %vm1193, %v4744, 0.0
      %v4842 = vadd.f32 %v4742, %v4841
      %4843 = vadd.xlane.f32.xlu0 %v4842
      %v4844 = vpop.xlane.xlu0 %4843
      %v4845 = vsel %vm1193, %v4748, 0.0
      %v4846 = vadd.f32 %v4746, %v4845
      %4847 = vadd.xlane.f32.xlu0 %v4846
      %v4848 = vpop.xlane.xlu0 %4847
      %v4849 = vsel %vm1193, %v4752, 0.0
      %v4850 = vadd.f32 %v4750, %v4849
      %4851 = vadd.xlane.f32.xlu0 %v4850
      %v4852 = vpop.xlane.xlu0 %4851
      %v4853 = vsel %vm1193, %v4756, 0.0
      %v4854 = vadd.f32 %v4754, %v4853
      %4855 = vadd.xlane.f32.xlu0 %v4854
      %v4856 = vpop.xlane.xlu0 %4855
      %v4857 = vsel %vm1193, %v4760, 0.0
      %v4858 = vadd.f32 %v4758, %v4857
      %4859 = vadd.xlane.f32.xlu0 %v4858
      %v4860 = vpop.xlane.xlu0 %4859
      %v4861 = vsel %vm1193, %v4764, 0.0
      %v4862 = vadd.f32 %v4762, %v4861
      %4863 = vadd.xlane.f32.xlu0 %v4862
      %v4864 = vpop.xlane.xlu0 %4863
      %v4865 = vsel %vm1193, %v4768, 0.0
      %v4866 = vadd.f32 %v4766, %v4865
      %4867 = vadd.xlane.f32.xlu0 %v4866
      %v4868 = vpop.xlane.xlu0 %4867
      %v4869 = vsel %vm1193, %v4772, 0.0
      %v4870 = vadd.f32 %v4770, %v4869
      %4871 = vadd.xlane.f32.xlu0 %v4870
      %v4872 = vpop.xlane.xlu0 %4871
      %v4873 = vsel %vm1193, %v4776, 0.0
      %v4874 = vadd.f32 %v4774, %v4873
      %4875 = vadd.xlane.f32.xlu0 %v4874
      %v4876 = vpop.xlane.xlu0 %4875
      %v4877 = vsel %vm1193, %v4780, 0.0
      %v4878 = vadd.f32 %v4778, %v4877
      %4879 = vadd.xlane.f32.xlu0 %v4878
      %v4880 = vpop.xlane.xlu0 %4879
      %v4881 = vsel %vm1193, %v4784, 0.0
      %v4882 = vadd.f32 %v4782, %v4881
      %4883 = vadd.xlane.f32.xlu0 %v4882
      %v4884 = vpop.xlane.xlu0 %4883
      %v4885 = vsel %vm1193, %v4788, 0.0
      %v4886 = vadd.f32 %v4786, %v4885
      %4887 = vadd.xlane.f32.xlu0 %v4886
      %v4888 = vpop.xlane.xlu0 %4887
      %v4889 = vsel %vm1193, %v4792, 0.0
      %v4890 = vadd.f32 %v4790, %v4889
      %4891 = vadd.xlane.f32.xlu0 %v4890
      %v4892 = vpop.xlane.xlu0 %4891
      %v4893 = vsel %vm1290, %v4794, 0.0
      %v4894 = vsel %vm1292, %v4796, 0.0
      %v4895 = vadd.f32 %v4893, %v4894
      %4896 = vadd.xlane.f32.xlu0 %v4895
      %v4897 = vpop.xlane.xlu0 %4896
      %4898 = vrot.lane.b32.xlu0 %v729, 32
      %v4899 = vpop.permute.xlu0 %4898
      %4900 = vrot.lane.b32.xlu0 %v735, 32
      %v4901 = vpop.permute.xlu0 %4900
      %4902 = vrot.lane.b32.xlu0 %v741, 32
      %v4903 = vpop.permute.xlu0 %4902
      %4904 = vrot.lane.b32.xlu0 %v747, 32
      %v4905 = vpop.permute.xlu0 %4904
      %4906 = vrot.lane.b32.xlu0 %v753, 32
      %v4907 = vpop.permute.xlu0 %4906
      %4908 = vrot.lane.b32.xlu0 %v759, 32
      %v4909 = vpop.permute.xlu0 %4908
      %4910 = vrot.lane.b32.xlu0 %v765, 32
      %v4911 = vpop.permute.xlu0 %4910
      %4912 = vrot.lane.b32.xlu0 %v771, 32
      %v4913 = vpop.permute.xlu0 %4912
      %4914 = vrot.lane.b32.xlu0 %v777, 32
      %v4915 = vpop.permute.xlu0 %4914
      %4916 = vrot.lane.b32.xlu0 %v783, 32
      %v4917 = vpop.permute.xlu0 %4916
      %4918 = vrot.lane.b32.xlu0 %v789, 32
      %v4919 = vpop.permute.xlu0 %4918
      %4920 = vrot.lane.b32.xlu0 %v795, 32
      %v4921 = vpop.permute.xlu0 %4920
      %4922 = vrot.lane.b32.xlu0 %v801, 32
      %v4923 = vpop.permute.xlu0 %4922
      %4924 = vrot.lane.b32.xlu0 %v807, 32
      %v4925 = vpop.permute.xlu0 %4924
      %4926 = vrot.lane.b32.xlu0 %v813, 32
      %v4927 = vpop.permute.xlu0 %4926
      %4928 = vrot.lane.b32.xlu0 %v819, 32
      %v4929 = vpop.permute.xlu0 %4928
      %4930 = vrot.lane.b32.xlu0 %v825, 32
      %v4931 = vpop.permute.xlu0 %4930
      %4932 = vrot.lane.b32.xlu0 %v831, 32
      %v4933 = vpop.permute.xlu0 %4932
      %4934 = vrot.lane.b32.xlu0 %v837, 32
      %v4935 = vpop.permute.xlu0 %4934
      %4936 = vrot.lane.b32.xlu0 %v843, 32
      %v4937 = vpop.permute.xlu0 %4936
      %4938 = vrot.lane.b32.xlu0 %v849, 32
      %v4939 = vpop.permute.xlu0 %4938
      %4940 = vrot.lane.b32.xlu0 %v855, 32
      %v4941 = vpop.permute.xlu0 %4940
      %4942 = vrot.lane.b32.xlu0 %v861, 32
      %v4943 = vpop.permute.xlu0 %4942
      %4944 = vrot.lane.b32.xlu0 %v867, 32
      %v4945 = vpop.permute.xlu0 %4944
      %4946 = vrot.lane.b32.xlu0 %v873, 32
      %v4947 = vpop.permute.xlu0 %4946
      %v4973 = vsel %vm1193, %v4700, 0
      %v4976 = vsel %vm1193, %v4704, 0
      %v4979 = vsel %vm1193, %v4708, 0
      %v4982 = vsel %vm1193, %v4712, 0
      %v4985 = vsel %vm1193, %v4716, 0
      %v4988 = vsel %vm1193, %v4720, 0
      %v4991 = vsel %vm1193, %v4724, 0
      %v4994 = vsel %vm1193, %v4728, 0
      %v4997 = vsel %vm1193, %v4732, 0
      %v5000 = vsel %vm1193, %v4736, 0
      %v5003 = vsel %vm1193, %v4740, 0
      %v5006 = vsel %vm1193, %v4744, 0
      %v5009 = vsel %vm1193, %v4748, 0
      %v5012 = vsel %vm1193, %v4752, 0
      %v5015 = vsel %vm1193, %v4756, 0
      %v5018 = vsel %vm1193, %v4760, 0
      %v5021 = vsel %vm1193, %v4764, 0
      %v5024 = vsel %vm1193, %v4768, 0
      %v5027 = vsel %vm1193, %v4772, 0
      %v5030 = vsel %vm1193, %v4776, 0
      %v5033 = vsel %vm1193, %v4780, 0
      %v5036 = vsel %vm1193, %v4784, 0
      %v5039 = vsel %vm1193, %v4788, 0
      %v5042 = vsel %vm1193, %v4792, 0
      %v5045 = vsel %vm1193, %v4796, 0
      %v5047 = vsel %vm1290, %v4947, 0
      %5049 = vmatprep.subr.mxu0 0.0
      %5050 = vmatpush1.msra.mxu0 %v4929
      %5051 = vmatprep.subr.mxu0 0.0
      %5052 = vmatpush1.msra.mxu0 %v4927
      %5053 = vmatprep.subr.mxu0 0.0
      %5054 = vmatpush1.msra.mxu0 %v4925
      %5055 = vmatprep.subr.mxu0 0.0
      %5056 = vmatpush1.msra.mxu0 %v4923
      %5057 = vmatprep.subr.mxu0 0.0
      %5058 = vmatpush1.msra.mxu0 %v4921
      %5059 = vmatprep.subr.mxu0 0.0
      %5060 = vmatpush1.msra.mxu0 %v4919
      %5061 = vmatprep.subr.mxu0 0.0
      %5062 = vmatpush1.msra.mxu0 %v4917
      %5063 = vmatprep.subr.mxu0 0.0
      %5064 = vmatpush1.msra.mxu0 %v4915
      %5065 = vmatprep.subr.mxu0 0.0
      %5066 = vmatpush1.msra.mxu0 %v4913
      %5067 = vmatprep.subr.mxu0 0.0
      %5068 = vmatpush1.msra.mxu0 %v4911
      %5069 = vmatprep.subr.mxu0 0.0
      %5070 = vmatpush1.msra.mxu0 %v4909
      %5071 = vmatprep.subr.mxu0 0.0
      %5072 = vmatpush1.msra.mxu0 %v4907
      %5073 = vmatprep.subr.mxu0 0.0
      %5074 = vmatpush1.msra.mxu0 %v4905
      %5075 = vmatprep.subr.mxu0 0.0
      %5076 = vmatpush1.msra.mxu0 %v4903
      %5077 = vmatprep.subr.mxu0 0.0
      %5078 = vmatpush1.msra.mxu0 %v4901
      %5079 = vmatprep.subr.mxu0 0.0
      %5080 = vmatpush1.msra.mxu0 %v4899
      %5081 = vmatprep.subr.mxu0 0.0
      %5082 = vmatpush2.msra.mxu0 0.0
      %5083 = vmatprep.subr.mxu0 0.0
      %5084 = vmatpush2.msra.mxu0 0.0
      %5085 = vmatprep.subr.mxu0 0.0
      %5086 = vmatpush2.msra.mxu0 0.0
      %5087 = vmatprep.subr.mxu0 0.0
      %5088 = vmatpush2.msra.mxu0 0.0
      %5089 = vmatprep.subr.mxu0 0.0
      %5090 = vmatpush2.msra.mxu0 0.0
      %5091 = vmatprep.subr.mxu0 0.0
      %5092 = vmatpush2.msra.mxu0 0.0
      %5093 = vmatprep.subr.mxu0 0.0
      %5094 = vmatpush2.msra.mxu0 0.0
      %5095 = vmatprep.subr.mxu0 0.0
      %5096 = vmatpush2.msra.mxu0 %v5047
      %5097 = vmatprep.subr.mxu0 0.0
      %5098 = vmatpush2.msra.mxu0 %v4945
      %5099 = vmatprep.subr.mxu0 0.0
      %5100 = vmatpush2.msra.mxu0 %v4943
      %5101 = vmatprep.subr.mxu0 0.0
      %5102 = vmatpush2.msra.mxu0 %v4941
      %5103 = vmatprep.subr.mxu0 0.0
      %5104 = vmatpush2.msra.mxu0 %v4939
      %5105 = vmatprep.subr.mxu0 0.0
      %5106 = vmatpush2.msra.mxu0 %v4937
      %5107 = vmatprep.subr.mxu0 0.0
      %5108 = vmatpush2.msra.mxu0 %v4935
      %5109 = vmatprep.subr.mxu0 0.0
      %5110 = vmatpush2.msra.mxu0 %v4933
      %5111 = vmatprep.subr.mxu0 0.0
      %5112 = vmatpush2.msra.mxu0 %v4931
      %5113 = vmatprep.mubr.f32.mxu0 %v4973
      %5114 = vmatmul.mubr.f32.gmra.mxu0 %v4698
      %v5115 = vpop.f32.mrf.mxu0
      %v5116 = vadd.f32 0.0, %v5115
      %v5117 = vpop.f32.mrf.mxu0
      %5118 = vmatprep.mubr.f32.mxu0 %v4976
      %5119 = vmatmul.mubr.f32.gmra.mxu0 %v4702
      %v5120 = vpop.f32.mrf.mxu0
      %v5121 = vadd.f32 0.0, %v5120
      %v5122 = vpop.f32.mrf.mxu0
      %5123 = vmatprep.mubr.f32.mxu0 %v4979
      %5124 = vmatmul.mubr.f32.gmra.mxu0 %v4706
      %v5125 = vpop.f32.mrf.mxu0
      %v5126 = vadd.f32 0.0, %v5125
      %v5127 = vpop.f32.mrf.mxu0
      %5128 = vmatprep.mubr.f32.mxu0 %v4982
      %5129 = vmatmul.mubr.f32.gmra.mxu0 %v4710
      %v5130 = vpop.f32.mrf.mxu0
      %v5131 = vadd.f32 0.0, %v5130
      %v5132 = vpop.f32.mrf.mxu0
      %5133 = vmatprep.mubr.f32.mxu0 %v4985
      %5134 = vmatmul.mubr.f32.gmra.mxu0 %v4714
      %v5135 = vpop.f32.mrf.mxu0
      %v5136 = vadd.f32 0.0, %v5135
      %v5137 = vpop.f32.mrf.mxu0
      %5138 = vmatprep.mubr.f32.mxu0 %v4988
      %5139 = vmatmul.mubr.f32.gmra.mxu0 %v4718
      %v5140 = vpop.f32.mrf.mxu0
      %v5141 = vadd.f32 0.0, %v5140
      %v5142 = vpop.f32.mrf.mxu0
      %5143 = vmatprep.mubr.f32.mxu0 %v4991
      %5144 = vmatmul.mubr.f32.gmra.mxu0 %v4722
      %v5145 = vpop.f32.mrf.mxu0
      %v5146 = vadd.f32 0.0, %v5145
      %v5147 = vpop.f32.mrf.mxu0
      %5148 = vmatprep.mubr.f32.mxu0 %v4994
      %5149 = vmatmul.mubr.f32.gmra.mxu0 %v4726
      %v5150 = vpop.f32.mrf.mxu0
      %v5151 = vadd.f32 0.0, %v5150
      %v5152 = vpop.f32.mrf.mxu0
      %5153 = vmatprep.mubr.f32.mxu0 %v4997
      %5154 = vmatmul.mubr.f32.gmra.mxu0 %v4730
      %v5155 = vpop.f32.mrf.mxu0
      %v5156 = vadd.f32 0.0, %v5155
      %v5157 = vpop.f32.mrf.mxu0
      %5158 = vmatprep.mubr.f32.mxu0 %v5000
      %5159 = vmatmul.mubr.f32.gmra.mxu0 %v4734
      %v5160 = vpop.f32.mrf.mxu0
      %v5161 = vadd.f32 0.0, %v5160
      %v5162 = vpop.f32.mrf.mxu0
      %5163 = vmatprep.mubr.f32.mxu0 %v5003
      %5164 = vmatmul.mubr.f32.gmra.mxu0 %v4738
      %v5165 = vpop.f32.mrf.mxu0
      %v5166 = vadd.f32 0.0, %v5165
      %v5167 = vpop.f32.mrf.mxu0
      %5168 = vmatprep.mubr.f32.mxu0 %v5006
      %5169 = vmatmul.mubr.f32.gmra.mxu0 %v4742
      %v5170 = vpop.f32.mrf.mxu0
      %v5171 = vadd.f32 0.0, %v5170
      %v5172 = vpop.f32.mrf.mxu0
      %5173 = vmatprep.mubr.f32.mxu0 %v5009
      %5174 = vmatmul.mubr.f32.gmra.mxu0 %v4746
      %v5175 = vpop.f32.mrf.mxu0
      %v5176 = vadd.f32 0.0, %v5175
      %v5177 = vpop.f32.mrf.mxu0
      %5178 = vmatprep.mubr.f32.mxu0 %v5012
      %5179 = vmatmul.mubr.f32.gmra.mxu0 %v4750
      %v5180 = vpop.f32.mrf.mxu0
      %v5181 = vadd.f32 0.0, %v5180
      %v5182 = vpop.f32.mrf.mxu0
      %5183 = vmatprep.mubr.f32.mxu0 %v5015
      %5184 = vmatmul.mubr.f32.gmra.mxu0 %v4754
      %v5185 = vpop.f32.mrf.mxu0
      %v5186 = vadd.f32 0.0, %v5185
      %v5187 = vpop.f32.mrf.mxu0
      %5188 = vmatprep.mubr.f32.mxu0 %v5018
      %5189 = vmatmul.mubr.f32.gmra.mxu0 %v4758
      %v5190 = vpop.f32.mrf.mxu0
      %v5191 = vadd.f32 0.0, %v5190
      %v5192 = vpop.f32.mrf.mxu0
      %5193 = vmatprep.mubr.f32.mxu0 %v5021
      %5194 = vmatmul.mubr.f32.gmra.mxu0 %v4762
      %v5195 = vpop.f32.mrf.mxu0
      %v5196 = vadd.f32 0.0, %v5195
      %v5197 = vpop.f32.mrf.mxu0
      %5198 = vmatprep.mubr.f32.mxu0 %v5024
      %5199 = vmatmul.mubr.f32.gmra.mxu0 %v4766
      %v5200 = vpop.f32.mrf.mxu0
      %v5201 = vadd.f32 0.0, %v5200
      %v5202 = vpop.f32.mrf.mxu0
      %5203 = vmatprep.mubr.f32.mxu0 %v5027
      %5204 = vmatmul.mubr.f32.gmra.mxu0 %v4770
      %v5205 = vpop.f32.mrf.mxu0
      %v5206 = vadd.f32 0.0, %v5205
      %v5207 = vpop.f32.mrf.mxu0
      %5208 = vmatprep.mubr.f32.mxu0 %v5030
      %5209 = vmatmul.mubr.f32.gmra.mxu0 %v4774
      %v5210 = vpop.f32.mrf.mxu0
      %v5211 = vadd.f32 0.0, %v5210
      %v5212 = vpop.f32.mrf.mxu0
      %5213 = vmatprep.mubr.f32.mxu0 %v5033
      %5214 = vmatmul.mubr.f32.gmra.mxu0 %v4778
      %v5215 = vpop.f32.mrf.mxu0
      %v5216 = vadd.f32 0.0, %v5215
      %v5217 = vpop.f32.mrf.mxu0
      %5218 = vmatprep.mubr.f32.mxu0 %v5036
      %5219 = vmatmul.mubr.f32.gmra.mxu0 %v4782
      %v5220 = vpop.f32.mrf.mxu0
      %v5221 = vadd.f32 0.0, %v5220
      %v5222 = vpop.f32.mrf.mxu0
      %5223 = vmatprep.mubr.f32.mxu0 %v5039
      %5224 = vmatmul.mubr.f32.gmra.mxu0 %v4786
      %v5225 = vpop.f32.mrf.mxu0
      %v5226 = vadd.f32 0.0, %v5225
      %v5227 = vpop.f32.mrf.mxu0
      %5228 = vmatprep.mubr.f32.mxu0 %v5042
      %5229 = vmatmul.mubr.f32.gmra.mxu0 %v4790
      %v5230 = vpop.f32.mrf.mxu0
      %v5231 = vadd.f32 0.0, %v5230
      %v5232 = vpop.f32.mrf.mxu0
      %5233 = vmatprep.mubr.f32.mxu0 %v5045
      %5234 = vmatmul.mubr.f32.gmra.mxu0 %v4794
      %v5235 = vpop.f32.mrf.mxu0
      %v5236 = vadd.f32 0.0, %v5235
      %v5237 = vpop.f32.mrf.mxu0
      %5238 = vdwg.mxu0
      %v5239 = vld [vmem:[#allocation2] sm:$0xff]
      %v5240 = vld [vmem:[#allocation2 + $0x8] sm:$0xff]
      %v5241 = vld [vmem:[#allocation2 + $0x10] sm:$0xff]
      %v5242 = vld [vmem:[#allocation2 + $0x18] sm:$0xff]
      %v5243 = vld [vmem:[#allocation2 + $0x20] sm:$0xff]
      %v5244 = vld [vmem:[#allocation2 + $0x28] sm:$0xff]
      %v5245 = vld [vmem:[#allocation2 + $0x30] sm:$0xff]
      %v5246 = vld [vmem:[#allocation2 + $0x38] sm:$0xff]
      %v5247 = vld [vmem:[#allocation2 + $0x40] sm:$0xff]
      %v5248 = vld [vmem:[#allocation2 + $0x48] sm:$0xff]
      %v5249 = vld [vmem:[#allocation2 + $0x50] sm:$0xff]
      %v5250 = vld [vmem:[#allocation2 + $0x58] sm:$0xff]
      %v5251 = vld [vmem:[#allocation2 + $0x60] sm:$0xff]
      %v5252 = vld [vmem:[#allocation2 + $0x68] sm:$0xff]
      %v5253 = vld [vmem:[#allocation2 + $0x70] sm:$0xff]
      %v5254 = vld [vmem:[#allocation2 + $0x78] sm:$0xff]
      %v5255 = vld [vmem:[#allocation2 + $0x80] sm:$0xff]
      %v5256 = vld [vmem:[#allocation2 + $0x88] sm:$0xff]
      %v5257 = vld [vmem:[#allocation2 + $0x90] sm:$0xff]
      %v5258 = vld [vmem:[#allocation2 + $0x98] sm:$0xff]
      %v5259 = vld [vmem:[#allocation2 + $0xa0] sm:$0xff]
      %v5260 = vld [vmem:[#allocation2 + $0xa8] sm:$0xff]
      %v5261 = vld [vmem:[#allocation2 + $0xb0] sm:$0xff]
      %v5262 = vld [vmem:[#allocation2 + $0xb8] sm:$0xff]
      %v5263 = vld [vmem:[#allocation2 + $0xc0] sm:$0xf]
      %v5264 = vrcp.pop %v4800
      %v5265 = vrcp.pop %v4804
      %v5266 = vrcp.pop %v4808
      %v5267 = vrcp.pop %v4812
      %v5268 = vrcp.pop %v4816
      %v5269 = vrcp.pop %v4820
      %v5270 = vrcp.pop %v4824
      %v5271 = vrcp.pop %v4828
      %v5272 = vrcp.pop %v4832
      %v5273 = vrcp.pop %v4836
      %v5274 = vrcp.pop %v4840
      %v5275 = vrcp.pop %v4844
      %v5276 = vrcp.pop %v4848
      %v5277 = vrcp.pop %v4852
      %v5278 = vrcp.pop %v4856
      %v5279 = vrcp.pop %v4860
      %v5280 = vrcp.pop %v4864
      %v5281 = vrcp.pop %v4868
      %v5282 = vrcp.pop %v4872
      %v5283 = vrcp.pop %v4876
      %v5284 = vrcp.pop %v4880
      %v5285 = vrcp.pop %v4884
      %v5286 = vrcp.pop %v4888
      %v5287 = vrcp.pop %v4892
      %v5288 = vrcp.pop %v4897
      %v5289 = vmul.f32 %v5116, %v5264
      %v5290 = vmul.f32 %v5121, %v5265
      %v5291 = vmul.f32 %v5126, %v5266
      %v5292 = vmul.f32 %v5131, %v5267
      %v5293 = vmul.f32 %v5136, %v5268
      %v5294 = vmul.f32 %v5141, %v5269
      %v5295 = vmul.f32 %v5146, %v5270
      %v5296 = vmul.f32 %v5151, %v5271
      %v5297 = vmul.f32 %v5156, %v5272
      %v5298 = vmul.f32 %v5161, %v5273
      %v5299 = vmul.f32 %v5166, %v5274
      %v5300 = vmul.f32 %v5171, %v5275
      %v5301 = vmul.f32 %v5176, %v5276
      %v5302 = vmul.f32 %v5181, %v5277
      %v5303 = vmul.f32 %v5186, %v5278
      %v5304 = vmul.f32 %v5191, %v5279
      %v5305 = vmul.f32 %v5196, %v5280
      %v5306 = vmul.f32 %v5201, %v5281
      %v5307 = vmul.f32 %v5206, %v5282
      %v5308 = vmul.f32 %v5211, %v5283
      %v5309 = vmul.f32 %v5216, %v5284
      %v5310 = vmul.f32 %v5221, %v5285
      %v5311 = vmul.f32 %v5226, %v5286
      %v5312 = vmul.f32 %v5231, %v5287
      %v5313 = vmul.f32 %v5236, %v5288
      %v5314 = vadd.f32 %v5239, %v5289
      %v5315 = vadd.f32 %v5240, %v5290
      %v5316 = vadd.f32 %v5241, %v5291
      %v5317 = vadd.f32 %v5242, %v5292
      %v5318 = vadd.f32 %v5243, %v5293
      %v5319 = vadd.f32 %v5244, %v5294
      %v5320 = vadd.f32 %v5245, %v5295
      %v5321 = vadd.f32 %v5246, %v5296
      %v5322 = vadd.f32 %v5247, %v5297
      %v5323 = vadd.f32 %v5248, %v5298
      %v5324 = vadd.f32 %v5249, %v5299
      %v5325 = vadd.f32 %v5250, %v5300
      %v5326 = vadd.f32 %v5251, %v5301
      %v5327 = vadd.f32 %v5252, %v5302
      %v5328 = vadd.f32 %v5253, %v5303
      %v5329 = vadd.f32 %v5254, %v5304
      %v5330 = vadd.f32 %v5255, %v5305
      %v5331 = vadd.f32 %v5256, %v5306
      %v5332 = vadd.f32 %v5257, %v5307
      %v5333 = vadd.f32 %v5258, %v5308
      %v5334 = vadd.f32 %v5259, %v5309
      %v5335 = vadd.f32 %v5260, %v5310
      %v5336 = vadd.f32 %v5261, %v5311
      %v5337 = vadd.f32 %v5262, %v5312
      %v5338 = vadd.f32 %v5263, %v5313
      %5339 = vst.msk [vmem:[#allocation2] sm:$0xff] %vm363, %v5314
      %5340 = vst.msk [vmem:[#allocation2 + $0x8] sm:$0xff] %vm363, %v5315
      %5341 = vst.msk [vmem:[#allocation2 + $0x10] sm:$0xff] %vm363, %v5316
      %5342 = vst.msk [vmem:[#allocation2 + $0x18] sm:$0xff] %vm363, %v5317
      %5343 = vst.msk [vmem:[#allocation2 + $0x20] sm:$0xff] %vm363, %v5318
      %5344 = vst.msk [vmem:[#allocation2 + $0x28] sm:$0xff] %vm363, %v5319
      %5345 = vst.msk [vmem:[#allocation2 + $0x30] sm:$0xff] %vm363, %v5320
      %5346 = vst.msk [vmem:[#allocation2 + $0x38] sm:$0xff] %vm363, %v5321
      %5347 = vst.msk [vmem:[#allocation2 + $0x40] sm:$0xff] %vm363, %v5322
      %5348 = vst.msk [vmem:[#allocation2 + $0x48] sm:$0xff] %vm363, %v5323
      %5349 = vst.msk [vmem:[#allocation2 + $0x50] sm:$0xff] %vm363, %v5324
      %5350 = vst.msk [vmem:[#allocation2 + $0x58] sm:$0xff] %vm363, %v5325
      %5351 = vst.msk [vmem:[#allocation2 + $0x60] sm:$0xff] %vm363, %v5326
      %5352 = vst.msk [vmem:[#allocation2 + $0x68] sm:$0xff] %vm363, %v5327
      %5353 = vst.msk [vmem:[#allocation2 + $0x70] sm:$0xff] %vm363, %v5328
      %5354 = vst.msk [vmem:[#allocation2 + $0x78] sm:$0xff] %vm363, %v5329
      %5355 = vst.msk [vmem:[#allocation2 + $0x80] sm:$0xff] %vm363, %v5330
      %5356 = vst.msk [vmem:[#allocation2 + $0x88] sm:$0xff] %vm363, %v5331
      %5357 = vst.msk [vmem:[#allocation2 + $0x90] sm:$0xff] %vm363, %v5332
      %5358 = vst.msk [vmem:[#allocation2 + $0x98] sm:$0xff] %vm363, %v5333
      %5359 = vst.msk [vmem:[#allocation2 + $0xa0] sm:$0xff] %vm363, %v5334
      %5360 = vst.msk [vmem:[#allocation2 + $0xa8] sm:$0xff] %vm363, %v5335
      %5361 = vst.msk [vmem:[#allocation2 + $0xb0] sm:$0xff] %vm363, %v5336
      %5362 = vst.msk [vmem:[#allocation2 + $0xb8] sm:$0xff] %vm363, %v5337
      %5363 = vst.msk [vmem:[#allocation2 + $0xc0] sm:$0xf] %vm901, %v5338
      %v5365 = vsel %vm363, %v508, 0
      %v5368 = vsel %vm363, %v514, 0
      %v5371 = vsel %vm363, %v520, 0
      %v5374 = vsel %vm363, %v526, 0
      %v5377 = vsel %vm363, %v532, 0
      %v5380 = vsel %vm363, %v538, 0
      %v5383 = vsel %vm363, %v544, 0
      %v5386 = vsel %vm363, %v550, 0
      %v5389 = vsel %vm363, %v556, 0
      %v5392 = vsel %vm363, %v562, 0
      %v5395 = vsel %vm363, %v568, 0
      %v5398 = vsel %vm363, %v574, 0
      %v5401 = vsel %vm363, %v580, 0
      %v5404 = vsel %vm363, %v586, 0
      %v5407 = vsel %vm363, %v592, 0
      %v5410 = vsel %vm363, %v598, 0
      %v5413 = vsel %vm363, %v604, 0
      %v5416 = vsel %vm363, %v610, 0
      %v5419 = vsel %vm363, %v616, 0
      %v5422 = vsel %vm363, %v622, 0
      %v5425 = vsel %vm363, %v628, 0
      %v5428 = vsel %vm363, %v634, 0
      %v5431 = vsel %vm363, %v640, 0
      %v5434 = vsel %vm363, %v646, 0
      %v5437 = vsel %vm363, %v652, 0
      %5439 = vmatprep.subr.mxu0 0.0
      %5440 = vmatpush1.msra.mxu0 0.0
      %5441 = vmatprep.subr.mxu0 0.0
      %5442 = vmatpush1.msra.mxu0 0.0
      %5443 = vmatprep.subr.mxu0 0.0
      %5444 = vmatpush1.msra.mxu0 0.0
      %5445 = vmatprep.subr.mxu0 0.0
      %5446 = vmatpush1.msra.mxu0 0.0
      %5447 = vmatprep.subr.mxu0 0.0
      %5448 = vmatpush1.msra.mxu0 0.0
      %5449 = vmatprep.subr.mxu0 0.0
      %5450 = vmatpush1.msra.mxu0 0.0
      %5451 = vmatprep.subr.mxu0 0.0
      %5452 = vmatpush1.msra.mxu0 0.0
      %5453 = vmatprep.subr.mxu0 0.0
      %5454 = vmatpush1.msra.mxu0 0.0
      %5455 = vmatprep.subr.mxu0 0.0
      %5456 = vmatpush1.msra.mxu0 0.0
      %5457 = vmatprep.subr.mxu0 0.0
      %5458 = vmatpush1.msra.mxu0 0.0
      %5459 = vmatprep.subr.mxu0 0.0
      %5460 = vmatpush1.msra.mxu0 0.0
      %5461 = vmatprep.subr.mxu0 0.0
      %5462 = vmatpush1.msra.mxu0 0.0
      %5463 = vmatprep.subr.mxu0 %v304
      %5464 = vmatpush1.msra.mxu0 %v303
      %5465 = vmatprep.subr.mxu0 %v302
      %5466 = vmatpush1.msra.mxu0 %v301
      %5467 = vmatprep.subr.mxu0 %v300
      %5468 = vmatpush1.msra.mxu0 %v299
      %5469 = vmatprep.subr.mxu0 %v298
      %5470 = vmatpush1.msra.mxu0 %v297
      %5471 = vmatprep.subr.mxu0 0.0
      %5472 = vmatpush2.msra.mxu0 0.0
      %5473 = vmatprep.subr.mxu0 0.0
      %5474 = vmatpush2.msra.mxu0 0.0
      %5475 = vmatprep.subr.mxu0 0.0
      %5476 = vmatpush2.msra.mxu0 0.0
      %5477 = vmatprep.subr.mxu0 0.0
      %5478 = vmatpush2.msra.mxu0 0.0
      %5479 = vmatprep.subr.mxu0 0.0
      %5480 = vmatpush2.msra.mxu0 0.0
      %5481 = vmatprep.subr.mxu0 0.0
      %5482 = vmatpush2.msra.mxu0 0.0
      %5483 = vmatprep.subr.mxu0 0.0
      %5484 = vmatpush2.msra.mxu0 0.0
      %5485 = vmatprep.subr.mxu0 0.0
      %5486 = vmatpush2.msra.mxu0 0.0
      %5487 = vmatprep.subr.mxu0 0.0
      %5488 = vmatpush2.msra.mxu0 0.0
      %5489 = vmatprep.subr.mxu0 0.0
      %5490 = vmatpush2.msra.mxu0 0.0
      %5491 = vmatprep.subr.mxu0 0.0
      %5492 = vmatpush2.msra.mxu0 0.0
      %5493 = vmatprep.subr.mxu0 0.0
      %5494 = vmatpush2.msra.mxu0 0.0
      %5495 = vmatprep.subr.mxu0 0.0
      %5496 = vmatpush2.msra.mxu0 0.0
      %5497 = vmatprep.subr.mxu0 0.0
      %5498 = vmatpush2.msra.mxu0 0.0
      %5499 = vmatprep.subr.mxu0 0.0
      %5500 = vmatpush2.msra.mxu0 0.0
      %5501 = vmatprep.subr.mxu0 0.0
      %5502 = vmatpush2.msra.mxu0 0.0
      %5503 = vmatprep.mubr.f32.mxu0 0.0
      %5504 = vmatmul.mubr.f32.gmra.mxu0 %v5365
      %v5505 = vpop.f32.mrf.mxu0
      %v5506 = vadd.f32 %v305, %v5505
      %v5507 = vpop.f32.mrf.mxu0
      %v5508 = vadd.f32 %v306, %v5507
      %5509 = vmatprep.mubr.f32.mxu0 0.0
      %5510 = vmatmul.mubr.f32.gmra.mxu0 %v5368
      %v5511 = vpop.f32.mrf.mxu0
      %v5512 = vadd.f32 %v307, %v5511
      %v5513 = vpop.f32.mrf.mxu0
      %v5514 = vadd.f32 %v308, %v5513
      %5515 = vmatprep.mubr.f32.mxu0 0.0
      %5516 = vmatmul.mubr.f32.gmra.mxu0 %v5371
      %v5517 = vpop.f32.mrf.mxu0
      %v5518 = vadd.f32 %v309, %v5517
      %v5519 = vpop.f32.mrf.mxu0
      %v5520 = vadd.f32 %v310, %v5519
      %5521 = vmatprep.mubr.f32.mxu0 0.0
      %5522 = vmatmul.mubr.f32.gmra.mxu0 %v5374
      %v5523 = vpop.f32.mrf.mxu0
      %v5524 = vadd.f32 %v311, %v5523
      %v5525 = vpop.f32.mrf.mxu0
      %v5526 = vadd.f32 %v312, %v5525
      %5527 = vmatprep.mubr.f32.mxu0 0.0
      %5528 = vmatmul.mubr.f32.gmra.mxu0 %v5377
      %v5529 = vpop.f32.mrf.mxu0
      %v5530 = vadd.f32 %v313, %v5529
      %v5531 = vpop.f32.mrf.mxu0
      %v5532 = vadd.f32 %v314, %v5531
      %5533 = vmatprep.mubr.f32.mxu0 0.0
      %5534 = vmatmul.mubr.f32.gmra.mxu0 %v5380
      %v5535 = vpop.f32.mrf.mxu0
      %v5536 = vadd.f32 %v315, %v5535
      %v5537 = vpop.f32.mrf.mxu0
      %v5538 = vadd.f32 %v316, %v5537
      %5539 = vmatprep.mubr.f32.mxu0 0.0
      %5540 = vmatmul.mubr.f32.gmra.mxu0 %v5383
      %v5541 = vpop.f32.mrf.mxu0
      %v5542 = vadd.f32 %v317, %v5541
      %v5543 = vpop.f32.mrf.mxu0
      %v5544 = vadd.f32 %v318, %v5543
      %5545 = vmatprep.mubr.f32.mxu0 0.0
      %5546 = vmatmul.mubr.f32.gmra.mxu0 %v5386
      %v5547 = vpop.f32.mrf.mxu0
      %v5548 = vadd.f32 %v319, %v5547
      %v5549 = vpop.f32.mrf.mxu0
      %v5550 = vadd.f32 %v320, %v5549
      %5551 = vmatprep.mubr.f32.mxu0 0.0
      %5552 = vmatmul.mubr.f32.gmra.mxu0 %v5389
      %v5553 = vpop.f32.mrf.mxu0
      %v5554 = vadd.f32 %v321, %v5553
      %v5555 = vpop.f32.mrf.mxu0
      %v5556 = vadd.f32 %v322, %v5555
      %5557 = vmatprep.mubr.f32.mxu0 0.0
      %5558 = vmatmul.mubr.f32.gmra.mxu0 %v5392
      %v5559 = vpop.f32.mrf.mxu0
      %v5560 = vadd.f32 %v323, %v5559
      %v5561 = vpop.f32.mrf.mxu0
      %v5562 = vadd.f32 %v324, %v5561
      %5563 = vmatprep.mubr.f32.mxu0 0.0
      %5564 = vmatmul.mubr.f32.gmra.mxu0 %v5395
      %v5565 = vpop.f32.mrf.mxu0
      %v5566 = vadd.f32 %v325, %v5565
      %v5567 = vpop.f32.mrf.mxu0
      %v5568 = vadd.f32 %v326, %v5567
      %5569 = vmatprep.mubr.f32.mxu0 0.0
      %5570 = vmatmul.mubr.f32.gmra.mxu0 %v5398
      %v5571 = vpop.f32.mrf.mxu0
      %v5572 = vadd.f32 %v327, %v5571
      %v5573 = vpop.f32.mrf.mxu0
      %v5574 = vadd.f32 %v328, %v5573
      %5575 = vmatprep.mubr.f32.mxu0 0.0
      %5576 = vmatmul.mubr.f32.gmra.mxu0 %v5401
      %v5577 = vpop.f32.mrf.mxu0
      %v5578 = vadd.f32 %v329, %v5577
      %v5579 = vpop.f32.mrf.mxu0
      %v5580 = vadd.f32 %v330, %v5579
      %5581 = vmatprep.mubr.f32.mxu0 0.0
      %5582 = vmatmul.mubr.f32.gmra.mxu0 %v5404
      %v5583 = vpop.f32.mrf.mxu0
      %v5584 = vadd.f32 %v331, %v5583
      %v5585 = vpop.f32.mrf.mxu0
      %v5586 = vadd.f32 %v332, %v5585
      %5587 = vmatprep.mubr.f32.mxu0 0.0
      %5588 = vmatmul.mubr.f32.gmra.mxu0 %v5407
      %v5589 = vpop.f32.mrf.mxu0
      %v5590 = vadd.f32 %v333, %v5589
      %v5591 = vpop.f32.mrf.mxu0
      %v5592 = vadd.f32 %v334, %v5591
      %5593 = vmatprep.mubr.f32.mxu0 0.0
      %5594 = vmatmul.mubr.f32.gmra.mxu0 %v5410
      %v5595 = vpop.f32.mrf.mxu0
      %v5596 = vadd.f32 %v335, %v5595
      %v5597 = vpop.f32.mrf.mxu0
      %v5598 = vadd.f32 %v336, %v5597
      %5599 = vmatprep.mubr.f32.mxu0 0.0
      %5600 = vmatmul.mubr.f32.gmra.mxu0 %v5413
      %v5601 = vpop.f32.mrf.mxu0
      %v5602 = vadd.f32 %v337, %v5601
      %v5603 = vpop.f32.mrf.mxu0
      %v5604 = vadd.f32 %v338, %v5603
      %5605 = vmatprep.mubr.f32.mxu0 0.0
      %5606 = vmatmul.mubr.f32.gmra.mxu0 %v5416
      %v5607 = vpop.f32.mrf.mxu0
      %v5608 = vadd.f32 %v339, %v5607
      %v5609 = vpop.f32.mrf.mxu0
      %v5610 = vadd.f32 %v340, %v5609
      %5611 = vmatprep.mubr.f32.mxu0 0.0
      %5612 = vmatmul.mubr.f32.gmra.mxu0 %v5419
      %v5613 = vpop.f32.mrf.mxu0
      %v5614 = vadd.f32 %v341, %v5613
      %v5615 = vpop.f32.mrf.mxu0
      %v5616 = vadd.f32 %v342, %v5615
      %5617 = vmatprep.mubr.f32.mxu0 0.0
      %5618 = vmatmul.mubr.f32.gmra.mxu0 %v5422
      %v5619 = vpop.f32.mrf.mxu0
      %v5620 = vadd.f32 %v343, %v5619
      %v5621 = vpop.f32.mrf.mxu0
      %v5622 = vadd.f32 %v344, %v5621
      %5623 = vmatprep.mubr.f32.mxu0 0.0
      %5624 = vmatmul.mubr.f32.gmra.mxu0 %v5425
      %v5625 = vpop.f32.mrf.mxu0
      %v5626 = vadd.f32 %v345, %v5625
      %v5627 = vpop.f32.mrf.mxu0
      %v5628 = vadd.f32 %v346, %v5627
      %5629 = vmatprep.mubr.f32.mxu0 0.0
      %5630 = vmatmul.mubr.f32.gmra.mxu0 %v5428
      %v5631 = vpop.f32.mrf.mxu0
      %v5632 = vadd.f32 %v347, %v5631
      %v5633 = vpop.f32.mrf.mxu0
      %v5634 = vadd.f32 %v348, %v5633
      %5635 = vmatprep.mubr.f32.mxu0 0.0
      %5636 = vmatmul.mubr.f32.gmra.mxu0 %v5431
      %v5637 = vpop.f32.mrf.mxu0
      %v5638 = vadd.f32 %v349, %v5637
      %v5639 = vpop.f32.mrf.mxu0
      %v5640 = vadd.f32 %v350, %v5639
      %5641 = vmatprep.mubr.f32.mxu0 0.0
      %5642 = vmatmul.mubr.f32.gmra.mxu0 %v5434
      %v5643 = vpop.f32.mrf.mxu0
      %v5644 = vadd.f32 %v351, %v5643
      %v5645 = vpop.f32.mrf.mxu0
      %v5646 = vadd.f32 %v352, %v5645
      %5647 = vmatprep.mubr.f32.mxu0 0.0
      %5648 = vmatmul.mubr.f32.gmra.mxu0 %v5437
      %v5649 = vpop.f32.mrf.mxu0
      %v5650 = vadd.f32 %v353, %v5649
      %v5651 = vpop.f32.mrf.mxu0
      %v5652 = vadd.f32 %v354, %v5651
      %5653 = vdwg.mxu0
      %v5654 = vsel %vm1193, %v5508, -inf
      %v5655 = vmax.f32 %v5506, %v5654
      %5656 = vmax.xlane.f32.xlu0 %v5655
      %v5657 = vpop.xlane.xlu0 %5656
      %v5658 = vsel %vm1193, %v5514, -inf
      %v5659 = vmax.f32 %v5512, %v5658
      %5660 = vmax.xlane.f32.xlu0 %v5659
      %v5661 = vpop.xlane.xlu0 %5660
      %v5662 = vsel %vm1193, %v5520, -inf
      %v5663 = vmax.f32 %v5518, %v5662
      %5664 = vmax.xlane.f32.xlu0 %v5663
      %v5665 = vpop.xlane.xlu0 %5664
      %v5666 = vsel %vm1193, %v5526, -inf
      %v5667 = vmax.f32 %v5524, %v5666
      %5668 = vmax.xlane.f32.xlu0 %v5667
      %v5669 = vpop.xlane.xlu0 %5668
      %v5670 = vsel %vm1193, %v5532, -inf
      %v5671 = vmax.f32 %v5530, %v5670
      %5672 = vmax.xlane.f32.xlu0 %v5671
      %v5673 = vpop.xlane.xlu0 %5672
      %v5674 = vsel %vm1193, %v5538, -inf
      %v5675 = vmax.f32 %v5536, %v5674
      %5676 = vmax.xlane.f32.xlu0 %v5675
      %v5677 = vpop.xlane.xlu0 %5676
      %v5678 = vsel %vm1193, %v5544, -inf
      %v5679 = vmax.f32 %v5542, %v5678
      %5680 = vmax.xlane.f32.xlu0 %v5679
      %v5681 = vpop.xlane.xlu0 %5680
      %v5682 = vsel %vm1193, %v5550, -inf
      %v5683 = vmax.f32 %v5548, %v5682
      %5684 = vmax.xlane.f32.xlu0 %v5683
      %v5685 = vpop.xlane.xlu0 %5684
      %v5686 = vsel %vm1193, %v5556, -inf
      %v5687 = vmax.f32 %v5554, %v5686
      %5688 = vmax.xlane.f32.xlu0 %v5687
      %v5689 = vpop.xlane.xlu0 %5688
      %v5690 = vsel %vm1193, %v5562, -inf
      %v5691 = vmax.f32 %v5560, %v5690
      %5692 = vmax.xlane.f32.xlu0 %v5691
      %v5693 = vpop.xlane.xlu0 %5692
      %v5694 = vsel %vm1193, %v5568, -inf
      %v5695 = vmax.f32 %v5566, %v5694
      %5696 = vmax.xlane.f32.xlu0 %v5695
      %v5697 = vpop.xlane.xlu0 %5696
      %v5698 = vsel %vm1193, %v5574, -inf
      %v5699 = vmax.f32 %v5572, %v5698
      %5700 = vmax.xlane.f32.xlu0 %v5699
      %v5701 = vpop.xlane.xlu0 %5700
      %v5702 = vsel %vm1193, %v5580, -inf
      %v5703 = vmax.f32 %v5578, %v5702
      %5704 = vmax.xlane.f32.xlu0 %v5703
      %v5705 = vpop.xlane.xlu0 %5704
      %v5706 = vsel %vm1193, %v5586, -inf
      %v5707 = vmax.f32 %v5584, %v5706
      %5708 = vmax.xlane.f32.xlu0 %v5707
      %v5709 = vpop.xlane.xlu0 %5708
      %v5710 = vsel %vm1193, %v5592, -inf
      %v5711 = vmax.f32 %v5590, %v5710
      %5712 = vmax.xlane.f32.xlu0 %v5711
      %v5713 = vpop.xlane.xlu0 %5712
      %v5714 = vsel %vm1193, %v5598, -inf
      %v5715 = vmax.f32 %v5596, %v5714
      %5716 = vmax.xlane.f32.xlu0 %v5715
      %v5717 = vpop.xlane.xlu0 %5716
      %v5718 = vsel %vm1193, %v5604, -inf
      %v5719 = vmax.f32 %v5602, %v5718
      %5720 = vmax.xlane.f32.xlu0 %v5719
      %v5721 = vpop.xlane.xlu0 %5720
      %v5722 = vsel %vm1193, %v5610, -inf
      %v5723 = vmax.f32 %v5608, %v5722
      %5724 = vmax.xlane.f32.xlu0 %v5723
      %v5725 = vpop.xlane.xlu0 %5724
      %v5726 = vsel %vm1193, %v5616, -inf
      %v5727 = vmax.f32 %v5614, %v5726
      %5728 = vmax.xlane.f32.xlu0 %v5727
      %v5729 = vpop.xlane.xlu0 %5728
      %v5730 = vsel %vm1193, %v5622, -inf
      %v5731 = vmax.f32 %v5620, %v5730
      %5732 = vmax.xlane.f32.xlu0 %v5731
      %v5733 = vpop.xlane.xlu0 %5732
      %v5734 = vsel %vm1193, %v5628, -inf
      %v5735 = vmax.f32 %v5626, %v5734
      %5736 = vmax.xlane.f32.xlu0 %v5735
      %v5737 = vpop.xlane.xlu0 %5736
      %v5738 = vsel %vm1193, %v5634, -inf
      %v5739 = vmax.f32 %v5632, %v5738
      %5740 = vmax.xlane.f32.xlu0 %v5739
      %v5741 = vpop.xlane.xlu0 %5740
      %v5742 = vsel %vm1193, %v5640, -inf
      %v5743 = vmax.f32 %v5638, %v5742
      %5744 = vmax.xlane.f32.xlu0 %v5743
      %v5745 = vpop.xlane.xlu0 %5744
      %v5746 = vsel %vm1193, %v5646, -inf
      %v5747 = vmax.f32 %v5644, %v5746
      %5748 = vmax.xlane.f32.xlu0 %v5747
      %v5749 = vpop.xlane.xlu0 %5748
      %v5750 = vsel %vm1290, %v5650, -inf
      %v5751 = vsel %vm1292, %v5652, -inf
      %v5752 = vmax.f32 %v5750, %v5751
      %5753 = vmax.xlane.f32.xlu0 %v5752
      %v5754 = vpop.xlane.xlu0 %5753
      %v5755 = vsub.f32 %v5506, %v5657
      %v5756 = vsub.f32 %v5508, %v5657
      %v5757 = vsub.f32 %v5512, %v5661
      %v5758 = vsub.f32 %v5514, %v5661
      %v5759 = vsub.f32 %v5518, %v5665
      %v5760 = vsub.f32 %v5520, %v5665
      %v5761 = vsub.f32 %v5524, %v5669
      %v5762 = vsub.f32 %v5526, %v5669
      %v5763 = vsub.f32 %v5530, %v5673
      %v5764 = vsub.f32 %v5532, %v5673
      %v5765 = vsub.f32 %v5536, %v5677
      %v5766 = vsub.f32 %v5538, %v5677
      %v5767 = vsub.f32 %v5542, %v5681
      %v5768 = vsub.f32 %v5544, %v5681
      %v5769 = vsub.f32 %v5548, %v5685
      %v5770 = vsub.f32 %v5550, %v5685
      %v5771 = vsub.f32 %v5554, %v5689
      %v5772 = vsub.f32 %v5556, %v5689
      %v5773 = vsub.f32 %v5560, %v5693
      %v5774 = vsub.f32 %v5562, %v5693
      %v5775 = vsub.f32 %v5566, %v5697
      %v5776 = vsub.f32 %v5568, %v5697
      %v5777 = vsub.f32 %v5572, %v5701
      %v5778 = vsub.f32 %v5574, %v5701
      %v5779 = vsub.f32 %v5578, %v5705
      %v5780 = vsub.f32 %v5580, %v5705
      %v5781 = vsub.f32 %v5584, %v5709
      %v5782 = vsub.f32 %v5586, %v5709
      %v5783 = vsub.f32 %v5590, %v5713
      %v5784 = vsub.f32 %v5592, %v5713
      %v5785 = vsub.f32 %v5596, %v5717
      %v5786 = vsub.f32 %v5598, %v5717
      %v5787 = vsub.f32 %v5602, %v5721
      %v5788 = vsub.f32 %v5604, %v5721
      %v5789 = vsub.f32 %v5608, %v5725
      %v5790 = vsub.f32 %v5610, %v5725
      %v5791 = vsub.f32 %v5614, %v5729
      %v5792 = vsub.f32 %v5616, %v5729
      %v5793 = vsub.f32 %v5620, %v5733
      %v5794 = vsub.f32 %v5622, %v5733
      %v5795 = vsub.f32 %v5626, %v5737
      %v5796 = vsub.f32 %v5628, %v5737
      %v5797 = vsub.f32 %v5632, %v5741
      %v5798 = vsub.f32 %v5634, %v5741
      %v5799 = vsub.f32 %v5638, %v5745
      %v5800 = vsub.f32 %v5640, %v5745
      %v5801 = vsub.f32 %v5644, %v5749
      %v5802 = vsub.f32 %v5646, %v5749
      %v5803 = vsub.f32 %v5650, %v5754
      %v5804 = vsub.f32 %v5652, %v5754
      %v5805 = vmul.f32 %v5755, 1.442695
      %v5806 = vpow.pop %v5805
      %v5807 = vmul.f32 %v5756, 1.442695
      %v5808 = vpow.pop %v5807
      %v5809 = vmul.f32 %v5757, 1.442695
      %v5810 = vpow.pop %v5809
      %v5811 = vmul.f32 %v5758, 1.442695
      %v5812 = vpow.pop %v5811
      %v5813 = vmul.f32 %v5759, 1.442695
      %v5814 = vpow.pop %v5813
      %v5815 = vmul.f32 %v5760, 1.442695
      %v5816 = vpow.pop %v5815
      %v5817 = vmul.f32 %v5761, 1.442695
      %v5818 = vpow.pop %v5817
      %v5819 = vmul.f32 %v5762, 1.442695
      %v5820 = vpow.pop %v5819
      %v5821 = vmul.f32 %v5763, 1.442695
      %v5822 = vpow.pop %v5821
      %v5823 = vmul.f32 %v5764, 1.442695
      %v5824 = vpow.pop %v5823
      %v5825 = vmul.f32 %v5765, 1.442695
      %v5826 = vpow.pop %v5825
      %v5827 = vmul.f32 %v5766, 1.442695
      %v5828 = vpow.pop %v5827
      %v5829 = vmul.f32 %v5767, 1.442695
      %v5830 = vpow.pop %v5829
      %v5831 = vmul.f32 %v5768, 1.442695
      %v5832 = vpow.pop %v5831
      %v5833 = vmul.f32 %v5769, 1.442695
      %v5834 = vpow.pop %v5833
      %v5835 = vmul.f32 %v5770, 1.442695
      %v5836 = vpow.pop %v5835
      %v5837 = vmul.f32 %v5771, 1.442695
      %v5838 = vpow.pop %v5837
      %v5839 = vmul.f32 %v5772, 1.442695
      %v5840 = vpow.pop %v5839
      %v5841 = vmul.f32 %v5773, 1.442695
      %v5842 = vpow.pop %v5841
      %v5843 = vmul.f32 %v5774, 1.442695
      %v5844 = vpow.pop %v5843
      %v5845 = vmul.f32 %v5775, 1.442695
      %v5846 = vpow.pop %v5845
      %v5847 = vmul.f32 %v5776, 1.442695
      %v5848 = vpow.pop %v5847
      %v5849 = vmul.f32 %v5777, 1.442695
      %v5850 = vpow.pop %v5849
      %v5851 = vmul.f32 %v5778, 1.442695
      %v5852 = vpow.pop %v5851
      %v5853 = vmul.f32 %v5779, 1.442695
      %v5854 = vpow.pop %v5853
      %v5855 = vmul.f32 %v5780, 1.442695
      %v5856 = vpow.pop %v5855
      %v5857 = vmul.f32 %v5781, 1.442695
      %v5858 = vpow.pop %v5857
      %v5859 = vmul.f32 %v5782, 1.442695
      %v5860 = vpow.pop %v5859
      %v5861 = vmul.f32 %v5783, 1.442695
      %v5862 = vpow.pop %v5861
      %v5863 = vmul.f32 %v5784, 1.442695
      %v5864 = vpow.pop %v5863
      %v5865 = vmul.f32 %v5785, 1.442695
      %v5866 = vpow.pop %v5865
      %v5867 = vmul.f32 %v5786, 1.442695
      %v5868 = vpow.pop %v5867
      %v5869 = vmul.f32 %v5787, 1.442695
      %v5870 = vpow.pop %v5869
      %v5871 = vmul.f32 %v5788, 1.442695
      %v5872 = vpow.pop %v5871
      %v5873 = vmul.f32 %v5789, 1.442695
      %v5874 = vpow.pop %v5873
      %v5875 = vmul.f32 %v5790, 1.442695
      %v5876 = vpow.pop %v5875
      %v5877 = vmul.f32 %v5791, 1.442695
      %v5878 = vpow.pop %v5877
      %v5879 = vmul.f32 %v5792, 1.442695
      %v5880 = vpow.pop %v5879
      %v5881 = vmul.f32 %v5793, 1.442695
      %v5882 = vpow.pop %v5881
      %v5883 = vmul.f32 %v5794, 1.442695
      %v5884 = vpow.pop %v5883
      %v5885 = vmul.f32 %v5795, 1.442695
      %v5886 = vpow.pop %v5885
      %v5887 = vmul.f32 %v5796, 1.442695
      %v5888 = vpow.pop %v5887
      %v5889 = vmul.f32 %v5797, 1.442695
      %v5890 = vpow.pop %v5889
      %v5891 = vmul.f32 %v5798, 1.442695
      %v5892 = vpow.pop %v5891
      %v5893 = vmul.f32 %v5799, 1.442695
      %v5894 = vpow.pop %v5893
      %v5895 = vmul.f32 %v5800, 1.442695
      %v5896 = vpow.pop %v5895
      %v5897 = vmul.f32 %v5801, 1.442695
      %v5898 = vpow.pop %v5897
      %v5899 = vmul.f32 %v5802, 1.442695
      %v5900 = vpow.pop %v5899
      %v5901 = vmul.f32 %v5803, 1.442695
      %v5902 = vpow.pop %v5901
      %v5903 = vmul.f32 %v5804, 1.442695
      %v5904 = vpow.pop %v5903
      %v5905 = vsel %vm1193, %v5808, 0.0
      %v5906 = vadd.f32 %v5806, %v5905
      %5907 = vadd.xlane.f32.xlu0 %v5906
      %v5908 = vpop.xlane.xlu0 %5907
      %v5909 = vsel %vm1193, %v5812, 0.0
      %v5910 = vadd.f32 %v5810, %v5909
      %5911 = vadd.xlane.f32.xlu0 %v5910
      %v5912 = vpop.xlane.xlu0 %5911
      %v5913 = vsel %vm1193, %v5816, 0.0
      %v5914 = vadd.f32 %v5814, %v5913
      %5915 = vadd.xlane.f32.xlu0 %v5914
      %v5916 = vpop.xlane.xlu0 %5915
      %v5917 = vsel %vm1193, %v5820, 0.0
      %v5918 = vadd.f32 %v5818, %v5917
      %5919 = vadd.xlane.f32.xlu0 %v5918
      %v5920 = vpop.xlane.xlu0 %5919
      %v5921 = vsel %vm1193, %v5824, 0.0
      %v5922 = vadd.f32 %v5822, %v5921
      %5923 = vadd.xlane.f32.xlu0 %v5922
      %v5924 = vpop.xlane.xlu0 %5923
      %v5925 = vsel %vm1193, %v5828, 0.0
      %v5926 = vadd.f32 %v5826, %v5925
      %5927 = vadd.xlane.f32.xlu0 %v5926
      %v5928 = vpop.xlane.xlu0 %5927
      %v5929 = vsel %vm1193, %v5832, 0.0
      %v5930 = vadd.f32 %v5830, %v5929
      %5931 = vadd.xlane.f32.xlu0 %v5930
      %v5932 = vpop.xlane.xlu0 %5931
      %v5933 = vsel %vm1193, %v5836, 0.0
      %v5934 = vadd.f32 %v5834, %v5933
      %5935 = vadd.xlane.f32.xlu0 %v5934
      %v5936 = vpop.xlane.xlu0 %5935
      %v5937 = vsel %vm1193, %v5840, 0.0
      %v5938 = vadd.f32 %v5838, %v5937
      %5939 = vadd.xlane.f32.xlu0 %v5938
      %v5940 = vpop.xlane.xlu0 %5939
      %v5941 = vsel %vm1193, %v5844, 0.0
      %v5942 = vadd.f32 %v5842, %v5941
      %5943 = vadd.xlane.f32.xlu0 %v5942
      %v5944 = vpop.xlane.xlu0 %5943
      %v5945 = vsel %vm1193, %v5848, 0.0
      %v5946 = vadd.f32 %v5846, %v5945
      %5947 = vadd.xlane.f32.xlu0 %v5946
      %v5948 = vpop.xlane.xlu0 %5947
      %v5949 = vsel %vm1193, %v5852, 0.0
      %v5950 = vadd.f32 %v5850, %v5949
      %5951 = vadd.xlane.f32.xlu0 %v5950
      %v5952 = vpop.xlane.xlu0 %5951
      %v5953 = vsel %vm1193, %v5856, 0.0
      %v5954 = vadd.f32 %v5854, %v5953
      %5955 = vadd.xlane.f32.xlu0 %v5954
      %v5956 = vpop.xlane.xlu0 %5955
      %v5957 = vsel %vm1193, %v5860, 0.0
      %v5958 = vadd.f32 %v5858, %v5957
      %5959 = vadd.xlane.f32.xlu0 %v5958
      %v5960 = vpop.xlane.xlu0 %5959
      %v5961 = vsel %vm1193, %v5864, 0.0
      %v5962 = vadd.f32 %v5862, %v5961
      %5963 = vadd.xlane.f32.xlu0 %v5962
      %v5964 = vpop.xlane.xlu0 %5963
      %v5965 = vsel %vm1193, %v5868, 0.0
      %v5966 = vadd.f32 %v5866, %v5965
      %5967 = vadd.xlane.f32.xlu0 %v5966
      %v5968 = vpop.xlane.xlu0 %5967
      %v5969 = vsel %vm1193, %v5872, 0.0
      %v5970 = vadd.f32 %v5870, %v5969
      %5971 = vadd.xlane.f32.xlu0 %v5970
      %v5972 = vpop.xlane.xlu0 %5971
      %v5973 = vsel %vm1193, %v5876, 0.0
      %v5974 = vadd.f32 %v5874, %v5973
      %5975 = vadd.xlane.f32.xlu0 %v5974
      %v5976 = vpop.xlane.xlu0 %5975
      %v5977 = vsel %vm1193, %v5880, 0.0
      %v5978 = vadd.f32 %v5878, %v5977
      %5979 = vadd.xlane.f32.xlu0 %v5978
      %v5980 = vpop.xlane.xlu0 %5979
      %v5981 = vsel %vm1193, %v5884, 0.0
      %v5982 = vadd.f32 %v5882, %v5981
      %5983 = vadd.xlane.f32.xlu0 %v5982
      %v5984 = vpop.xlane.xlu0 %5983
      %v5985 = vsel %vm1193, %v5888, 0.0
      %v5986 = vadd.f32 %v5886, %v5985
      %5987 = vadd.xlane.f32.xlu0 %v5986
      %v5988 = vpop.xlane.xlu0 %5987
      %v5989 = vsel %vm1193, %v5892, 0.0
      %v5990 = vadd.f32 %v5890, %v5989
      %5991 = vadd.xlane.f32.xlu0 %v5990
      %v5992 = vpop.xlane.xlu0 %5991
      %v5993 = vsel %vm1193, %v5896, 0.0
      %v5994 = vadd.f32 %v5894, %v5993
      %5995 = vadd.xlane.f32.xlu0 %v5994
      %v5996 = vpop.xlane.xlu0 %5995
      %v5997 = vsel %vm1193, %v5900, 0.0
      %v5998 = vadd.f32 %v5898, %v5997
      %5999 = vadd.xlane.f32.xlu0 %v5998
      %v6000 = vpop.xlane.xlu0 %5999
      %v6001 = vsel %vm1290, %v5902, 0.0
      %v6002 = vsel %vm1292, %v5904, 0.0
      %v6003 = vadd.f32 %v6001, %v6002
      %6004 = vadd.xlane.f32.xlu0 %v6003
      %v6005 = vpop.xlane.xlu0 %6004
      %v6007 = vsel %vm1193, %v5808, 0
      %v6010 = vsel %vm1193, %v5812, 0
      %v6013 = vsel %vm1193, %v5816, 0
      %v6016 = vsel %vm1193, %v5820, 0
      %v6019 = vsel %vm1193, %v5824, 0
      %v6022 = vsel %vm1193, %v5828, 0
      %v6025 = vsel %vm1193, %v5832, 0
      %v6028 = vsel %vm1193, %v5836, 0
      %v6031 = vsel %vm1193, %v5840, 0
      %v6034 = vsel %vm1193, %v5844, 0
      %v6037 = vsel %vm1193, %v5848, 0
      %v6040 = vsel %vm1193, %v5852, 0
      %v6043 = vsel %vm1193, %v5856, 0
      %v6046 = vsel %vm1193, %v5860, 0
      %v6049 = vsel %vm1193, %v5864, 0
      %v6052 = vsel %vm1193, %v5868, 0
      %v6055 = vsel %vm1193, %v5872, 0
      %v6058 = vsel %vm1193, %v5876, 0
      %v6061 = vsel %vm1193, %v5880, 0
      %v6064 = vsel %vm1193, %v5884, 0
      %v6067 = vsel %vm1193, %v5888, 0
      %v6070 = vsel %vm1193, %v5892, 0
      %v6073 = vsel %vm1193, %v5896, 0
      %v6076 = vsel %vm1193, %v5900, 0
      %v6079 = vsel %vm1193, %v5904, 0
      %v6082 = vsel %vm1290, %v875, 0
      %6084 = vmatprep.subr.mxu0 0.0
      %6085 = vmatpush1.msra.mxu0 %v821
      %6086 = vmatprep.subr.mxu0 0.0
      %6087 = vmatpush1.msra.mxu0 %v815
      %6088 = vmatprep.subr.mxu0 0.0
      %6089 = vmatpush1.msra.mxu0 %v809
      %6090 = vmatprep.subr.mxu0 0.0
      %6091 = vmatpush1.msra.mxu0 %v803
      %6092 = vmatprep.subr.mxu0 0.0
      %6093 = vmatpush1.msra.mxu0 %v797
      %6094 = vmatprep.subr.mxu0 0.0
      %6095 = vmatpush1.msra.mxu0 %v791
      %6096 = vmatprep.subr.mxu0 0.0
      %6097 = vmatpush1.msra.mxu0 %v785
      %6098 = vmatprep.subr.mxu0 0.0
      %6099 = vmatpush1.msra.mxu0 %v779
      %6100 = vmatprep.subr.mxu0 0.0
      %6101 = vmatpush1.msra.mxu0 %v773
      %6102 = vmatprep.subr.mxu0 0.0
      %6103 = vmatpush1.msra.mxu0 %v767
      %6104 = vmatprep.subr.mxu0 0.0
      %6105 = vmatpush1.msra.mxu0 %v761
      %6106 = vmatprep.subr.mxu0 0.0
      %6107 = vmatpush1.msra.mxu0 %v755
      %6108 = vmatprep.subr.mxu0 0.0
      %6109 = vmatpush1.msra.mxu0 %v749
      %6110 = vmatprep.subr.mxu0 0.0
      %6111 = vmatpush1.msra.mxu0 %v743
      %6112 = vmatprep.subr.mxu0 0.0
      %6113 = vmatpush1.msra.mxu0 %v737
      %6114 = vmatprep.subr.mxu0 0.0
      %6115 = vmatpush1.msra.mxu0 %v731
      %6116 = vmatprep.subr.mxu0 0.0
      %6117 = vmatpush2.msra.mxu0 0.0
      %6118 = vmatprep.subr.mxu0 0.0
      %6119 = vmatpush2.msra.mxu0 0.0
      %6120 = vmatprep.subr.mxu0 0.0
      %6121 = vmatpush2.msra.mxu0 0.0
      %6122 = vmatprep.subr.mxu0 0.0
      %6123 = vmatpush2.msra.mxu0 0.0
      %6124 = vmatprep.subr.mxu0 0.0
      %6125 = vmatpush2.msra.mxu0 0.0
      %6126 = vmatprep.subr.mxu0 0.0
      %6127 = vmatpush2.msra.mxu0 0.0
      %6128 = vmatprep.subr.mxu0 0.0
      %6129 = vmatpush2.msra.mxu0 0.0
      %6130 = vmatprep.subr.mxu0 0.0
      %6131 = vmatpush2.msra.mxu0 %v6082
      %6132 = vmatprep.subr.mxu0 0.0
      %6133 = vmatpush2.msra.mxu0 %v869
      %6134 = vmatprep.subr.mxu0 0.0
      %6135 = vmatpush2.msra.mxu0 %v863
      %6136 = vmatprep.subr.mxu0 0.0
      %6137 = vmatpush2.msra.mxu0 %v857
      %6138 = vmatprep.subr.mxu0 0.0
      %6139 = vmatpush2.msra.mxu0 %v851
      %6140 = vmatprep.subr.mxu0 0.0
      %6141 = vmatpush2.msra.mxu0 %v845
      %6142 = vmatprep.subr.mxu0 0.0
      %6143 = vmatpush2.msra.mxu0 %v839
      %6144 = vmatprep.subr.mxu0 0.0
      %6145 = vmatpush2.msra.mxu0 %v833
      %6146 = vmatprep.subr.mxu0 0.0
      %6147 = vmatpush2.msra.mxu0 %v827
      %6148 = vmatprep.mubr.f32.mxu0 %v6007
      %6149 = vmatmul.mubr.f32.gmra.mxu0 %v5806
      %v6150 = vpop.f32.mrf.mxu0
      %v6151 = vadd.f32 0.0, %v6150
      %v6152 = vpop.f32.mrf.mxu0
      %6153 = vmatprep.mubr.f32.mxu0 %v6010
      %6154 = vmatmul.mubr.f32.gmra.mxu0 %v5810
      %v6155 = vpop.f32.mrf.mxu0
      %v6156 = vadd.f32 0.0, %v6155
      %v6157 = vpop.f32.mrf.mxu0
      %6158 = vmatprep.mubr.f32.mxu0 %v6013
      %6159 = vmatmul.mubr.f32.gmra.mxu0 %v5814
      %v6160 = vpop.f32.mrf.mxu0
      %v6161 = vadd.f32 0.0, %v6160
      %v6162 = vpop.f32.mrf.mxu0
      %6163 = vmatprep.mubr.f32.mxu0 %v6016
      %6164 = vmatmul.mubr.f32.gmra.mxu0 %v5818
      %v6165 = vpop.f32.mrf.mxu0
      %v6166 = vadd.f32 0.0, %v6165
      %v6167 = vpop.f32.mrf.mxu0
      %6168 = vmatprep.mubr.f32.mxu0 %v6019
      %6169 = vmatmul.mubr.f32.gmra.mxu0 %v5822
      %v6170 = vpop.f32.mrf.mxu0
      %v6171 = vadd.f32 0.0, %v6170
      %v6172 = vpop.f32.mrf.mxu0
      %6173 = vmatprep.mubr.f32.mxu0 %v6022
      %6174 = vmatmul.mubr.f32.gmra.mxu0 %v5826
      %v6175 = vpop.f32.mrf.mxu0
      %v6176 = vadd.f32 0.0, %v6175
      %v6177 = vpop.f32.mrf.mxu0
      %6178 = vmatprep.mubr.f32.mxu0 %v6025
      %6179 = vmatmul.mubr.f32.gmra.mxu0 %v5830
      %v6180 = vpop.f32.mrf.mxu0
      %v6181 = vadd.f32 0.0, %v6180
      %v6182 = vpop.f32.mrf.mxu0
      %6183 = vmatprep.mubr.f32.mxu0 %v6028
      %6184 = vmatmul.mubr.f32.gmra.mxu0 %v5834
      %v6185 = vpop.f32.mrf.mxu0
      %v6186 = vadd.f32 0.0, %v6185
      %v6187 = vpop.f32.mrf.mxu0
      %6188 = vmatprep.mubr.f32.mxu0 %v6031
      %6189 = vmatmul.mubr.f32.gmra.mxu0 %v5838
      %v6190 = vpop.f32.mrf.mxu0
      %v6191 = vadd.f32 0.0, %v6190
      %v6192 = vpop.f32.mrf.mxu0
      %6193 = vmatprep.mubr.f32.mxu0 %v6034
      %6194 = vmatmul.mubr.f32.gmra.mxu0 %v5842
      %v6195 = vpop.f32.mrf.mxu0
      %v6196 = vadd.f32 0.0, %v6195
      %v6197 = vpop.f32.mrf.mxu0
      %6198 = vmatprep.mubr.f32.mxu0 %v6037
      %6199 = vmatmul.mubr.f32.gmra.mxu0 %v5846
      %v6200 = vpop.f32.mrf.mxu0
      %v6201 = vadd.f32 0.0, %v6200
      %v6202 = vpop.f32.mrf.mxu0
      %6203 = vmatprep.mubr.f32.mxu0 %v6040
      %6204 = vmatmul.mubr.f32.gmra.mxu0 %v5850
      %v6205 = vpop.f32.mrf.mxu0
      %v6206 = vadd.f32 0.0, %v6205
      %v6207 = vpop.f32.mrf.mxu0
      %6208 = vmatprep.mubr.f32.mxu0 %v6043
      %6209 = vmatmul.mubr.f32.gmra.mxu0 %v5854
      %v6210 = vpop.f32.mrf.mxu0
      %v6211 = vadd.f32 0.0, %v6210
      %v6212 = vpop.f32.mrf.mxu0
      %6213 = vmatprep.mubr.f32.mxu0 %v6046
      %6214 = vmatmul.mubr.f32.gmra.mxu0 %v5858
      %v6215 = vpop.f32.mrf.mxu0
      %v6216 = vadd.f32 0.0, %v6215
      %v6217 = vpop.f32.mrf.mxu0
      %6218 = vmatprep.mubr.f32.mxu0 %v6049
      %6219 = vmatmul.mubr.f32.gmra.mxu0 %v5862
      %v6220 = vpop.f32.mrf.mxu0
      %v6221 = vadd.f32 0.0, %v6220
      %v6222 = vpop.f32.mrf.mxu0
      %6223 = vmatprep.mubr.f32.mxu0 %v6052
      %6224 = vmatmul.mubr.f32.gmra.mxu0 %v5866
      %v6225 = vpop.f32.mrf.mxu0
      %v6226 = vadd.f32 0.0, %v6225
      %v6227 = vpop.f32.mrf.mxu0
      %6228 = vmatprep.mubr.f32.mxu0 %v6055
      %6229 = vmatmul.mubr.f32.gmra.mxu0 %v5870
      %v6230 = vpop.f32.mrf.mxu0
      %v6231 = vadd.f32 0.0, %v6230
      %v6232 = vpop.f32.mrf.mxu0
      %6233 = vmatprep.mubr.f32.mxu0 %v6058
      %6234 = vmatmul.mubr.f32.gmra.mxu0 %v5874
      %v6235 = vpop.f32.mrf.mxu0
      %v6236 = vadd.f32 0.0, %v6235
      %v6237 = vpop.f32.mrf.mxu0
      %6238 = vmatprep.mubr.f32.mxu0 %v6061
      %6239 = vmatmul.mubr.f32.gmra.mxu0 %v5878
      %v6240 = vpop.f32.mrf.mxu0
      %v6241 = vadd.f32 0.0, %v6240
      %v6242 = vpop.f32.mrf.mxu0
      %6243 = vmatprep.mubr.f32.mxu0 %v6064
      %6244 = vmatmul.mubr.f32.gmra.mxu0 %v5882
      %v6245 = vpop.f32.mrf.mxu0
      %v6246 = vadd.f32 0.0, %v6245
      %v6247 = vpop.f32.mrf.mxu0
      %6248 = vmatprep.mubr.f32.mxu0 %v6067
      %6249 = vmatmul.mubr.f32.gmra.mxu0 %v5886
      %v6250 = vpop.f32.mrf.mxu0
      %v6251 = vadd.f32 0.0, %v6250
      %v6252 = vpop.f32.mrf.mxu0
      %6253 = vmatprep.mubr.f32.mxu0 %v6070
      %6254 = vmatmul.mubr.f32.gmra.mxu0 %v5890
      %v6255 = vpop.f32.mrf.mxu0
      %v6256 = vadd.f32 0.0, %v6255
      %v6257 = vpop.f32.mrf.mxu0
      %6258 = vmatprep.mubr.f32.mxu0 %v6073
      %6259 = vmatmul.mubr.f32.gmra.mxu0 %v5894
      %v6260 = vpop.f32.mrf.mxu0
      %v6261 = vadd.f32 0.0, %v6260
      %v6262 = vpop.f32.mrf.mxu0
      %6263 = vmatprep.mubr.f32.mxu0 %v6076
      %6264 = vmatmul.mubr.f32.gmra.mxu0 %v5898
      %v6265 = vpop.f32.mrf.mxu0
      %v6266 = vadd.f32 0.0, %v6265
      %v6267 = vpop.f32.mrf.mxu0
      %6268 = vmatprep.mubr.f32.mxu0 %v6079
      %6269 = vmatmul.mubr.f32.gmra.mxu0 %v5902
      %v6270 = vpop.f32.mrf.mxu0
      %v6271 = vadd.f32 0.0, %v6270
      %v6272 = vpop.f32.mrf.mxu0
      %6273 = vdwg.mxu0
      %v6274 = vld [vmem:[#allocation2] sm:$0xff]
      %v6275 = vld [vmem:[#allocation2 + $0x8] sm:$0xff]
      %v6276 = vld [vmem:[#allocation2 + $0x10] sm:$0xff]
      %v6277 = vld [vmem:[#allocation2 + $0x18] sm:$0xff]
      %v6278 = vld [vmem:[#allocation2 + $0x20] sm:$0xff]
      %v6279 = vld [vmem:[#allocation2 + $0x28] sm:$0xff]
      %v6280 = vld [vmem:[#allocation2 + $0x30] sm:$0xff]
      %v6281 = vld [vmem:[#allocation2 + $0x38] sm:$0xff]
      %v6282 = vld [vmem:[#allocation2 + $0x40] sm:$0xff]
      %v6283 = vld [vmem:[#allocation2 + $0x48] sm:$0xff]
      %v6284 = vld [vmem:[#allocation2 + $0x50] sm:$0xff]
      %v6285 = vld [vmem:[#allocation2 + $0x58] sm:$0xff]
      %v6286 = vld [vmem:[#allocation2 + $0x60] sm:$0xff]
      %v6287 = vld [vmem:[#allocation2 + $0x68] sm:$0xff]
      %v6288 = vld [vmem:[#allocation2 + $0x70] sm:$0xff]
      %v6289 = vld [vmem:[#allocation2 + $0x78] sm:$0xff]
      %v6290 = vld [vmem:[#allocation2 + $0x80] sm:$0xff]
      %v6291 = vld [vmem:[#allocation2 + $0x88] sm:$0xff]
      %v6292 = vld [vmem:[#allocation2 + $0x90] sm:$0xff]
      %v6293 = vld [vmem:[#allocation2 + $0x98] sm:$0xff]
      %v6294 = vld [vmem:[#allocation2 + $0xa0] sm:$0xff]
      %v6295 = vld [vmem:[#allocation2 + $0xa8] sm:$0xff]
      %v6296 = vld [vmem:[#allocation2 + $0xb0] sm:$0xff]
      %v6297 = vld [vmem:[#allocation2 + $0xb8] sm:$0xff]
      %v6298 = vld [vmem:[#allocation2 + $0xc0] sm:$0xf]
      %v6299 = vrcp.pop %v5908
      %v6300 = vrcp.pop %v5912
      %v6301 = vrcp.pop %v5916
      %v6302 = vrcp.pop %v5920
      %v6303 = vrcp.pop %v5924
      %v6304 = vrcp.pop %v5928
      %v6305 = vrcp.pop %v5932
      %v6306 = vrcp.pop %v5936
      %v6307 = vrcp.pop %v5940
      %v6308 = vrcp.pop %v5944
      %v6309 = vrcp.pop %v5948
      %v6310 = vrcp.pop %v5952
      %v6311 = vrcp.pop %v5956
      %v6312 = vrcp.pop %v5960
      %v6313 = vrcp.pop %v5964
      %v6314 = vrcp.pop %v5968
      %v6315 = vrcp.pop %v5972
      %v6316 = vrcp.pop %v5976
      %v6317 = vrcp.pop %v5980
      %v6318 = vrcp.pop %v5984
      %v6319 = vrcp.pop %v5988
      %v6320 = vrcp.pop %v5992
      %v6321 = vrcp.pop %v5996
      %v6322 = vrcp.pop %v6000
      %v6323 = vrcp.pop %v6005
      %v6324 = vmul.f32 %v6151, %v6299
      %v6325 = vmul.f32 %v6156, %v6300
      %v6326 = vmul.f32 %v6161, %v6301
      %v6327 = vmul.f32 %v6166, %v6302
      %v6328 = vmul.f32 %v6171, %v6303
      %v6329 = vmul.f32 %v6176, %v6304
      %v6330 = vmul.f32 %v6181, %v6305
      %v6331 = vmul.f32 %v6186, %v6306
      %v6332 = vmul.f32 %v6191, %v6307
      %v6333 = vmul.f32 %v6196, %v6308
      %v6334 = vmul.f32 %v6201, %v6309
      %v6335 = vmul.f32 %v6206, %v6310
      %v6336 = vmul.f32 %v6211, %v6311
      %v6337 = vmul.f32 %v6216, %v6312
      %v6338 = vmul.f32 %v6221, %v6313
      %v6339 = vmul.f32 %v6226, %v6314
      %v6340 = vmul.f32 %v6231, %v6315
      %v6341 = vmul.f32 %v6236, %v6316
      %v6342 = vmul.f32 %v6241, %v6317
      %v6343 = vmul.f32 %v6246, %v6318
      %v6344 = vmul.f32 %v6251, %v6319
      %v6345 = vmul.f32 %v6256, %v6320
      %v6346 = vmul.f32 %v6261, %v6321
      %v6347 = vmul.f32 %v6266, %v6322
      %v6348 = vmul.f32 %v6271, %v6323
      %v6349 = vadd.f32 %v6274, %v6324
      %v6350 = vadd.f32 %v6275, %v6325
      %v6351 = vadd.f32 %v6276, %v6326
      %v6352 = vadd.f32 %v6277, %v6327
      %v6353 = vadd.f32 %v6278, %v6328
      %v6354 = vadd.f32 %v6279, %v6329
      %v6355 = vadd.f32 %v6280, %v6330
      %v6356 = vadd.f32 %v6281, %v6331
      %v6357 = vadd.f32 %v6282, %v6332
      %v6358 = vadd.f32 %v6283, %v6333
      %v6359 = vadd.f32 %v6284, %v6334
      %v6360 = vadd.f32 %v6285, %v6335
      %v6361 = vadd.f32 %v6286, %v6336
      %v6362 = vadd.f32 %v6287, %v6337
      %v6363 = vadd.f32 %v6288, %v6338
      %v6364 = vadd.f32 %v6289, %v6339
      %v6365 = vadd.f32 %v6290, %v6340
      %v6366 = vadd.f32 %v6291, %v6341
      %v6367 = vadd.f32 %v6292, %v6342
      %v6368 = vadd.f32 %v6293, %v6343
      %v6369 = vadd.f32 %v6294, %v6344
      %v6370 = vadd.f32 %v6295, %v6345
      %v6371 = vadd.f32 %v6296, %v6346
      %v6372 = vadd.f32 %v6297, %v6347
      %v6373 = vadd.f32 %v6298, %v6348
      %6374 = vst.msk [vmem:[#allocation2] sm:$0xff] %vm363, %v6349
      %6375 = vst.msk [vmem:[#allocation2 + $0x8] sm:$0xff] %vm363, %v6350
      %6376 = vst.msk [vmem:[#allocation2 + $0x10] sm:$0xff] %vm363, %v6351
      %6377 = vst.msk [vmem:[#allocation2 + $0x18] sm:$0xff] %vm363, %v6352
      %6378 = vst.msk [vmem:[#allocation2 + $0x20] sm:$0xff] %vm363, %v6353
      %6379 = vst.msk [vmem:[#allocation2 + $0x28] sm:$0xff] %vm363, %v6354
      %6380 = vst.msk [vmem:[#allocation2 + $0x30] sm:$0xff] %vm363, %v6355
      %6381 = vst.msk [vmem:[#allocation2 + $0x38] sm:$0xff] %vm363, %v6356
      %6382 = vst.msk [vmem:[#allocation2 + $0x40] sm:$0xff] %vm363, %v6357
      %6383 = vst.msk [vmem:[#allocation2 + $0x48] sm:$0xff] %vm363, %v6358
      %6384 = vst.msk [vmem:[#allocation2 + $0x50] sm:$0xff] %vm363, %v6359
      %6385 = vst.msk [vmem:[#allocation2 + $0x58] sm:$0xff] %vm363, %v6360
      %6386 = vst.msk [vmem:[#allocation2 + $0x60] sm:$0xff] %vm363, %v6361
      %6387 = vst.msk [vmem:[#allocation2 + $0x68] sm:$0xff] %vm363, %v6362
      %6388 = vst.msk [vmem:[#allocation2 + $0x70] sm:$0xff] %vm363, %v6363
      %6389 = vst.msk [vmem:[#allocation2 + $0x78] sm:$0xff] %vm363, %v6364
      %6390 = vst.msk [vmem:[#allocation2 + $0x80] sm:$0xff] %vm363, %v6365
      %6391 = vst.msk [vmem:[#allocation2 + $0x88] sm:$0xff] %vm363, %v6366
      %6392 = vst.msk [vmem:[#allocation2 + $0x90] sm:$0xff] %vm363, %v6367
      %6393 = vst.msk [vmem:[#allocation2 + $0x98] sm:$0xff] %vm363, %v6368
      %6394 = vst.msk [vmem:[#allocation2 + $0xa0] sm:$0xff] %vm363, %v6369
      %6395 = vst.msk [vmem:[#allocation2 + $0xa8] sm:$0xff] %vm363, %v6370
      %6396 = vst.msk [vmem:[#allocation2 + $0xb0] sm:$0xff] %vm363, %v6371
      %6397 = vst.msk [vmem:[#allocation2 + $0xb8] sm:$0xff] %vm363, %v6372
      %6398 = vst.msk [vmem:[#allocation2 + $0xc0] sm:$0xf] %vm901, %v6373
      %6399 = vrot.lane.b32.xlu0 %v508, 96
      %v6400 = vpop.permute.xlu0 %6399
      %6401 = vrot.lane.b32.xlu0 %v514, 96
      %v6402 = vpop.permute.xlu0 %6401
      %6403 = vrot.lane.b32.xlu0 %v520, 96
      %v6404 = vpop.permute.xlu0 %6403
      %6405 = vrot.lane.b32.xlu0 %v526, 96
      %v6406 = vpop.permute.xlu0 %6405
      %6407 = vrot.lane.b32.xlu0 %v532, 96
      %v6408 = vpop.permute.xlu0 %6407
      %6409 = vrot.lane.b32.xlu0 %v538, 96
      %v6410 = vpop.permute.xlu0 %6409
      %6411 = vrot.lane.b32.xlu0 %v544, 96
      %v6412 = vpop.permute.xlu0 %6411
      %6413 = vrot.lane.b32.xlu0 %v550, 96
      %v6414 = vpop.permute.xlu0 %6413
      %6415 = vrot.lane.b32.xlu0 %v556, 96
      %v6416 = vpop.permute.xlu0 %6415
      %6417 = vrot.lane.b32.xlu0 %v562, 96
      %v6418 = vpop.permute.xlu0 %6417
      %6419 = vrot.lane.b32.xlu0 %v568, 96
      %v6420 = vpop.permute.xlu0 %6419
      %6421 = vrot.lane.b32.xlu0 %v574, 96
      %v6422 = vpop.permute.xlu0 %6421
      %6423 = vrot.lane.b32.xlu0 %v580, 96
      %v6424 = vpop.permute.xlu0 %6423
      %6425 = vrot.lane.b32.xlu0 %v586, 96
      %v6426 = vpop.permute.xlu0 %6425
      %6427 = vrot.lane.b32.xlu0 %v592, 96
      %v6428 = vpop.permute.xlu0 %6427
      %6429 = vrot.lane.b32.xlu0 %v598, 96
      %v6430 = vpop.permute.xlu0 %6429
      %6431 = vrot.lane.b32.xlu0 %v604, 96
      %v6432 = vpop.permute.xlu0 %6431
      %6433 = vrot.lane.b32.xlu0 %v610, 96
      %v6434 = vpop.permute.xlu0 %6433
      %6435 = vrot.lane.b32.xlu0 %v616, 96
      %v6436 = vpop.permute.xlu0 %6435
      %6437 = vrot.lane.b32.xlu0 %v622, 96
      %v6438 = vpop.permute.xlu0 %6437
      %6439 = vrot.lane.b32.xlu0 %v628, 96
      %v6440 = vpop.permute.xlu0 %6439
      %6441 = vrot.lane.b32.xlu0 %v634, 96
      %v6442 = vpop.permute.xlu0 %6441
      %6443 = vrot.lane.b32.xlu0 %v640, 96
      %v6444 = vpop.permute.xlu0 %6443
      %6445 = vrot.lane.b32.xlu0 %v646, 96
      %v6446 = vpop.permute.xlu0 %6445
      %6447 = vrot.lane.b32.xlu0 %v652, 96
      %v6448 = vpop.permute.xlu0 %6447
      %v6449 = vsel %vm363, %v6400, 0
      %v6451 = vsel %vm363, %v6402, 0
      %v6453 = vsel %vm363, %v6404, 0
      %v6455 = vsel %vm363, %v6406, 0
      %v6457 = vsel %vm363, %v6408, 0
      %v6459 = vsel %vm363, %v6410, 0
      %v6461 = vsel %vm363, %v6412, 0
      %v6463 = vsel %vm363, %v6414, 0
      %v6465 = vsel %vm363, %v6416, 0
      %v6467 = vsel %vm363, %v6418, 0
      %v6469 = vsel %vm363, %v6420, 0
      %v6471 = vsel %vm363, %v6422, 0
      %v6473 = vsel %vm363, %v6424, 0
      %v6475 = vsel %vm363, %v6426, 0
      %v6477 = vsel %vm363, %v6428, 0
      %v6479 = vsel %vm363, %v6430, 0
      %v6481 = vsel %vm363, %v6432, 0
      %v6483 = vsel %vm363, %v6434, 0
      %v6485 = vsel %vm363, %v6436, 0
      %v6487 = vsel %vm363, %v6438, 0
      %v6489 = vsel %vm363, %v6440, 0
      %v6491 = vsel %vm363, %v6442, 0
      %v6493 = vsel %vm363, %v6444, 0
      %v6495 = vsel %vm363, %v6446, 0
      %v6497 = vsel %vm363, %v6448, 0
      %6499 = vmatprep.subr.mxu0 0.0
      %6500 = vmatpush1.msra.mxu0 0.0
      %6501 = vmatprep.subr.mxu0 0.0
      %6502 = vmatpush1.msra.mxu0 0.0
      %6503 = vmatprep.subr.mxu0 0.0
      %6504 = vmatpush1.msra.mxu0 0.0
      %6505 = vmatprep.subr.mxu0 0.0
      %6506 = vmatpush1.msra.mxu0 0.0
      %6507 = vmatprep.subr.mxu0 0.0
      %6508 = vmatpush1.msra.mxu0 0.0
      %6509 = vmatprep.subr.mxu0 0.0
      %6510 = vmatpush1.msra.mxu0 0.0
      %6511 = vmatprep.subr.mxu0 0.0
      %6512 = vmatpush1.msra.mxu0 0.0
      %6513 = vmatprep.subr.mxu0 0.0
      %6514 = vmatpush1.msra.mxu0 0.0
      %6515 = vmatprep.subr.mxu0 0.0
      %6516 = vmatpush1.msra.mxu0 0.0
      %6517 = vmatprep.subr.mxu0 0.0
      %6518 = vmatpush1.msra.mxu0 0.0
      %6519 = vmatprep.subr.mxu0 0.0
      %6520 = vmatpush1.msra.mxu0 0.0
      %6521 = vmatprep.subr.mxu0 0.0
      %6522 = vmatpush1.msra.mxu0 0.0
      %6523 = vmatprep.subr.mxu0 %v304
      %6524 = vmatpush1.msra.mxu0 %v303
      %6525 = vmatprep.subr.mxu0 %v302
      %6526 = vmatpush1.msra.mxu0 %v301
      %6527 = vmatprep.subr.mxu0 %v300
      %6528 = vmatpush1.msra.mxu0 %v299
      %6529 = vmatprep.subr.mxu0 %v298
      %6530 = vmatpush1.msra.mxu0 %v297
      %6531 = vmatprep.subr.mxu0 0.0
      %6532 = vmatpush2.msra.mxu0 0.0
      %6533 = vmatprep.subr.mxu0 0.0
      %6534 = vmatpush2.msra.mxu0 0.0
      %6535 = vmatprep.subr.mxu0 0.0
      %6536 = vmatpush2.msra.mxu0 0.0
      %6537 = vmatprep.subr.mxu0 0.0
      %6538 = vmatpush2.msra.mxu0 0.0
      %6539 = vmatprep.subr.mxu0 0.0
      %6540 = vmatpush2.msra.mxu0 0.0
      %6541 = vmatprep.subr.mxu0 0.0
      %6542 = vmatpush2.msra.mxu0 0.0
      %6543 = vmatprep.subr.mxu0 0.0
      %6544 = vmatpush2.msra.mxu0 0.0
      %6545 = vmatprep.subr.mxu0 0.0
      %6546 = vmatpush2.msra.mxu0 0.0
      %6547 = vmatprep.subr.mxu0 0.0
      %6548 = vmatpush2.msra.mxu0 0.0
      %6549 = vmatprep.subr.mxu0 0.0
      %6550 = vmatpush2.msra.mxu0 0.0
      %6551 = vmatprep.subr.mxu0 0.0
      %6552 = vmatpush2.msra.mxu0 0.0
      %6553 = vmatprep.subr.mxu0 0.0
      %6554 = vmatpush2.msra.mxu0 0.0
      %6555 = vmatprep.subr.mxu0 0.0
      %6556 = vmatpush2.msra.mxu0 0.0
      %6557 = vmatprep.subr.mxu0 0.0
      %6558 = vmatpush2.msra.mxu0 0.0
      %6559 = vmatprep.subr.mxu0 0.0
      %6560 = vmatpush2.msra.mxu0 0.0
      %6561 = vmatprep.subr.mxu0 0.0
      %6562 = vmatpush2.msra.mxu0 0.0
      %6563 = vmatprep.mubr.f32.mxu0 0.0
      %6564 = vmatmul.mubr.f32.gmra.mxu0 %v6449
      %v6565 = vpop.f32.mrf.mxu0
      %v6566 = vadd.f32 %v305, %v6565
      %v6567 = vpop.f32.mrf.mxu0
      %v6568 = vadd.f32 %v306, %v6567
      %6569 = vmatprep.mubr.f32.mxu0 0.0
      %6570 = vmatmul.mubr.f32.gmra.mxu0 %v6451
      %v6571 = vpop.f32.mrf.mxu0
      %v6572 = vadd.f32 %v307, %v6571
      %v6573 = vpop.f32.mrf.mxu0
      %v6574 = vadd.f32 %v308, %v6573
      %6575 = vmatprep.mubr.f32.mxu0 0.0
      %6576 = vmatmul.mubr.f32.gmra.mxu0 %v6453
      %v6577 = vpop.f32.mrf.mxu0
      %v6578 = vadd.f32 %v309, %v6577
      %v6579 = vpop.f32.mrf.mxu0
      %v6580 = vadd.f32 %v310, %v6579
      %6581 = vmatprep.mubr.f32.mxu0 0.0
      %6582 = vmatmul.mubr.f32.gmra.mxu0 %v6455
      %v6583 = vpop.f32.mrf.mxu0
      %v6584 = vadd.f32 %v311, %v6583
      %v6585 = vpop.f32.mrf.mxu0
      %v6586 = vadd.f32 %v312, %v6585
      %6587 = vmatprep.mubr.f32.mxu0 0.0
      %6588 = vmatmul.mubr.f32.gmra.mxu0 %v6457
      %v6589 = vpop.f32.mrf.mxu0
      %v6590 = vadd.f32 %v313, %v6589
      %v6591 = vpop.f32.mrf.mxu0
      %v6592 = vadd.f32 %v314, %v6591
      %6593 = vmatprep.mubr.f32.mxu0 0.0
      %6594 = vmatmul.mubr.f32.gmra.mxu0 %v6459
      %v6595 = vpop.f32.mrf.mxu0
      %v6596 = vadd.f32 %v315, %v6595
      %v6597 = vpop.f32.mrf.mxu0
      %v6598 = vadd.f32 %v316, %v6597
      %6599 = vmatprep.mubr.f32.mxu0 0.0
      %6600 = vmatmul.mubr.f32.gmra.mxu0 %v6461
      %v6601 = vpop.f32.mrf.mxu0
      %v6602 = vadd.f32 %v317, %v6601
      %v6603 = vpop.f32.mrf.mxu0
      %v6604 = vadd.f32 %v318, %v6603
      %6605 = vmatprep.mubr.f32.mxu0 0.0
      %6606 = vmatmul.mubr.f32.gmra.mxu0 %v6463
      %v6607 = vpop.f32.mrf.mxu0
      %v6608 = vadd.f32 %v319, %v6607
      %v6609 = vpop.f32.mrf.mxu0
      %v6610 = vadd.f32 %v320, %v6609
      %6611 = vmatprep.mubr.f32.mxu0 0.0
      %6612 = vmatmul.mubr.f32.gmra.mxu0 %v6465
      %v6613 = vpop.f32.mrf.mxu0
      %v6614 = vadd.f32 %v321, %v6613
      %v6615 = vpop.f32.mrf.mxu0
      %v6616 = vadd.f32 %v322, %v6615
      %6617 = vmatprep.mubr.f32.mxu0 0.0
      %6618 = vmatmul.mubr.f32.gmra.mxu0 %v6467
      %v6619 = vpop.f32.mrf.mxu0
      %v6620 = vadd.f32 %v323, %v6619
      %v6621 = vpop.f32.mrf.mxu0
      %v6622 = vadd.f32 %v324, %v6621
      %6623 = vmatprep.mubr.f32.mxu0 0.0
      %6624 = vmatmul.mubr.f32.gmra.mxu0 %v6469
      %v6625 = vpop.f32.mrf.mxu0
      %v6626 = vadd.f32 %v325, %v6625
      %v6627 = vpop.f32.mrf.mxu0
      %v6628 = vadd.f32 %v326, %v6627
      %6629 = vmatprep.mubr.f32.mxu0 0.0
      %6630 = vmatmul.mubr.f32.gmra.mxu0 %v6471
      %v6631 = vpop.f32.mrf.mxu0
      %v6632 = vadd.f32 %v327, %v6631
      %v6633 = vpop.f32.mrf.mxu0
      %v6634 = vadd.f32 %v328, %v6633
      %6635 = vmatprep.mubr.f32.mxu0 0.0
      %6636 = vmatmul.mubr.f32.gmra.mxu0 %v6473
      %v6637 = vpop.f32.mrf.mxu0
      %v6638 = vadd.f32 %v329, %v6637
      %v6639 = vpop.f32.mrf.mxu0
      %v6640 = vadd.f32 %v330, %v6639
      %6641 = vmatprep.mubr.f32.mxu0 0.0
      %6642 = vmatmul.mubr.f32.gmra.mxu0 %v6475
      %v6643 = vpop.f32.mrf.mxu0
      %v6644 = vadd.f32 %v331, %v6643
      %v6645 = vpop.f32.mrf.mxu0
      %v6646 = vadd.f32 %v332, %v6645
      %6647 = vmatprep.mubr.f32.mxu0 0.0
      %6648 = vmatmul.mubr.f32.gmra.mxu0 %v6477
      %v6649 = vpop.f32.mrf.mxu0
      %v6650 = vadd.f32 %v333, %v6649
      %v6651 = vpop.f32.mrf.mxu0
      %v6652 = vadd.f32 %v334, %v6651
      %6653 = vmatprep.mubr.f32.mxu0 0.0
      %6654 = vmatmul.mubr.f32.gmra.mxu0 %v6479
      %v6655 = vpop.f32.mrf.mxu0
      %v6656 = vadd.f32 %v335, %v6655
      %v6657 = vpop.f32.mrf.mxu0
      %v6658 = vadd.f32 %v336, %v6657
      %6659 = vmatprep.mubr.f32.mxu0 0.0
      %6660 = vmatmul.mubr.f32.gmra.mxu0 %v6481
      %v6661 = vpop.f32.mrf.mxu0
      %v6662 = vadd.f32 %v337, %v6661
      %v6663 = vpop.f32.mrf.mxu0
      %v6664 = vadd.f32 %v338, %v6663
      %6665 = vmatprep.mubr.f32.mxu0 0.0
      %6666 = vmatmul.mubr.f32.gmra.mxu0 %v6483
      %v6667 = vpop.f32.mrf.mxu0
      %v6668 = vadd.f32 %v339, %v6667
      %v6669 = vpop.f32.mrf.mxu0
      %v6670 = vadd.f32 %v340, %v6669
      %6671 = vmatprep.mubr.f32.mxu0 0.0
      %6672 = vmatmul.mubr.f32.gmra.mxu0 %v6485
      %v6673 = vpop.f32.mrf.mxu0
      %v6674 = vadd.f32 %v341, %v6673
      %v6675 = vpop.f32.mrf.mxu0
      %v6676 = vadd.f32 %v342, %v6675
      %6677 = vmatprep.mubr.f32.mxu0 0.0
      %6678 = vmatmul.mubr.f32.gmra.mxu0 %v6487
      %v6679 = vpop.f32.mrf.mxu0
      %v6680 = vadd.f32 %v343, %v6679
      %v6681 = vpop.f32.mrf.mxu0
      %v6682 = vadd.f32 %v344, %v6681
      %6683 = vmatprep.mubr.f32.mxu0 0.0
      %6684 = vmatmul.mubr.f32.gmra.mxu0 %v6489
      %v6685 = vpop.f32.mrf.mxu0
      %v6686 = vadd.f32 %v345, %v6685
      %v6687 = vpop.f32.mrf.mxu0
      %v6688 = vadd.f32 %v346, %v6687
      %6689 = vmatprep.mubr.f32.mxu0 0.0
      %6690 = vmatmul.mubr.f32.gmra.mxu0 %v6491
      %v6691 = vpop.f32.mrf.mxu0
      %v6692 = vadd.f32 %v347, %v6691
      %v6693 = vpop.f32.mrf.mxu0
      %v6694 = vadd.f32 %v348, %v6693
      %6695 = vmatprep.mubr.f32.mxu0 0.0
      %6696 = vmatmul.mubr.f32.gmra.mxu0 %v6493
      %v6697 = vpop.f32.mrf.mxu0
      %v6698 = vadd.f32 %v349, %v6697
      %v6699 = vpop.f32.mrf.mxu0
      %v6700 = vadd.f32 %v350, %v6699
      %6701 = vmatprep.mubr.f32.mxu0 0.0
      %6702 = vmatmul.mubr.f32.gmra.mxu0 %v6495
      %v6703 = vpop.f32.mrf.mxu0
      %v6704 = vadd.f32 %v351, %v6703
      %v6705 = vpop.f32.mrf.mxu0
      %v6706 = vadd.f32 %v352, %v6705
      %6707 = vmatprep.mubr.f32.mxu0 0.0
      %6708 = vmatmul.mubr.f32.gmra.mxu0 %v6497
      %v6709 = vpop.f32.mrf.mxu0
      %v6710 = vadd.f32 %v353, %v6709
      %v6711 = vpop.f32.mrf.mxu0
      %v6712 = vadd.f32 %v354, %v6711
      %6713 = vdwg.mxu0
      %v6714 = vsel %vm1193, %v6568, -inf
      %v6715 = vmax.f32 %v6566, %v6714
      %6716 = vmax.xlane.f32.xlu0 %v6715
      %v6717 = vpop.xlane.xlu0 %6716
      %v6718 = vsel %vm1193, %v6574, -inf
      %v6719 = vmax.f32 %v6572, %v6718
      %6720 = vmax.xlane.f32.xlu0 %v6719
      %v6721 = vpop.xlane.xlu0 %6720
      %v6722 = vsel %vm1193, %v6580, -inf
      %v6723 = vmax.f32 %v6578, %v6722
      %6724 = vmax.xlane.f32.xlu0 %v6723
      %v6725 = vpop.xlane.xlu0 %6724
      %v6726 = vsel %vm1193, %v6586, -inf
      %v6727 = vmax.f32 %v6584, %v6726
      %6728 = vmax.xlane.f32.xlu0 %v6727
      %v6729 = vpop.xlane.xlu0 %6728
      %v6730 = vsel %vm1193, %v6592, -inf
      %v6731 = vmax.f32 %v6590, %v6730
      %6732 = vmax.xlane.f32.xlu0 %v6731
      %v6733 = vpop.xlane.xlu0 %6732
      %v6734 = vsel %vm1193, %v6598, -inf
      %v6735 = vmax.f32 %v6596, %v6734
      %6736 = vmax.xlane.f32.xlu0 %v6735
      %v6737 = vpop.xlane.xlu0 %6736
      %v6738 = vsel %vm1193, %v6604, -inf
      %v6739 = vmax.f32 %v6602, %v6738
      %6740 = vmax.xlane.f32.xlu0 %v6739
      %v6741 = vpop.xlane.xlu0 %6740
      %v6742 = vsel %vm1193, %v6610, -inf
      %v6743 = vmax.f32 %v6608, %v6742
      %6744 = vmax.xlane.f32.xlu0 %v6743
      %v6745 = vpop.xlane.xlu0 %6744
      %v6746 = vsel %vm1193, %v6616, -inf
      %v6747 = vmax.f32 %v6614, %v6746
      %6748 = vmax.xlane.f32.xlu0 %v6747
      %v6749 = vpop.xlane.xlu0 %6748
      %v6750 = vsel %vm1193, %v6622, -inf
      %v6751 = vmax.f32 %v6620, %v6750
      %6752 = vmax.xlane.f32.xlu0 %v6751
      %v6753 = vpop.xlane.xlu0 %6752
      %v6754 = vsel %vm1193, %v6628, -inf
      %v6755 = vmax.f32 %v6626, %v6754
      %6756 = vmax.xlane.f32.xlu0 %v6755
      %v6757 = vpop.xlane.xlu0 %6756
      %v6758 = vsel %vm1193, %v6634, -inf
      %v6759 = vmax.f32 %v6632, %v6758
      %6760 = vmax.xlane.f32.xlu0 %v6759
      %v6761 = vpop.xlane.xlu0 %6760
      %v6762 = vsel %vm1193, %v6640, -inf
      %v6763 = vmax.f32 %v6638, %v6762
      %6764 = vmax.xlane.f32.xlu0 %v6763
      %v6765 = vpop.xlane.xlu0 %6764
      %v6766 = vsel %vm1193, %v6646, -inf
      %v6767 = vmax.f32 %v6644, %v6766
      %6768 = vmax.xlane.f32.xlu0 %v6767
      %v6769 = vpop.xlane.xlu0 %6768
      %v6770 = vsel %vm1193, %v6652, -inf
      %v6771 = vmax.f32 %v6650, %v6770
      %6772 = vmax.xlane.f32.xlu0 %v6771
      %v6773 = vpop.xlane.xlu0 %6772
      %v6774 = vsel %vm1193, %v6658, -inf
      %v6775 = vmax.f32 %v6656, %v6774
      %6776 = vmax.xlane.f32.xlu0 %v6775
      %v6777 = vpop.xlane.xlu0 %6776
      %v6778 = vsel %vm1193, %v6664, -inf
      %v6779 = vmax.f32 %v6662, %v6778
      %6780 = vmax.xlane.f32.xlu0 %v6779
      %v6781 = vpop.xlane.xlu0 %6780
      %v6782 = vsel %vm1193, %v6670, -inf
      %v6783 = vmax.f32 %v6668, %v6782
      %6784 = vmax.xlane.f32.xlu0 %v6783
      %v6785 = vpop.xlane.xlu0 %6784
      %v6786 = vsel %vm1193, %v6676, -inf
      %v6787 = vmax.f32 %v6674, %v6786
      %6788 = vmax.xlane.f32.xlu0 %v6787
      %v6789 = vpop.xlane.xlu0 %6788
      %v6790 = vsel %vm1193, %v6682, -inf
      %v6791 = vmax.f32 %v6680, %v6790
      %6792 = vmax.xlane.f32.xlu0 %v6791
      %v6793 = vpop.xlane.xlu0 %6792
      %v6794 = vsel %vm1193, %v6688, -inf
      %v6795 = vmax.f32 %v6686, %v6794
      %6796 = vmax.xlane.f32.xlu0 %v6795
      %v6797 = vpop.xlane.xlu0 %6796
      %v6798 = vsel %vm1193, %v6694, -inf
      %v6799 = vmax.f32 %v6692, %v6798
      %6800 = vmax.xlane.f32.xlu0 %v6799
      %v6801 = vpop.xlane.xlu0 %6800
      %v6802 = vsel %vm1193, %v6700, -inf
      %v6803 = vmax.f32 %v6698, %v6802
      %6804 = vmax.xlane.f32.xlu0 %v6803
      %v6805 = vpop.xlane.xlu0 %6804
      %v6806 = vsel %vm1193, %v6706, -inf
      %v6807 = vmax.f32 %v6704, %v6806
      %6808 = vmax.xlane.f32.xlu0 %v6807
      %v6809 = vpop.xlane.xlu0 %6808
      %v6810 = vsel %vm1290, %v6710, -inf
      %v6811 = vsel %vm1292, %v6712, -inf
      %v6812 = vmax.f32 %v6810, %v6811
      %6813 = vmax.xlane.f32.xlu0 %v6812
      %v6814 = vpop.xlane.xlu0 %6813
      %v6815 = vsub.f32 %v6566, %v6717
      %v6816 = vsub.f32 %v6568, %v6717
      %v6817 = vsub.f32 %v6572, %v6721
      %v6818 = vsub.f32 %v6574, %v6721
      %v6819 = vsub.f32 %v6578, %v6725
      %v6820 = vsub.f32 %v6580, %v6725
      %v6821 = vsub.f32 %v6584, %v6729
      %v6822 = vsub.f32 %v6586, %v6729
      %v6823 = vsub.f32 %v6590, %v6733
      %v6824 = vsub.f32 %v6592, %v6733
      %v6825 = vsub.f32 %v6596, %v6737
      %v6826 = vsub.f32 %v6598, %v6737
      %v6827 = vsub.f32 %v6602, %v6741
      %v6828 = vsub.f32 %v6604, %v6741
      %v6829 = vsub.f32 %v6608, %v6745
      %v6830 = vsub.f32 %v6610, %v6745
      %v6831 = vsub.f32 %v6614, %v6749
      %v6832 = vsub.f32 %v6616, %v6749
      %v6833 = vsub.f32 %v6620, %v6753
      %v6834 = vsub.f32 %v6622, %v6753
      %v6835 = vsub.f32 %v6626, %v6757
      %v6836 = vsub.f32 %v6628, %v6757
      %v6837 = vsub.f32 %v6632, %v6761
      %v6838 = vsub.f32 %v6634, %v6761
      %v6839 = vsub.f32 %v6638, %v6765
      %v6840 = vsub.f32 %v6640, %v6765
      %v6841 = vsub.f32 %v6644, %v6769
      %v6842 = vsub.f32 %v6646, %v6769
      %v6843 = vsub.f32 %v6650, %v6773
      %v6844 = vsub.f32 %v6652, %v6773
      %v6845 = vsub.f32 %v6656, %v6777
      %v6846 = vsub.f32 %v6658, %v6777
      %v6847 = vsub.f32 %v6662, %v6781
      %v6848 = vsub.f32 %v6664, %v6781
      %v6849 = vsub.f32 %v6668, %v6785
      %v6850 = vsub.f32 %v6670, %v6785
      %v6851 = vsub.f32 %v6674, %v6789
      %v6852 = vsub.f32 %v6676, %v6789
      %v6853 = vsub.f32 %v6680, %v6793
      %v6854 = vsub.f32 %v6682, %v6793
      %v6855 = vsub.f32 %v6686, %v6797
      %v6856 = vsub.f32 %v6688, %v6797
      %v6857 = vsub.f32 %v6692, %v6801
      %v6858 = vsub.f32 %v6694, %v6801
      %v6859 = vsub.f32 %v6698, %v6805
      %v6860 = vsub.f32 %v6700, %v6805
      %v6861 = vsub.f32 %v6704, %v6809
      %v6862 = vsub.f32 %v6706, %v6809
      %v6863 = vsub.f32 %v6710, %v6814
      %v6864 = vsub.f32 %v6712, %v6814
      %v6865 = vmul.f32 %v6815, 1.442695
      %v6866 = vpow.pop %v6865
      %v6867 = vmul.f32 %v6816, 1.442695
      %v6868 = vpow.pop %v6867
      %v6869 = vmul.f32 %v6817, 1.442695
      %v6870 = vpow.pop %v6869
      %v6871 = vmul.f32 %v6818, 1.442695
      %v6872 = vpow.pop %v6871
      %v6873 = vmul.f32 %v6819, 1.442695
      %v6874 = vpow.pop %v6873
      %v6875 = vmul.f32 %v6820, 1.442695
      %v6876 = vpow.pop %v6875
      %v6877 = vmul.f32 %v6821, 1.442695
      %v6878 = vpow.pop %v6877
      %v6879 = vmul.f32 %v6822, 1.442695
      %v6880 = vpow.pop %v6879
      %v6881 = vmul.f32 %v6823, 1.442695
      %v6882 = vpow.pop %v6881
      %v6883 = vmul.f32 %v6824, 1.442695
      %v6884 = vpow.pop %v6883
      %v6885 = vmul.f32 %v6825, 1.442695
      %v6886 = vpow.pop %v6885
      %v6887 = vmul.f32 %v6826, 1.442695
      %v6888 = vpow.pop %v6887
      %v6889 = vmul.f32 %v6827, 1.442695
      %v6890 = vpow.pop %v6889
      %v6891 = vmul.f32 %v6828, 1.442695
      %v6892 = vpow.pop %v6891
      %v6893 = vmul.f32 %v6829, 1.442695
      %v6894 = vpow.pop %v6893
      %v6895 = vmul.f32 %v6830, 1.442695
      %v6896 = vpow.pop %v6895
      %v6897 = vmul.f32 %v6831, 1.442695
      %v6898 = vpow.pop %v6897
      %v6899 = vmul.f32 %v6832, 1.442695
      %v6900 = vpow.pop %v6899
      %v6901 = vmul.f32 %v6833, 1.442695
      %v6902 = vpow.pop %v6901
      %v6903 = vmul.f32 %v6834, 1.442695
      %v6904 = vpow.pop %v6903
      %v6905 = vmul.f32 %v6835, 1.442695
      %v6906 = vpow.pop %v6905
      %v6907 = vmul.f32 %v6836, 1.442695
      %v6908 = vpow.pop %v6907
      %v6909 = vmul.f32 %v6837, 1.442695
      %v6910 = vpow.pop %v6909
      %v6911 = vmul.f32 %v6838, 1.442695
      %v6912 = vpow.pop %v6911
      %v6913 = vmul.f32 %v6839, 1.442695
      %v6914 = vpow.pop %v6913
      %v6915 = vmul.f32 %v6840, 1.442695
      %v6916 = vpow.pop %v6915
      %v6917 = vmul.f32 %v6841, 1.442695
      %v6918 = vpow.pop %v6917
      %v6919 = vmul.f32 %v6842, 1.442695
      %v6920 = vpow.pop %v6919
      %v6921 = vmul.f32 %v6843, 1.442695
      %v6922 = vpow.pop %v6921
      %v6923 = vmul.f32 %v6844, 1.442695
      %v6924 = vpow.pop %v6923
      %v6925 = vmul.f32 %v6845, 1.442695
      %v6926 = vpow.pop %v6925
      %v6927 = vmul.f32 %v6846, 1.442695
      %v6928 = vpow.pop %v6927
      %v6929 = vmul.f32 %v6847, 1.442695
      %v6930 = vpow.pop %v6929
      %v6931 = vmul.f32 %v6848, 1.442695
      %v6932 = vpow.pop %v6931
      %v6933 = vmul.f32 %v6849, 1.442695
      %v6934 = vpow.pop %v6933
      %v6935 = vmul.f32 %v6850, 1.442695
      %v6936 = vpow.pop %v6935
      %v6937 = vmul.f32 %v6851, 1.442695
      %v6938 = vpow.pop %v6937
      %v6939 = vmul.f32 %v6852, 1.442695
      %v6940 = vpow.pop %v6939
      %v6941 = vmul.f32 %v6853, 1.442695
      %v6942 = vpow.pop %v6941
      %v6943 = vmul.f32 %v6854, 1.442695
      %v6944 = vpow.pop %v6943
      %v6945 = vmul.f32 %v6855, 1.442695
      %v6946 = vpow.pop %v6945
      %v6947 = vmul.f32 %v6856, 1.442695
      %v6948 = vpow.pop %v6947
      %v6949 = vmul.f32 %v6857, 1.442695
      %v6950 = vpow.pop %v6949
      %v6951 = vmul.f32 %v6858, 1.442695
      %v6952 = vpow.pop %v6951
      %v6953 = vmul.f32 %v6859, 1.442695
      %v6954 = vpow.pop %v6953
      %v6955 = vmul.f32 %v6860, 1.442695
      %v6956 = vpow.pop %v6955
      %v6957 = vmul.f32 %v6861, 1.442695
      %v6958 = vpow.pop %v6957
      %v6959 = vmul.f32 %v6862, 1.442695
      %v6960 = vpow.pop %v6959
      %v6961 = vmul.f32 %v6863, 1.442695
      %v6962 = vpow.pop %v6961
      %v6963 = vmul.f32 %v6864, 1.442695
      %v6964 = vpow.pop %v6963
      %v6965 = vsel %vm1193, %v6868, 0.0
      %v6966 = vadd.f32 %v6866, %v6965
      %6967 = vadd.xlane.f32.xlu0 %v6966
      %v6968 = vpop.xlane.xlu0 %6967
      %v6969 = vsel %vm1193, %v6872, 0.0
      %v6970 = vadd.f32 %v6870, %v6969
      %6971 = vadd.xlane.f32.xlu0 %v6970
      %v6972 = vpop.xlane.xlu0 %6971
      %v6973 = vsel %vm1193, %v6876, 0.0
      %v6974 = vadd.f32 %v6874, %v6973
      %6975 = vadd.xlane.f32.xlu0 %v6974
      %v6976 = vpop.xlane.xlu0 %6975
      %v6977 = vsel %vm1193, %v6880, 0.0
      %v6978 = vadd.f32 %v6878, %v6977
      %6979 = vadd.xlane.f32.xlu0 %v6978
      %v6980 = vpop.xlane.xlu0 %6979
      %v6981 = vsel %vm1193, %v6884, 0.0
      %v6982 = vadd.f32 %v6882, %v6981
      %6983 = vadd.xlane.f32.xlu0 %v6982
      %v6984 = vpop.xlane.xlu0 %6983
      %v6985 = vsel %vm1193, %v6888, 0.0
      %v6986 = vadd.f32 %v6886, %v6985
      %6987 = vadd.xlane.f32.xlu0 %v6986
      %v6988 = vpop.xlane.xlu0 %6987
      %v6989 = vsel %vm1193, %v6892, 0.0
      %v6990 = vadd.f32 %v6890, %v6989
      %6991 = vadd.xlane.f32.xlu0 %v6990
      %v6992 = vpop.xlane.xlu0 %6991
      %v6993 = vsel %vm1193, %v6896, 0.0
      %v6994 = vadd.f32 %v6894, %v6993
      %6995 = vadd.xlane.f32.xlu0 %v6994
      %v6996 = vpop.xlane.xlu0 %6995
      %v6997 = vsel %vm1193, %v6900, 0.0
      %v6998 = vadd.f32 %v6898, %v6997
      %6999 = vadd.xlane.f32.xlu0 %v6998
      %v7000 = vpop.xlane.xlu0 %6999
      %v7001 = vsel %vm1193, %v6904, 0.0
      %v7002 = vadd.f32 %v6902, %v7001
      %7003 = vadd.xlane.f32.xlu0 %v7002
      %v7004 = vpop.xlane.xlu0 %7003
      %v7005 = vsel %vm1193, %v6908, 0.0
      %v7006 = vadd.f32 %v6906, %v7005
      %7007 = vadd.xlane.f32.xlu0 %v7006
      %v7008 = vpop.xlane.xlu0 %7007
      %v7009 = vsel %vm1193, %v6912, 0.0
      %v7010 = vadd.f32 %v6910, %v7009
      %7011 = vadd.xlane.f32.xlu0 %v7010
      %v7012 = vpop.xlane.xlu0 %7011
      %v7013 = vsel %vm1193, %v6916, 0.0
      %v7014 = vadd.f32 %v6914, %v7013
      %7015 = vadd.xlane.f32.xlu0 %v7014
      %v7016 = vpop.xlane.xlu0 %7015
      %v7017 = vsel %vm1193, %v6920, 0.0
      %v7018 = vadd.f32 %v6918, %v7017
      %7019 = vadd.xlane.f32.xlu0 %v7018
      %v7020 = vpop.xlane.xlu0 %7019
      %v7021 = vsel %vm1193, %v6924, 0.0
      %v7022 = vadd.f32 %v6922, %v7021
      %7023 = vadd.xlane.f32.xlu0 %v7022
      %v7024 = vpop.xlane.xlu0 %7023
      %v7025 = vsel %vm1193, %v6928, 0.0
      %v7026 = vadd.f32 %v6926, %v7025
      %7027 = vadd.xlane.f32.xlu0 %v7026
      %v7028 = vpop.xlane.xlu0 %7027
      %v7029 = vsel %vm1193, %v6932, 0.0
      %v7030 = vadd.f32 %v6930, %v7029
      %7031 = vadd.xlane.f32.xlu0 %v7030
      %v7032 = vpop.xlane.xlu0 %7031
      %v7033 = vsel %vm1193, %v6936, 0.0
      %v7034 = vadd.f32 %v6934, %v7033
      %7035 = vadd.xlane.f32.xlu0 %v7034
      %v7036 = vpop.xlane.xlu0 %7035
      %v7037 = vsel %vm1193, %v6940, 0.0
      %v7038 = vadd.f32 %v6938, %v7037
      %7039 = vadd.xlane.f32.xlu0 %v7038
      %v7040 = vpop.xlane.xlu0 %7039
      %v7041 = vsel %vm1193, %v6944, 0.0
      %v7042 = vadd.f32 %v6942, %v7041
      %7043 = vadd.xlane.f32.xlu0 %v7042
      %v7044 = vpop.xlane.xlu0 %7043
      %v7045 = vsel %vm1193, %v6948, 0.0
      %v7046 = vadd.f32 %v6946, %v7045
      %7047 = vadd.xlane.f32.xlu0 %v7046
      %v7048 = vpop.xlane.xlu0 %7047
      %v7049 = vsel %vm1193, %v6952, 0.0
      %v7050 = vadd.f32 %v6950, %v7049
      %7051 = vadd.xlane.f32.xlu0 %v7050
      %v7052 = vpop.xlane.xlu0 %7051
      %v7053 = vsel %vm1193, %v6956, 0.0
      %v7054 = vadd.f32 %v6954, %v7053
      %7055 = vadd.xlane.f32.xlu0 %v7054
      %v7056 = vpop.xlane.xlu0 %7055
      %v7057 = vsel %vm1193, %v6960, 0.0
      %v7058 = vadd.f32 %v6958, %v7057
      %7059 = vadd.xlane.f32.xlu0 %v7058
      %v7060 = vpop.xlane.xlu0 %7059
      %v7061 = vsel %vm1290, %v6962, 0.0
      %v7062 = vsel %vm1292, %v6964, 0.0
      %v7063 = vadd.f32 %v7061, %v7062
      %7064 = vadd.xlane.f32.xlu0 %v7063
      %v7065 = vpop.xlane.xlu0 %7064
      %7090 = vrot.lane.b32.xlu0 %v731, 96
      %v7091 = vpop.permute.xlu0 %7090
      %7092 = vrot.lane.b32.xlu0 %v737, 96
      %v7093 = vpop.permute.xlu0 %7092
      %7094 = vrot.lane.b32.xlu0 %v743, 96
      %v7095 = vpop.permute.xlu0 %7094
      %7096 = vrot.lane.b32.xlu0 %v749, 96
      %v7097 = vpop.permute.xlu0 %7096
      %7098 = vrot.lane.b32.xlu0 %v755, 96
      %v7099 = vpop.permute.xlu0 %7098
      %7100 = vrot.lane.b32.xlu0 %v761, 96
      %v7101 = vpop.permute.xlu0 %7100
      %7102 = vrot.lane.b32.xlu0 %v767, 96
      %v7103 = vpop.permute.xlu0 %7102
      %7104 = vrot.lane.b32.xlu0 %v773, 96
      %v7105 = vpop.permute.xlu0 %7104
      %7106 = vrot.lane.b32.xlu0 %v779, 96
      %v7107 = vpop.permute.xlu0 %7106
      %7108 = vrot.lane.b32.xlu0 %v785, 96
      %v7109 = vpop.permute.xlu0 %7108
      %7110 = vrot.lane.b32.xlu0 %v791, 96
      %v7111 = vpop.permute.xlu0 %7110
      %7112 = vrot.lane.b32.xlu0 %v797, 96
      %v7113 = vpop.permute.xlu0 %7112
      %7114 = vrot.lane.b32.xlu0 %v803, 96
      %v7115 = vpop.permute.xlu0 %7114
      %7116 = vrot.lane.b32.xlu0 %v809, 96
      %v7117 = vpop.permute.xlu0 %7116
      %7118 = vrot.lane.b32.xlu0 %v815, 96
      %v7119 = vpop.permute.xlu0 %7118
      %7120 = vrot.lane.b32.xlu0 %v821, 96
      %v7121 = vpop.permute.xlu0 %7120
      %7122 = vrot.lane.b32.xlu0 %v827, 96
      %v7123 = vpop.permute.xlu0 %7122
      %7124 = vrot.lane.b32.xlu0 %v833, 96
      %v7125 = vpop.permute.xlu0 %7124
      %7126 = vrot.lane.b32.xlu0 %v839, 96
      %v7127 = vpop.permute.xlu0 %7126
      %7128 = vrot.lane.b32.xlu0 %v845, 96
      %v7129 = vpop.permute.xlu0 %7128
      %7130 = vrot.lane.b32.xlu0 %v851, 96
      %v7131 = vpop.permute.xlu0 %7130
      %7132 = vrot.lane.b32.xlu0 %v857, 96
      %v7133 = vpop.permute.xlu0 %7132
      %7134 = vrot.lane.b32.xlu0 %v863, 96
      %v7135 = vpop.permute.xlu0 %7134
      %7136 = vrot.lane.b32.xlu0 %v869, 96
      %v7137 = vpop.permute.xlu0 %7136
      %7138 = vrot.lane.b32.xlu0 %v875, 96
      %v7139 = vpop.permute.xlu0 %7138
      %v7165 = vsel %vm1193, %v6868, 0
      %v7168 = vsel %vm1193, %v6872, 0
      %v7171 = vsel %vm1193, %v6876, 0
      %v7174 = vsel %vm1193, %v6880, 0
      %v7177 = vsel %vm1193, %v6884, 0
      %v7180 = vsel %vm1193, %v6888, 0
      %v7183 = vsel %vm1193, %v6892, 0
      %v7186 = vsel %vm1193, %v6896, 0
      %v7189 = vsel %vm1193, %v6900, 0
      %v7192 = vsel %vm1193, %v6904, 0
      %v7195 = vsel %vm1193, %v6908, 0
      %v7198 = vsel %vm1193, %v6912, 0
      %v7201 = vsel %vm1193, %v6916, 0
      %v7204 = vsel %vm1193, %v6920, 0
      %v7207 = vsel %vm1193, %v6924, 0
      %v7210 = vsel %vm1193, %v6928, 0
      %v7213 = vsel %vm1193, %v6932, 0
      %v7216 = vsel %vm1193, %v6936, 0
      %v7219 = vsel %vm1193, %v6940, 0
      %v7222 = vsel %vm1193, %v6944, 0
      %v7225 = vsel %vm1193, %v6948, 0
      %v7228 = vsel %vm1193, %v6952, 0
      %v7231 = vsel %vm1193, %v6956, 0
      %v7234 = vsel %vm1193, %v6960, 0
      %v7237 = vsel %vm1193, %v6964, 0
      %v7239 = vsel %vm1290, %v7139, 0
      %7241 = vmatprep.subr.mxu0 0.0
      %7242 = vmatpush1.msra.mxu0 %v7121
      %7243 = vmatprep.subr.mxu0 0.0
      %7244 = vmatpush1.msra.mxu0 %v7119
      %7245 = vmatprep.subr.mxu0 0.0
      %7246 = vmatpush1.msra.mxu0 %v7117
      %7247 = vmatprep.subr.mxu0 0.0
      %7248 = vmatpush1.msra.mxu0 %v7115
      %7249 = vmatprep.subr.mxu0 0.0
      %7250 = vmatpush1.msra.mxu0 %v7113
      %7251 = vmatprep.subr.mxu0 0.0
      %7252 = vmatpush1.msra.mxu0 %v7111
      %7253 = vmatprep.subr.mxu0 0.0
      %7254 = vmatpush1.msra.mxu0 %v7109
      %7255 = vmatprep.subr.mxu0 0.0
      %7256 = vmatpush1.msra.mxu0 %v7107
      %7257 = vmatprep.subr.mxu0 0.0
      %7258 = vmatpush1.msra.mxu0 %v7105
      %7259 = vmatprep.subr.mxu0 0.0
      %7260 = vmatpush1.msra.mxu0 %v7103
      %7261 = vmatprep.subr.mxu0 0.0
      %7262 = vmatpush1.msra.mxu0 %v7101
      %7263 = vmatprep.subr.mxu0 0.0
      %7264 = vmatpush1.msra.mxu0 %v7099
      %7265 = vmatprep.subr.mxu0 0.0
      %7266 = vmatpush1.msra.mxu0 %v7097
      %7267 = vmatprep.subr.mxu0 0.0
      %7268 = vmatpush1.msra.mxu0 %v7095
      %7269 = vmatprep.subr.mxu0 0.0
      %7270 = vmatpush1.msra.mxu0 %v7093
      %7271 = vmatprep.subr.mxu0 0.0
      %7272 = vmatpush1.msra.mxu0 %v7091
      %7273 = vmatprep.subr.mxu0 0.0
      %7274 = vmatpush2.msra.mxu0 0.0
      %7275 = vmatprep.subr.mxu0 0.0
      %7276 = vmatpush2.msra.mxu0 0.0
      %7277 = vmatprep.subr.mxu0 0.0
      %7278 = vmatpush2.msra.mxu0 0.0
      %7279 = vmatprep.subr.mxu0 0.0
      %7280 = vmatpush2.msra.mxu0 0.0
      %7281 = vmatprep.subr.mxu0 0.0
      %7282 = vmatpush2.msra.mxu0 0.0
      %7283 = vmatprep.subr.mxu0 0.0
      %7284 = vmatpush2.msra.mxu0 0.0
      %7285 = vmatprep.subr.mxu0 0.0
      %7286 = vmatpush2.msra.mxu0 0.0
      %7287 = vmatprep.subr.mxu0 0.0
      %7288 = vmatpush2.msra.mxu0 %v7239
      %7289 = vmatprep.subr.mxu0 0.0
      %7290 = vmatpush2.msra.mxu0 %v7137
      %7291 = vmatprep.subr.mxu0 0.0
      %7292 = vmatpush2.msra.mxu0 %v7135
      %7293 = vmatprep.subr.mxu0 0.0
      %7294 = vmatpush2.msra.mxu0 %v7133
      %7295 = vmatprep.subr.mxu0 0.0
      %7296 = vmatpush2.msra.mxu0 %v7131
      %7297 = vmatprep.subr.mxu0 0.0
      %7298 = vmatpush2.msra.mxu0 %v7129
      %7299 = vmatprep.subr.mxu0 0.0
      %7300 = vmatpush2.msra.mxu0 %v7127
      %7301 = vmatprep.subr.mxu0 0.0
      %7302 = vmatpush2.msra.mxu0 %v7125
      %7303 = vmatprep.subr.mxu0 0.0
      %7304 = vmatpush2.msra.mxu0 %v7123
      %7305 = vmatprep.mubr.f32.mxu0 %v7165
      %7306 = vmatmul.mubr.f32.gmra.mxu0 %v6866
      %v7307 = vpop.f32.mrf.mxu0
      %v7308 = vadd.f32 0.0, %v7307
      %v7309 = vpop.f32.mrf.mxu0
      %7310 = vmatprep.mubr.f32.mxu0 %v7168
      %7311 = vmatmul.mubr.f32.gmra.mxu0 %v6870
      %v7312 = vpop.f32.mrf.mxu0
      %v7313 = vadd.f32 0.0, %v7312
      %v7314 = vpop.f32.mrf.mxu0
      %7315 = vmatprep.mubr.f32.mxu0 %v7171
      %7316 = vmatmul.mubr.f32.gmra.mxu0 %v6874
      %v7317 = vpop.f32.mrf.mxu0
      %v7318 = vadd.f32 0.0, %v7317
      %v7319 = vpop.f32.mrf.mxu0
      %7320 = vmatprep.mubr.f32.mxu0 %v7174
      %7321 = vmatmul.mubr.f32.gmra.mxu0 %v6878
      %v7322 = vpop.f32.mrf.mxu0
      %v7323 = vadd.f32 0.0, %v7322
      %v7324 = vpop.f32.mrf.mxu0
      %7325 = vmatprep.mubr.f32.mxu0 %v7177
      %7326 = vmatmul.mubr.f32.gmra.mxu0 %v6882
      %v7327 = vpop.f32.mrf.mxu0
      %v7328 = vadd.f32 0.0, %v7327
      %v7329 = vpop.f32.mrf.mxu0
      %7330 = vmatprep.mubr.f32.mxu0 %v7180
      %7331 = vmatmul.mubr.f32.gmra.mxu0 %v6886
      %v7332 = vpop.f32.mrf.mxu0
      %v7333 = vadd.f32 0.0, %v7332
      %v7334 = vpop.f32.mrf.mxu0
      %7335 = vmatprep.mubr.f32.mxu0 %v7183
      %7336 = vmatmul.mubr.f32.gmra.mxu0 %v6890
      %v7337 = vpop.f32.mrf.mxu0
      %v7338 = vadd.f32 0.0, %v7337
      %v7339 = vpop.f32.mrf.mxu0
      %7340 = vmatprep.mubr.f32.mxu0 %v7186
      %7341 = vmatmul.mubr.f32.gmra.mxu0 %v6894
      %v7342 = vpop.f32.mrf.mxu0
      %v7343 = vadd.f32 0.0, %v7342
      %v7344 = vpop.f32.mrf.mxu0
      %7345 = vmatprep.mubr.f32.mxu0 %v7189
      %7346 = vmatmul.mubr.f32.gmra.mxu0 %v6898
      %v7347 = vpop.f32.mrf.mxu0
      %v7348 = vadd.f32 0.0, %v7347
      %v7349 = vpop.f32.mrf.mxu0
      %7350 = vmatprep.mubr.f32.mxu0 %v7192
      %7351 = vmatmul.mubr.f32.gmra.mxu0 %v6902
      %v7352 = vpop.f32.mrf.mxu0
      %v7353 = vadd.f32 0.0, %v7352
      %v7354 = vpop.f32.mrf.mxu0
      %7355 = vmatprep.mubr.f32.mxu0 %v7195
      %7356 = vmatmul.mubr.f32.gmra.mxu0 %v6906
      %v7357 = vpop.f32.mrf.mxu0
      %v7358 = vadd.f32 0.0, %v7357
      %v7359 = vpop.f32.mrf.mxu0
      %7360 = vmatprep.mubr.f32.mxu0 %v7198
      %7361 = vmatmul.mubr.f32.gmra.mxu0 %v6910
      %v7362 = vpop.f32.mrf.mxu0
      %v7363 = vadd.f32 0.0, %v7362
      %v7364 = vpop.f32.mrf.mxu0
      %7365 = vmatprep.mubr.f32.mxu0 %v7201
      %7366 = vmatmul.mubr.f32.gmra.mxu0 %v6914
      %v7367 = vpop.f32.mrf.mxu0
      %v7368 = vadd.f32 0.0, %v7367
      %v7369 = vpop.f32.mrf.mxu0
      %7370 = vmatprep.mubr.f32.mxu0 %v7204
      %7371 = vmatmul.mubr.f32.gmra.mxu0 %v6918
      %v7372 = vpop.f32.mrf.mxu0
      %v7373 = vadd.f32 0.0, %v7372
      %v7374 = vpop.f32.mrf.mxu0
      %7375 = vmatprep.mubr.f32.mxu0 %v7207
      %7376 = vmatmul.mubr.f32.gmra.mxu0 %v6922
      %v7377 = vpop.f32.mrf.mxu0
      %v7378 = vadd.f32 0.0, %v7377
      %v7379 = vpop.f32.mrf.mxu0
      %7380 = vmatprep.mubr.f32.mxu0 %v7210
      %7381 = vmatmul.mubr.f32.gmra.mxu0 %v6926
      %v7382 = vpop.f32.mrf.mxu0
      %v7383 = vadd.f32 0.0, %v7382
      %v7384 = vpop.f32.mrf.mxu0
      %7385 = vmatprep.mubr.f32.mxu0 %v7213
      %7386 = vmatmul.mubr.f32.gmra.mxu0 %v6930
      %v7387 = vpop.f32.mrf.mxu0
      %v7388 = vadd.f32 0.0, %v7387
      %v7389 = vpop.f32.mrf.mxu0
      %7390 = vmatprep.mubr.f32.mxu0 %v7216
      %7391 = vmatmul.mubr.f32.gmra.mxu0 %v6934
      %v7392 = vpop.f32.mrf.mxu0
      %v7393 = vadd.f32 0.0, %v7392
      %v7394 = vpop.f32.mrf.mxu0
      %7395 = vmatprep.mubr.f32.mxu0 %v7219
      %7396 = vmatmul.mubr.f32.gmra.mxu0 %v6938
      %v7397 = vpop.f32.mrf.mxu0
      %v7398 = vadd.f32 0.0, %v7397
      %v7399 = vpop.f32.mrf.mxu0
      %7400 = vmatprep.mubr.f32.mxu0 %v7222
      %7401 = vmatmul.mubr.f32.gmra.mxu0 %v6942
      %v7402 = vpop.f32.mrf.mxu0
      %v7403 = vadd.f32 0.0, %v7402
      %v7404 = vpop.f32.mrf.mxu0
      %7405 = vmatprep.mubr.f32.mxu0 %v7225
      %7406 = vmatmul.mubr.f32.gmra.mxu0 %v6946
      %v7407 = vpop.f32.mrf.mxu0
      %v7408 = vadd.f32 0.0, %v7407
      %v7409 = vpop.f32.mrf.mxu0
      %7410 = vmatprep.mubr.f32.mxu0 %v7228
      %7411 = vmatmul.mubr.f32.gmra.mxu0 %v6950
      %v7412 = vpop.f32.mrf.mxu0
      %v7413 = vadd.f32 0.0, %v7412
      %v7414 = vpop.f32.mrf.mxu0
      %7415 = vmatprep.mubr.f32.mxu0 %v7231
      %7416 = vmatmul.mubr.f32.gmra.mxu0 %v6954
      %v7417 = vpop.f32.mrf.mxu0
      %v7418 = vadd.f32 0.0, %v7417
      %v7419 = vpop.f32.mrf.mxu0
      %7420 = vmatprep.mubr.f32.mxu0 %v7234
      %7421 = vmatmul.mubr.f32.gmra.mxu0 %v6958
      %v7422 = vpop.f32.mrf.mxu0
      %v7423 = vadd.f32 0.0, %v7422
      %v7424 = vpop.f32.mrf.mxu0
      %7425 = vmatprep.mubr.f32.mxu0 %v7237
      %7426 = vmatmul.mubr.f32.gmra.mxu0 %v6962
      %v7427 = vpop.f32.mrf.mxu0
      %v7428 = vadd.f32 0.0, %v7427
      %v7429 = vpop.f32.mrf.mxu0
      %7430 = vdwg.mxu0
      %v7431 = vld [vmem:[#allocation2] sm:$0xff]
      %v7432 = vld [vmem:[#allocation2 + $0x8] sm:$0xff]
      %v7433 = vld [vmem:[#allocation2 + $0x10] sm:$0xff]
      %v7434 = vld [vmem:[#allocation2 + $0x18] sm:$0xff]
      %v7435 = vld [vmem:[#allocation2 + $0x20] sm:$0xff]
      %v7436 = vld [vmem:[#allocation2 + $0x28] sm:$0xff]
      %v7437 = vld [vmem:[#allocation2 + $0x30] sm:$0xff]
      %v7438 = vld [vmem:[#allocation2 + $0x38] sm:$0xff]
      %v7439 = vld [vmem:[#allocation2 + $0x40] sm:$0xff]
      %v7440 = vld [vmem:[#allocation2 + $0x48] sm:$0xff]
      %v7441 = vld [vmem:[#allocation2 + $0x50] sm:$0xff]
      %v7442 = vld [vmem:[#allocation2 + $0x58] sm:$0xff]
      %v7443 = vld [vmem:[#allocation2 + $0x60] sm:$0xff]
      %v7444 = vld [vmem:[#allocation2 + $0x68] sm:$0xff]
      %v7445 = vld [vmem:[#allocation2 + $0x70] sm:$0xff]
      %v7446 = vld [vmem:[#allocation2 + $0x78] sm:$0xff]
      %v7447 = vld [vmem:[#allocation2 + $0x80] sm:$0xff]
      %v7448 = vld [vmem:[#allocation2 + $0x88] sm:$0xff]
      %v7449 = vld [vmem:[#allocation2 + $0x90] sm:$0xff]
      %v7450 = vld [vmem:[#allocation2 + $0x98] sm:$0xff]
      %v7451 = vld [vmem:[#allocation2 + $0xa0] sm:$0xff]
      %v7452 = vld [vmem:[#allocation2 + $0xa8] sm:$0xff]
      %v7453 = vld [vmem:[#allocation2 + $0xb0] sm:$0xff]
      %v7454 = vld [vmem:[#allocation2 + $0xb8] sm:$0xff]
      %v7455 = vld [vmem:[#allocation2 + $0xc0] sm:$0xf]
      %v7456 = vrcp.pop %v6968
      %v7457 = vrcp.pop %v6972
      %v7458 = vrcp.pop %v6976
      %v7459 = vrcp.pop %v6980
      %v7460 = vrcp.pop %v6984
      %v7461 = vrcp.pop %v6988
      %v7462 = vrcp.pop %v6992
      %v7463 = vrcp.pop %v6996
      %v7464 = vrcp.pop %v7000
      %v7465 = vrcp.pop %v7004
      %v7466 = vrcp.pop %v7008
      %v7467 = vrcp.pop %v7012
      %v7468 = vrcp.pop %v7016
      %v7469 = vrcp.pop %v7020
      %v7470 = vrcp.pop %v7024
      %v7471 = vrcp.pop %v7028
      %v7472 = vrcp.pop %v7032
      %v7473 = vrcp.pop %v7036
      %v7474 = vrcp.pop %v7040
      %v7475 = vrcp.pop %v7044
      %v7476 = vrcp.pop %v7048
      %v7477 = vrcp.pop %v7052
      %v7478 = vrcp.pop %v7056
      %v7479 = vrcp.pop %v7060
      %v7480 = vrcp.pop %v7065
      %v7481 = vmul.f32 %v7308, %v7456
      %v7482 = vmul.f32 %v7313, %v7457
      %v7483 = vmul.f32 %v7318, %v7458
      %v7484 = vmul.f32 %v7323, %v7459
      %v7485 = vmul.f32 %v7328, %v7460
      %v7486 = vmul.f32 %v7333, %v7461
      %v7487 = vmul.f32 %v7338, %v7462
      %v7488 = vmul.f32 %v7343, %v7463
      %v7489 = vmul.f32 %v7348, %v7464
      %v7490 = vmul.f32 %v7353, %v7465
      %v7491 = vmul.f32 %v7358, %v7466
      %v7492 = vmul.f32 %v7363, %v7467
      %v7493 = vmul.f32 %v7368, %v7468
      %v7494 = vmul.f32 %v7373, %v7469
      %v7495 = vmul.f32 %v7378, %v7470
      %v7496 = vmul.f32 %v7383, %v7471
      %v7497 = vmul.f32 %v7388, %v7472
      %v7498 = vmul.f32 %v7393, %v7473
      %v7499 = vmul.f32 %v7398, %v7474
      %v7500 = vmul.f32 %v7403, %v7475
      %v7501 = vmul.f32 %v7408, %v7476
      %v7502 = vmul.f32 %v7413, %v7477
      %v7503 = vmul.f32 %v7418, %v7478
      %v7504 = vmul.f32 %v7423, %v7479
      %v7505 = vmul.f32 %v7428, %v7480
      %v7506 = vadd.f32 %v7431, %v7481
      %v7507 = vadd.f32 %v7432, %v7482
      %v7508 = vadd.f32 %v7433, %v7483
      %v7509 = vadd.f32 %v7434, %v7484
      %v7510 = vadd.f32 %v7435, %v7485
      %v7511 = vadd.f32 %v7436, %v7486
      %v7512 = vadd.f32 %v7437, %v7487
      %v7513 = vadd.f32 %v7438, %v7488
      %v7514 = vadd.f32 %v7439, %v7489
      %v7515 = vadd.f32 %v7440, %v7490
      %v7516 = vadd.f32 %v7441, %v7491
      %v7517 = vadd.f32 %v7442, %v7492
      %v7518 = vadd.f32 %v7443, %v7493
      %v7519 = vadd.f32 %v7444, %v7494
      %v7520 = vadd.f32 %v7445, %v7495
      %v7521 = vadd.f32 %v7446, %v7496
      %v7522 = vadd.f32 %v7447, %v7497
      %v7523 = vadd.f32 %v7448, %v7498
      %v7524 = vadd.f32 %v7449, %v7499
      %v7525 = vadd.f32 %v7450, %v7500
      %v7526 = vadd.f32 %v7451, %v7501
      %v7527 = vadd.f32 %v7452, %v7502
      %v7528 = vadd.f32 %v7453, %v7503
      %v7529 = vadd.f32 %v7454, %v7504
      %v7530 = vadd.f32 %v7455, %v7505
      %7531 = vst.msk [vmem:[#allocation2] sm:$0xff] %vm363, %v7506
      %7532 = vst.msk [vmem:[#allocation2 + $0x8] sm:$0xff] %vm363, %v7507
      %7533 = vst.msk [vmem:[#allocation2 + $0x10] sm:$0xff] %vm363, %v7508
      %7534 = vst.msk [vmem:[#allocation2 + $0x18] sm:$0xff] %vm363, %v7509
      %7535 = vst.msk [vmem:[#allocation2 + $0x20] sm:$0xff] %vm363, %v7510
      %7536 = vst.msk [vmem:[#allocation2 + $0x28] sm:$0xff] %vm363, %v7511
      %7537 = vst.msk [vmem:[#allocation2 + $0x30] sm:$0xff] %vm363, %v7512
      %7538 = vst.msk [vmem:[#allocation2 + $0x38] sm:$0xff] %vm363, %v7513
      %7539 = vst.msk [vmem:[#allocation2 + $0x40] sm:$0xff] %vm363, %v7514
      %7540 = vst.msk [vmem:[#allocation2 + $0x48] sm:$0xff] %vm363, %v7515
      %7541 = vst.msk [vmem:[#allocation2 + $0x50] sm:$0xff] %vm363, %v7516
      %7542 = vst.msk [vmem:[#allocation2 + $0x58] sm:$0xff] %vm363, %v7517
      %7543 = vst.msk [vmem:[#allocation2 + $0x60] sm:$0xff] %vm363, %v7518
      %7544 = vst.msk [vmem:[#allocation2 + $0x68] sm:$0xff] %vm363, %v7519
      %7545 = vst.msk [vmem:[#allocation2 + $0x70] sm:$0xff] %vm363, %v7520
      %7546 = vst.msk [vmem:[#allocation2 + $0x78] sm:$0xff] %vm363, %v7521
      %7547 = vst.msk [vmem:[#allocation2 + $0x80] sm:$0xff] %vm363, %v7522
      %7548 = vst.msk [vmem:[#allocation2 + $0x88] sm:$0xff] %vm363, %v7523
      %7549 = vst.msk [vmem:[#allocation2 + $0x90] sm:$0xff] %vm363, %v7524
      %7550 = vst.msk [vmem:[#allocation2 + $0x98] sm:$0xff] %vm363, %v7525
      %7551 = vst.msk [vmem:[#allocation2 + $0xa0] sm:$0xff] %vm363, %v7526
      %7552 = vst.msk [vmem:[#allocation2 + $0xa8] sm:$0xff] %vm363, %v7527
      %7553 = vst.msk [vmem:[#allocation2 + $0xb0] sm:$0xff] %vm363, %v7528
      %7554 = vst.msk [vmem:[#allocation2 + $0xb8] sm:$0xff] %vm363, %v7529
      %7555 = vst.msk [vmem:[#allocation2 + $0xc0] sm:$0xf] %vm901, %v7530
      %7556 = vrot.lane.b32.xlu0 %v508, 64
      %v7557 = vpop.permute.xlu0 %7556
      %7558 = vrot.lane.b32.xlu0 %v514, 64
      %v7559 = vpop.permute.xlu0 %7558
      %7560 = vrot.lane.b32.xlu0 %v520, 64
      %v7561 = vpop.permute.xlu0 %7560
      %7562 = vrot.lane.b32.xlu0 %v526, 64
      %v7563 = vpop.permute.xlu0 %7562
      %7564 = vrot.lane.b32.xlu0 %v532, 64
      %v7565 = vpop.permute.xlu0 %7564
      %7566 = vrot.lane.b32.xlu0 %v538, 64
      %v7567 = vpop.permute.xlu0 %7566
      %7568 = vrot.lane.b32.xlu0 %v544, 64
      %v7569 = vpop.permute.xlu0 %7568
      %7570 = vrot.lane.b32.xlu0 %v550, 64
      %v7571 = vpop.permute.xlu0 %7570
      %7572 = vrot.lane.b32.xlu0 %v556, 64
      %v7573 = vpop.permute.xlu0 %7572
      %7574 = vrot.lane.b32.xlu0 %v562, 64
      %v7575 = vpop.permute.xlu0 %7574
      %7576 = vrot.lane.b32.xlu0 %v568, 64
      %v7577 = vpop.permute.xlu0 %7576
      %7578 = vrot.lane.b32.xlu0 %v574, 64
      %v7579 = vpop.permute.xlu0 %7578
      %7580 = vrot.lane.b32.xlu0 %v580, 64
      %v7581 = vpop.permute.xlu0 %7580
      %7582 = vrot.lane.b32.xlu0 %v586, 64
      %v7583 = vpop.permute.xlu0 %7582
      %7584 = vrot.lane.b32.xlu0 %v592, 64
      %v7585 = vpop.permute.xlu0 %7584
      %7586 = vrot.lane.b32.xlu0 %v598, 64
      %v7587 = vpop.permute.xlu0 %7586
      %7588 = vrot.lane.b32.xlu0 %v604, 64
      %v7589 = vpop.permute.xlu0 %7588
      %7590 = vrot.lane.b32.xlu0 %v610, 64
      %v7591 = vpop.permute.xlu0 %7590
      %7592 = vrot.lane.b32.xlu0 %v616, 64
      %v7593 = vpop.permute.xlu0 %7592
      %7594 = vrot.lane.b32.xlu0 %v622, 64
      %v7595 = vpop.permute.xlu0 %7594
      %7596 = vrot.lane.b32.xlu0 %v628, 64
      %v7597 = vpop.permute.xlu0 %7596
      %7598 = vrot.lane.b32.xlu0 %v634, 64
      %v7599 = vpop.permute.xlu0 %7598
      %7600 = vrot.lane.b32.xlu0 %v640, 64
      %v7601 = vpop.permute.xlu0 %7600
      %7602 = vrot.lane.b32.xlu0 %v646, 64
      %v7603 = vpop.permute.xlu0 %7602
      %7604 = vrot.lane.b32.xlu0 %v652, 64
      %v7605 = vpop.permute.xlu0 %7604
      %v7606 = vsel %vm363, %v7557, 0
      %v7608 = vsel %vm363, %v7559, 0
      %v7610 = vsel %vm363, %v7561, 0
      %v7612 = vsel %vm363, %v7563, 0
      %v7614 = vsel %vm363, %v7565, 0
      %v7616 = vsel %vm363, %v7567, 0
      %v7618 = vsel %vm363, %v7569, 0
      %v7620 = vsel %vm363, %v7571, 0
      %v7622 = vsel %vm363, %v7573, 0
      %v7624 = vsel %vm363, %v7575, 0
      %v7626 = vsel %vm363, %v7577, 0
      %v7628 = vsel %vm363, %v7579, 0
      %v7630 = vsel %vm363, %v7581, 0
      %v7632 = vsel %vm363, %v7583, 0
      %v7634 = vsel %vm363, %v7585, 0
      %v7636 = vsel %vm363, %v7587, 0
      %v7638 = vsel %vm363, %v7589, 0
      %v7640 = vsel %vm363, %v7591, 0
      %v7642 = vsel %vm363, %v7593, 0
      %v7644 = vsel %vm363, %v7595, 0
      %v7646 = vsel %vm363, %v7597, 0
      %v7648 = vsel %vm363, %v7599, 0
      %v7650 = vsel %vm363, %v7601, 0
      %v7652 = vsel %vm363, %v7603, 0
      %v7654 = vsel %vm363, %v7605, 0
      %7656 = vmatprep.subr.mxu0 0.0
      %7657 = vmatpush1.msra.mxu0 0.0
      %7658 = vmatprep.subr.mxu0 0.0
      %7659 = vmatpush1.msra.mxu0 0.0
      %7660 = vmatprep.subr.mxu0 0.0
      %7661 = vmatpush1.msra.mxu0 0.0
      %7662 = vmatprep.subr.mxu0 0.0
      %7663 = vmatpush1.msra.mxu0 0.0
      %7664 = vmatprep.subr.mxu0 0.0
      %7665 = vmatpush1.msra.mxu0 0.0
      %7666 = vmatprep.subr.mxu0 0.0
      %7667 = vmatpush1.msra.mxu0 0.0
      %7668 = vmatprep.subr.mxu0 0.0
      %7669 = vmatpush1.msra.mxu0 0.0
      %7670 = vmatprep.subr.mxu0 0.0
      %7671 = vmatpush1.msra.mxu0 0.0
      %7672 = vmatprep.subr.mxu0 0.0
      %7673 = vmatpush1.msra.mxu0 0.0
      %7674 = vmatprep.subr.mxu0 0.0
      %7675 = vmatpush1.msra.mxu0 0.0
      %7676 = vmatprep.subr.mxu0 0.0
      %7677 = vmatpush1.msra.mxu0 0.0
      %7678 = vmatprep.subr.mxu0 0.0
      %7679 = vmatpush1.msra.mxu0 0.0
      %7680 = vmatprep.subr.mxu0 %v304
      %7681 = vmatpush1.msra.mxu0 %v303
      %7682 = vmatprep.subr.mxu0 %v302
      %7683 = vmatpush1.msra.mxu0 %v301
      %7684 = vmatprep.subr.mxu0 %v300
      %7685 = vmatpush1.msra.mxu0 %v299
      %7686 = vmatprep.subr.mxu0 %v298
      %7687 = vmatpush1.msra.mxu0 %v297
      %7688 = vmatprep.subr.mxu0 0.0
      %7689 = vmatpush2.msra.mxu0 0.0
      %7690 = vmatprep.subr.mxu0 0.0
      %7691 = vmatpush2.msra.mxu0 0.0
      %7692 = vmatprep.subr.mxu0 0.0
      %7693 = vmatpush2.msra.mxu0 0.0
      %7694 = vmatprep.subr.mxu0 0.0
      %7695 = vmatpush2.msra.mxu0 0.0
      %7696 = vmatprep.subr.mxu0 0.0
      %7697 = vmatpush2.msra.mxu0 0.0
      %7698 = vmatprep.subr.mxu0 0.0
      %7699 = vmatpush2.msra.mxu0 0.0
      %7700 = vmatprep.subr.mxu0 0.0
      %7701 = vmatpush2.msra.mxu0 0.0
      %7702 = vmatprep.subr.mxu0 0.0
      %7703 = vmatpush2.msra.mxu0 0.0
      %7704 = vmatprep.subr.mxu0 0.0
      %7705 = vmatpush2.msra.mxu0 0.0
      %7706 = vmatprep.subr.mxu0 0.0
      %7707 = vmatpush2.msra.mxu0 0.0
      %7708 = vmatprep.subr.mxu0 0.0
      %7709 = vmatpush2.msra.mxu0 0.0
      %7710 = vmatprep.subr.mxu0 0.0
      %7711 = vmatpush2.msra.mxu0 0.0
      %7712 = vmatprep.subr.mxu0 0.0
      %7713 = vmatpush2.msra.mxu0 0.0
      %7714 = vmatprep.subr.mxu0 0.0
      %7715 = vmatpush2.msra.mxu0 0.0
      %7716 = vmatprep.subr.mxu0 0.0
      %7717 = vmatpush2.msra.mxu0 0.0
      %7718 = vmatprep.subr.mxu0 0.0
      %7719 = vmatpush2.msra.mxu0 0.0
      %7720 = vmatprep.mubr.f32.mxu0 0.0
      %7721 = vmatmul.mubr.f32.gmra.mxu0 %v7606
      %v7722 = vpop.f32.mrf.mxu0
      %v7723 = vadd.f32 %v305, %v7722
      %v7724 = vpop.f32.mrf.mxu0
      %v7725 = vadd.f32 %v306, %v7724
      %7726 = vmatprep.mubr.f32.mxu0 0.0
      %7727 = vmatmul.mubr.f32.gmra.mxu0 %v7608
      %v7728 = vpop.f32.mrf.mxu0
      %v7729 = vadd.f32 %v307, %v7728
      %v7730 = vpop.f32.mrf.mxu0
      %v7731 = vadd.f32 %v308, %v7730
      %7732 = vmatprep.mubr.f32.mxu0 0.0
      %7733 = vmatmul.mubr.f32.gmra.mxu0 %v7610
      %v7734 = vpop.f32.mrf.mxu0
      %v7735 = vadd.f32 %v309, %v7734
      %v7736 = vpop.f32.mrf.mxu0
      %v7737 = vadd.f32 %v310, %v7736
      %7738 = vmatprep.mubr.f32.mxu0 0.0
      %7739 = vmatmul.mubr.f32.gmra.mxu0 %v7612
      %v7740 = vpop.f32.mrf.mxu0
      %v7741 = vadd.f32 %v311, %v7740
      %v7742 = vpop.f32.mrf.mxu0
      %v7743 = vadd.f32 %v312, %v7742
      %7744 = vmatprep.mubr.f32.mxu0 0.0
      %7745 = vmatmul.mubr.f32.gmra.mxu0 %v7614
      %v7746 = vpop.f32.mrf.mxu0
      %v7747 = vadd.f32 %v313, %v7746
      %v7748 = vpop.f32.mrf.mxu0
      %v7749 = vadd.f32 %v314, %v7748
      %7750 = vmatprep.mubr.f32.mxu0 0.0
      %7751 = vmatmul.mubr.f32.gmra.mxu0 %v7616
      %v7752 = vpop.f32.mrf.mxu0
      %v7753 = vadd.f32 %v315, %v7752
      %v7754 = vpop.f32.mrf.mxu0
      %v7755 = vadd.f32 %v316, %v7754
      %7756 = vmatprep.mubr.f32.mxu0 0.0
      %7757 = vmatmul.mubr.f32.gmra.mxu0 %v7618
      %v7758 = vpop.f32.mrf.mxu0
      %v7759 = vadd.f32 %v317, %v7758
      %v7760 = vpop.f32.mrf.mxu0
      %v7761 = vadd.f32 %v318, %v7760
      %7762 = vmatprep.mubr.f32.mxu0 0.0
      %7763 = vmatmul.mubr.f32.gmra.mxu0 %v7620
      %v7764 = vpop.f32.mrf.mxu0
      %v7765 = vadd.f32 %v319, %v7764
      %v7766 = vpop.f32.mrf.mxu0
      %v7767 = vadd.f32 %v320, %v7766
      %7768 = vmatprep.mubr.f32.mxu0 0.0
      %7769 = vmatmul.mubr.f32.gmra.mxu0 %v7622
      %v7770 = vpop.f32.mrf.mxu0
      %v7771 = vadd.f32 %v321, %v7770
      %v7772 = vpop.f32.mrf.mxu0
      %v7773 = vadd.f32 %v322, %v7772
      %7774 = vmatprep.mubr.f32.mxu0 0.0
      %7775 = vmatmul.mubr.f32.gmra.mxu0 %v7624
      %v7776 = vpop.f32.mrf.mxu0
      %v7777 = vadd.f32 %v323, %v7776
      %v7778 = vpop.f32.mrf.mxu0
      %v7779 = vadd.f32 %v324, %v7778
      %7780 = vmatprep.mubr.f32.mxu0 0.0
      %7781 = vmatmul.mubr.f32.gmra.mxu0 %v7626
      %v7782 = vpop.f32.mrf.mxu0
      %v7783 = vadd.f32 %v325, %v7782
      %v7784 = vpop.f32.mrf.mxu0
      %v7785 = vadd.f32 %v326, %v7784
      %7786 = vmatprep.mubr.f32.mxu0 0.0
      %7787 = vmatmul.mubr.f32.gmra.mxu0 %v7628
      %v7788 = vpop.f32.mrf.mxu0
      %v7789 = vadd.f32 %v327, %v7788
      %v7790 = vpop.f32.mrf.mxu0
      %v7791 = vadd.f32 %v328, %v7790
      %7792 = vmatprep.mubr.f32.mxu0 0.0
      %7793 = vmatmul.mubr.f32.gmra.mxu0 %v7630
      %v7794 = vpop.f32.mrf.mxu0
      %v7795 = vadd.f32 %v329, %v7794
      %v7796 = vpop.f32.mrf.mxu0
      %v7797 = vadd.f32 %v330, %v7796
      %7798 = vmatprep.mubr.f32.mxu0 0.0
      %7799 = vmatmul.mubr.f32.gmra.mxu0 %v7632
      %v7800 = vpop.f32.mrf.mxu0
      %v7801 = vadd.f32 %v331, %v7800
      %v7802 = vpop.f32.mrf.mxu0
      %v7803 = vadd.f32 %v332, %v7802
      %7804 = vmatprep.mubr.f32.mxu0 0.0
      %7805 = vmatmul.mubr.f32.gmra.mxu0 %v7634
      %v7806 = vpop.f32.mrf.mxu0
      %v7807 = vadd.f32 %v333, %v7806
      %v7808 = vpop.f32.mrf.mxu0
      %v7809 = vadd.f32 %v334, %v7808
      %7810 = vmatprep.mubr.f32.mxu0 0.0
      %7811 = vmatmul.mubr.f32.gmra.mxu0 %v7636
      %v7812 = vpop.f32.mrf.mxu0
      %v7813 = vadd.f32 %v335, %v7812
      %v7814 = vpop.f32.mrf.mxu0
      %v7815 = vadd.f32 %v336, %v7814
      %7816 = vmatprep.mubr.f32.mxu0 0.0
      %7817 = vmatmul.mubr.f32.gmra.mxu0 %v7638
      %v7818 = vpop.f32.mrf.mxu0
      %v7819 = vadd.f32 %v337, %v7818
      %v7820 = vpop.f32.mrf.mxu0
      %v7821 = vadd.f32 %v338, %v7820
      %7822 = vmatprep.mubr.f32.mxu0 0.0
      %7823 = vmatmul.mubr.f32.gmra.mxu0 %v7640
      %v7824 = vpop.f32.mrf.mxu0
      %v7825 = vadd.f32 %v339, %v7824
      %v7826 = vpop.f32.mrf.mxu0
      %v7827 = vadd.f32 %v340, %v7826
      %7828 = vmatprep.mubr.f32.mxu0 0.0
      %7829 = vmatmul.mubr.f32.gmra.mxu0 %v7642
      %v7830 = vpop.f32.mrf.mxu0
      %v7831 = vadd.f32 %v341, %v7830
      %v7832 = vpop.f32.mrf.mxu0
      %v7833 = vadd.f32 %v342, %v7832
      %7834 = vmatprep.mubr.f32.mxu0 0.0
      %7835 = vmatmul.mubr.f32.gmra.mxu0 %v7644
      %v7836 = vpop.f32.mrf.mxu0
      %v7837 = vadd.f32 %v343, %v7836
      %v7838 = vpop.f32.mrf.mxu0
      %v7839 = vadd.f32 %v344, %v7838
      %7840 = vmatprep.mubr.f32.mxu0 0.0
      %7841 = vmatmul.mubr.f32.gmra.mxu0 %v7646
      %v7842 = vpop.f32.mrf.mxu0
      %v7843 = vadd.f32 %v345, %v7842
      %v7844 = vpop.f32.mrf.mxu0
      %v7845 = vadd.f32 %v346, %v7844
      %7846 = vmatprep.mubr.f32.mxu0 0.0
      %7847 = vmatmul.mubr.f32.gmra.mxu0 %v7648
      %v7848 = vpop.f32.mrf.mxu0
      %v7849 = vadd.f32 %v347, %v7848
      %v7850 = vpop.f32.mrf.mxu0
      %v7851 = vadd.f32 %v348, %v7850
      %7852 = vmatprep.mubr.f32.mxu0 0.0
      %7853 = vmatmul.mubr.f32.gmra.mxu0 %v7650
      %v7854 = vpop.f32.mrf.mxu0
      %v7855 = vadd.f32 %v349, %v7854
      %v7856 = vpop.f32.mrf.mxu0
      %v7857 = vadd.f32 %v350, %v7856
      %7858 = vmatprep.mubr.f32.mxu0 0.0
      %7859 = vmatmul.mubr.f32.gmra.mxu0 %v7652
      %v7860 = vpop.f32.mrf.mxu0
      %v7861 = vadd.f32 %v351, %v7860
      %v7862 = vpop.f32.mrf.mxu0
      %v7863 = vadd.f32 %v352, %v7862
      %7864 = vmatprep.mubr.f32.mxu0 0.0
      %7865 = vmatmul.mubr.f32.gmra.mxu0 %v7654
      %v7866 = vpop.f32.mrf.mxu0
      %v7867 = vadd.f32 %v353, %v7866
      %v7868 = vpop.f32.mrf.mxu0
      %v7869 = vadd.f32 %v354, %v7868
      %7870 = vdwg.mxu0
      %v7871 = vsel %vm1193, %v7725, -inf
      %v7872 = vmax.f32 %v7723, %v7871
      %7873 = vmax.xlane.f32.xlu0 %v7872
      %v7874 = vpop.xlane.xlu0 %7873
      %v7875 = vsel %vm1193, %v7731, -inf
      %v7876 = vmax.f32 %v7729, %v7875
      %7877 = vmax.xlane.f32.xlu0 %v7876
      %v7878 = vpop.xlane.xlu0 %7877
      %v7879 = vsel %vm1193, %v7737, -inf
      %v7880 = vmax.f32 %v7735, %v7879
      %7881 = vmax.xlane.f32.xlu0 %v7880
      %v7882 = vpop.xlane.xlu0 %7881
      %v7883 = vsel %vm1193, %v7743, -inf
      %v7884 = vmax.f32 %v7741, %v7883
      %7885 = vmax.xlane.f32.xlu0 %v7884
      %v7886 = vpop.xlane.xlu0 %7885
      %v7887 = vsel %vm1193, %v7749, -inf
      %v7888 = vmax.f32 %v7747, %v7887
      %7889 = vmax.xlane.f32.xlu0 %v7888
      %v7890 = vpop.xlane.xlu0 %7889
      %v7891 = vsel %vm1193, %v7755, -inf
      %v7892 = vmax.f32 %v7753, %v7891
      %7893 = vmax.xlane.f32.xlu0 %v7892
      %v7894 = vpop.xlane.xlu0 %7893
      %v7895 = vsel %vm1193, %v7761, -inf
      %v7896 = vmax.f32 %v7759, %v7895
      %7897 = vmax.xlane.f32.xlu0 %v7896
      %v7898 = vpop.xlane.xlu0 %7897
      %v7899 = vsel %vm1193, %v7767, -inf
      %v7900 = vmax.f32 %v7765, %v7899
      %7901 = vmax.xlane.f32.xlu0 %v7900
      %v7902 = vpop.xlane.xlu0 %7901
      %v7903 = vsel %vm1193, %v7773, -inf
      %v7904 = vmax.f32 %v7771, %v7903
      %7905 = vmax.xlane.f32.xlu0 %v7904
      %v7906 = vpop.xlane.xlu0 %7905
      %v7907 = vsel %vm1193, %v7779, -inf
      %v7908 = vmax.f32 %v7777, %v7907
      %7909 = vmax.xlane.f32.xlu0 %v7908
      %v7910 = vpop.xlane.xlu0 %7909
      %v7911 = vsel %vm1193, %v7785, -inf
      %v7912 = vmax.f32 %v7783, %v7911
      %7913 = vmax.xlane.f32.xlu0 %v7912
      %v7914 = vpop.xlane.xlu0 %7913
      %v7915 = vsel %vm1193, %v7791, -inf
      %v7916 = vmax.f32 %v7789, %v7915
      %7917 = vmax.xlane.f32.xlu0 %v7916
      %v7918 = vpop.xlane.xlu0 %7917
      %v7919 = vsel %vm1193, %v7797, -inf
      %v7920 = vmax.f32 %v7795, %v7919
      %7921 = vmax.xlane.f32.xlu0 %v7920
      %v7922 = vpop.xlane.xlu0 %7921
      %v7923 = vsel %vm1193, %v7803, -inf
      %v7924 = vmax.f32 %v7801, %v7923
      %7925 = vmax.xlane.f32.xlu0 %v7924
      %v7926 = vpop.xlane.xlu0 %7925
      %v7927 = vsel %vm1193, %v7809, -inf
      %v7928 = vmax.f32 %v7807, %v7927
      %7929 = vmax.xlane.f32.xlu0 %v7928
      %v7930 = vpop.xlane.xlu0 %7929
      %v7931 = vsel %vm1193, %v7815, -inf
      %v7932 = vmax.f32 %v7813, %v7931
      %7933 = vmax.xlane.f32.xlu0 %v7932
      %v7934 = vpop.xlane.xlu0 %7933
      %v7935 = vsel %vm1193, %v7821, -inf
      %v7936 = vmax.f32 %v7819, %v7935
      %7937 = vmax.xlane.f32.xlu0 %v7936
      %v7938 = vpop.xlane.xlu0 %7937
      %v7939 = vsel %vm1193, %v7827, -inf
      %v7940 = vmax.f32 %v7825, %v7939
      %7941 = vmax.xlane.f32.xlu0 %v7940
      %v7942 = vpop.xlane.xlu0 %7941
      %v7943 = vsel %vm1193, %v7833, -inf
      %v7944 = vmax.f32 %v7831, %v7943
      %7945 = vmax.xlane.f32.xlu0 %v7944
      %v7946 = vpop.xlane.xlu0 %7945
      %v7947 = vsel %vm1193, %v7839, -inf
      %v7948 = vmax.f32 %v7837, %v7947
      %7949 = vmax.xlane.f32.xlu0 %v7948
      %v7950 = vpop.xlane.xlu0 %7949
      %v7951 = vsel %vm1193, %v7845, -inf
      %v7952 = vmax.f32 %v7843, %v7951
      %7953 = vmax.xlane.f32.xlu0 %v7952
      %v7954 = vpop.xlane.xlu0 %7953
      %v7955 = vsel %vm1193, %v7851, -inf
      %v7956 = vmax.f32 %v7849, %v7955
      %7957 = vmax.xlane.f32.xlu0 %v7956
      %v7958 = vpop.xlane.xlu0 %7957
      %v7959 = vsel %vm1193, %v7857, -inf
      %v7960 = vmax.f32 %v7855, %v7959
      %7961 = vmax.xlane.f32.xlu0 %v7960
      %v7962 = vpop.xlane.xlu0 %7961
      %v7963 = vsel %vm1193, %v7863, -inf
      %v7964 = vmax.f32 %v7861, %v7963
      %7965 = vmax.xlane.f32.xlu0 %v7964
      %v7966 = vpop.xlane.xlu0 %7965
      %v7967 = vsel %vm1290, %v7867, -inf
      %v7968 = vsel %vm1292, %v7869, -inf
      %v7969 = vmax.f32 %v7967, %v7968
      %7970 = vmax.xlane.f32.xlu0 %v7969
      %v7971 = vpop.xlane.xlu0 %7970
      %v7972 = vsub.f32 %v7723, %v7874
      %v7973 = vsub.f32 %v7725, %v7874
      %v7974 = vsub.f32 %v7729, %v7878
      %v7975 = vsub.f32 %v7731, %v7878
      %v7976 = vsub.f32 %v7735, %v7882
      %v7977 = vsub.f32 %v7737, %v7882
      %v7978 = vsub.f32 %v7741, %v7886
      %v7979 = vsub.f32 %v7743, %v7886
      %v7980 = vsub.f32 %v7747, %v7890
      %v7981 = vsub.f32 %v7749, %v7890
      %v7982 = vsub.f32 %v7753, %v7894
      %v7983 = vsub.f32 %v7755, %v7894
      %v7984 = vsub.f32 %v7759, %v7898
      %v7985 = vsub.f32 %v7761, %v7898
      %v7986 = vsub.f32 %v7765, %v7902
      %v7987 = vsub.f32 %v7767, %v7902
      %v7988 = vsub.f32 %v7771, %v7906
      %v7989 = vsub.f32 %v7773, %v7906
      %v7990 = vsub.f32 %v7777, %v7910
      %v7991 = vsub.f32 %v7779, %v7910
      %v7992 = vsub.f32 %v7783, %v7914
      %v7993 = vsub.f32 %v7785, %v7914
      %v7994 = vsub.f32 %v7789, %v7918
      %v7995 = vsub.f32 %v7791, %v7918
      %v7996 = vsub.f32 %v7795, %v7922
      %v7997 = vsub.f32 %v7797, %v7922
      %v7998 = vsub.f32 %v7801, %v7926
      %v7999 = vsub.f32 %v7803, %v7926
      %v8000 = vsub.f32 %v7807, %v7930
      %v8001 = vsub.f32 %v7809, %v7930
      %v8002 = vsub.f32 %v7813, %v7934
      %v8003 = vsub.f32 %v7815, %v7934
      %v8004 = vsub.f32 %v7819, %v7938
      %v8005 = vsub.f32 %v7821, %v7938
      %v8006 = vsub.f32 %v7825, %v7942
      %v8007 = vsub.f32 %v7827, %v7942
      %v8008 = vsub.f32 %v7831, %v7946
      %v8009 = vsub.f32 %v7833, %v7946
      %v8010 = vsub.f32 %v7837, %v7950
      %v8011 = vsub.f32 %v7839, %v7950
      %v8012 = vsub.f32 %v7843, %v7954
      %v8013 = vsub.f32 %v7845, %v7954
      %v8014 = vsub.f32 %v7849, %v7958
      %v8015 = vsub.f32 %v7851, %v7958
      %v8016 = vsub.f32 %v7855, %v7962
      %v8017 = vsub.f32 %v7857, %v7962
      %v8018 = vsub.f32 %v7861, %v7966
      %v8019 = vsub.f32 %v7863, %v7966
      %v8020 = vsub.f32 %v7867, %v7971
      %v8021 = vsub.f32 %v7869, %v7971
      %v8022 = vmul.f32 %v7972, 1.442695
      %v8023 = vpow.pop %v8022
      %v8024 = vmul.f32 %v7973, 1.442695
      %v8025 = vpow.pop %v8024
      %v8026 = vmul.f32 %v7974, 1.442695
      %v8027 = vpow.pop %v8026
      %v8028 = vmul.f32 %v7975, 1.442695
      %v8029 = vpow.pop %v8028
      %v8030 = vmul.f32 %v7976, 1.442695
      %v8031 = vpow.pop %v8030
      %v8032 = vmul.f32 %v7977, 1.442695
      %v8033 = vpow.pop %v8032
      %v8034 = vmul.f32 %v7978, 1.442695
      %v8035 = vpow.pop %v8034
      %v8036 = vmul.f32 %v7979, 1.442695
      %v8037 = vpow.pop %v8036
      %v8038 = vmul.f32 %v7980, 1.442695
      %v8039 = vpow.pop %v8038
      %v8040 = vmul.f32 %v7981, 1.442695
      %v8041 = vpow.pop %v8040
      %v8042 = vmul.f32 %v7982, 1.442695
      %v8043 = vpow.pop %v8042
      %v8044 = vmul.f32 %v7983, 1.442695
      %v8045 = vpow.pop %v8044
      %v8046 = vmul.f32 %v7984, 1.442695
      %v8047 = vpow.pop %v8046
      %v8048 = vmul.f32 %v7985, 1.442695
      %v8049 = vpow.pop %v8048
      %v8050 = vmul.f32 %v7986, 1.442695
      %v8051 = vpow.pop %v8050
      %v8052 = vmul.f32 %v7987, 1.442695
      %v8053 = vpow.pop %v8052
      %v8054 = vmul.f32 %v7988, 1.442695
      %v8055 = vpow.pop %v8054
      %v8056 = vmul.f32 %v7989, 1.442695
      %v8057 = vpow.pop %v8056
      %v8058 = vmul.f32 %v7990, 1.442695
      %v8059 = vpow.pop %v8058
      %v8060 = vmul.f32 %v7991, 1.442695
      %v8061 = vpow.pop %v8060
      %v8062 = vmul.f32 %v7992, 1.442695
      %v8063 = vpow.pop %v8062
      %v8064 = vmul.f32 %v7993, 1.442695
      %v8065 = vpow.pop %v8064
      %v8066 = vmul.f32 %v7994, 1.442695
      %v8067 = vpow.pop %v8066
      %v8068 = vmul.f32 %v7995, 1.442695
      %v8069 = vpow.pop %v8068
      %v8070 = vmul.f32 %v7996, 1.442695
      %v8071 = vpow.pop %v8070
      %v8072 = vmul.f32 %v7997, 1.442695
      %v8073 = vpow.pop %v8072
      %v8074 = vmul.f32 %v7998, 1.442695
      %v8075 = vpow.pop %v8074
      %v8076 = vmul.f32 %v7999, 1.442695
      %v8077 = vpow.pop %v8076
      %v8078 = vmul.f32 %v8000, 1.442695
      %v8079 = vpow.pop %v8078
      %v8080 = vmul.f32 %v8001, 1.442695
      %v8081 = vpow.pop %v8080
      %v8082 = vmul.f32 %v8002, 1.442695
      %v8083 = vpow.pop %v8082
      %v8084 = vmul.f32 %v8003, 1.442695
      %v8085 = vpow.pop %v8084
      %v8086 = vmul.f32 %v8004, 1.442695
      %v8087 = vpow.pop %v8086
      %v8088 = vmul.f32 %v8005, 1.442695
      %v8089 = vpow.pop %v8088
      %v8090 = vmul.f32 %v8006, 1.442695
      %v8091 = vpow.pop %v8090
      %v8092 = vmul.f32 %v8007, 1.442695
      %v8093 = vpow.pop %v8092
      %v8094 = vmul.f32 %v8008, 1.442695
      %v8095 = vpow.pop %v8094
      %v8096 = vmul.f32 %v8009, 1.442695
      %v8097 = vpow.pop %v8096
      %v8098 = vmul.f32 %v8010, 1.442695
      %v8099 = vpow.pop %v8098
      %v8100 = vmul.f32 %v8011, 1.442695
      %v8101 = vpow.pop %v8100
      %v8102 = vmul.f32 %v8012, 1.442695
      %v8103 = vpow.pop %v8102
      %v8104 = vmul.f32 %v8013, 1.442695
      %v8105 = vpow.pop %v8104
      %v8106 = vmul.f32 %v8014, 1.442695
      %v8107 = vpow.pop %v8106
      %v8108 = vmul.f32 %v8015, 1.442695
      %v8109 = vpow.pop %v8108
      %v8110 = vmul.f32 %v8016, 1.442695
      %v8111 = vpow.pop %v8110
      %v8112 = vmul.f32 %v8017, 1.442695
      %v8113 = vpow.pop %v8112
      %v8114 = vmul.f32 %v8018, 1.442695
      %v8115 = vpow.pop %v8114
      %v8116 = vmul.f32 %v8019, 1.442695
      %v8117 = vpow.pop %v8116
      %v8118 = vmul.f32 %v8020, 1.442695
      %v8119 = vpow.pop %v8118
      %v8120 = vmul.f32 %v8021, 1.442695
      %v8121 = vpow.pop %v8120
      %v8122 = vsel %vm1193, %v8025, 0.0
      %v8123 = vadd.f32 %v8023, %v8122
      %8124 = vadd.xlane.f32.xlu0 %v8123
      %v8125 = vpop.xlane.xlu0 %8124
      %v8126 = vsel %vm1193, %v8029, 0.0
      %v8127 = vadd.f32 %v8027, %v8126
      %8128 = vadd.xlane.f32.xlu0 %v8127
      %v8129 = vpop.xlane.xlu0 %8128
      %v8130 = vsel %vm1193, %v8033, 0.0
      %v8131 = vadd.f32 %v8031, %v8130
      %8132 = vadd.xlane.f32.xlu0 %v8131
      %v8133 = vpop.xlane.xlu0 %8132
      %v8134 = vsel %vm1193, %v8037, 0.0
      %v8135 = vadd.f32 %v8035, %v8134
      %8136 = vadd.xlane.f32.xlu0 %v8135
      %v8137 = vpop.xlane.xlu0 %8136
      %v8138 = vsel %vm1193, %v8041, 0.0
      %v8139 = vadd.f32 %v8039, %v8138
      %8140 = vadd.xlane.f32.xlu0 %v8139
      %v8141 = vpop.xlane.xlu0 %8140
      %v8142 = vsel %vm1193, %v8045, 0.0
      %v8143 = vadd.f32 %v8043, %v8142
      %8144 = vadd.xlane.f32.xlu0 %v8143
      %v8145 = vpop.xlane.xlu0 %8144
      %v8146 = vsel %vm1193, %v8049, 0.0
      %v8147 = vadd.f32 %v8047, %v8146
      %8148 = vadd.xlane.f32.xlu0 %v8147
      %v8149 = vpop.xlane.xlu0 %8148
      %v8150 = vsel %vm1193, %v8053, 0.0
      %v8151 = vadd.f32 %v8051, %v8150
      %8152 = vadd.xlane.f32.xlu0 %v8151
      %v8153 = vpop.xlane.xlu0 %8152
      %v8154 = vsel %vm1193, %v8057, 0.0
      %v8155 = vadd.f32 %v8055, %v8154
      %8156 = vadd.xlane.f32.xlu0 %v8155
      %v8157 = vpop.xlane.xlu0 %8156
      %v8158 = vsel %vm1193, %v8061, 0.0
      %v8159 = vadd.f32 %v8059, %v8158
      %8160 = vadd.xlane.f32.xlu0 %v8159
      %v8161 = vpop.xlane.xlu0 %8160
      %v8162 = vsel %vm1193, %v8065, 0.0
      %v8163 = vadd.f32 %v8063, %v8162
      %8164 = vadd.xlane.f32.xlu0 %v8163
      %v8165 = vpop.xlane.xlu0 %8164
      %v8166 = vsel %vm1193, %v8069, 0.0
      %v8167 = vadd.f32 %v8067, %v8166
      %8168 = vadd.xlane.f32.xlu0 %v8167
      %v8169 = vpop.xlane.xlu0 %8168
      %v8170 = vsel %vm1193, %v8073, 0.0
      %v8171 = vadd.f32 %v8071, %v8170
      %8172 = vadd.xlane.f32.xlu0 %v8171
      %v8173 = vpop.xlane.xlu0 %8172
      %v8174 = vsel %vm1193, %v8077, 0.0
      %v8175 = vadd.f32 %v8075, %v8174
      %8176 = vadd.xlane.f32.xlu0 %v8175
      %v8177 = vpop.xlane.xlu0 %8176
      %v8178 = vsel %vm1193, %v8081, 0.0
      %v8179 = vadd.f32 %v8079, %v8178
      %8180 = vadd.xlane.f32.xlu0 %v8179
      %v8181 = vpop.xlane.xlu0 %8180
      %v8182 = vsel %vm1193, %v8085, 0.0
      %v8183 = vadd.f32 %v8083, %v8182
      %8184 = vadd.xlane.f32.xlu0 %v8183
      %v8185 = vpop.xlane.xlu0 %8184
      %v8186 = vsel %vm1193, %v8089, 0.0
      %v8187 = vadd.f32 %v8087, %v8186
      %8188 = vadd.xlane.f32.xlu0 %v8187
      %v8189 = vpop.xlane.xlu0 %8188
      %v8190 = vsel %vm1193, %v8093, 0.0
      %v8191 = vadd.f32 %v8091, %v8190
      %8192 = vadd.xlane.f32.xlu0 %v8191
      %v8193 = vpop.xlane.xlu0 %8192
      %v8194 = vsel %vm1193, %v8097, 0.0
      %v8195 = vadd.f32 %v8095, %v8194
      %8196 = vadd.xlane.f32.xlu0 %v8195
      %v8197 = vpop.xlane.xlu0 %8196
      %v8198 = vsel %vm1193, %v8101, 0.0
      %v8199 = vadd.f32 %v8099, %v8198
      %8200 = vadd.xlane.f32.xlu0 %v8199
      %v8201 = vpop.xlane.xlu0 %8200
      %v8202 = vsel %vm1193, %v8105, 0.0
      %v8203 = vadd.f32 %v8103, %v8202
      %8204 = vadd.xlane.f32.xlu0 %v8203
      %v8205 = vpop.xlane.xlu0 %8204
      %v8206 = vsel %vm1193, %v8109, 0.0
      %v8207 = vadd.f32 %v8107, %v8206
      %8208 = vadd.xlane.f32.xlu0 %v8207
      %v8209 = vpop.xlane.xlu0 %8208
      %v8210 = vsel %vm1193, %v8113, 0.0
      %v8211 = vadd.f32 %v8111, %v8210
      %8212 = vadd.xlane.f32.xlu0 %v8211
      %v8213 = vpop.xlane.xlu0 %8212
      %v8214 = vsel %vm1193, %v8117, 0.0
      %v8215 = vadd.f32 %v8115, %v8214
      %8216 = vadd.xlane.f32.xlu0 %v8215
      %v8217 = vpop.xlane.xlu0 %8216
      %v8218 = vsel %vm1290, %v8119, 0.0
      %v8219 = vsel %vm1292, %v8121, 0.0
      %v8220 = vadd.f32 %v8218, %v8219
      %8221 = vadd.xlane.f32.xlu0 %v8220
      %v8222 = vpop.xlane.xlu0 %8221
      %8223 = vrot.lane.b32.xlu0 %v731, 64
      %v8224 = vpop.permute.xlu0 %8223
      %8225 = vrot.lane.b32.xlu0 %v737, 64
      %v8226 = vpop.permute.xlu0 %8225
      %8227 = vrot.lane.b32.xlu0 %v743, 64
      %v8228 = vpop.permute.xlu0 %8227
      %8229 = vrot.lane.b32.xlu0 %v749, 64
      %v8230 = vpop.permute.xlu0 %8229
      %8231 = vrot.lane.b32.xlu0 %v755, 64
      %v8232 = vpop.permute.xlu0 %8231
      %8233 = vrot.lane.b32.xlu0 %v761, 64
      %v8234 = vpop.permute.xlu0 %8233
      %8235 = vrot.lane.b32.xlu0 %v767, 64
      %v8236 = vpop.permute.xlu0 %8235
      %8237 = vrot.lane.b32.xlu0 %v773, 64
      %v8238 = vpop.permute.xlu0 %8237
      %8239 = vrot.lane.b32.xlu0 %v779, 64
      %v8240 = vpop.permute.xlu0 %8239
      %8241 = vrot.lane.b32.xlu0 %v785, 64
      %v8242 = vpop.permute.xlu0 %8241
      %8243 = vrot.lane.b32.xlu0 %v791, 64
      %v8244 = vpop.permute.xlu0 %8243
      %8245 = vrot.lane.b32.xlu0 %v797, 64
      %v8246 = vpop.permute.xlu0 %8245
      %8247 = vrot.lane.b32.xlu0 %v803, 64
      %v8248 = vpop.permute.xlu0 %8247
      %8249 = vrot.lane.b32.xlu0 %v809, 64
      %v8250 = vpop.permute.xlu0 %8249
      %8251 = vrot.lane.b32.xlu0 %v815, 64
      %v8252 = vpop.permute.xlu0 %8251
      %8253 = vrot.lane.b32.xlu0 %v821, 64
      %v8254 = vpop.permute.xlu0 %8253
      %8255 = vrot.lane.b32.xlu0 %v827, 64
      %v8256 = vpop.permute.xlu0 %8255
      %8257 = vrot.lane.b32.xlu0 %v833, 64
      %v8258 = vpop.permute.xlu0 %8257
      %8259 = vrot.lane.b32.xlu0 %v839, 64
      %v8260 = vpop.permute.xlu0 %8259
      %8261 = vrot.lane.b32.xlu0 %v845, 64
      %v8262 = vpop.permute.xlu0 %8261
      %8263 = vrot.lane.b32.xlu0 %v851, 64
      %v8264 = vpop.permute.xlu0 %8263
      %8265 = vrot.lane.b32.xlu0 %v857, 64
      %v8266 = vpop.permute.xlu0 %8265
      %8267 = vrot.lane.b32.xlu0 %v863, 64
      %v8268 = vpop.permute.xlu0 %8267
      %8269 = vrot.lane.b32.xlu0 %v869, 64
      %v8270 = vpop.permute.xlu0 %8269
      %8271 = vrot.lane.b32.xlu0 %v875, 64
      %v8272 = vpop.permute.xlu0 %8271
      %v8298 = vsel %vm1193, %v8025, 0
      %v8301 = vsel %vm1193, %v8029, 0
      %v8304 = vsel %vm1193, %v8033, 0
      %v8307 = vsel %vm1193, %v8037, 0
      %v8310 = vsel %vm1193, %v8041, 0
      %v8313 = vsel %vm1193, %v8045, 0
      %v8316 = vsel %vm1193, %v8049, 0
      %v8319 = vsel %vm1193, %v8053, 0
      %v8322 = vsel %vm1193, %v8057, 0
      %v8325 = vsel %vm1193, %v8061, 0
      %v8328 = vsel %vm1193, %v8065, 0
      %v8331 = vsel %vm1193, %v8069, 0
      %v8334 = vsel %vm1193, %v8073, 0
      %v8337 = vsel %vm1193, %v8077, 0
      %v8340 = vsel %vm1193, %v8081, 0
      %v8343 = vsel %vm1193, %v8085, 0
      %v8346 = vsel %vm1193, %v8089, 0
      %v8349 = vsel %vm1193, %v8093, 0
      %v8352 = vsel %vm1193, %v8097, 0
      %v8355 = vsel %vm1193, %v8101, 0
      %v8358 = vsel %vm1193, %v8105, 0
      %v8361 = vsel %vm1193, %v8109, 0
      %v8364 = vsel %vm1193, %v8113, 0
      %v8367 = vsel %vm1193, %v8117, 0
      %v8370 = vsel %vm1193, %v8121, 0
      %v8372 = vsel %vm1290, %v8272, 0
      %8374 = vmatprep.subr.mxu0 0.0
      %8375 = vmatpush1.msra.mxu0 %v8254
      %8376 = vmatprep.subr.mxu0 0.0
      %8377 = vmatpush1.msra.mxu0 %v8252
      %8378 = vmatprep.subr.mxu0 0.0
      %8379 = vmatpush1.msra.mxu0 %v8250
      %8380 = vmatprep.subr.mxu0 0.0
      %8381 = vmatpush1.msra.mxu0 %v8248
      %8382 = vmatprep.subr.mxu0 0.0
      %8383 = vmatpush1.msra.mxu0 %v8246
      %8384 = vmatprep.subr.mxu0 0.0
      %8385 = vmatpush1.msra.mxu0 %v8244
      %8386 = vmatprep.subr.mxu0 0.0
      %8387 = vmatpush1.msra.mxu0 %v8242
      %8388 = vmatprep.subr.mxu0 0.0
      %8389 = vmatpush1.msra.mxu0 %v8240
      %8390 = vmatprep.subr.mxu0 0.0
      %8391 = vmatpush1.msra.mxu0 %v8238
      %8392 = vmatprep.subr.mxu0 0.0
      %8393 = vmatpush1.msra.mxu0 %v8236
      %8394 = vmatprep.subr.mxu0 0.0
      %8395 = vmatpush1.msra.mxu0 %v8234
      %8396 = vmatprep.subr.mxu0 0.0
      %8397 = vmatpush1.msra.mxu0 %v8232
      %8398 = vmatprep.subr.mxu0 0.0
      %8399 = vmatpush1.msra.mxu0 %v8230
      %8400 = vmatprep.subr.mxu0 0.0
      %8401 = vmatpush1.msra.mxu0 %v8228
      %8402 = vmatprep.subr.mxu0 0.0
      %8403 = vmatpush1.msra.mxu0 %v8226
      %8404 = vmatprep.subr.mxu0 0.0
      %8405 = vmatpush1.msra.mxu0 %v8224
      %8406 = vmatprep.subr.mxu0 0.0
      %8407 = vmatpush2.msra.mxu0 0.0
      %8408 = vmatprep.subr.mxu0 0.0
      %8409 = vmatpush2.msra.mxu0 0.0
      %8410 = vmatprep.subr.mxu0 0.0
      %8411 = vmatpush2.msra.mxu0 0.0
      %8412 = vmatprep.subr.mxu0 0.0
      %8413 = vmatpush2.msra.mxu0 0.0
      %8414 = vmatprep.subr.mxu0 0.0
      %8415 = vmatpush2.msra.mxu0 0.0
      %8416 = vmatprep.subr.mxu0 0.0
      %8417 = vmatpush2.msra.mxu0 0.0
      %8418 = vmatprep.subr.mxu0 0.0
      %8419 = vmatpush2.msra.mxu0 0.0
      %8420 = vmatprep.subr.mxu0 0.0
      %8421 = vmatpush2.msra.mxu0 %v8372
      %8422 = vmatprep.subr.mxu0 0.0
      %8423 = vmatpush2.msra.mxu0 %v8270
      %8424 = vmatprep.subr.mxu0 0.0
      %8425 = vmatpush2.msra.mxu0 %v8268
      %8426 = vmatprep.subr.mxu0 0.0
      %8427 = vmatpush2.msra.mxu0 %v8266
      %8428 = vmatprep.subr.mxu0 0.0
      %8429 = vmatpush2.msra.mxu0 %v8264
      %8430 = vmatprep.subr.mxu0 0.0
      %8431 = vmatpush2.msra.mxu0 %v8262
      %8432 = vmatprep.subr.mxu0 0.0
      %8433 = vmatpush2.msra.mxu0 %v8260
      %8434 = vmatprep.subr.mxu0 0.0
      %8435 = vmatpush2.msra.mxu0 %v8258
      %8436 = vmatprep.subr.mxu0 0.0
      %8437 = vmatpush2.msra.mxu0 %v8256
      %8438 = vmatprep.mubr.f32.mxu0 %v8298
      %8439 = vmatmul.mubr.f32.gmra.mxu0 %v8023
      %v8440 = vpop.f32.mrf.mxu0
      %v8441 = vadd.f32 0.0, %v8440
      %v8442 = vpop.f32.mrf.mxu0
      %8443 = vmatprep.mubr.f32.mxu0 %v8301
      %8444 = vmatmul.mubr.f32.gmra.mxu0 %v8027
      %v8445 = vpop.f32.mrf.mxu0
      %v8446 = vadd.f32 0.0, %v8445
      %v8447 = vpop.f32.mrf.mxu0
      %8448 = vmatprep.mubr.f32.mxu0 %v8304
      %8449 = vmatmul.mubr.f32.gmra.mxu0 %v8031
      %v8450 = vpop.f32.mrf.mxu0
      %v8451 = vadd.f32 0.0, %v8450
      %v8452 = vpop.f32.mrf.mxu0
      %8453 = vmatprep.mubr.f32.mxu0 %v8307
      %8454 = vmatmul.mubr.f32.gmra.mxu0 %v8035
      %v8455 = vpop.f32.mrf.mxu0
      %v8456 = vadd.f32 0.0, %v8455
      %v8457 = vpop.f32.mrf.mxu0
      %8458 = vmatprep.mubr.f32.mxu0 %v8310
      %8459 = vmatmul.mubr.f32.gmra.mxu0 %v8039
      %v8460 = vpop.f32.mrf.mxu0
      %v8461 = vadd.f32 0.0, %v8460
      %v8462 = vpop.f32.mrf.mxu0
      %8463 = vmatprep.mubr.f32.mxu0 %v8313
      %8464 = vmatmul.mubr.f32.gmra.mxu0 %v8043
      %v8465 = vpop.f32.mrf.mxu0
      %v8466 = vadd.f32 0.0, %v8465
      %v8467 = vpop.f32.mrf.mxu0
      %8468 = vmatprep.mubr.f32.mxu0 %v8316
      %8469 = vmatmul.mubr.f32.gmra.mxu0 %v8047
      %v8470 = vpop.f32.mrf.mxu0
      %v8471 = vadd.f32 0.0, %v8470
      %v8472 = vpop.f32.mrf.mxu0
      %8473 = vmatprep.mubr.f32.mxu0 %v8319
      %8474 = vmatmul.mubr.f32.gmra.mxu0 %v8051
      %v8475 = vpop.f32.mrf.mxu0
      %v8476 = vadd.f32 0.0, %v8475
      %v8477 = vpop.f32.mrf.mxu0
      %8478 = vmatprep.mubr.f32.mxu0 %v8322
      %8479 = vmatmul.mubr.f32.gmra.mxu0 %v8055
      %v8480 = vpop.f32.mrf.mxu0
      %v8481 = vadd.f32 0.0, %v8480
      %v8482 = vpop.f32.mrf.mxu0
      %8483 = vmatprep.mubr.f32.mxu0 %v8325
      %8484 = vmatmul.mubr.f32.gmra.mxu0 %v8059
      %v8485 = vpop.f32.mrf.mxu0
      %v8486 = vadd.f32 0.0, %v8485
      %v8487 = vpop.f32.mrf.mxu0
      %8488 = vmatprep.mubr.f32.mxu0 %v8328
      %8489 = vmatmul.mubr.f32.gmra.mxu0 %v8063
      %v8490 = vpop.f32.mrf.mxu0
      %v8491 = vadd.f32 0.0, %v8490
      %v8492 = vpop.f32.mrf.mxu0
      %8493 = vmatprep.mubr.f32.mxu0 %v8331
      %8494 = vmatmul.mubr.f32.gmra.mxu0 %v8067
      %v8495 = vpop.f32.mrf.mxu0
      %v8496 = vadd.f32 0.0, %v8495
      %v8497 = vpop.f32.mrf.mxu0
      %8498 = vmatprep.mubr.f32.mxu0 %v8334
      %8499 = vmatmul.mubr.f32.gmra.mxu0 %v8071
      %v8500 = vpop.f32.mrf.mxu0
      %v8501 = vadd.f32 0.0, %v8500
      %v8502 = vpop.f32.mrf.mxu0
      %8503 = vmatprep.mubr.f32.mxu0 %v8337
      %8504 = vmatmul.mubr.f32.gmra.mxu0 %v8075
      %v8505 = vpop.f32.mrf.mxu0
      %v8506 = vadd.f32 0.0, %v8505
      %v8507 = vpop.f32.mrf.mxu0
      %8508 = vmatprep.mubr.f32.mxu0 %v8340
      %8509 = vmatmul.mubr.f32.gmra.mxu0 %v8079
      %v8510 = vpop.f32.mrf.mxu0
      %v8511 = vadd.f32 0.0, %v8510
      %v8512 = vpop.f32.mrf.mxu0
      %8513 = vmatprep.mubr.f32.mxu0 %v8343
      %8514 = vmatmul.mubr.f32.gmra.mxu0 %v8083
      %v8515 = vpop.f32.mrf.mxu0
      %v8516 = vadd.f32 0.0, %v8515
      %v8517 = vpop.f32.mrf.mxu0
      %8518 = vmatprep.mubr.f32.mxu0 %v8346
      %8519 = vmatmul.mubr.f32.gmra.mxu0 %v8087
      %v8520 = vpop.f32.mrf.mxu0
      %v8521 = vadd.f32 0.0, %v8520
      %v8522 = vpop.f32.mrf.mxu0
      %8523 = vmatprep.mubr.f32.mxu0 %v8349
      %8524 = vmatmul.mubr.f32.gmra.mxu0 %v8091
      %v8525 = vpop.f32.mrf.mxu0
      %v8526 = vadd.f32 0.0, %v8525
      %v8527 = vpop.f32.mrf.mxu0
      %8528 = vmatprep.mubr.f32.mxu0 %v8352
      %8529 = vmatmul.mubr.f32.gmra.mxu0 %v8095
      %v8530 = vpop.f32.mrf.mxu0
      %v8531 = vadd.f32 0.0, %v8530
      %v8532 = vpop.f32.mrf.mxu0
      %8533 = vmatprep.mubr.f32.mxu0 %v8355
      %8534 = vmatmul.mubr.f32.gmra.mxu0 %v8099
      %v8535 = vpop.f32.mrf.mxu0
      %v8536 = vadd.f32 0.0, %v8535
      %v8537 = vpop.f32.mrf.mxu0
      %8538 = vmatprep.mubr.f32.mxu0 %v8358
      %8539 = vmatmul.mubr.f32.gmra.mxu0 %v8103
      %v8540 = vpop.f32.mrf.mxu0
      %v8541 = vadd.f32 0.0, %v8540
      %v8542 = vpop.f32.mrf.mxu0
      %8543 = vmatprep.mubr.f32.mxu0 %v8361
      %8544 = vmatmul.mubr.f32.gmra.mxu0 %v8107
      %v8545 = vpop.f32.mrf.mxu0
      %v8546 = vadd.f32 0.0, %v8545
      %v8547 = vpop.f32.mrf.mxu0
      %8548 = vmatprep.mubr.f32.mxu0 %v8364
      %8549 = vmatmul.mubr.f32.gmra.mxu0 %v8111
      %v8550 = vpop.f32.mrf.mxu0
      %v8551 = vadd.f32 0.0, %v8550
      %v8552 = vpop.f32.mrf.mxu0
      %8553 = vmatprep.mubr.f32.mxu0 %v8367
      %8554 = vmatmul.mubr.f32.gmra.mxu0 %v8115
      %v8555 = vpop.f32.mrf.mxu0
      %v8556 = vadd.f32 0.0, %v8555
      %v8557 = vpop.f32.mrf.mxu0
      %8558 = vmatprep.mubr.f32.mxu0 %v8370
      %8559 = vmatmul.mubr.f32.gmra.mxu0 %v8119
      %v8560 = vpop.f32.mrf.mxu0
      %v8561 = vadd.f32 0.0, %v8560
      %v8562 = vpop.f32.mrf.mxu0
      %8563 = vdwg.mxu0
      %v8564 = vld [vmem:[#allocation2] sm:$0xff]
      %v8565 = vld [vmem:[#allocation2 + $0x8] sm:$0xff]
      %v8566 = vld [vmem:[#allocation2 + $0x10] sm:$0xff]
      %v8567 = vld [vmem:[#allocation2 + $0x18] sm:$0xff]
      %v8568 = vld [vmem:[#allocation2 + $0x20] sm:$0xff]
      %v8569 = vld [vmem:[#allocation2 + $0x28] sm:$0xff]
      %v8570 = vld [vmem:[#allocation2 + $0x30] sm:$0xff]
      %v8571 = vld [vmem:[#allocation2 + $0x38] sm:$0xff]
      %v8572 = vld [vmem:[#allocation2 + $0x40] sm:$0xff]
      %v8573 = vld [vmem:[#allocation2 + $0x48] sm:$0xff]
      %v8574 = vld [vmem:[#allocation2 + $0x50] sm:$0xff]
      %v8575 = vld [vmem:[#allocation2 + $0x58] sm:$0xff]
      %v8576 = vld [vmem:[#allocation2 + $0x60] sm:$0xff]
      %v8577 = vld [vmem:[#allocation2 + $0x68] sm:$0xff]
      %v8578 = vld [vmem:[#allocation2 + $0x70] sm:$0xff]
      %v8579 = vld [vmem:[#allocation2 + $0x78] sm:$0xff]
      %v8580 = vld [vmem:[#allocation2 + $0x80] sm:$0xff]
      %v8581 = vld [vmem:[#allocation2 + $0x88] sm:$0xff]
      %v8582 = vld [vmem:[#allocation2 + $0x90] sm:$0xff]
      %v8583 = vld [vmem:[#allocation2 + $0x98] sm:$0xff]
      %v8584 = vld [vmem:[#allocation2 + $0xa0] sm:$0xff]
      %v8585 = vld [vmem:[#allocation2 + $0xa8] sm:$0xff]
      %v8586 = vld [vmem:[#allocation2 + $0xb0] sm:$0xff]
      %v8587 = vld [vmem:[#allocation2 + $0xb8] sm:$0xff]
      %v8588 = vld [vmem:[#allocation2 + $0xc0] sm:$0xf]
      %v8589 = vrcp.pop %v8125
      %v8590 = vrcp.pop %v8129
      %v8591 = vrcp.pop %v8133
      %v8592 = vrcp.pop %v8137
      %v8593 = vrcp.pop %v8141
      %v8594 = vrcp.pop %v8145
      %v8595 = vrcp.pop %v8149
      %v8596 = vrcp.pop %v8153
      %v8597 = vrcp.pop %v8157
      %v8598 = vrcp.pop %v8161
      %v8599 = vrcp.pop %v8165
      %v8600 = vrcp.pop %v8169
      %v8601 = vrcp.pop %v8173
      %v8602 = vrcp.pop %v8177
      %v8603 = vrcp.pop %v8181
      %v8604 = vrcp.pop %v8185
      %v8605 = vrcp.pop %v8189
      %v8606 = vrcp.pop %v8193
      %v8607 = vrcp.pop %v8197
      %v8608 = vrcp.pop %v8201
      %v8609 = vrcp.pop %v8205
      %v8610 = vrcp.pop %v8209
      %v8611 = vrcp.pop %v8213
      %v8612 = vrcp.pop %v8217
      %v8613 = vrcp.pop %v8222
      %v8614 = vmul.f32 %v8441, %v8589
      %v8615 = vmul.f32 %v8446, %v8590
      %v8616 = vmul.f32 %v8451, %v8591
      %v8617 = vmul.f32 %v8456, %v8592
      %v8618 = vmul.f32 %v8461, %v8593
      %v8619 = vmul.f32 %v8466, %v8594
      %v8620 = vmul.f32 %v8471, %v8595
      %v8621 = vmul.f32 %v8476, %v8596
      %v8622 = vmul.f32 %v8481, %v8597
      %v8623 = vmul.f32 %v8486, %v8598
      %v8624 = vmul.f32 %v8491, %v8599
      %v8625 = vmul.f32 %v8496, %v8600
      %v8626 = vmul.f32 %v8501, %v8601
      %v8627 = vmul.f32 %v8506, %v8602
      %v8628 = vmul.f32 %v8511, %v8603
      %v8629 = vmul.f32 %v8516, %v8604
      %v8630 = vmul.f32 %v8521, %v8605
      %v8631 = vmul.f32 %v8526, %v8606
      %v8632 = vmul.f32 %v8531, %v8607
      %v8633 = vmul.f32 %v8536, %v8608
      %v8634 = vmul.f32 %v8541, %v8609
      %v8635 = vmul.f32 %v8546, %v8610
      %v8636 = vmul.f32 %v8551, %v8611
      %v8637 = vmul.f32 %v8556, %v8612
      %v8638 = vmul.f32 %v8561, %v8613
      %v8639 = vadd.f32 %v8564, %v8614
      %v8640 = vadd.f32 %v8565, %v8615
      %v8641 = vadd.f32 %v8566, %v8616
      %v8642 = vadd.f32 %v8567, %v8617
      %v8643 = vadd.f32 %v8568, %v8618
      %v8644 = vadd.f32 %v8569, %v8619
      %v8645 = vadd.f32 %v8570, %v8620
      %v8646 = vadd.f32 %v8571, %v8621
      %v8647 = vadd.f32 %v8572, %v8622
      %v8648 = vadd.f32 %v8573, %v8623
      %v8649 = vadd.f32 %v8574, %v8624
      %v8650 = vadd.f32 %v8575, %v8625
      %v8651 = vadd.f32 %v8576, %v8626
      %v8652 = vadd.f32 %v8577, %v8627
      %v8653 = vadd.f32 %v8578, %v8628
      %v8654 = vadd.f32 %v8579, %v8629
      %v8655 = vadd.f32 %v8580, %v8630
      %v8656 = vadd.f32 %v8581, %v8631
      %v8657 = vadd.f32 %v8582, %v8632
      %v8658 = vadd.f32 %v8583, %v8633
      %v8659 = vadd.f32 %v8584, %v8634
      %v8660 = vadd.f32 %v8585, %v8635
      %v8661 = vadd.f32 %v8586, %v8636
      %v8662 = vadd.f32 %v8587, %v8637
      %v8663 = vadd.f32 %v8588, %v8638
      %8664 = vst.msk [vmem:[#allocation2] sm:$0xff] %vm363, %v8639
      %8665 = vst.msk [vmem:[#allocation2 + $0x8] sm:$0xff] %vm363, %v8640
      %8666 = vst.msk [vmem:[#allocation2 + $0x10] sm:$0xff] %vm363, %v8641
      %8667 = vst.msk [vmem:[#allocation2 + $0x18] sm:$0xff] %vm363, %v8642
      %8668 = vst.msk [vmem:[#allocation2 + $0x20] sm:$0xff] %vm363, %v8643
      %8669 = vst.msk [vmem:[#allocation2 + $0x28] sm:$0xff] %vm363, %v8644
      %8670 = vst.msk [vmem:[#allocation2 + $0x30] sm:$0xff] %vm363, %v8645
      %8671 = vst.msk [vmem:[#allocation2 + $0x38] sm:$0xff] %vm363, %v8646
      %8672 = vst.msk [vmem:[#allocation2 + $0x40] sm:$0xff] %vm363, %v8647
      %8673 = vst.msk [vmem:[#allocation2 + $0x48] sm:$0xff] %vm363, %v8648
      %8674 = vst.msk [vmem:[#allocation2 + $0x50] sm:$0xff] %vm363, %v8649
      %8675 = vst.msk [vmem:[#allocation2 + $0x58] sm:$0xff] %vm363, %v8650
      %8676 = vst.msk [vmem:[#allocation2 + $0x60] sm:$0xff] %vm363, %v8651
      %8677 = vst.msk [vmem:[#allocation2 + $0x68] sm:$0xff] %vm363, %v8652
      %8678 = vst.msk [vmem:[#allocation2 + $0x70] sm:$0xff] %vm363, %v8653
      %8679 = vst.msk [vmem:[#allocation2 + $0x78] sm:$0xff] %vm363, %v8654
      %8680 = vst.msk [vmem:[#allocation2 + $0x80] sm:$0xff] %vm363, %v8655
      %8681 = vst.msk [vmem:[#allocation2 + $0x88] sm:$0xff] %vm363, %v8656
      %8682 = vst.msk [vmem:[#allocation2 + $0x90] sm:$0xff] %vm363, %v8657
      %8683 = vst.msk [vmem:[#allocation2 + $0x98] sm:$0xff] %vm363, %v8658
      %8684 = vst.msk [vmem:[#allocation2 + $0xa0] sm:$0xff] %vm363, %v8659
      %8685 = vst.msk [vmem:[#allocation2 + $0xa8] sm:$0xff] %vm363, %v8660
      %8686 = vst.msk [vmem:[#allocation2 + $0xb0] sm:$0xff] %vm363, %v8661
      %8687 = vst.msk [vmem:[#allocation2 + $0xb8] sm:$0xff] %vm363, %v8662
      %8688 = vst.msk [vmem:[#allocation2 + $0xc0] sm:$0xf] %vm901, %v8663
      %8689 = vrot.lane.b32.xlu0 %v508, 32
      %v8690 = vpop.permute.xlu0 %8689
      %8691 = vrot.lane.b32.xlu0 %v514, 32
      %v8692 = vpop.permute.xlu0 %8691
      %8693 = vrot.lane.b32.xlu0 %v520, 32
      %v8694 = vpop.permute.xlu0 %8693
      %8695 = vrot.lane.b32.xlu0 %v526, 32
      %v8696 = vpop.permute.xlu0 %8695
      %8697 = vrot.lane.b32.xlu0 %v532, 32
      %v8698 = vpop.permute.xlu0 %8697
      %8699 = vrot.lane.b32.xlu0 %v538, 32
      %v8700 = vpop.permute.xlu0 %8699
      %8701 = vrot.lane.b32.xlu0 %v544, 32
      %v8702 = vpop.permute.xlu0 %8701
      %8703 = vrot.lane.b32.xlu0 %v550, 32
      %v8704 = vpop.permute.xlu0 %8703
      %8705 = vrot.lane.b32.xlu0 %v556, 32
      %v8706 = vpop.permute.xlu0 %8705
      %8707 = vrot.lane.b32.xlu0 %v562, 32
      %v8708 = vpop.permute.xlu0 %8707
      %8709 = vrot.lane.b32.xlu0 %v568, 32
      %v8710 = vpop.permute.xlu0 %8709
      %8711 = vrot.lane.b32.xlu0 %v574, 32
      %v8712 = vpop.permute.xlu0 %8711
      %8713 = vrot.lane.b32.xlu0 %v580, 32
      %v8714 = vpop.permute.xlu0 %8713
      %8715 = vrot.lane.b32.xlu0 %v586, 32
      %v8716 = vpop.permute.xlu0 %8715
      %8717 = vrot.lane.b32.xlu0 %v592, 32
      %v8718 = vpop.permute.xlu0 %8717
      %8719 = vrot.lane.b32.xlu0 %v598, 32
      %v8720 = vpop.permute.xlu0 %8719
      %8721 = vrot.lane.b32.xlu0 %v604, 32
      %v8722 = vpop.permute.xlu0 %8721
      %8723 = vrot.lane.b32.xlu0 %v610, 32
      %v8724 = vpop.permute.xlu0 %8723
      %8725 = vrot.lane.b32.xlu0 %v616, 32
      %v8726 = vpop.permute.xlu0 %8725
      %8727 = vrot.lane.b32.xlu0 %v622, 32
      %v8728 = vpop.permute.xlu0 %8727
      %8729 = vrot.lane.b32.xlu0 %v628, 32
      %v8730 = vpop.permute.xlu0 %8729
      %8731 = vrot.lane.b32.xlu0 %v634, 32
      %v8732 = vpop.permute.xlu0 %8731
      %8733 = vrot.lane.b32.xlu0 %v640, 32
      %v8734 = vpop.permute.xlu0 %8733
      %8735 = vrot.lane.b32.xlu0 %v646, 32
      %v8736 = vpop.permute.xlu0 %8735
      %8737 = vrot.lane.b32.xlu0 %v652, 32
      %v8738 = vpop.permute.xlu0 %8737
      %v8739 = vsel %vm363, %v8690, 0
      %v8741 = vsel %vm363, %v8692, 0
      %v8743 = vsel %vm363, %v8694, 0
      %v8745 = vsel %vm363, %v8696, 0
      %v8747 = vsel %vm363, %v8698, 0
      %v8749 = vsel %vm363, %v8700, 0
      %v8751 = vsel %vm363, %v8702, 0
      %v8753 = vsel %vm363, %v8704, 0
      %v8755 = vsel %vm363, %v8706, 0
      %v8757 = vsel %vm363, %v8708, 0
      %v8759 = vsel %vm363, %v8710, 0
      %v8761 = vsel %vm363, %v8712, 0
      %v8763 = vsel %vm363, %v8714, 0
      %v8765 = vsel %vm363, %v8716, 0
      %v8767 = vsel %vm363, %v8718, 0
      %v8769 = vsel %vm363, %v8720, 0
      %v8771 = vsel %vm363, %v8722, 0
      %v8773 = vsel %vm363, %v8724, 0
      %v8775 = vsel %vm363, %v8726, 0
      %v8777 = vsel %vm363, %v8728, 0
      %v8779 = vsel %vm363, %v8730, 0
      %v8781 = vsel %vm363, %v8732, 0
      %v8783 = vsel %vm363, %v8734, 0
      %v8785 = vsel %vm363, %v8736, 0
      %v8787 = vsel %vm363, %v8738, 0
      %8789 = vmatprep.subr.mxu0 0.0
      %8790 = vmatpush1.msra.mxu0 0.0
      %8791 = vmatprep.subr.mxu0 0.0
      %8792 = vmatpush1.msra.mxu0 0.0
      %8793 = vmatprep.subr.mxu0 0.0
      %8794 = vmatpush1.msra.mxu0 0.0
      %8795 = vmatprep.subr.mxu0 0.0
      %8796 = vmatpush1.msra.mxu0 0.0
      %8797 = vmatprep.subr.mxu0 0.0
      %8798 = vmatpush1.msra.mxu0 0.0
      %8799 = vmatprep.subr.mxu0 0.0
      %8800 = vmatpush1.msra.mxu0 0.0
      %8801 = vmatprep.subr.mxu0 0.0
      %8802 = vmatpush1.msra.mxu0 0.0
      %8803 = vmatprep.subr.mxu0 0.0
      %8804 = vmatpush1.msra.mxu0 0.0
      %8805 = vmatprep.subr.mxu0 0.0
      %8806 = vmatpush1.msra.mxu0 0.0
      %8807 = vmatprep.subr.mxu0 0.0
      %8808 = vmatpush1.msra.mxu0 0.0
      %8809 = vmatprep.subr.mxu0 0.0
      %8810 = vmatpush1.msra.mxu0 0.0
      %8811 = vmatprep.subr.mxu0 0.0
      %8812 = vmatpush1.msra.mxu0 0.0
      %8813 = vmatprep.subr.mxu0 %v304
      %8814 = vmatpush1.msra.mxu0 %v303
      %8815 = vmatprep.subr.mxu0 %v302
      %8816 = vmatpush1.msra.mxu0 %v301
      %8817 = vmatprep.subr.mxu0 %v300
      %8818 = vmatpush1.msra.mxu0 %v299
      %8819 = vmatprep.subr.mxu0 %v298
      %8820 = vmatpush1.msra.mxu0 %v297
      %8821 = vmatprep.subr.mxu0 0.0
      %8822 = vmatpush2.msra.mxu0 0.0
      %8823 = vmatprep.subr.mxu0 0.0
      %8824 = vmatpush2.msra.mxu0 0.0
      %8825 = vmatprep.subr.mxu0 0.0
      %8826 = vmatpush2.msra.mxu0 0.0
      %8827 = vmatprep.subr.mxu0 0.0
      %8828 = vmatpush2.msra.mxu0 0.0
      %8829 = vmatprep.subr.mxu0 0.0
      %8830 = vmatpush2.msra.mxu0 0.0
      %8831 = vmatprep.subr.mxu0 0.0
      %8832 = vmatpush2.msra.mxu0 0.0
      %8833 = vmatprep.subr.mxu0 0.0
      %8834 = vmatpush2.msra.mxu0 0.0
      %8835 = vmatprep.subr.mxu0 0.0
      %8836 = vmatpush2.msra.mxu0 0.0
      %8837 = vmatprep.subr.mxu0 0.0
      %8838 = vmatpush2.msra.mxu0 0.0
      %8839 = vmatprep.subr.mxu0 0.0
      %8840 = vmatpush2.msra.mxu0 0.0
      %8841 = vmatprep.subr.mxu0 0.0
      %8842 = vmatpush2.msra.mxu0 0.0
      %8843 = vmatprep.subr.mxu0 0.0
      %8844 = vmatpush2.msra.mxu0 0.0
      %8845 = vmatprep.subr.mxu0 0.0
      %8846 = vmatpush2.msra.mxu0 0.0
      %8847 = vmatprep.subr.mxu0 0.0
      %8848 = vmatpush2.msra.mxu0 0.0
      %8849 = vmatprep.subr.mxu0 0.0
      %8850 = vmatpush2.msra.mxu0 0.0
      %8851 = vmatprep.subr.mxu0 0.0
      %8852 = vmatpush2.msra.mxu0 0.0
      %8853 = vmatprep.mubr.f32.mxu0 0.0
      %8854 = vmatmul.mubr.f32.gmra.mxu0 %v8739
      %v8855 = vpop.f32.mrf.mxu0
      %v8856 = vadd.f32 %v305, %v8855
      %v8857 = vpop.f32.mrf.mxu0
      %v8858 = vadd.f32 %v306, %v8857
      %8859 = vmatprep.mubr.f32.mxu0 0.0
      %8860 = vmatmul.mubr.f32.gmra.mxu0 %v8741
      %v8861 = vpop.f32.mrf.mxu0
      %v8862 = vadd.f32 %v307, %v8861
      %v8863 = vpop.f32.mrf.mxu0
      %v8864 = vadd.f32 %v308, %v8863
      %8865 = vmatprep.mubr.f32.mxu0 0.0
      %8866 = vmatmul.mubr.f32.gmra.mxu0 %v8743
      %v8867 = vpop.f32.mrf.mxu0
      %v8868 = vadd.f32 %v309, %v8867
      %v8869 = vpop.f32.mrf.mxu0
      %v8870 = vadd.f32 %v310, %v8869
      %8871 = vmatprep.mubr.f32.mxu0 0.0
      %8872 = vmatmul.mubr.f32.gmra.mxu0 %v8745
      %v8873 = vpop.f32.mrf.mxu0
      %v8874 = vadd.f32 %v311, %v8873
      %v8875 = vpop.f32.mrf.mxu0
      %v8876 = vadd.f32 %v312, %v8875
      %8877 = vmatprep.mubr.f32.mxu0 0.0
      %8878 = vmatmul.mubr.f32.gmra.mxu0 %v8747
      %v8879 = vpop.f32.mrf.mxu0
      %v8880 = vadd.f32 %v313, %v8879
      %v8881 = vpop.f32.mrf.mxu0
      %v8882 = vadd.f32 %v314, %v8881
      %8883 = vmatprep.mubr.f32.mxu0 0.0
      %8884 = vmatmul.mubr.f32.gmra.mxu0 %v8749
      %v8885 = vpop.f32.mrf.mxu0
      %v8886 = vadd.f32 %v315, %v8885
      %v8887 = vpop.f32.mrf.mxu0
      %v8888 = vadd.f32 %v316, %v8887
      %8889 = vmatprep.mubr.f32.mxu0 0.0
      %8890 = vmatmul.mubr.f32.gmra.mxu0 %v8751
      %v8891 = vpop.f32.mrf.mxu0
      %v8892 = vadd.f32 %v317, %v8891
      %v8893 = vpop.f32.mrf.mxu0
      %v8894 = vadd.f32 %v318, %v8893
      %8895 = vmatprep.mubr.f32.mxu0 0.0
      %8896 = vmatmul.mubr.f32.gmra.mxu0 %v8753
      %v8897 = vpop.f32.mrf.mxu0
      %v8898 = vadd.f32 %v319, %v8897
      %v8899 = vpop.f32.mrf.mxu0
      %v8900 = vadd.f32 %v320, %v8899
      %8901 = vmatprep.mubr.f32.mxu0 0.0
      %8902 = vmatmul.mubr.f32.gmra.mxu0 %v8755
      %v8903 = vpop.f32.mrf.mxu0
      %v8904 = vadd.f32 %v321, %v8903
      %v8905 = vpop.f32.mrf.mxu0
      %v8906 = vadd.f32 %v322, %v8905
      %8907 = vmatprep.mubr.f32.mxu0 0.0
      %8908 = vmatmul.mubr.f32.gmra.mxu0 %v8757
      %v8909 = vpop.f32.mrf.mxu0
      %v8910 = vadd.f32 %v323, %v8909
      %v8911 = vpop.f32.mrf.mxu0
      %v8912 = vadd.f32 %v324, %v8911
      %8913 = vmatprep.mubr.f32.mxu0 0.0
      %8914 = vmatmul.mubr.f32.gmra.mxu0 %v8759
      %v8915 = vpop.f32.mrf.mxu0
      %v8916 = vadd.f32 %v325, %v8915
      %v8917 = vpop.f32.mrf.mxu0
      %v8918 = vadd.f32 %v326, %v8917
      %8919 = vmatprep.mubr.f32.mxu0 0.0
      %8920 = vmatmul.mubr.f32.gmra.mxu0 %v8761
      %v8921 = vpop.f32.mrf.mxu0
      %v8922 = vadd.f32 %v327, %v8921
      %v8923 = vpop.f32.mrf.mxu0
      %v8924 = vadd.f32 %v328, %v8923
      %8925 = vmatprep.mubr.f32.mxu0 0.0
      %8926 = vmatmul.mubr.f32.gmra.mxu0 %v8763
      %v8927 = vpop.f32.mrf.mxu0
      %v8928 = vadd.f32 %v329, %v8927
      %v8929 = vpop.f32.mrf.mxu0
      %v8930 = vadd.f32 %v330, %v8929
      %8931 = vmatprep.mubr.f32.mxu0 0.0
      %8932 = vmatmul.mubr.f32.gmra.mxu0 %v8765
      %v8933 = vpop.f32.mrf.mxu0
      %v8934 = vadd.f32 %v331, %v8933
      %v8935 = vpop.f32.mrf.mxu0
      %v8936 = vadd.f32 %v332, %v8935
      %8937 = vmatprep.mubr.f32.mxu0 0.0
      %8938 = vmatmul.mubr.f32.gmra.mxu0 %v8767
      %v8939 = vpop.f32.mrf.mxu0
      %v8940 = vadd.f32 %v333, %v8939
      %v8941 = vpop.f32.mrf.mxu0
      %v8942 = vadd.f32 %v334, %v8941
      %8943 = vmatprep.mubr.f32.mxu0 0.0
      %8944 = vmatmul.mubr.f32.gmra.mxu0 %v8769
      %v8945 = vpop.f32.mrf.mxu0
      %v8946 = vadd.f32 %v335, %v8945
      %v8947 = vpop.f32.mrf.mxu0
      %v8948 = vadd.f32 %v336, %v8947
      %8949 = vmatprep.mubr.f32.mxu0 0.0
      %8950 = vmatmul.mubr.f32.gmra.mxu0 %v8771
      %v8951 = vpop.f32.mrf.mxu0
      %v8952 = vadd.f32 %v337, %v8951
      %v8953 = vpop.f32.mrf.mxu0
      %v8954 = vadd.f32 %v338, %v8953
      %8955 = vmatprep.mubr.f32.mxu0 0.0
      %8956 = vmatmul.mubr.f32.gmra.mxu0 %v8773
      %v8957 = vpop.f32.mrf.mxu0
      %v8958 = vadd.f32 %v339, %v8957
      %v8959 = vpop.f32.mrf.mxu0
      %v8960 = vadd.f32 %v340, %v8959
      %8961 = vmatprep.mubr.f32.mxu0 0.0
      %8962 = vmatmul.mubr.f32.gmra.mxu0 %v8775
      %v8963 = vpop.f32.mrf.mxu0
      %v8964 = vadd.f32 %v341, %v8963
      %v8965 = vpop.f32.mrf.mxu0
      %v8966 = vadd.f32 %v342, %v8965
      %8967 = vmatprep.mubr.f32.mxu0 0.0
      %8968 = vmatmul.mubr.f32.gmra.mxu0 %v8777
      %v8969 = vpop.f32.mrf.mxu0
      %v8970 = vadd.f32 %v343, %v8969
      %v8971 = vpop.f32.mrf.mxu0
      %v8972 = vadd.f32 %v344, %v8971
      %8973 = vmatprep.mubr.f32.mxu0 0.0
      %8974 = vmatmul.mubr.f32.gmra.mxu0 %v8779
      %v8975 = vpop.f32.mrf.mxu0
      %v8976 = vadd.f32 %v345, %v8975
      %v8977 = vpop.f32.mrf.mxu0
      %v8978 = vadd.f32 %v346, %v8977
      %8979 = vmatprep.mubr.f32.mxu0 0.0
      %8980 = vmatmul.mubr.f32.gmra.mxu0 %v8781
      %v8981 = vpop.f32.mrf.mxu0
      %v8982 = vadd.f32 %v347, %v8981
      %v8983 = vpop.f32.mrf.mxu0
      %v8984 = vadd.f32 %v348, %v8983
      %8985 = vmatprep.mubr.f32.mxu0 0.0
      %8986 = vmatmul.mubr.f32.gmra.mxu0 %v8783
      %v8987 = vpop.f32.mrf.mxu0
      %v8988 = vadd.f32 %v349, %v8987
      %v8989 = vpop.f32.mrf.mxu0
      %v8990 = vadd.f32 %v350, %v8989
      %8991 = vmatprep.mubr.f32.mxu0 0.0
      %8992 = vmatmul.mubr.f32.gmra.mxu0 %v8785
      %v8993 = vpop.f32.mrf.mxu0
      %v8994 = vadd.f32 %v351, %v8993
      %v8995 = vpop.f32.mrf.mxu0
      %v8996 = vadd.f32 %v352, %v8995
      %8997 = vmatprep.mubr.f32.mxu0 0.0
      %8998 = vmatmul.mubr.f32.gmra.mxu0 %v8787
      %v8999 = vpop.f32.mrf.mxu0
      %v9000 = vadd.f32 %v353, %v8999
      %v9001 = vpop.f32.mrf.mxu0
      %v9002 = vadd.f32 %v354, %v9001
      %9003 = vdwg.mxu0
      %v9004 = vsel %vm1193, %v8858, -inf
      %v9005 = vmax.f32 %v8856, %v9004
      %9006 = vmax.xlane.f32.xlu0 %v9005
      %v9007 = vpop.xlane.xlu0 %9006
      %v9008 = vsel %vm1193, %v8864, -inf
      %v9009 = vmax.f32 %v8862, %v9008
      %9010 = vmax.xlane.f32.xlu0 %v9009
      %v9011 = vpop.xlane.xlu0 %9010
      %v9012 = vsel %vm1193, %v8870, -inf
      %v9013 = vmax.f32 %v8868, %v9012
      %9014 = vmax.xlane.f32.xlu0 %v9013
      %v9015 = vpop.xlane.xlu0 %9014
      %v9016 = vsel %vm1193, %v8876, -inf
      %v9017 = vmax.f32 %v8874, %v9016
      %9018 = vmax.xlane.f32.xlu0 %v9017
      %v9019 = vpop.xlane.xlu0 %9018
      %v9020 = vsel %vm1193, %v8882, -inf
      %v9021 = vmax.f32 %v8880, %v9020
      %9022 = vmax.xlane.f32.xlu0 %v9021
      %v9023 = vpop.xlane.xlu0 %9022
      %v9024 = vsel %vm1193, %v8888, -inf
      %v9025 = vmax.f32 %v8886, %v9024
      %9026 = vmax.xlane.f32.xlu0 %v9025
      %v9027 = vpop.xlane.xlu0 %9026
      %v9028 = vsel %vm1193, %v8894, -inf
      %v9029 = vmax.f32 %v8892, %v9028
      %9030 = vmax.xlane.f32.xlu0 %v9029
      %v9031 = vpop.xlane.xlu0 %9030
      %v9032 = vsel %vm1193, %v8900, -inf
      %v9033 = vmax.f32 %v8898, %v9032
      %9034 = vmax.xlane.f32.xlu0 %v9033
      %v9035 = vpop.xlane.xlu0 %9034
      %v9036 = vsel %vm1193, %v8906, -inf
      %v9037 = vmax.f32 %v8904, %v9036
      %9038 = vmax.xlane.f32.xlu0 %v9037
      %v9039 = vpop.xlane.xlu0 %9038
      %v9040 = vsel %vm1193, %v8912, -inf
      %v9041 = vmax.f32 %v8910, %v9040
      %9042 = vmax.xlane.f32.xlu0 %v9041
      %v9043 = vpop.xlane.xlu0 %9042
      %v9044 = vsel %vm1193, %v8918, -inf
      %v9045 = vmax.f32 %v8916, %v9044
      %9046 = vmax.xlane.f32.xlu0 %v9045
      %v9047 = vpop.xlane.xlu0 %9046
      %v9048 = vsel %vm1193, %v8924, -inf
      %v9049 = vmax.f32 %v8922, %v9048
      %9050 = vmax.xlane.f32.xlu0 %v9049
      %v9051 = vpop.xlane.xlu0 %9050
      %v9052 = vsel %vm1193, %v8930, -inf
      %v9053 = vmax.f32 %v8928, %v9052
      %9054 = vmax.xlane.f32.xlu0 %v9053
      %v9055 = vpop.xlane.xlu0 %9054
      %v9056 = vsel %vm1193, %v8936, -inf
      %v9057 = vmax.f32 %v8934, %v9056
      %9058 = vmax.xlane.f32.xlu0 %v9057
      %v9059 = vpop.xlane.xlu0 %9058
      %v9060 = vsel %vm1193, %v8942, -inf
      %v9061 = vmax.f32 %v8940, %v9060
      %9062 = vmax.xlane.f32.xlu0 %v9061
      %v9063 = vpop.xlane.xlu0 %9062
      %v9064 = vsel %vm1193, %v8948, -inf
      %v9065 = vmax.f32 %v8946, %v9064
      %9066 = vmax.xlane.f32.xlu0 %v9065
      %v9067 = vpop.xlane.xlu0 %9066
      %v9068 = vsel %vm1193, %v8954, -inf
      %v9069 = vmax.f32 %v8952, %v9068
      %9070 = vmax.xlane.f32.xlu0 %v9069
      %v9071 = vpop.xlane.xlu0 %9070
      %v9072 = vsel %vm1193, %v8960, -inf
      %v9073 = vmax.f32 %v8958, %v9072
      %9074 = vmax.xlane.f32.xlu0 %v9073
      %v9075 = vpop.xlane.xlu0 %9074
      %v9076 = vsel %vm1193, %v8966, -inf
      %v9077 = vmax.f32 %v8964, %v9076
      %9078 = vmax.xlane.f32.xlu0 %v9077
      %v9079 = vpop.xlane.xlu0 %9078
      %v9080 = vsel %vm1193, %v8972, -inf
      %v9081 = vmax.f32 %v8970, %v9080
      %9082 = vmax.xlane.f32.xlu0 %v9081
      %v9083 = vpop.xlane.xlu0 %9082
      %v9084 = vsel %vm1193, %v8978, -inf
      %v9085 = vmax.f32 %v8976, %v9084
      %9086 = vmax.xlane.f32.xlu0 %v9085
      %v9087 = vpop.xlane.xlu0 %9086
      %v9088 = vsel %vm1193, %v8984, -inf
      %v9089 = vmax.f32 %v8982, %v9088
      %9090 = vmax.xlane.f32.xlu0 %v9089
      %v9091 = vpop.xlane.xlu0 %9090
      %v9092 = vsel %vm1193, %v8990, -inf
      %v9093 = vmax.f32 %v8988, %v9092
      %9094 = vmax.xlane.f32.xlu0 %v9093
      %v9095 = vpop.xlane.xlu0 %9094
      %v9096 = vsel %vm1193, %v8996, -inf
      %v9097 = vmax.f32 %v8994, %v9096
      %9098 = vmax.xlane.f32.xlu0 %v9097
      %v9099 = vpop.xlane.xlu0 %9098
      %v9100 = vsel %vm1290, %v9000, -inf
      %v9101 = vsel %vm1292, %v9002, -inf
      %v9102 = vmax.f32 %v9100, %v9101
      %9103 = vmax.xlane.f32.xlu0 %v9102
      %v9104 = vpop.xlane.xlu0 %9103
      %v9105 = vsub.f32 %v8856, %v9007
      %v9106 = vsub.f32 %v8858, %v9007
      %v9107 = vsub.f32 %v8862, %v9011
      %v9108 = vsub.f32 %v8864, %v9011
      %v9109 = vsub.f32 %v8868, %v9015
      %v9110 = vsub.f32 %v8870, %v9015
      %v9111 = vsub.f32 %v8874, %v9019
      %v9112 = vsub.f32 %v8876, %v9019
      %v9113 = vsub.f32 %v8880, %v9023
      %v9114 = vsub.f32 %v8882, %v9023
      %v9115 = vsub.f32 %v8886, %v9027
      %v9116 = vsub.f32 %v8888, %v9027
      %v9117 = vsub.f32 %v8892, %v9031
      %v9118 = vsub.f32 %v8894, %v9031
      %v9119 = vsub.f32 %v8898, %v9035
      %v9120 = vsub.f32 %v8900, %v9035
      %v9121 = vsub.f32 %v8904, %v9039
      %v9122 = vsub.f32 %v8906, %v9039
      %v9123 = vsub.f32 %v8910, %v9043
      %v9124 = vsub.f32 %v8912, %v9043
      %v9125 = vsub.f32 %v8916, %v9047
      %v9126 = vsub.f32 %v8918, %v9047
      %v9127 = vsub.f32 %v8922, %v9051
      %v9128 = vsub.f32 %v8924, %v9051
      %v9129 = vsub.f32 %v8928, %v9055
      %v9130 = vsub.f32 %v8930, %v9055
      %v9131 = vsub.f32 %v8934, %v9059
      %v9132 = vsub.f32 %v8936, %v9059
      %v9133 = vsub.f32 %v8940, %v9063
      %v9134 = vsub.f32 %v8942, %v9063
      %v9135 = vsub.f32 %v8946, %v9067
      %v9136 = vsub.f32 %v8948, %v9067
      %v9137 = vsub.f32 %v8952, %v9071
      %v9138 = vsub.f32 %v8954, %v9071
      %v9139 = vsub.f32 %v8958, %v9075
      %v9140 = vsub.f32 %v8960, %v9075
      %v9141 = vsub.f32 %v8964, %v9079
      %v9142 = vsub.f32 %v8966, %v9079
      %v9143 = vsub.f32 %v8970, %v9083
      %v9144 = vsub.f32 %v8972, %v9083
      %v9145 = vsub.f32 %v8976, %v9087
      %v9146 = vsub.f32 %v8978, %v9087
      %v9147 = vsub.f32 %v8982, %v9091
      %v9148 = vsub.f32 %v8984, %v9091
      %v9149 = vsub.f32 %v8988, %v9095
      %v9150 = vsub.f32 %v8990, %v9095
      %v9151 = vsub.f32 %v8994, %v9099
      %v9152 = vsub.f32 %v8996, %v9099
      %v9153 = vsub.f32 %v9000, %v9104
      %v9154 = vsub.f32 %v9002, %v9104
      %v9155 = vmul.f32 %v9105, 1.442695
      %v9156 = vpow.pop %v9155
      %v9157 = vmul.f32 %v9106, 1.442695
      %v9158 = vpow.pop %v9157
      %v9159 = vmul.f32 %v9107, 1.442695
      %v9160 = vpow.pop %v9159
      %v9161 = vmul.f32 %v9108, 1.442695
      %v9162 = vpow.pop %v9161
      %v9163 = vmul.f32 %v9109, 1.442695
      %v9164 = vpow.pop %v9163
      %v9165 = vmul.f32 %v9110, 1.442695
      %v9166 = vpow.pop %v9165
      %v9167 = vmul.f32 %v9111, 1.442695
      %v9168 = vpow.pop %v9167
      %v9169 = vmul.f32 %v9112, 1.442695
      %v9170 = vpow.pop %v9169
      %v9171 = vmul.f32 %v9113, 1.442695
      %v9172 = vpow.pop %v9171
      %v9173 = vmul.f32 %v9114, 1.442695
      %v9174 = vpow.pop %v9173
      %v9175 = vmul.f32 %v9115, 1.442695
      %v9176 = vpow.pop %v9175
      %v9177 = vmul.f32 %v9116, 1.442695
      %v9178 = vpow.pop %v9177
      %v9179 = vmul.f32 %v9117, 1.442695
      %v9180 = vpow.pop %v9179
      %v9181 = vmul.f32 %v9118, 1.442695
      %v9182 = vpow.pop %v9181
      %v9183 = vmul.f32 %v9119, 1.442695
      %v9184 = vpow.pop %v9183
      %v9185 = vmul.f32 %v9120, 1.442695
      %v9186 = vpow.pop %v9185
      %v9187 = vmul.f32 %v9121, 1.442695
      %v9188 = vpow.pop %v9187
      %v9189 = vmul.f32 %v9122, 1.442695
      %v9190 = vpow.pop %v9189
      %v9191 = vmul.f32 %v9123, 1.442695
      %v9192 = vpow.pop %v9191
      %v9193 = vmul.f32 %v9124, 1.442695
      %v9194 = vpow.pop %v9193
      %v9195 = vmul.f32 %v9125, 1.442695
      %v9196 = vpow.pop %v9195
      %v9197 = vmul.f32 %v9126, 1.442695
      %v9198 = vpow.pop %v9197
      %v9199 = vmul.f32 %v9127, 1.442695
      %v9200 = vpow.pop %v9199
      %v9201 = vmul.f32 %v9128, 1.442695
      %v9202 = vpow.pop %v9201
      %v9203 = vmul.f32 %v9129, 1.442695
      %v9204 = vpow.pop %v9203
      %v9205 = vmul.f32 %v9130, 1.442695
      %v9206 = vpow.pop %v9205
      %v9207 = vmul.f32 %v9131, 1.442695
      %v9208 = vpow.pop %v9207
      %v9209 = vmul.f32 %v9132, 1.442695
      %v9210 = vpow.pop %v9209
      %v9211 = vmul.f32 %v9133, 1.442695
      %v9212 = vpow.pop %v9211
      %v9213 = vmul.f32 %v9134, 1.442695
      %v9214 = vpow.pop %v9213
      %v9215 = vmul.f32 %v9135, 1.442695
      %v9216 = vpow.pop %v9215
      %v9217 = vmul.f32 %v9136, 1.442695
      %v9218 = vpow.pop %v9217
      %v9219 = vmul.f32 %v9137, 1.442695
      %v9220 = vpow.pop %v9219
      %v9221 = vmul.f32 %v9138, 1.442695
      %v9222 = vpow.pop %v9221
      %v9223 = vmul.f32 %v9139, 1.442695
      %v9224 = vpow.pop %v9223
      %v9225 = vmul.f32 %v9140, 1.442695
      %v9226 = vpow.pop %v9225
      %v9227 = vmul.f32 %v9141, 1.442695
      %v9228 = vpow.pop %v9227
      %v9229 = vmul.f32 %v9142, 1.442695
      %v9230 = vpow.pop %v9229
      %v9231 = vmul.f32 %v9143, 1.442695
      %v9232 = vpow.pop %v9231
      %v9233 = vmul.f32 %v9144, 1.442695
      %v9234 = vpow.pop %v9233
      %v9235 = vmul.f32 %v9145, 1.442695
      %v9236 = vpow.pop %v9235
      %v9237 = vmul.f32 %v9146, 1.442695
      %v9238 = vpow.pop %v9237
      %v9239 = vmul.f32 %v9147, 1.442695
      %v9240 = vpow.pop %v9239
      %v9241 = vmul.f32 %v9148, 1.442695
      %v9242 = vpow.pop %v9241
      %v9243 = vmul.f32 %v9149, 1.442695
      %v9244 = vpow.pop %v9243
      %v9245 = vmul.f32 %v9150, 1.442695
      %v9246 = vpow.pop %v9245
      %v9247 = vmul.f32 %v9151, 1.442695
      %v9248 = vpow.pop %v9247
      %v9249 = vmul.f32 %v9152, 1.442695
      %v9250 = vpow.pop %v9249
      %v9251 = vmul.f32 %v9153, 1.442695
      %v9252 = vpow.pop %v9251
      %v9253 = vmul.f32 %v9154, 1.442695
      %v9254 = vpow.pop %v9253
      %v9255 = vsel %vm1193, %v9158, 0.0
      %v9256 = vadd.f32 %v9156, %v9255
      %9257 = vadd.xlane.f32.xlu0 %v9256
      %v9258 = vpop.xlane.xlu0 %9257
      %v9259 = vsel %vm1193, %v9162, 0.0
      %v9260 = vadd.f32 %v9160, %v9259
      %9261 = vadd.xlane.f32.xlu0 %v9260
      %v9262 = vpop.xlane.xlu0 %9261
      %v9263 = vsel %vm1193, %v9166, 0.0
      %v9264 = vadd.f32 %v9164, %v9263
      %9265 = vadd.xlane.f32.xlu0 %v9264
      %v9266 = vpop.xlane.xlu0 %9265
      %v9267 = vsel %vm1193, %v9170, 0.0
      %v9268 = vadd.f32 %v9168, %v9267
      %9269 = vadd.xlane.f32.xlu0 %v9268
      %v9270 = vpop.xlane.xlu0 %9269
      %v9271 = vsel %vm1193, %v9174, 0.0
      %v9272 = vadd.f32 %v9172, %v9271
      %9273 = vadd.xlane.f32.xlu0 %v9272
      %v9274 = vpop.xlane.xlu0 %9273
      %v9275 = vsel %vm1193, %v9178, 0.0
      %v9276 = vadd.f32 %v9176, %v9275
      %9277 = vadd.xlane.f32.xlu0 %v9276
      %v9278 = vpop.xlane.xlu0 %9277
      %v9279 = vsel %vm1193, %v9182, 0.0
      %v9280 = vadd.f32 %v9180, %v9279
      %9281 = vadd.xlane.f32.xlu0 %v9280
      %v9282 = vpop.xlane.xlu0 %9281
      %v9283 = vsel %vm1193, %v9186, 0.0
      %v9284 = vadd.f32 %v9184, %v9283
      %9285 = vadd.xlane.f32.xlu0 %v9284
      %v9286 = vpop.xlane.xlu0 %9285
      %v9287 = vsel %vm1193, %v9190, 0.0
      %v9288 = vadd.f32 %v9188, %v9287
      %9289 = vadd.xlane.f32.xlu0 %v9288
      %v9290 = vpop.xlane.xlu0 %9289
      %v9291 = vsel %vm1193, %v9194, 0.0
      %v9292 = vadd.f32 %v9192, %v9291
      %9293 = vadd.xlane.f32.xlu0 %v9292
      %v9294 = vpop.xlane.xlu0 %9293
      %v9295 = vsel %vm1193, %v9198, 0.0
      %v9296 = vadd.f32 %v9196, %v9295
      %9297 = vadd.xlane.f32.xlu0 %v9296
      %v9298 = vpop.xlane.xlu0 %9297
      %v9299 = vsel %vm1193, %v9202, 0.0
      %v9300 = vadd.f32 %v9200, %v9299
      %9301 = vadd.xlane.f32.xlu0 %v9300
      %v9302 = vpop.xlane.xlu0 %9301
      %v9303 = vsel %vm1193, %v9206, 0.0
      %v9304 = vadd.f32 %v9204, %v9303
      %9305 = vadd.xlane.f32.xlu0 %v9304
      %v9306 = vpop.xlane.xlu0 %9305
      %v9307 = vsel %vm1193, %v9210, 0.0
      %v9308 = vadd.f32 %v9208, %v9307
      %9309 = vadd.xlane.f32.xlu0 %v9308
      %v9310 = vpop.xlane.xlu0 %9309
      %v9311 = vsel %vm1193, %v9214, 0.0
      %v9312 = vadd.f32 %v9212, %v9311
      %9313 = vadd.xlane.f32.xlu0 %v9312
      %v9314 = vpop.xlane.xlu0 %9313
      %v9315 = vsel %vm1193, %v9218, 0.0
      %v9316 = vadd.f32 %v9216, %v9315
      %9317 = vadd.xlane.f32.xlu0 %v9316
      %v9318 = vpop.xlane.xlu0 %9317
      %v9319 = vsel %vm1193, %v9222, 0.0
      %v9320 = vadd.f32 %v9220, %v9319
      %9321 = vadd.xlane.f32.xlu0 %v9320
      %v9322 = vpop.xlane.xlu0 %9321
      %v9323 = vsel %vm1193, %v9226, 0.0
      %v9324 = vadd.f32 %v9224, %v9323
      %9325 = vadd.xlane.f32.xlu0 %v9324
      %v9326 = vpop.xlane.xlu0 %9325
      %v9327 = vsel %vm1193, %v9230, 0.0
      %v9328 = vadd.f32 %v9228, %v9327
      %9329 = vadd.xlane.f32.xlu0 %v9328
      %v9330 = vpop.xlane.xlu0 %9329
      %v9331 = vsel %vm1193, %v9234, 0.0
      %v9332 = vadd.f32 %v9232, %v9331
      %9333 = vadd.xlane.f32.xlu0 %v9332
      %v9334 = vpop.xlane.xlu0 %9333
      %v9335 = vsel %vm1193, %v9238, 0.0
      %v9336 = vadd.f32 %v9236, %v9335
      %9337 = vadd.xlane.f32.xlu0 %v9336
      %v9338 = vpop.xlane.xlu0 %9337
      %v9339 = vsel %vm1193, %v9242, 0.0
      %v9340 = vadd.f32 %v9240, %v9339
      %9341 = vadd.xlane.f32.xlu0 %v9340
      %v9342 = vpop.xlane.xlu0 %9341
      %v9343 = vsel %vm1193, %v9246, 0.0
      %v9344 = vadd.f32 %v9244, %v9343
      %9345 = vadd.xlane.f32.xlu0 %v9344
      %v9346 = vpop.xlane.xlu0 %9345
      %v9347 = vsel %vm1193, %v9250, 0.0
      %v9348 = vadd.f32 %v9248, %v9347
      %9349 = vadd.xlane.f32.xlu0 %v9348
      %v9350 = vpop.xlane.xlu0 %9349
      %v9351 = vsel %vm1290, %v9252, 0.0
      %v9352 = vsel %vm1292, %v9254, 0.0
      %v9353 = vadd.f32 %v9351, %v9352
      %9354 = vadd.xlane.f32.xlu0 %v9353
      %v9355 = vpop.xlane.xlu0 %9354
      %9356 = vrot.lane.b32.xlu0 %v731, 32
      %v9357 = vpop.permute.xlu0 %9356
      %9358 = vrot.lane.b32.xlu0 %v737, 32
      %v9359 = vpop.permute.xlu0 %9358
      %9360 = vrot.lane.b32.xlu0 %v743, 32
      %v9361 = vpop.permute.xlu0 %9360
      %9362 = vrot.lane.b32.xlu0 %v749, 32
      %v9363 = vpop.permute.xlu0 %9362
      %9364 = vrot.lane.b32.xlu0 %v755, 32
      %v9365 = vpop.permute.xlu0 %9364
      %9366 = vrot.lane.b32.xlu0 %v761, 32
      %v9367 = vpop.permute.xlu0 %9366
      %9368 = vrot.lane.b32.xlu0 %v767, 32
      %v9369 = vpop.permute.xlu0 %9368
      %9370 = vrot.lane.b32.xlu0 %v773, 32
      %v9371 = vpop.permute.xlu0 %9370
      %9372 = vrot.lane.b32.xlu0 %v779, 32
      %v9373 = vpop.permute.xlu0 %9372
      %9374 = vrot.lane.b32.xlu0 %v785, 32
      %v9375 = vpop.permute.xlu0 %9374
      %9376 = vrot.lane.b32.xlu0 %v791, 32
      %v9377 = vpop.permute.xlu0 %9376
      %9378 = vrot.lane.b32.xlu0 %v797, 32
      %v9379 = vpop.permute.xlu0 %9378
      %9380 = vrot.lane.b32.xlu0 %v803, 32
      %v9381 = vpop.permute.xlu0 %9380
      %9382 = vrot.lane.b32.xlu0 %v809, 32
      %v9383 = vpop.permute.xlu0 %9382
      %9384 = vrot.lane.b32.xlu0 %v815, 32
      %v9385 = vpop.permute.xlu0 %9384
      %9386 = vrot.lane.b32.xlu0 %v821, 32
      %v9387 = vpop.permute.xlu0 %9386
      %9388 = vrot.lane.b32.xlu0 %v827, 32
      %v9389 = vpop.permute.xlu0 %9388
      %9390 = vrot.lane.b32.xlu0 %v833, 32
      %v9391 = vpop.permute.xlu0 %9390
      %9392 = vrot.lane.b32.xlu0 %v839, 32
      %v9393 = vpop.permute.xlu0 %9392
      %9394 = vrot.lane.b32.xlu0 %v845, 32
      %v9395 = vpop.permute.xlu0 %9394
      %9396 = vrot.lane.b32.xlu0 %v851, 32
      %v9397 = vpop.permute.xlu0 %9396
      %9398 = vrot.lane.b32.xlu0 %v857, 32
      %v9399 = vpop.permute.xlu0 %9398
      %9400 = vrot.lane.b32.xlu0 %v863, 32
      %v9401 = vpop.permute.xlu0 %9400
      %9402 = vrot.lane.b32.xlu0 %v869, 32
      %v9403 = vpop.permute.xlu0 %9402
      %9404 = vrot.lane.b32.xlu0 %v875, 32
      %v9405 = vpop.permute.xlu0 %9404
      %v9431 = vsel %vm1193, %v9158, 0
      %v9434 = vsel %vm1193, %v9162, 0
      %v9437 = vsel %vm1193, %v9166, 0
      %v9440 = vsel %vm1193, %v9170, 0
      %v9443 = vsel %vm1193, %v9174, 0
      %v9446 = vsel %vm1193, %v9178, 0
      %v9449 = vsel %vm1193, %v9182, 0
      %v9452 = vsel %vm1193, %v9186, 0
      %v9455 = vsel %vm1193, %v9190, 0
      %v9458 = vsel %vm1193, %v9194, 0
      %v9461 = vsel %vm1193, %v9198, 0
      %v9464 = vsel %vm1193, %v9202, 0
      %v9467 = vsel %vm1193, %v9206, 0
      %v9470 = vsel %vm1193, %v9210, 0
      %v9473 = vsel %vm1193, %v9214, 0
      %v9476 = vsel %vm1193, %v9218, 0
      %v9479 = vsel %vm1193, %v9222, 0
      %v9482 = vsel %vm1193, %v9226, 0
      %v9485 = vsel %vm1193, %v9230, 0
      %v9488 = vsel %vm1193, %v9234, 0
      %v9491 = vsel %vm1193, %v9238, 0
      %v9494 = vsel %vm1193, %v9242, 0
      %v9497 = vsel %vm1193, %v9246, 0
      %v9500 = vsel %vm1193, %v9250, 0
      %v9503 = vsel %vm1193, %v9254, 0
      %v9505 = vsel %vm1290, %v9405, 0
      %9507 = vmatprep.subr.mxu0 0.0
      %9508 = vmatpush1.msra.mxu0 %v9387
      %9509 = vmatprep.subr.mxu0 0.0
      %9510 = vmatpush1.msra.mxu0 %v9385
      %9511 = vmatprep.subr.mxu0 0.0
      %9512 = vmatpush1.msra.mxu0 %v9383
      %9513 = vmatprep.subr.mxu0 0.0
      %9514 = vmatpush1.msra.mxu0 %v9381
      %9515 = vmatprep.subr.mxu0 0.0
      %9516 = vmatpush1.msra.mxu0 %v9379
      %9517 = vmatprep.subr.mxu0 0.0
      %9518 = vmatpush1.msra.mxu0 %v9377
      %9519 = vmatprep.subr.mxu0 0.0
      %9520 = vmatpush1.msra.mxu0 %v9375
      %9521 = vmatprep.subr.mxu0 0.0
      %9522 = vmatpush1.msra.mxu0 %v9373
      %9523 = vmatprep.subr.mxu0 0.0
      %9524 = vmatpush1.msra.mxu0 %v9371
      %9525 = vmatprep.subr.mxu0 0.0
      %9526 = vmatpush1.msra.mxu0 %v9369
      %9527 = vmatprep.subr.mxu0 0.0
      %9528 = vmatpush1.msra.mxu0 %v9367
      %9529 = vmatprep.subr.mxu0 0.0
      %9530 = vmatpush1.msra.mxu0 %v9365
      %9531 = vmatprep.subr.mxu0 0.0
      %9532 = vmatpush1.msra.mxu0 %v9363
      %9533 = vmatprep.subr.mxu0 0.0
      %9534 = vmatpush1.msra.mxu0 %v9361
      %9535 = vmatprep.subr.mxu0 0.0
      %9536 = vmatpush1.msra.mxu0 %v9359
      %9537 = vmatprep.subr.mxu0 0.0
      %9538 = vmatpush1.msra.mxu0 %v9357
      %9539 = vmatprep.subr.mxu0 0.0
      %9540 = vmatpush2.msra.mxu0 0.0
      %9541 = vmatprep.subr.mxu0 0.0
      %9542 = vmatpush2.msra.mxu0 0.0
      %9543 = vmatprep.subr.mxu0 0.0
      %9544 = vmatpush2.msra.mxu0 0.0
      %9545 = vmatprep.subr.mxu0 0.0
      %9546 = vmatpush2.msra.mxu0 0.0
      %9547 = vmatprep.subr.mxu0 0.0
      %9548 = vmatpush2.msra.mxu0 0.0
      %9549 = vmatprep.subr.mxu0 0.0
      %9550 = vmatpush2.msra.mxu0 0.0
      %9551 = vmatprep.subr.mxu0 0.0
      %9552 = vmatpush2.msra.mxu0 0.0
      %9553 = vmatprep.subr.mxu0 0.0
      %9554 = vmatpush2.msra.mxu0 %v9505
      %9555 = vmatprep.subr.mxu0 0.0
      %9556 = vmatpush2.msra.mxu0 %v9403
      %9557 = vmatprep.subr.mxu0 0.0
      %9558 = vmatpush2.msra.mxu0 %v9401
      %9559 = vmatprep.subr.mxu0 0.0
      %9560 = vmatpush2.msra.mxu0 %v9399
      %9561 = vmatprep.subr.mxu0 0.0
      %9562 = vmatpush2.msra.mxu0 %v9397
      %9563 = vmatprep.subr.mxu0 0.0
      %9564 = vmatpush2.msra.mxu0 %v9395
      %9565 = vmatprep.subr.mxu0 0.0
      %9566 = vmatpush2.msra.mxu0 %v9393
      %9567 = vmatprep.subr.mxu0 0.0
      %9568 = vmatpush2.msra.mxu0 %v9391
      %9569 = vmatprep.subr.mxu0 0.0
      %9570 = vmatpush2.msra.mxu0 %v9389
      %9571 = vmatprep.mubr.f32.mxu0 %v9431
      %9572 = vmatmul.mubr.f32.gmra.mxu0 %v9156
      %v9573 = vpop.f32.mrf.mxu0
      %v9574 = vadd.f32 0.0, %v9573
      %v9575 = vpop.f32.mrf.mxu0
      %9576 = vmatprep.mubr.f32.mxu0 %v9434
      %9577 = vmatmul.mubr.f32.gmra.mxu0 %v9160
      %v9578 = vpop.f32.mrf.mxu0
      %v9579 = vadd.f32 0.0, %v9578
      %v9580 = vpop.f32.mrf.mxu0
      %9581 = vmatprep.mubr.f32.mxu0 %v9437
      %9582 = vmatmul.mubr.f32.gmra.mxu0 %v9164
      %v9583 = vpop.f32.mrf.mxu0
      %v9584 = vadd.f32 0.0, %v9583
      %v9585 = vpop.f32.mrf.mxu0
      %9586 = vmatprep.mubr.f32.mxu0 %v9440
      %9587 = vmatmul.mubr.f32.gmra.mxu0 %v9168
      %v9588 = vpop.f32.mrf.mxu0
      %v9589 = vadd.f32 0.0, %v9588
      %v9590 = vpop.f32.mrf.mxu0
      %9591 = vmatprep.mubr.f32.mxu0 %v9443
      %9592 = vmatmul.mubr.f32.gmra.mxu0 %v9172
      %v9593 = vpop.f32.mrf.mxu0
      %v9594 = vadd.f32 0.0, %v9593
      %v9595 = vpop.f32.mrf.mxu0
      %9596 = vmatprep.mubr.f32.mxu0 %v9446
      %9597 = vmatmul.mubr.f32.gmra.mxu0 %v9176
      %v9598 = vpop.f32.mrf.mxu0
      %v9599 = vadd.f32 0.0, %v9598
      %v9600 = vpop.f32.mrf.mxu0
      %9601 = vmatprep.mubr.f32.mxu0 %v9449
      %9602 = vmatmul.mubr.f32.gmra.mxu0 %v9180
      %v9603 = vpop.f32.mrf.mxu0
      %v9604 = vadd.f32 0.0, %v9603
      %v9605 = vpop.f32.mrf.mxu0
      %9606 = vmatprep.mubr.f32.mxu0 %v9452
      %9607 = vmatmul.mubr.f32.gmra.mxu0 %v9184
      %v9608 = vpop.f32.mrf.mxu0
      %v9609 = vadd.f32 0.0, %v9608
      %v9610 = vpop.f32.mrf.mxu0
      %9611 = vmatprep.mubr.f32.mxu0 %v9455
      %9612 = vmatmul.mubr.f32.gmra.mxu0 %v9188
      %v9613 = vpop.f32.mrf.mxu0
      %v9614 = vadd.f32 0.0, %v9613
      %v9615 = vpop.f32.mrf.mxu0
      %9616 = vmatprep.mubr.f32.mxu0 %v9458
      %9617 = vmatmul.mubr.f32.gmra.mxu0 %v9192
      %v9618 = vpop.f32.mrf.mxu0
      %v9619 = vadd.f32 0.0, %v9618
      %v9620 = vpop.f32.mrf.mxu0
      %9621 = vmatprep.mubr.f32.mxu0 %v9461
      %9622 = vmatmul.mubr.f32.gmra.mxu0 %v9196
      %v9623 = vpop.f32.mrf.mxu0
      %v9624 = vadd.f32 0.0, %v9623
      %v9625 = vpop.f32.mrf.mxu0
      %9626 = vmatprep.mubr.f32.mxu0 %v9464
      %9627 = vmatmul.mubr.f32.gmra.mxu0 %v9200
      %v9628 = vpop.f32.mrf.mxu0
      %v9629 = vadd.f32 0.0, %v9628
      %v9630 = vpop.f32.mrf.mxu0
      %9631 = vmatprep.mubr.f32.mxu0 %v9467
      %9632 = vmatmul.mubr.f32.gmra.mxu0 %v9204
      %v9633 = vpop.f32.mrf.mxu0
      %v9634 = vadd.f32 0.0, %v9633
      %v9635 = vpop.f32.mrf.mxu0
      %9636 = vmatprep.mubr.f32.mxu0 %v9470
      %9637 = vmatmul.mubr.f32.gmra.mxu0 %v9208
      %v9638 = vpop.f32.mrf.mxu0
      %v9639 = vadd.f32 0.0, %v9638
      %v9640 = vpop.f32.mrf.mxu0
      %9641 = vmatprep.mubr.f32.mxu0 %v9473
      %9642 = vmatmul.mubr.f32.gmra.mxu0 %v9212
      %v9643 = vpop.f32.mrf.mxu0
      %v9644 = vadd.f32 0.0, %v9643
      %v9645 = vpop.f32.mrf.mxu0
      %9646 = vmatprep.mubr.f32.mxu0 %v9476
      %9647 = vmatmul.mubr.f32.gmra.mxu0 %v9216
      %v9648 = vpop.f32.mrf.mxu0
      %v9649 = vadd.f32 0.0, %v9648
      %v9650 = vpop.f32.mrf.mxu0
      %9651 = vmatprep.mubr.f32.mxu0 %v9479
      %9652 = vmatmul.mubr.f32.gmra.mxu0 %v9220
      %v9653 = vpop.f32.mrf.mxu0
      %v9654 = vadd.f32 0.0, %v9653
      %v9655 = vpop.f32.mrf.mxu0
      %9656 = vmatprep.mubr.f32.mxu0 %v9482
      %9657 = vmatmul.mubr.f32.gmra.mxu0 %v9224
      %v9658 = vpop.f32.mrf.mxu0
      %v9659 = vadd.f32 0.0, %v9658
      %v9660 = vpop.f32.mrf.mxu0
      %9661 = vmatprep.mubr.f32.mxu0 %v9485
      %9662 = vmatmul.mubr.f32.gmra.mxu0 %v9228
      %v9663 = vpop.f32.mrf.mxu0
      %v9664 = vadd.f32 0.0, %v9663
      %v9665 = vpop.f32.mrf.mxu0
      %9666 = vmatprep.mubr.f32.mxu0 %v9488
      %9667 = vmatmul.mubr.f32.gmra.mxu0 %v9232
      %v9668 = vpop.f32.mrf.mxu0
      %v9669 = vadd.f32 0.0, %v9668
      %v9670 = vpop.f32.mrf.mxu0
      %9671 = vmatprep.mubr.f32.mxu0 %v9491
      %9672 = vmatmul.mubr.f32.gmra.mxu0 %v9236
      %v9673 = vpop.f32.mrf.mxu0
      %v9674 = vadd.f32 0.0, %v9673
      %v9675 = vpop.f32.mrf.mxu0
      %9676 = vmatprep.mubr.f32.mxu0 %v9494
      %9677 = vmatmul.mubr.f32.gmra.mxu0 %v9240
      %v9678 = vpop.f32.mrf.mxu0
      %v9679 = vadd.f32 0.0, %v9678
      %v9680 = vpop.f32.mrf.mxu0
      %9681 = vmatprep.mubr.f32.mxu0 %v9497
      %9682 = vmatmul.mubr.f32.gmra.mxu0 %v9244
      %v9683 = vpop.f32.mrf.mxu0
      %v9684 = vadd.f32 0.0, %v9683
      %v9685 = vpop.f32.mrf.mxu0
      %9686 = vmatprep.mubr.f32.mxu0 %v9500
      %9687 = vmatmul.mubr.f32.gmra.mxu0 %v9248
      %v9688 = vpop.f32.mrf.mxu0
      %v9689 = vadd.f32 0.0, %v9688
      %v9690 = vpop.f32.mrf.mxu0
      %9691 = vmatprep.mubr.f32.mxu0 %v9503
      %9692 = vmatmul.mubr.f32.gmra.mxu0 %v9252
      %v9693 = vpop.f32.mrf.mxu0
      %v9694 = vadd.f32 0.0, %v9693
      %v9695 = vpop.f32.mrf.mxu0
      %9696 = vdwg.mxu0
      %v9697 = vld [vmem:[#allocation2] sm:$0xff]
      %v9698 = vld [vmem:[#allocation2 + $0x8] sm:$0xff]
      %v9699 = vld [vmem:[#allocation2 + $0x10] sm:$0xff]
      %v9700 = vld [vmem:[#allocation2 + $0x18] sm:$0xff]
      %v9701 = vld [vmem:[#allocation2 + $0x20] sm:$0xff]
      %v9702 = vld [vmem:[#allocation2 + $0x28] sm:$0xff]
      %v9703 = vld [vmem:[#allocation2 + $0x30] sm:$0xff]
      %v9704 = vld [vmem:[#allocation2 + $0x38] sm:$0xff]
      %v9705 = vld [vmem:[#allocation2 + $0x40] sm:$0xff]
      %v9706 = vld [vmem:[#allocation2 + $0x48] sm:$0xff]
      %v9707 = vld [vmem:[#allocation2 + $0x50] sm:$0xff]
      %v9708 = vld [vmem:[#allocation2 + $0x58] sm:$0xff]
      %v9709 = vld [vmem:[#allocation2 + $0x60] sm:$0xff]
      %v9710 = vld [vmem:[#allocation2 + $0x68] sm:$0xff]
      %v9711 = vld [vmem:[#allocation2 + $0x70] sm:$0xff]
      %v9712 = vld [vmem:[#allocation2 + $0x78] sm:$0xff]
      %v9713 = vld [vmem:[#allocation2 + $0x80] sm:$0xff]
      %v9714 = vld [vmem:[#allocation2 + $0x88] sm:$0xff]
      %v9715 = vld [vmem:[#allocation2 + $0x90] sm:$0xff]
      %v9716 = vld [vmem:[#allocation2 + $0x98] sm:$0xff]
      %v9717 = vld [vmem:[#allocation2 + $0xa0] sm:$0xff]
      %v9718 = vld [vmem:[#allocation2 + $0xa8] sm:$0xff]
      %v9719 = vld [vmem:[#allocation2 + $0xb0] sm:$0xff]
      %v9720 = vld [vmem:[#allocation2 + $0xb8] sm:$0xff]
      %v9721 = vld [vmem:[#allocation2 + $0xc0] sm:$0xf]
      %v9722 = vrcp.pop %v9258
      %v9723 = vrcp.pop %v9262
      %v9724 = vrcp.pop %v9266
      %v9725 = vrcp.pop %v9270
      %v9726 = vrcp.pop %v9274
      %v9727 = vrcp.pop %v9278
      %v9728 = vrcp.pop %v9282
      %v9729 = vrcp.pop %v9286
      %v9730 = vrcp.pop %v9290
      %v9731 = vrcp.pop %v9294
      %v9732 = vrcp.pop %v9298
      %v9733 = vrcp.pop %v9302
      %v9734 = vrcp.pop %v9306
      %v9735 = vrcp.pop %v9310
      %v9736 = vrcp.pop %v9314
      %v9737 = vrcp.pop %v9318
      %v9738 = vrcp.pop %v9322
      %v9739 = vrcp.pop %v9326
      %v9740 = vrcp.pop %v9330
      %v9741 = vrcp.pop %v9334
      %v9742 = vrcp.pop %v9338
      %v9743 = vrcp.pop %v9342
      %v9744 = vrcp.pop %v9346
      %v9745 = vrcp.pop %v9350
      %v9746 = vrcp.pop %v9355
      %v9747 = vmul.f32 %v9574, %v9722
      %v9748 = vmul.f32 %v9579, %v9723
      %v9749 = vmul.f32 %v9584, %v9724
      %v9750 = vmul.f32 %v9589, %v9725
      %v9751 = vmul.f32 %v9594, %v9726
      %v9752 = vmul.f32 %v9599, %v9727
      %v9753 = vmul.f32 %v9604, %v9728
      %v9754 = vmul.f32 %v9609, %v9729
      %v9755 = vmul.f32 %v9614, %v9730
      %v9756 = vmul.f32 %v9619, %v9731
      %v9757 = vmul.f32 %v9624, %v9732
      %v9758 = vmul.f32 %v9629, %v9733
      %v9759 = vmul.f32 %v9634, %v9734
      %v9760 = vmul.f32 %v9639, %v9735
      %v9761 = vmul.f32 %v9644, %v9736
      %v9762 = vmul.f32 %v9649, %v9737
      %v9763 = vmul.f32 %v9654, %v9738
      %v9764 = vmul.f32 %v9659, %v9739
      %v9765 = vmul.f32 %v9664, %v9740
      %v9766 = vmul.f32 %v9669, %v9741
      %v9767 = vmul.f32 %v9674, %v9742
      %v9768 = vmul.f32 %v9679, %v9743
      %v9769 = vmul.f32 %v9684, %v9744
      %v9770 = vmul.f32 %v9689, %v9745
      %v9771 = vmul.f32 %v9694, %v9746
      %v9772 = vadd.f32 %v9697, %v9747
      %v9773 = vadd.f32 %v9698, %v9748
      %v9774 = vadd.f32 %v9699, %v9749
      %v9775 = vadd.f32 %v9700, %v9750
      %v9776 = vadd.f32 %v9701, %v9751
      %v9777 = vadd.f32 %v9702, %v9752
      %v9778 = vadd.f32 %v9703, %v9753
      %v9779 = vadd.f32 %v9704, %v9754
      %v9780 = vadd.f32 %v9705, %v9755
      %v9781 = vadd.f32 %v9706, %v9756
      %v9782 = vadd.f32 %v9707, %v9757
      %v9783 = vadd.f32 %v9708, %v9758
      %v9784 = vadd.f32 %v9709, %v9759
      %v9785 = vadd.f32 %v9710, %v9760
      %v9786 = vadd.f32 %v9711, %v9761
      %v9787 = vadd.f32 %v9712, %v9762
      %v9788 = vadd.f32 %v9713, %v9763
      %v9789 = vadd.f32 %v9714, %v9764
      %v9790 = vadd.f32 %v9715, %v9765
      %v9791 = vadd.f32 %v9716, %v9766
      %v9792 = vadd.f32 %v9717, %v9767
      %v9793 = vadd.f32 %v9718, %v9768
      %v9794 = vadd.f32 %v9719, %v9769
      %v9795 = vadd.f32 %v9720, %v9770
      %v9796 = vadd.f32 %v9721, %v9771
      %9797 = vst.msk [vmem:[#allocation2] sm:$0xff] %vm363, %v9772
      %9798 = vst.msk [vmem:[#allocation2 + $0x8] sm:$0xff] %vm363, %v9773
      %9799 = vst.msk [vmem:[#allocation2 + $0x10] sm:$0xff] %vm363, %v9774
      %9800 = vst.msk [vmem:[#allocation2 + $0x18] sm:$0xff] %vm363, %v9775
      %9801 = vst.msk [vmem:[#allocation2 + $0x20] sm:$0xff] %vm363, %v9776
      %9802 = vst.msk [vmem:[#allocation2 + $0x28] sm:$0xff] %vm363, %v9777
      %9803 = vst.msk [vmem:[#allocation2 + $0x30] sm:$0xff] %vm363, %v9778
      %9804 = vst.msk [vmem:[#allocation2 + $0x38] sm:$0xff] %vm363, %v9779
      %9805 = vst.msk [vmem:[#allocation2 + $0x40] sm:$0xff] %vm363, %v9780
      %9806 = vst.msk [vmem:[#allocation2 + $0x48] sm:$0xff] %vm363, %v9781
      %9807 = vst.msk [vmem:[#allocation2 + $0x50] sm:$0xff] %vm363, %v9782
      %9808 = vst.msk [vmem:[#allocation2 + $0x58] sm:$0xff] %vm363, %v9783
      %9809 = vst.msk [vmem:[#allocation2 + $0x60] sm:$0xff] %vm363, %v9784
      %9810 = vst.msk [vmem:[#allocation2 + $0x68] sm:$0xff] %vm363, %v9785
      %9811 = vst.msk [vmem:[#allocation2 + $0x70] sm:$0xff] %vm363, %v9786
      %9812 = vst.msk [vmem:[#allocation2 + $0x78] sm:$0xff] %vm363, %v9787
      %9813 = vst.msk [vmem:[#allocation2 + $0x80] sm:$0xff] %vm363, %v9788
      %9814 = vst.msk [vmem:[#allocation2 + $0x88] sm:$0xff] %vm363, %v9789
      %9815 = vst.msk [vmem:[#allocation2 + $0x90] sm:$0xff] %vm363, %v9790
      %9816 = vst.msk [vmem:[#allocation2 + $0x98] sm:$0xff] %vm363, %v9791
      %9817 = vst.msk [vmem:[#allocation2 + $0xa0] sm:$0xff] %vm363, %v9792
      %9818 = vst.msk [vmem:[#allocation2 + $0xa8] sm:$0xff] %vm363, %v9793
      %9819 = vst.msk [vmem:[#allocation2 + $0xb0] sm:$0xff] %vm363, %v9794
      %9820 = vst.msk [vmem:[#allocation2 + $0xb8] sm:$0xff] %vm363, %v9795
      %9821 = vst.msk [vmem:[#allocation2 + $0xc0] sm:$0xf] %vm901, %v9796
      %v9822 = vld [vmem:[%s5] sm:$0xff]
      %v9823 = vld [vmem:[%s5 + $0x8] sm:$0xff]
      %v9824 = vld [vmem:[#allocation2] sm:$0xff]
      %v9825 = vld [vmem:[#allocation2 + $0x8] sm:$0xff]
      %v9826 = vld [vmem:[#allocation2 + $0x10] sm:$0xff]
      %v9827 = vld [vmem:[#allocation2 + $0x18] sm:$0xff]
      %v9828 = vld [vmem:[#allocation2 + $0x20] sm:$0xff]
      %v9829 = vld [vmem:[#allocation2 + $0x28] sm:$0xff]
      %v9830 = vld [vmem:[#allocation2 + $0x30] sm:$0xff]
      %v9831 = vld [vmem:[#allocation2 + $0x38] sm:$0xff]
      %v9832 = vld [vmem:[#allocation2 + $0x40] sm:$0xff]
      %v9833 = vld [vmem:[#allocation2 + $0x48] sm:$0xff]
      %v9834 = vld [vmem:[#allocation2 + $0x50] sm:$0xff]
      %v9835 = vld [vmem:[#allocation2 + $0x58] sm:$0xff]
      %v9836 = vld [vmem:[#allocation2 + $0x60] sm:$0xff]
      %v9837 = vld [vmem:[#allocation2 + $0x68] sm:$0xff]
      %v9838 = vld [vmem:[#allocation2 + $0x70] sm:$0xff]
      %v9839 = vld [vmem:[#allocation2 + $0x78] sm:$0xff]
      %v9840 = vld [vmem:[#allocation2 + $0x80] sm:$0xff]
      %v9841 = vld [vmem:[#allocation2 + $0x88] sm:$0xff]
      %v9842 = vld [vmem:[#allocation2 + $0x90] sm:$0xff]
      %v9843 = vld [vmem:[#allocation2 + $0x98] sm:$0xff]
      %v9844 = vld [vmem:[#allocation2 + $0xa0] sm:$0xff]
      %v9845 = vld [vmem:[#allocation2 + $0xa8] sm:$0xff]
      %v9846 = vld [vmem:[#allocation2 + $0xb0] sm:$0xff]
      %v9847 = vld [vmem:[#allocation2 + $0xb8] sm:$0xff]
      %v9848 = vld [vmem:[#allocation2 + $0xc0] sm:$0xf]
      %v9850 = vsel %vm363, %v9822, 0
      %v9853 = vsel %vm363, %v9823, 0
      %v9856 = vsel %vm363, %v9824, 0
      %v9859 = vsel %vm363, %v9825, 0
      %v9862 = vsel %vm363, %v9826, 0
      %v9865 = vsel %vm363, %v9827, 0
      %v9868 = vsel %vm363, %v9828, 0
      %v9871 = vsel %vm363, %v9829, 0
      %v9874 = vsel %vm363, %v9830, 0
      %v9877 = vsel %vm363, %v9831, 0
      %v9880 = vsel %vm363, %v9832, 0
      %v9883 = vsel %vm363, %v9833, 0
      %v9886 = vsel %vm363, %v9834, 0
      %v9889 = vsel %vm363, %v9835, 0
      %v9892 = vsel %vm363, %v9836, 0
      %v9895 = vsel %vm363, %v9837, 0
      %v9898 = vsel %vm363, %v9838, 0
      %v9901 = vsel %vm363, %v9839, 0
      %v9904 = vsel %vm363, %v9840, 0
      %v9907 = vsel %vm363, %v9841, 0
      %v9910 = vsel %vm363, %v9842, 0
      %v9913 = vsel %vm363, %v9843, 0
      %v9916 = vsel %vm363, %v9844, 0
      %v9919 = vsel %vm363, %v9845, 0
      %v9922 = vsel %vm363, %v9846, 0
      %v9925 = vsel %vm363, %v9847, 0
      %v9928 = vsel %vm363, %v9848, 0
      %9930 = vmatprep.subr.mxu0 0.0
      %9931 = vmatpush1.xpose.msra.mxu0 %v9901
      %9932 = vmatprep.subr.mxu0 0.0
      %9933 = vmatpush1.xpose.msra.mxu0 %v9898
      %9934 = vmatprep.subr.mxu0 0.0
      %9935 = vmatpush1.xpose.msra.mxu0 %v9895
      %9936 = vmatprep.subr.mxu0 0.0
      %9937 = vmatpush1.xpose.msra.mxu0 %v9892
      %9938 = vmatprep.subr.mxu0 0.0
      %9939 = vmatpush1.xpose.msra.mxu0 %v9889
      %9940 = vmatprep.subr.mxu0 0.0
      %9941 = vmatpush1.xpose.msra.mxu0 %v9886
      %9942 = vmatprep.subr.mxu0 0.0
      %9943 = vmatpush1.xpose.msra.mxu0 %v9883
      %9944 = vmatprep.subr.mxu0 0.0
      %9945 = vmatpush1.xpose.msra.mxu0 %v9880
      %9946 = vmatprep.subr.mxu0 0.0
      %9947 = vmatpush1.xpose.msra.mxu0 %v9877
      %9948 = vmatprep.subr.mxu0 0.0
      %9949 = vmatpush1.xpose.msra.mxu0 %v9874
      %9950 = vmatprep.subr.mxu0 0.0
      %9951 = vmatpush1.xpose.msra.mxu0 %v9871
      %9952 = vmatprep.subr.mxu0 0.0
      %9953 = vmatpush1.xpose.msra.mxu0 %v9868
      %9954 = vmatprep.subr.mxu0 0.0
      %9955 = vmatpush1.xpose.msra.mxu0 %v9865
      %9956 = vmatprep.subr.mxu0 0.0
      %9957 = vmatpush1.xpose.msra.mxu0 %v9862
      %9958 = vmatprep.subr.mxu0 0.0
      %9959 = vmatpush1.xpose.msra.mxu0 %v9859
      %9960 = vmatprep.subr.mxu0 0.0
      %9961 = vmatpush1.xpose.msra.mxu0 %v9856
      %9962 = vmatprep.subr.mxu0 0.0
      %9963 = vmatpush2.xpose.msra.mxu0 0.0
      %9964 = vmatprep.subr.mxu0 0.0
      %9965 = vmatpush2.xpose.msra.mxu0 0.0
      %9966 = vmatprep.subr.mxu0 0.0
      %9967 = vmatpush2.xpose.msra.mxu0 0.0
      %9968 = vmatprep.subr.mxu0 0.0
      %9969 = vmatpush2.xpose.msra.mxu0 0.0
      %9970 = vmatprep.subr.mxu0 0.0
      %9971 = vmatpush2.xpose.msra.mxu0 0.0
      %9972 = vmatprep.subr.mxu0 0.0
      %9973 = vmatpush2.xpose.msra.mxu0 0.0
      %9974 = vmatprep.subr.mxu0 0.0
      %9975 = vmatpush2.xpose.msra.mxu0 0.0
      %9976 = vmatprep.subr.mxu0 0.0
      %9977 = vmatpush2.xpose.msra.mxu0 %v9928
      %9978 = vmatprep.subr.mxu0 0.0
      %9979 = vmatpush2.xpose.msra.mxu0 %v9925
      %9980 = vmatprep.subr.mxu0 0.0
      %9981 = vmatpush2.xpose.msra.mxu0 %v9922
      %9982 = vmatprep.subr.mxu0 0.0
      %9983 = vmatpush2.xpose.msra.mxu0 %v9919
      %9984 = vmatprep.subr.mxu0 0.0
      %9985 = vmatpush2.xpose.msra.mxu0 %v9916
      %9986 = vmatprep.subr.mxu0 0.0
      %9987 = vmatpush2.xpose.msra.mxu0 %v9913
      %9988 = vmatprep.subr.mxu0 0.0
      %9989 = vmatpush2.xpose.msra.mxu0 %v9910
      %9990 = vmatprep.subr.mxu0 0.0
      %9991 = vmatpush2.xpose.msra.mxu0 %v9907
      %9992 = vmatprep.subr.mxu0 0.0
      %9993 = vmatpush2.xpose.msra.mxu0 %v9904
      %9994 = vmatprep.mubr.f32.mxu0 0.0
      %9995 = vmatmul.mubr.f32.gmra.mxu0 %v9850
      %v9996 = vpop.f32.mrf.mxu0
      %v9997 = vadd.f32 0.0, %v9996
      %v9998 = vpop.f32.mrf.mxu0
      %v9999 = vadd.f32 0.0, %v9998
      %10000 = vmatprep.mubr.f32.mxu0 0.0
      %10001 = vmatmul.mubr.f32.gmra.mxu0 %v9853
      %v10002 = vpop.f32.mrf.mxu0
      %v10003 = vadd.f32 0.0, %v10002
      %v10004 = vpop.f32.mrf.mxu0
      %v10005 = vadd.f32 0.0, %v10004
      %10006 = vdwg.mxu0
      %10007 = vst [vmem:[%s271] sm:$0xff] %v9997
      %10008 = vst.msk [vmem:[%s271 + $0x8] sm:$0xff] %vm1193, %v9999
      %10009 = vst [vmem:[%s271 + $0x10] sm:$0xff] %v10003
      %10010 = vst.msk [vmem:[%s271 + $0x18] sm:$0xff] %vm1193, %v10005
      %p10011 = scmp.lt.s32.totalorder %s17, 1
      %s10012 = scalar_select %p10011, %s17, 1
      %s10013 = smul.addr %s10012, 4
      %s10014 = smul.addr %s10013, 8
      %s10015 = scalar_lea.vmem %s6, %s10014
      // Predicated region
      $region45: #{embed_forward.1} parent=43 // pred_check
        %p10016 = pneg %p171
      $region46: #{embed_forward.1} parent=43 // pred_check_branch
        %10018 = sbr.rel (%p10016) target = $region48
      $region47: #{embed_forward.1} parent=43 // pred_region
        _
      $region48: #{embed_forward.1} parent=43 // pred_fallthru
        _
    $region44: #{embed_forward.1} parent=5 // pred_fallthru
      _
    %p10019 = scmp.le.s32.totalorder 2, %s12
    // Predicated region
    $region49: #{embed_forward.1} parent=5 // pred_check
      %p10020 = pneg %p10019
    $region50: #{embed_forward.1} parent=5 // pred_check_branch
      %10022 = sbr.rel (%p10020) target = $region52
    $region51: #{embed_forward.1} parent=5 // pred_region
      %s10023 = ssub.s32 %s12, 2
      // Predicated region
      $region53: #{embed_forward.1} parent=51 // pred_check
        %p10024 = pneg %p177
      $region54: #{embed_forward.1} parent=51 // pred_check_branch
        %10026 = sbr.rel (%p10024) target = $region56
      $region55: #{embed_forward.1} parent=51 // pred_region
        %p10027 = scmp.lt.s32.totalorder %s18, 1
        %s10028 = scalar_select %p10027, %s18, 1
        %s10029 = smul.addr %s10028, 4
        %s10030 = smul.addr %s10029, 8
        %s10031 = scalar_lea.vmem %s6, %s10030
      $region56: #{embed_forward.1} parent=51 // pred_fallthru
        _
    $region52: #{embed_forward.1} parent=5 // pred_fallthru
      _
  $region6: #{embed_forward.1} parent=0 // loop_footer
    %s16 = sadd.s32 1, %s12
  $region7: #{embed_forward.1} parent=0 // loop_footer_branch
    %11 = sbr.rel target = $region3
  $region8: #{embed_forward.1} parent=0 // loop_exit
    _

</llo_original>
